<compile_context>
chip_gen: v7x
topology: tpu7x:2x2x1
jax: 0.10.0
libtpu: 0.0.40
codegen_flags: <defaults>
</compile_context>

<pallas_src>
import numpy as np
import jax
import jax.numpy as jnp
from jax import lax
from jax.experimental import pallas as pl
from jax.experimental.pallas import tpu as pltpu


# ------------------------------ fused kernel -------------------------------- #

def unet_fused_kernel(x_ref,
                      w_inc1, st_inc1, w_inc2, st_inc2,
                      w_d1a, st_d1a, w_d1b, st_d1b,
                      a_up,
                      w_u1, st_u1, w_u2, st_u2,
                      w_head, b_head,
                      o_ref):
    """Whole UNet forward for one batch element; every intermediate stays in VMEM.

    x_ref  : (1, H, W, Cin) f32        input tile (NHWC)
    w_*    : (9*Cin, Cout)  bf16       im2col conv weights (row index = (3*dy+dx)*Cin + cin)
    st_*   : (2, Cout)      f32        folded eval-mode BatchNorm scale / shift
    a_up   : (H*W, (H/2)*(W/2)) f32    kron(A_h, A_w) bilinear upsample matrix
    w_head : (n_classes, 64) f32       folded (outc_w @ final_w).T
    b_head : (n_classes, 1)  f32       folded bias
    o_ref  : (1, n_classes, H*W) f32   lane-dense output (reshaped to NCHW outside)
    """
    H, W = x_ref.shape[1], x_ref.shape[2]

    def conv3x3_bn_relu(x_hwc, w_ref, st_ref):
        h, w, cin = x_hwc.shape
        xb = x_hwc.astype(jnp.bfloat16)
        # zero-pad H and W by 1 inside the kernel (no HBM round-trip for the pad)
        zc = jnp.zeros((h, 1, cin), jnp.bfloat16)
        xp = jnp.concatenate([zc, xb, zc], axis=1)                  # (h, w+2, cin)
        zr = jnp.zeros((1, w + 2, cin), jnp.bfloat16)
        xp = jnp.concatenate([zr, xp, zr], axis=0)                  # (h+2, w+2, cin)
        # im2col: one MXU matmul with K = 9*cin instead of nine K=cin matmuls
        taps = [xp[dy:dy + h, dx:dx + w, :] for dy in range(3) for dx in range(3)]
        patches = jnp.concatenate(taps, axis=-1).reshape(h * w, 9 * cin)
        acc = jnp.dot(patches, w_ref[...], preferred_element_type=jnp.float32)
        y = jnp.maximum(acc * st_ref[0:1, :] + st_ref[1:2, :], 0.0)  # BN (eval) + ReLU
        return y.reshape(h, w, -1)

    x = x_ref[0].astype(jnp.float32)                                # (H, W, Cin)

    # inc: DoubleConv(Cin -> 64)
    x1 = conv3x3_bn_relu(x, w_inc1, st_inc1)
    x1 = conv3x3_bn_relu(x1, w_inc2, st_inc2)                       # (H, W, 64)

    # down1: MaxPool2d(2) then DoubleConv(64 -> 128)
    c1 = x1.shape[-1]
    xm = jnp.max(x1.reshape(H // 2, 2, W, c1), axis=1)
    xm = jnp.max(xm.reshape(H // 2, W // 2, 2, c1), axis=2)         # (H/2, W/2, 64)
    x2 = conv3x3_bn_relu(xm, w_d1a, st_d1a)
    x2 = conv3x3_bn_relu(x2, w_d1b, st_d1b)                         # (H/2, W/2, 128)

    # up4: bilinear 2x upsample (align_corners=True) as one kron matmul, concat with
    # the skip entirely in VMEM, then DoubleConv(192 -> 64, mid_channels=96).
    c2 = x2.shape[-1]
    xu = jnp.dot(a_up[...], x2.reshape((H // 2) * (W // 2), c2),
                 preferred_element_type=jnp.float32)                # (H*W, 128)
    xu = xu.reshape(H, W, c2)
    xc = jnp.concatenate([x1, xu], axis=-1)                         # (H, W, 192) = cat([skip, up])
    xc = conv3x3_bn_relu(xc, w_u1, st_u1)
    xc = conv3x3_bn_relu(xc, w_u2, st_u2)                           # (H, W, 64)

    # head: OutConv(64 -> n_classes) + trailing 1x1 conv folded into one matmul,
    # computed transposed (A @ B^T) so the store is lane-dense (last dim = H*W).
    co = xc.shape[-1]
    yt = lax.dot_general(w_head[...], xc.reshape(H * W, co),
                         dimension_numbers=(((1,), (1,)), ((), ())),
                         preferred_element_type=jnp.float32)        # (n_classes, H*W)
    o_ref[...] = (yt + b_head[...])[None].astype(o_ref.dtype)


# ------------------------------- wrapper ------------------------------------ #

def _whole_spec(arr):
    nd = arr.ndim
    return pl.BlockSpec(arr.shape, lambda n, _nd=nd: (0,) * _nd)


def unet_forward(x_nchw, p):
    N, Cin, H, W = x_nchw.shape
    n_classes = p["w_head"].shape[0]
    x = jnp.transpose(x_nchw, (0, 2, 3, 1))        # NCHW -> NHWC (tiny; only pre-kernel XLA op)

    weights = (p["w_inc1"], p["st_inc1"], p["w_inc2"], p["st_inc2"],
               p["w_d1a"], p["st_d1a"], p["w_d1b"], p["st_d1b"],
               p["a_up"],
               p["w_u1"], p["st_u1"], p["w_u2"], p["st_u2"],
               p["w_head"], p["b_head"])

    out_flat = pl.pallas_call(
        unet_fused_kernel,
        out_shape=jax.ShapeDtypeStruct((N, n_classes, H * W), jnp.float32),
        grid=(N,),
        in_specs=[pl.BlockSpec((1, H, W, Cin), lambda n: (n, 0, 0, 0))]
                 + [_whole_spec(wt) for wt in weights],
        out_specs=pl.BlockSpec((1, n_classes, H * W), lambda n: (n, 0, 0)),
        compiler_params=pltpu.CompilerParams(
            dimension_semantics=("parallel",),     # v7x: the two TCs split the batch
            vmem_limit_bytes=64 * 1024 * 1024),
    )(x, *weights)

    return out_flat.reshape(N, n_classes, H, W)    # lane-dense (C, H*W) -> NCHW, reshape only


# ---------------------------- parameter setup ------------------------------- #

def bilinear_matrix_np(n_out, n_in):
    """PyTorch bilinear upsample, align_corners=True, as an (n_out, n_in) matrix."""
    A = np.zeros((n_out, n_in), np.float64)
    if n_out == 1 or n_in == 1:
        A[:, 0] = 1.0
        return A
    scale = (n_in - 1) / (n_out - 1)
    for i in range(n_out):
        src = i * scale
        i0 = min(int(np.floor(src)), n_in - 1)
        i1 = min(i0 + 1, n_in - 1)
        w = src - i0
        A[i, i0] += 1.0 - w
        A[i, i1] += w
    return A


def init_conv_bn(key, cin, cout):
    """Conv3x3 weights (im2col layout, bf16) + folded eval-mode BatchNorm."""
    # TODO(synk): BatchNorm is folded in eval mode; training-mode batch statistics not implemented.
    k1, k2, k3, k4 = jax.random.split(key, 4)
    w = jax.random.normal(k1, (9, cin, cout), jnp.float32) * (1.0 / np.sqrt(9 * cin))
    b = 0.01 * jax.random.normal(k2, (cout,), jnp.float32)
    gamma = 1.0 + 0.1 * jax.random.normal(k3, (cout,), jnp.float32)
    beta = 0.1 * jax.random.normal(k4, (cout,), jnp.float32)
    eps = 1e-5
    s = gamma / jnp.sqrt(1.0 + eps)                # running_var = 1, running_mean = 0
    t = beta + b * s
    w_im2col = w.reshape(9 * cin, cout).astype(jnp.bfloat16)   # K index = (3*dy+dx)*cin + c
    st = jnp.stack([s, t], axis=0)                 # (2, cout) f32
    return w_im2col, st


def init_unet_params(key, n_channels, n_classes, H, W):
    keys = jax.random.split(key, 10)
    p = {}
    p["w_inc1"], p["st_inc1"] = init_conv_bn(keys[0], n_channels, 64)
    p["w_inc2"], p["st_inc2"] = init_conv_bn(keys[1], 64, 64)
    p["w_d1a"], p["st_d1a"] = init_conv_bn(keys[2], 64, 128)
    p["w_d1b"], p["st_d1b"] = init_conv_bn(keys[3], 128, 128)
    # Up(192, 64, bilinear=True) -> DoubleConv(192, 64, mid_channels=96)
    p["w_u1"], p["st_u1"] = init_conv_bn(keys[4], 192, 96)
    p["w_u2"], p["st_u2"] = init_conv_bn(keys[5], 96, 64)

    # OutConv(64 -> n_classes) followed by the trailing 1x1 conv (kernel_size=1,
    # padding=0 since in_d == out_d); both linear, folded into one matmul (exact).
    outc_w = jax.random.normal(keys[6], (64, n_classes), jnp.float32) / np.sqrt(64.0)
    outc_b = 0.01 * jax.random.normal(keys[7], (n_classes,), jnp.float32)
    final_w = jax.random.normal(keys[8], (n_classes, n_classes), jnp.float32) / np.sqrt(float(n_classes))
    final_b = 0.01 * jax.random.normal(keys[9], (n_classes,), jnp.float32)
    w_fold = outc_w @ final_w                      # (64, n_classes)
    b_fold = outc_b @ final_w + final_b            # (n_classes,)
    p["w_head"] = jnp.asarray(w_fold.T)            # (n_classes, 64) for the trans_b dot
    p["b_head"] = jnp.asarray(b_fold.reshape(n_classes, 1))

    # bilinear 2x upsample (align_corners=True) as one (H*W, (H/2)*(W/2)) kron matrix
    a_h = bilinear_matrix_np(H, H // 2)
    a_w = bilinear_matrix_np(W, W // 2)
    p["a_up"] = jnp.asarray(np.kron(a_h, a_w), jnp.float32)
    return p


# --------------------------------- main -------------------------------------- #

if __name__ == "__main__":
    key = jax.random.PRNGKey(0)
    N, n_channels, H, W = 2, 4, 16, 16
    n_classes = 10
    in_d, out_d = (H, W), (H, W)   # => trailing conv kernel_size 1, padding 0

    k_in, k_par = jax.random.split(key)
    x = jax.random.normal(k_in, (N, n_channels, H, W), jnp.float32)
    params = init_unet_params(k_par, n_channels, n_classes, H, W)

    fwd = jax.jit(unet_forward)
    out = jax.block_until_ready(fwd(x, params))

    assert out.shape == (N, n_classes, H, W), out.shape
    assert bool(jnp.isfinite(out).all())
    print("KERNEL_OK")
</pallas_src>

<mosaic_0001>
module attributes {stable_mosaic.version = 11 : i64} {
  func.func @unet_fused_kernel(%arg0: i32, %arg1: memref<1x16x16x4xf32, #tpu.memory_space<vmem>>, %arg2: memref<36x64xbf16, #tpu.memory_space<vmem>>, %arg3: memref<2x64xf32, #tpu.memory_space<vmem>>, %arg4: memref<576x64xbf16, #tpu.memory_space<vmem>>, %arg5: memref<2x64xf32, #tpu.memory_space<vmem>>, %arg6: memref<576x128xbf16, #tpu.memory_space<vmem>>, %arg7: memref<2x128xf32, #tpu.memory_space<vmem>>, %arg8: memref<1152x128xbf16, #tpu.memory_space<vmem>>, %arg9: memref<2x128xf32, #tpu.memory_space<vmem>>, %arg10: memref<256x64xf32, #tpu.memory_space<vmem>>, %arg11: memref<1728x96xbf16, #tpu.memory_space<vmem>>, %arg12: memref<2x96xf32, #tpu.memory_space<vmem>>, %arg13: memref<864x64xbf16, #tpu.memory_space<vmem>>, %arg14: memref<2x64xf32, #tpu.memory_space<vmem>>, %arg15: memref<10x64xf32, #tpu.memory_space<vmem>>, %arg16: memref<10x1xf32, #tpu.memory_space<vmem>>, %arg17: memref<1x10x256xf32, #tpu.memory_space<vmem>>) attributes {dimension_semantics = [#tpu.dimension_semantics<parallel>], iteration_bounds = array<i64: 2>, scalar_prefetch = 0 : i64, scratch_operands = 0 : i64, tpu.core_type = #tpu.core_type<tc>, window_params = [{transform_indices = @transform_0, window_bounds = array<i64: 1, 16, 16, 4>}, {pipeline_mode = #tpu.pipeline_mode<synchronous>, transform_indices = @transform_1, window_bounds = array<i64: 36, 64>}, {pipeline_mode = #tpu.pipeline_mode<synchronous>, transform_indices = @transform_2, window_bounds = array<i64: 2, 64>}, {pipeline_mode = #tpu.pipeline_mode<synchronous>, transform_indices = @transform_3, window_bounds = array<i64: 576, 64>}, {pipeline_mode = #tpu.pipeline_mode<synchronous>, transform_indices = @transform_4, window_bounds = array<i64: 2, 64>}, {pipeline_mode = #tpu.pipeline_mode<synchronous>, transform_indices = @transform_5, window_bounds = array<i64: 576, 128>}, {pipeline_mode = #tpu.pipeline_mode<synchronous>, transform_indices = @transform_6, window_bounds = array<i64: 2, 128>}, {pipeline_mode = #tpu.pipeline_mode<synchronous>, transform_indices = @transform_7, window_bounds = array<i64: 1152, 128>}, {pipeline_mode = #tpu.pipeline_mode<synchronous>, transform_indices = @transform_8, window_bounds = array<i64: 2, 128>}, {pipeline_mode = #tpu.pipeline_mode<synchronous>, transform_indices = @transform_9, window_bounds = array<i64: 256, 64>}, {pipeline_mode = #tpu.pipeline_mode<synchronous>, transform_indices = @transform_10, window_bounds = array<i64: 1728, 96>}, {pipeline_mode = #tpu.pipeline_mode<synchronous>, transform_indices = @transform_11, window_bounds = array<i64: 2, 96>}, {pipeline_mode = #tpu.pipeline_mode<synchronous>, transform_indices = @transform_12, window_bounds = array<i64: 864, 64>}, {pipeline_mode = #tpu.pipeline_mode<synchronous>, transform_indices = @transform_13, window_bounds = array<i64: 2, 64>}, {pipeline_mode = #tpu.pipeline_mode<synchronous>, transform_indices = @transform_14, window_bounds = array<i64: 10, 64>}, {pipeline_mode = #tpu.pipeline_mode<synchronous>, transform_indices = @transform_15, window_bounds = array<i64: 10, 1>}, {transform_indices = @transform_16, window_bounds = array<i64: 1, 10, 256>}]} {
    %c0 = arith.constant 0 : index
    %c0_0 = arith.constant 0 : index
    %c0_1 = arith.constant 0 : index
    %c0_2 = arith.constant 0 : index
    %0 = vector.load %arg1[%c0, %c0_0, %c0_1, %c0_2] : memref<1x16x16x4xf32, #tpu.memory_space<vmem>>, vector<1x16x16x4xf32>
    %1 = vector.shape_cast %0 : vector<1x16x16x4xf32> to vector<16x16x4xf32>
    %2 = arith.truncf %1 : vector<16x16x4xf32> to vector<16x16x4xbf16>
    %cst = arith.constant 0.000000e+00 : bf16
    %3 = vector.broadcast %cst : bf16 to vector<16x1x4xbf16>
    %4 = tpu.concatenate %3, %2, %3 in 1 : vector<16x1x4xbf16>, vector<16x16x4xbf16>, vector<16x1x4xbf16> -> vector<16x18x4xbf16>
    %cst_3 = arith.constant 0.000000e+00 : bf16
    %5 = vector.broadcast %cst_3 : bf16 to vector<1x18x4xbf16>
    %6 = tpu.concatenate %5, %4, %5 in 0 : vector<1x18x4xbf16>, vector<16x18x4xbf16>, vector<1x18x4xbf16> -> vector<18x18x4xbf16>
    %7 = vector.extract_strided_slice %6 {offsets = [0, 0, 0], sizes = [16, 16, 4], strides = [1, 1, 1]} : vector<18x18x4xbf16> to vector<16x16x4xbf16>
    %8 = vector.extract_strided_slice %6 {offsets = [0, 1, 0], sizes = [16, 16, 4], strides = [1, 1, 1]} : vector<18x18x4xbf16> to vector<16x16x4xbf16>
    %9 = vector.extract_strided_slice %6 {offsets = [0, 2, 0], sizes = [16, 16, 4], strides = [1, 1, 1]} : vector<18x18x4xbf16> to vector<16x16x4xbf16>
    %10 = vector.extract_strided_slice %6 {offsets = [1, 0, 0], sizes = [16, 16, 4], strides = [1, 1, 1]} : vector<18x18x4xbf16> to vector<16x16x4xbf16>
    %11 = vector.extract_strided_slice %6 {offsets = [1, 1, 0], sizes = [16, 16, 4], strides = [1, 1, 1]} : vector<18x18x4xbf16> to vector<16x16x4xbf16>
    %12 = vector.extract_strided_slice %6 {offsets = [1, 2, 0], sizes = [16, 16, 4], strides = [1, 1, 1]} : vector<18x18x4xbf16> to vector<16x16x4xbf16>
    %13 = vector.extract_strided_slice %6 {offsets = [2, 0, 0], sizes = [16, 16, 4], strides = [1, 1, 1]} : vector<18x18x4xbf16> to vector<16x16x4xbf16>
    %14 = vector.extract_strided_slice %6 {offsets = [2, 1, 0], sizes = [16, 16, 4], strides = [1, 1, 1]} : vector<18x18x4xbf16> to vector<16x16x4xbf16>
    %15 = vector.extract_strided_slice %6 {offsets = [2, 2, 0], sizes = [16, 16, 4], strides = [1, 1, 1]} : vector<18x18x4xbf16> to vector<16x16x4xbf16>
    %16 = tpu.concatenate %7, %8, %9, %10, %11, %12, %13, %14, %15 in 2 : vector<16x16x4xbf16>, vector<16x16x4xbf16>, vector<16x16x4xbf16>, vector<16x16x4xbf16>, vector<16x16x4xbf16>, vector<16x16x4xbf16>, vector<16x16x4xbf16>, vector<16x16x4xbf16>, vector<16x16x4xbf16> -> vector<16x16x36xbf16>
    %17 = vector.shape_cast %16 : vector<16x16x36xbf16> to vector<256x36xbf16>
    %c0_4 = arith.constant 0 : index
    %c0_5 = arith.constant 0 : index
    %18 = vector.load %arg2[%c0_4, %c0_5] : memref<36x64xbf16, #tpu.memory_space<vmem>>, vector<36x64xbf16>
    %cst_6 = arith.constant dense<0.000000e+00> : vector<256x64xf32>
    %19 = tpu.matmul %17, %18, %cst_6 {dimension_numbers = #tpu.dot_dimension_numbers<[1], [0], [0], [1], [0, 0, 1, 1], [], []>} : vector<256x36xbf16>, vector<36x64xbf16>, vector<256x64xf32> -> vector<256x64xf32>
    %c0_7 = arith.constant 0 : index
    %c0_8 = arith.constant 0 : index
    %20 = vector.load %arg3[%c0_7, %c0_8] : memref<2x64xf32, #tpu.memory_space<vmem>>, vector<1x64xf32>
    %21 = vector.broadcast %20 : vector<1x64xf32> to vector<256x64xf32>
    %22 = arith.mulf %19, %21 : vector<256x64xf32>
    %c1 = arith.constant 1 : index
    %c0_9 = arith.constant 0 : index
    %23 = vector.load %arg3[%c1, %c0_9] : memref<2x64xf32, #tpu.memory_space<vmem>>, vector<1x64xf32>
    %24 = vector.broadcast %23 : vector<1x64xf32> to vector<256x64xf32>
    %25 = arith.addf %22, %24 : vector<256x64xf32>
    %cst_10 = arith.constant 0.000000e+00 : f32
    %26 = vector.broadcast %cst_10 : f32 to vector<256x64xf32>
    %27 = arith.maximumf %25, %26 : vector<256x64xf32>
    %28 = vector.shape_cast %27 : vector<256x64xf32> to vector<16x16x64xf32>
    %29 = arith.truncf %28 : vector<16x16x64xf32> to vector<16x16x64xbf16>
    %cst_11 = arith.constant 0.000000e+00 : bf16
    %30 = vector.broadcast %cst_11 : bf16 to vector<16x1x64xbf16>
    %31 = tpu.concatenate %30, %29, %30 in 1 : vector<16x1x64xbf16>, vector<16x16x64xbf16>, vector<16x1x64xbf16> -> vector<16x18x64xbf16>
    %cst_12 = arith.constant 0.000000e+00 : bf16
    %32 = vector.broadcast %cst_12 : bf16 to vector<1x18x64xbf16>
    %33 = tpu.concatenate %32, %31, %32 in 0 : vector<1x18x64xbf16>, vector<16x18x64xbf16>, vector<1x18x64xbf16> -> vector<18x18x64xbf16>
    %34 = vector.extract_strided_slice %33 {offsets = [0, 0, 0], sizes = [16, 16, 64], strides = [1, 1, 1]} : vector<18x18x64xbf16> to vector<16x16x64xbf16>
    %35 = vector.extract_strided_slice %33 {offsets = [0, 1, 0], sizes = [16, 16, 64], strides = [1, 1, 1]} : vector<18x18x64xbf16> to vector<16x16x64xbf16>
    %36 = vector.extract_strided_slice %33 {offsets = [0, 2, 0], sizes = [16, 16, 64], strides = [1, 1, 1]} : vector<18x18x64xbf16> to vector<16x16x64xbf16>
    %37 = vector.extract_strided_slice %33 {offsets = [1, 0, 0], sizes = [16, 16, 64], strides = [1, 1, 1]} : vector<18x18x64xbf16> to vector<16x16x64xbf16>
    %38 = vector.extract_strided_slice %33 {offsets = [1, 1, 0], sizes = [16, 16, 64], strides = [1, 1, 1]} : vector<18x18x64xbf16> to vector<16x16x64xbf16>
    %39 = vector.extract_strided_slice %33 {offsets = [1, 2, 0], sizes = [16, 16, 64], strides = [1, 1, 1]} : vector<18x18x64xbf16> to vector<16x16x64xbf16>
    %40 = vector.extract_strided_slice %33 {offsets = [2, 0, 0], sizes = [16, 16, 64], strides = [1, 1, 1]} : vector<18x18x64xbf16> to vector<16x16x64xbf16>
    %41 = vector.extract_strided_slice %33 {offsets = [2, 1, 0], sizes = [16, 16, 64], strides = [1, 1, 1]} : vector<18x18x64xbf16> to vector<16x16x64xbf16>
    %42 = vector.extract_strided_slice %33 {offsets = [2, 2, 0], sizes = [16, 16, 64], strides = [1, 1, 1]} : vector<18x18x64xbf16> to vector<16x16x64xbf16>
    %43 = tpu.concatenate %34, %35, %36, %37, %38, %39, %40, %41, %42 in 2 : vector<16x16x64xbf16>, vector<16x16x64xbf16>, vector<16x16x64xbf16>, vector<16x16x64xbf16>, vector<16x16x64xbf16>, vector<16x16x64xbf16>, vector<16x16x64xbf16>, vector<16x16x64xbf16>, vector<16x16x64xbf16> -> vector<16x16x576xbf16>
    %44 = vector.shape_cast %43 : vector<16x16x576xbf16> to vector<256x576xbf16>
    %c0_13 = arith.constant 0 : index
    %c0_14 = arith.constant 0 : index
    %45 = vector.load %arg4[%c0_13, %c0_14] : memref<576x64xbf16, #tpu.memory_space<vmem>>, vector<576x64xbf16>
    %cst_15 = arith.constant dense<0.000000e+00> : vector<256x64xf32>
    %46 = tpu.matmul %44, %45, %cst_15 {dimension_numbers = #tpu.dot_dimension_numbers<[1], [0], [0], [1], [0, 0, 1, 1], [], []>} : vector<256x576xbf16>, vector<576x64xbf16>, vector<256x64xf32> -> vector<256x64xf32>
    %c0_16 = arith.constant 0 : index
    %c0_17 = arith.constant 0 : index
    %47 = vector.load %arg5[%c0_16, %c0_17] : memref<2x64xf32, #tpu.memory_space<vmem>>, vector<1x64xf32>
    %48 = vector.broadcast %47 : vector<1x64xf32> to vector<256x64xf32>
    %49 = arith.mulf %46, %48 : vector<256x64xf32>
    %c1_18 = arith.constant 1 : index
    %c0_19 = arith.constant 0 : index
    %50 = vector.load %arg5[%c1_18, %c0_19] : memref<2x64xf32, #tpu.memory_space<vmem>>, vector<1x64xf32>
    %51 = vector.broadcast %50 : vector<1x64xf32> to vector<256x64xf32>
    %52 = arith.addf %49, %51 : vector<256x64xf32>
    %cst_20 = arith.constant 0.000000e+00 : f32
    %53 = vector.broadcast %cst_20 : f32 to vector<256x64xf32>
    %54 = arith.maximumf %52, %53 : vector<256x64xf32>
    %55 = vector.shape_cast %54 : vector<256x64xf32> to vector<16x16x64xf32>
    %56 = vector.shape_cast %55 : vector<16x16x64xf32> to vector<8x2x16x64xf32>
    %cst_21 = arith.constant dense<0xFF800000> : vector<8x16x64xf32>
    %57 = vector.multi_reduction <maximumf>, %56, %cst_21 [1] : vector<8x2x16x64xf32> to vector<8x16x64xf32>
    %58 = vector.shape_cast %57 : vector<8x16x64xf32> to vector<8x8x2x64xf32>
    %cst_22 = arith.constant dense<0xFF800000> : vector<8x8x64xf32>
    %59 = vector.multi_reduction <maximumf>, %58, %cst_22 [2] : vector<8x8x2x64xf32> to vector<8x8x64xf32>
    %60 = arith.truncf %59 : vector<8x8x64xf32> to vector<8x8x64xbf16>
    %cst_23 = arith.constant 0.000000e+00 : bf16
    %61 = vector.broadcast %cst_23 : bf16 to vector<8x1x64xbf16>
    %62 = tpu.concatenate %61, %60, %61 in 1 : vector<8x1x64xbf16>, vector<8x8x64xbf16>, vector<8x1x64xbf16> -> vector<8x10x64xbf16>
    %cst_24 = arith.constant 0.000000e+00 : bf16
    %63 = vector.broadcast %cst_24 : bf16 to vector<1x10x64xbf16>
    %64 = tpu.concatenate %63, %62, %63 in 0 : vector<1x10x64xbf16>, vector<8x10x64xbf16>, vector<1x10x64xbf16> -> vector<10x10x64xbf16>
    %65 = vector.extract_strided_slice %64 {offsets = [0, 0, 0], sizes = [8, 8, 64], strides = [1, 1, 1]} : vector<10x10x64xbf16> to vector<8x8x64xbf16>
    %66 = vector.extract_strided_slice %64 {offsets = [0, 1, 0], sizes = [8, 8, 64], strides = [1, 1, 1]} : vector<10x10x64xbf16> to vector<8x8x64xbf16>
    %67 = vector.extract_strided_slice %64 {offsets = [0, 2, 0], sizes = [8, 8, 64], strides = [1, 1, 1]} : vector<10x10x64xbf16> to vector<8x8x64xbf16>
    %68 = vector.extract_strided_slice %64 {offsets = [1, 0, 0], sizes = [8, 8, 64], strides = [1, 1, 1]} : vector<10x10x64xbf16> to vector<8x8x64xbf16>
    %69 = vector.extract_strided_slice %64 {offsets = [1, 1, 0], sizes = [8, 8, 64], strides = [1, 1, 1]} : vector<10x10x64xbf16> to vector<8x8x64xbf16>
    %70 = vector.extract_strided_slice %64 {offsets = [1, 2, 0], sizes = [8, 8, 64], strides = [1, 1, 1]} : vector<10x10x64xbf16> to vector<8x8x64xbf16>
    %71 = vector.extract_strided_slice %64 {offsets = [2, 0, 0], sizes = [8, 8, 64], strides = [1, 1, 1]} : vector<10x10x64xbf16> to vector<8x8x64xbf16>
    %72 = vector.extract_strided_slice %64 {offsets = [2, 1, 0], sizes = [8, 8, 64], strides = [1, 1, 1]} : vector<10x10x64xbf16> to vector<8x8x64xbf16>
    %73 = vector.extract_strided_slice %64 {offsets = [2, 2, 0], sizes = [8, 8, 64], strides = [1, 1, 1]} : vector<10x10x64xbf16> to vector<8x8x64xbf16>
    %74 = tpu.concatenate %65, %66, %67, %68, %69, %70, %71, %72, %73 in 2 : vector<8x8x64xbf16>, vector<8x8x64xbf16>, vector<8x8x64xbf16>, vector<8x8x64xbf16>, vector<8x8x64xbf16>, vector<8x8x64xbf16>, vector<8x8x64xbf16>, vector<8x8x64xbf16>, vector<8x8x64xbf16> -> vector<8x8x576xbf16>
    %75 = vector.shape_cast %74 : vector<8x8x576xbf16> to vector<64x576xbf16>
    %c0_25 = arith.constant 0 : index
    %c0_26 = arith.constant 0 : index
    %76 = vector.load %arg6[%c0_25, %c0_26] : memref<576x128xbf16, #tpu.memory_space<vmem>>, vector<576x128xbf16>
    %cst_27 = arith.constant dense<0.000000e+00> : vector<64x128xf32>
    %77 = tpu.matmul %75, %76, %cst_27 {dimension_numbers = #tpu.dot_dimension_numbers<[1], [0], [0], [1], [0, 0, 1, 1], [], []>} : vector<64x576xbf16>, vector<576x128xbf16>, vector<64x128xf32> -> vector<64x128xf32>
    %c0_28 = arith.constant 0 : index
    %c0_29 = arith.constant 0 : index
    %78 = vector.load %arg7[%c0_28, %c0_29] : memref<2x128xf32, #tpu.memory_space<vmem>>, vector<1x128xf32>
    %79 = vector.broadcast %78 : vector<1x128xf32> to vector<64x128xf32>
    %80 = arith.mulf %77, %79 : vector<64x128xf32>
    %c1_30 = arith.constant 1 : index
    %c0_31 = arith.constant 0 : index
    %81 = vector.load %arg7[%c1_30, %c0_31] : memref<2x128xf32, #tpu.memory_space<vmem>>, vector<1x128xf32>
    %82 = vector.broadcast %81 : vector<1x128xf32> to vector<64x128xf32>
    %83 = arith.addf %80, %82 : vector<64x128xf32>
    %cst_32 = arith.constant 0.000000e+00 : f32
    %84 = vector.broadcast %cst_32 : f32 to vector<64x128xf32>
    %85 = arith.maximumf %83, %84 : vector<64x128xf32>
    %86 = vector.shape_cast %85 : vector<64x128xf32> to vector<8x8x128xf32>
    %87 = arith.truncf %86 : vector<8x8x128xf32> to vector<8x8x128xbf16>
    %cst_33 = arith.constant 0.000000e+00 : bf16
    %88 = vector.broadcast %cst_33 : bf16 to vector<8x1x128xbf16>
    %89 = tpu.concatenate %88, %87, %88 in 1 : vector<8x1x128xbf16>, vector<8x8x128xbf16>, vector<8x1x128xbf16> -> vector<8x10x128xbf16>
    %cst_34 = arith.constant 0.000000e+00 : bf16
    %90 = vector.broadcast %cst_34 : bf16 to vector<1x10x128xbf16>
    %91 = tpu.concatenate %90, %89, %90 in 0 : vector<1x10x128xbf16>, vector<8x10x128xbf16>, vector<1x10x128xbf16> -> vector<10x10x128xbf16>
    %92 = vector.extract_strided_slice %91 {offsets = [0, 0, 0], sizes = [8, 8, 128], strides = [1, 1, 1]} : vector<10x10x128xbf16> to vector<8x8x128xbf16>
    %93 = vector.extract_strided_slice %91 {offsets = [0, 1, 0], sizes = [8, 8, 128], strides = [1, 1, 1]} : vector<10x10x128xbf16> to vector<8x8x128xbf16>
    %94 = vector.extract_strided_slice %91 {offsets = [0, 2, 0], sizes = [8, 8, 128], strides = [1, 1, 1]} : vector<10x10x128xbf16> to vector<8x8x128xbf16>
    %95 = vector.extract_strided_slice %91 {offsets = [1, 0, 0], sizes = [8, 8, 128], strides = [1, 1, 1]} : vector<10x10x128xbf16> to vector<8x8x128xbf16>
    %96 = vector.extract_strided_slice %91 {offsets = [1, 1, 0], sizes = [8, 8, 128], strides = [1, 1, 1]} : vector<10x10x128xbf16> to vector<8x8x128xbf16>
    %97 = vector.extract_strided_slice %91 {offsets = [1, 2, 0], sizes = [8, 8, 128], strides = [1, 1, 1]} : vector<10x10x128xbf16> to vector<8x8x128xbf16>
    %98 = vector.extract_strided_slice %91 {offsets = [2, 0, 0], sizes = [8, 8, 128], strides = [1, 1, 1]} : vector<10x10x128xbf16> to vector<8x8x128xbf16>
    %99 = vector.extract_strided_slice %91 {offsets = [2, 1, 0], sizes = [8, 8, 128], strides = [1, 1, 1]} : vector<10x10x128xbf16> to vector<8x8x128xbf16>
    %100 = vector.extract_strided_slice %91 {offsets = [2, 2, 0], sizes = [8, 8, 128], strides = [1, 1, 1]} : vector<10x10x128xbf16> to vector<8x8x128xbf16>
    %101 = tpu.concatenate %92, %93, %94, %95, %96, %97, %98, %99, %100 in 2 : vector<8x8x128xbf16>, vector<8x8x128xbf16>, vector<8x8x128xbf16>, vector<8x8x128xbf16>, vector<8x8x128xbf16>, vector<8x8x128xbf16>, vector<8x8x128xbf16>, vector<8x8x128xbf16>, vector<8x8x128xbf16> -> vector<8x8x1152xbf16>
    %102 = vector.shape_cast %101 : vector<8x8x1152xbf16> to vector<64x1152xbf16>
    %c0_35 = arith.constant 0 : index
    %c0_36 = arith.constant 0 : index
    %103 = vector.load %arg8[%c0_35, %c0_36] : memref<1152x128xbf16, #tpu.memory_space<vmem>>, vector<1152x128xbf16>
    %cst_37 = arith.constant dense<0.000000e+00> : vector<64x128xf32>
    %104 = tpu.matmul %102, %103, %cst_37 {dimension_numbers = #tpu.dot_dimension_numbers<[1], [0], [0], [1], [0, 0, 1, 1], [], []>} : vector<64x1152xbf16>, vector<1152x128xbf16>, vector<64x128xf32> -> vector<64x128xf32>
    %c0_38 = arith.constant 0 : index
    %c0_39 = arith.constant 0 : index
    %105 = vector.load %arg9[%c0_38, %c0_39] : memref<2x128xf32, #tpu.memory_space<vmem>>, vector<1x128xf32>
    %106 = vector.broadcast %105 : vector<1x128xf32> to vector<64x128xf32>
    %107 = arith.mulf %104, %106 : vector<64x128xf32>
    %c1_40 = arith.constant 1 : index
    %c0_41 = arith.constant 0 : index
    %108 = vector.load %arg9[%c1_40, %c0_41] : memref<2x128xf32, #tpu.memory_space<vmem>>, vector<1x128xf32>
    %109 = vector.broadcast %108 : vector<1x128xf32> to vector<64x128xf32>
    %110 = arith.addf %107, %109 : vector<64x128xf32>
    %cst_42 = arith.constant 0.000000e+00 : f32
    %111 = vector.broadcast %cst_42 : f32 to vector<64x128xf32>
    %112 = arith.maximumf %110, %111 : vector<64x128xf32>
    %113 = vector.shape_cast %112 : vector<64x128xf32> to vector<8x8x128xf32>
    %c0_43 = arith.constant 0 : index
    %c0_44 = arith.constant 0 : index
    %114 = vector.load %arg10[%c0_43, %c0_44] : memref<256x64xf32, #tpu.memory_space<vmem>>, vector<256x64xf32>
    %115 = vector.shape_cast %113 : vector<8x8x128xf32> to vector<64x128xf32>
    %cst_45 = arith.constant dense<0.000000e+00> : vector<256x128xf32>
    %116 = tpu.matmul %114, %115, %cst_45 {dimension_numbers = #tpu.dot_dimension_numbers<[1], [0], [0], [1], [0, 0, 1, 1], [], []>} : vector<256x64xf32>, vector<64x128xf32>, vector<256x128xf32> -> vector<256x128xf32>
    %117 = vector.shape_cast %116 : vector<256x128xf32> to vector<16x16x128xf32>
    %118 = tpu.concatenate %55, %117 in 2 : vector<16x16x64xf32>, vector<16x16x128xf32> -> vector<16x16x192xf32>
    %119 = arith.truncf %118 : vector<16x16x192xf32> to vector<16x16x192xbf16>
    %cst_46 = arith.constant 0.000000e+00 : bf16
    %120 = vector.broadcast %cst_46 : bf16 to vector<16x1x192xbf16>
    %121 = tpu.concatenate %120, %119, %120 in 1 : vector<16x1x192xbf16>, vector<16x16x192xbf16>, vector<16x1x192xbf16> -> vector<16x18x192xbf16>
    %cst_47 = arith.constant 0.000000e+00 : bf16
    %122 = vector.broadcast %cst_47 : bf16 to vector<1x18x192xbf16>
    %123 = tpu.concatenate %122, %121, %122 in 0 : vector<1x18x192xbf16>, vector<16x18x192xbf16>, vector<1x18x192xbf16> -> vector<18x18x192xbf16>
    %124 = vector.extract_strided_slice %123 {offsets = [0, 0, 0], sizes = [16, 16, 192], strides = [1, 1, 1]} : vector<18x18x192xbf16> to vector<16x16x192xbf16>
    %125 = vector.extract_strided_slice %123 {offsets = [0, 1, 0], sizes = [16, 16, 192], strides = [1, 1, 1]} : vector<18x18x192xbf16> to vector<16x16x192xbf16>
    %126 = vector.extract_strided_slice %123 {offsets = [0, 2, 0], sizes = [16, 16, 192], strides = [1, 1, 1]} : vector<18x18x192xbf16> to vector<16x16x192xbf16>
    %127 = vector.extract_strided_slice %123 {offsets = [1, 0, 0], sizes = [16, 16, 192], strides = [1, 1, 1]} : vector<18x18x192xbf16> to vector<16x16x192xbf16>
    %128 = vector.extract_strided_slice %123 {offsets = [1, 1, 0], sizes = [16, 16, 192], strides = [1, 1, 1]} : vector<18x18x192xbf16> to vector<16x16x192xbf16>
    %129 = vector.extract_strided_slice %123 {offsets = [1, 2, 0], sizes = [16, 16, 192], strides = [1, 1, 1]} : vector<18x18x192xbf16> to vector<16x16x192xbf16>
    %130 = vector.extract_strided_slice %123 {offsets = [2, 0, 0], sizes = [16, 16, 192], strides = [1, 1, 1]} : vector<18x18x192xbf16> to vector<16x16x192xbf16>
    %131 = vector.extract_strided_slice %123 {offsets = [2, 1, 0], sizes = [16, 16, 192], strides = [1, 1, 1]} : vector<18x18x192xbf16> to vector<16x16x192xbf16>
    %132 = vector.extract_strided_slice %123 {offsets = [2, 2, 0], sizes = [16, 16, 192], strides = [1, 1, 1]} : vector<18x18x192xbf16> to vector<16x16x192xbf16>
    %133 = tpu.concatenate %124, %125, %126, %127, %128, %129, %130, %131, %132 in 2 : vector<16x16x192xbf16>, vector<16x16x192xbf16>, vector<16x16x192xbf16>, vector<16x16x192xbf16>, vector<16x16x192xbf16>, vector<16x16x192xbf16>, vector<16x16x192xbf16>, vector<16x16x192xbf16>, vector<16x16x192xbf16> -> vector<16x16x1728xbf16>
    %134 = vector.shape_cast %133 : vector<16x16x1728xbf16> to vector<256x1728xbf16>
    %c0_48 = arith.constant 0 : index
    %c0_49 = arith.constant 0 : index
    %135 = vector.load %arg11[%c0_48, %c0_49] : memref<1728x96xbf16, #tpu.memory_space<vmem>>, vector<1728x96xbf16>
    %cst_50 = arith.constant dense<0.000000e+00> : vector<256x96xf32>
    %136 = tpu.matmul %134, %135, %cst_50 {dimension_numbers = #tpu.dot_dimension_numbers<[1], [0], [0], [1], [0, 0, 1, 1], [], []>} : vector<256x1728xbf16>, vector<1728x96xbf16>, vector<256x96xf32> -> vector<256x96xf32>
    %c0_51 = arith.constant 0 : index
    %c0_52 = arith.constant 0 : index
    %137 = vector.load %arg12[%c0_51, %c0_52] : memref<2x96xf32, #tpu.memory_space<vmem>>, vector<1x96xf32>
    %138 = vector.broadcast %137 : vector<1x96xf32> to vector<256x96xf32>
    %139 = arith.mulf %136, %138 : vector<256x96xf32>
    %c1_53 = arith.constant 1 : index
    %c0_54 = arith.constant 0 : index
    %140 = vector.load %arg12[%c1_53, %c0_54] : memref<2x96xf32, #tpu.memory_space<vmem>>, vector<1x96xf32>
    %141 = vector.broadcast %140 : vector<1x96xf32> to vector<256x96xf32>
    %142 = arith.addf %139, %141 : vector<256x96xf32>
    %cst_55 = arith.constant 0.000000e+00 : f32
    %143 = vector.broadcast %cst_55 : f32 to vector<256x96xf32>
    %144 = arith.maximumf %142, %143 : vector<256x96xf32>
    %145 = vector.shape_cast %144 : vector<256x96xf32> to vector<16x16x96xf32>
    %146 = arith.truncf %145 : vector<16x16x96xf32> to vector<16x16x96xbf16>
    %cst_56 = arith.constant 0.000000e+00 : bf16
    %147 = vector.broadcast %cst_56 : bf16 to vector<16x1x96xbf16>
    %148 = tpu.concatenate %147, %146, %147 in 1 : vector<16x1x96xbf16>, vector<16x16x96xbf16>, vector<16x1x96xbf16> -> vector<16x18x96xbf16>
    %cst_57 = arith.constant 0.000000e+00 : bf16
    %149 = vector.broadcast %cst_57 : bf16 to vector<1x18x96xbf16>
    %150 = tpu.concatenate %149, %148, %149 in 0 : vector<1x18x96xbf16>, vector<16x18x96xbf16>, vector<1x18x96xbf16> -> vector<18x18x96xbf16>
    %151 = vector.extract_strided_slice %150 {offsets = [0, 0, 0], sizes = [16, 16, 96], strides = [1, 1, 1]} : vector<18x18x96xbf16> to vector<16x16x96xbf16>
    %152 = vector.extract_strided_slice %150 {offsets = [0, 1, 0], sizes = [16, 16, 96], strides = [1, 1, 1]} : vector<18x18x96xbf16> to vector<16x16x96xbf16>
    %153 = vector.extract_strided_slice %150 {offsets = [0, 2, 0], sizes = [16, 16, 96], strides = [1, 1, 1]} : vector<18x18x96xbf16> to vector<16x16x96xbf16>
    %154 = vector.extract_strided_slice %150 {offsets = [1, 0, 0], sizes = [16, 16, 96], strides = [1, 1, 1]} : vector<18x18x96xbf16> to vector<16x16x96xbf16>
    %155 = vector.extract_strided_slice %150 {offsets = [1, 1, 0], sizes = [16, 16, 96], strides = [1, 1, 1]} : vector<18x18x96xbf16> to vector<16x16x96xbf16>
    %156 = vector.extract_strided_slice %150 {offsets = [1, 2, 0], sizes = [16, 16, 96], strides = [1, 1, 1]} : vector<18x18x96xbf16> to vector<16x16x96xbf16>
    %157 = vector.extract_strided_slice %150 {offsets = [2, 0, 0], sizes = [16, 16, 96], strides = [1, 1, 1]} : vector<18x18x96xbf16> to vector<16x16x96xbf16>
    %158 = vector.extract_strided_slice %150 {offsets = [2, 1, 0], sizes = [16, 16, 96], strides = [1, 1, 1]} : vector<18x18x96xbf16> to vector<16x16x96xbf16>
    %159 = vector.extract_strided_slice %150 {offsets = [2, 2, 0], sizes = [16, 16, 96], strides = [1, 1, 1]} : vector<18x18x96xbf16> to vector<16x16x96xbf16>
    %160 = tpu.concatenate %151, %152, %153, %154, %155, %156, %157, %158, %159 in 2 : vector<16x16x96xbf16>, vector<16x16x96xbf16>, vector<16x16x96xbf16>, vector<16x16x96xbf16>, vector<16x16x96xbf16>, vector<16x16x96xbf16>, vector<16x16x96xbf16>, vector<16x16x96xbf16>, vector<16x16x96xbf16> -> vector<16x16x864xbf16>
    %161 = vector.shape_cast %160 : vector<16x16x864xbf16> to vector<256x864xbf16>
    %c0_58 = arith.constant 0 : index
    %c0_59 = arith.constant 0 : index
    %162 = vector.load %arg13[%c0_58, %c0_59] : memref<864x64xbf16, #tpu.memory_space<vmem>>, vector<864x64xbf16>
    %cst_60 = arith.constant dense<0.000000e+00> : vector<256x64xf32>
    %163 = tpu.matmul %161, %162, %cst_60 {dimension_numbers = #tpu.dot_dimension_numbers<[1], [0], [0], [1], [0, 0, 1, 1], [], []>} : vector<256x864xbf16>, vector<864x64xbf16>, vector<256x64xf32> -> vector<256x64xf32>
    %c0_61 = arith.constant 0 : index
    %c0_62 = arith.constant 0 : index
    %164 = vector.load %arg14[%c0_61, %c0_62] : memref<2x64xf32, #tpu.memory_space<vmem>>, vector<1x64xf32>
    %165 = vector.broadcast %164 : vector<1x64xf32> to vector<256x64xf32>
    %166 = arith.mulf %163, %165 : vector<256x64xf32>
    %c1_63 = arith.constant 1 : index
    %c0_64 = arith.constant 0 : index
    %167 = vector.load %arg14[%c1_63, %c0_64] : memref<2x64xf32, #tpu.memory_space<vmem>>, vector<1x64xf32>
    %168 = vector.broadcast %167 : vector<1x64xf32> to vector<256x64xf32>
    %169 = arith.addf %166, %168 : vector<256x64xf32>
    %cst_65 = arith.constant 0.000000e+00 : f32
    %170 = vector.broadcast %cst_65 : f32 to vector<256x64xf32>
    %171 = arith.maximumf %169, %170 : vector<256x64xf32>
    %172 = vector.shape_cast %171 : vector<256x64xf32> to vector<16x16x64xf32>
    %c0_66 = arith.constant 0 : index
    %c0_67 = arith.constant 0 : index
    %173 = vector.load %arg15[%c0_66, %c0_67] : memref<10x64xf32, #tpu.memory_space<vmem>>, vector<10x64xf32>
    %174 = vector.shape_cast %172 : vector<16x16x64xf32> to vector<256x64xf32>
    %cst_68 = arith.constant dense<0.000000e+00> : vector<10x256xf32>
    %175 = tpu.matmul %173, %174, %cst_68 {dimension_numbers = #tpu.dot_dimension_numbers<[1], [1], [0], [0], [0, 0, 1, 0], [], []>} : vector<10x64xf32>, vector<256x64xf32>, vector<10x256xf32> -> vector<10x256xf32>
    %c0_69 = arith.constant 0 : index
    %c0_70 = arith.constant 0 : index
    %176 = vector.load %arg16[%c0_69, %c0_70] : memref<10x1xf32, #tpu.memory_space<vmem>>, vector<10x1xf32>
    %177 = vector.broadcast %176 : vector<10x1xf32> to vector<10x256xf32>
    %178 = arith.addf %175, %177 : vector<10x256xf32>
    %179 = vector.shape_cast %178 : vector<10x256xf32> to vector<1x10x256xf32>
    %c0_71 = arith.constant 0 : index
    %c0_72 = arith.constant 0 : index
    %c0_73 = arith.constant 0 : index
    %180 = vector.load %arg17[%c0_71, %c0_72, %c0_73] : memref<1x10x256xf32, #tpu.memory_space<vmem>>, vector<1x10x256xf32>
    tpu.vector_store %arg17[%c0_71, %c0_72, %c0_73], %179 {strides = array<i32>} : memref<1x10x256xf32, #tpu.memory_space<vmem>>, vector<1x10x256xf32>,
    return
  }
  func.func @transform_0(%arg0: i32) -> (i32, i32, i32, i32) {
    %c0_i32 = arith.constant 0 : i32
    %c0_i32_0 = arith.constant 0 : i32
    %c0_i32_1 = arith.constant 0 : i32
    %c0_i32_2 = arith.constant 0 : i32
    return %arg0, %c0_i32, %c0_i32_0, %c0_i32_1 : i32, i32, i32, i32
  }
  func.func @transform_1(%arg0: i32) -> (i32, i32) {
    %c0_i32 = arith.constant 0 : i32
    %c0_i32_0 = arith.constant 0 : i32
    %c0_i32_1 = arith.constant 0 : i32
    return %c0_i32, %c0_i32_0 : i32, i32
  }
  func.func @transform_2(%arg0: i32) -> (i32, i32) {
    %c0_i32 = arith.constant 0 : i32
    %c0_i32_0 = arith.constant 0 : i32
    %c0_i32_1 = arith.constant 0 : i32
    return %c0_i32, %c0_i32_0 : i32, i32
  }
  func.func @transform_3(%arg0: i32) -> (i32, i32) {
    %c0_i32 = arith.constant 0 : i32
    %c0_i32_0 = arith.constant 0 : i32
    %c0_i32_1 = arith.constant 0 : i32
    return %c0_i32, %c0_i32_0 : i32, i32
  }
  func.func @transform_4(%arg0: i32) -> (i32, i32) {
    %c0_i32 = arith.constant 0 : i32
    %c0_i32_0 = arith.constant 0 : i32
    %c0_i32_1 = arith.constant 0 : i32
    return %c0_i32, %c0_i32_0 : i32, i32
  }
  func.func @transform_5(%arg0: i32) -> (i32, i32) {
    %c0_i32 = arith.constant 0 : i32
    %c0_i32_0 = arith.constant 0 : i32
    %c0_i32_1 = arith.constant 0 : i32
    return %c0_i32, %c0_i32_0 : i32, i32
  }
  func.func @transform_6(%arg0: i32) -> (i32, i32) {
    %c0_i32 = arith.constant 0 : i32
    %c0_i32_0 = arith.constant 0 : i32
    %c0_i32_1 = arith.constant 0 : i32
    return %c0_i32, %c0_i32_0 : i32, i32
  }
  func.func @transform_7(%arg0: i32) -> (i32, i32) {
    %c0_i32 = arith.constant 0 : i32
    %c0_i32_0 = arith.constant 0 : i32
    %c0_i32_1 = arith.constant 0 : i32
    return %c0_i32, %c0_i32_0 : i32, i32
  }
  func.func @transform_8(%arg0: i32) -> (i32, i32) {
    %c0_i32 = arith.constant 0 : i32
    %c0_i32_0 = arith.constant 0 : i32
    %c0_i32_1 = arith.constant 0 : i32
    return %c0_i32, %c0_i32_0 : i32, i32
  }
  func.func @transform_9(%arg0: i32) -> (i32, i32) {
    %c0_i32 = arith.constant 0 : i32
    %c0_i32_0 = arith.constant 0 : i32
    %c0_i32_1 = arith.constant 0 : i32
    return %c0_i32, %c0_i32_0 : i32, i32
  }
  func.func @transform_10(%arg0: i32) -> (i32, i32) {
    %c0_i32 = arith.constant 0 : i32
    %c0_i32_0 = arith.constant 0 : i32
    %c0_i32_1 = arith.constant 0 : i32
    return %c0_i32, %c0_i32_0 : i32, i32
  }
  func.func @transform_11(%arg0: i32) -> (i32, i32) {
    %c0_i32 = arith.constant 0 : i32
    %c0_i32_0 = arith.constant 0 : i32
    %c0_i32_1 = arith.constant 0 : i32
    return %c0_i32, %c0_i32_0 : i32, i32
  }
  func.func @transform_12(%arg0: i32) -> (i32, i32) {
    %c0_i32 = arith.constant 0 : i32
    %c0_i32_0 = arith.constant 0 : i32
    %c0_i32_1 = arith.constant 0 : i32
    return %c0_i32, %c0_i32_0 : i32, i32
  }
  func.func @transform_13(%arg0: i32) -> (i32, i32) {
    %c0_i32 = arith.constant 0 : i32
    %c0_i32_0 = arith.constant 0 : i32
    %c0_i32_1 = arith.constant 0 : i32
    return %c0_i32, %c0_i32_0 : i32, i32
  }
  func.func @transform_14(%arg0: i32) -> (i32, i32) {
    %c0_i32 = arith.constant 0 : i32
    %c0_i32_0 = arith.constant 0 : i32
    %c0_i32_1 = arith.constant 0 : i32
    return %c0_i32, %c0_i32_0 : i32, i32
  }
  func.func @transform_15(%arg0: i32) -> (i32, i32) {
    %c0_i32 = arith.constant 0 : i32
    %c0_i32_0 = arith.constant 0 : i32
    %c0_i32_1 = arith.constant 0 : i32
    return %c0_i32, %c0_i32_0 : i32, i32
  }
  func.func @transform_16(%arg0: i32) -> (i32, i32, i32) {
    %c0_i32 = arith.constant 0 : i32
    %c0_i32_0 = arith.constant 0 : i32
    %c0_i32_1 = arith.constant 0 : i32
    return %arg0, %c0_i32, %c0_i32_0 : i32, i32, i32
  }
}

</mosaic_0001>

<llo_original>
// kernel: unet_forward.1
$region0: #{unet_forward.1}
  #allocation0 [shape = 'u32[]', space=smem, size = 0x4, offset = 0x4, fixed_abs, tag = 'smem constant byte address 0x4 - core index']
  #allocation1 [shape = 'u32[144,128]{1,0:T(1,128)}', space=vmem, size = 0x12000, scoped, tag = 'internal scratch']
  %s0 = inlined_call_operand.hbm [shape: f32[2,16,16,4], index: 0, kind: input, shape index: {}]
  %s1 = inlined_call_operand.hbm [shape: bf16[36,64], index: 1, kind: input, shape index: {}]
  %s2 = inlined_call_operand.hbm [shape: f32[2,64], index: 2, kind: input, shape index: {}]
  %s3 = inlined_call_operand.hbm [shape: bf16[576,64], index: 3, kind: input, shape index: {}]
  %s4 = inlined_call_operand.hbm [shape: f32[2,64], index: 4, kind: input, shape index: {}]
  %s5 = inlined_call_operand.hbm [shape: bf16[576,128], index: 5, kind: input, shape index: {}]
  %s6 = inlined_call_operand.hbm [shape: f32[2,128], index: 6, kind: input, shape index: {}]
  %s7 = inlined_call_operand.hbm [shape: bf16[1152,128], index: 7, kind: input, shape index: {}]
  %s8 = inlined_call_operand.hbm [shape: f32[2,128], index: 8, kind: input, shape index: {}]
  %s9 = inlined_call_operand.hbm [shape: f32[256,64], index: 9, kind: input, shape index: {}]
  %s10 = inlined_call_operand.hbm [shape: bf16[1728,96], index: 10, kind: input, shape index: {}]
  %s11 = inlined_call_operand.hbm [shape: f32[2,96], index: 11, kind: input, shape index: {}]
  %s12 = inlined_call_operand.hbm [shape: bf16[864,64], index: 12, kind: input, shape index: {}]
  %s13 = inlined_call_operand.hbm [shape: f32[2,64], index: 13, kind: input, shape index: {}]
  %s14 = inlined_call_operand.hbm [shape: f32[10,64], index: 14, kind: input, shape index: {}]
  %s15 = inlined_call_operand.hbm [shape: f32[10,1], index: 15, kind: input, shape index: {}]
  %s16 = inlined_call_operand.hbm [shape: f32[2,10,256], index: 16, kind: output, shape index: {}]
  %s17 = sld [smem:[#allocation0]]
  $region161: #{unet_forward.1} parent=0
    _
  %s19 = ssub.s32 1, %s17
  %s20 = scalar_select 0, %s19, %s17
  $region1: #{unet_forward.1} parent=0
    #allocation2 [shape = 'u8[262144]{0}', space=vmem, size = 0x40000, scoped, tag = 'input window, operand 0']
    #allocation3 [shape = 's32[2]{0}', space=sflag, size = 0x8, scoped, tag = 'scoped memory for unet_forward.1']
    #allocation4 [shape = 's32[2]{0}', space=sflag, size = 0x8, scoped, tag = 'scoped memory for unet_forward.1']
    #allocation5 [shape = 'u8[10240]{0}', space=vmem, size = 0x2800, scoped, tag = 'input window, operand 1, single buffered']
    #allocation6 [shape = 's32[1]{0}', space=sflag, size = 0x4, scoped, tag = 'scoped memory for unet_forward.1']
    #allocation7 [shape = 'u8[1024]{0}', space=vmem, size = 0x400, scoped, tag = 'input window, operand 2, single buffered']
    #allocation8 [shape = 'u8[147456]{0}', space=vmem, size = 0x24000, scoped, tag = 'input window, operand 3, single buffered']
    #allocation9 [shape = 's32[1]{0}', space=sflag, size = 0x4, scoped, tag = 'scoped memory for unet_forward.1']
    #allocation10 [shape = 'u8[1024]{0}', space=vmem, size = 0x400, scoped, tag = 'input window, operand 4, single buffered']
    #allocation11 [shape = 'u8[147456]{0}', space=vmem, size = 0x24000, scoped, tag = 'input window, operand 5, single buffered']
    #allocation12 [shape = 's32[1]{0}', space=sflag, size = 0x4, scoped, tag = 'scoped memory for unet_forward.1']
    #allocation13 [shape = 'u8[1024]{0}', space=vmem, size = 0x400, scoped, tag = 'input window, operand 6, single buffered']
    #allocation14 [shape = 'u8[294912]{0}', space=vmem, size = 0x48000, scoped, tag = 'input window, operand 7, single buffered']
    #allocation15 [shape = 's32[1]{0}', space=sflag, size = 0x4, scoped, tag = 'scoped memory for unet_forward.1']
    #allocation16 [shape = 'u8[1024]{0}', space=vmem, size = 0x400, scoped, tag = 'input window, operand 8, single buffered']
    #allocation17 [shape = 'u8[131072]{0}', space=vmem, size = 0x20000, scoped, tag = 'input window, operand 9, single buffered']
    #allocation18 [shape = 's32[1]{0}', space=sflag, size = 0x4, scoped, tag = 'scoped memory for unet_forward.1']
    #allocation19 [shape = 'u8[442368]{0}', space=vmem, size = 0x6c000, scoped, tag = 'input window, operand 10, single buffered']
    #allocation20 [shape = 'u8[1024]{0}', space=vmem, size = 0x400, scoped, tag = 'input window, operand 11, single buffered']
    #allocation21 [shape = 's32[1]{0}', space=sflag, size = 0x4, scoped, tag = 'scoped memory for unet_forward.1']
    #allocation22 [shape = 'u8[221184]{0}', space=vmem, size = 0x36000, scoped, tag = 'input window, operand 12, single buffered']
    #allocation23 [shape = 'u8[1024]{0}', space=vmem, size = 0x400, scoped, tag = 'input window, operand 13, single buffered']
    #allocation24 [shape = 's32[1]{0}', space=sflag, size = 0x4, scoped, tag = 'scoped memory for unet_forward.1']
    #allocation25 [shape = 'u8[8192]{0}', space=vmem, size = 0x2000, scoped, tag = 'input window, operand 14, single buffered']
    #allocation26 [shape = 'u8[8192]{0}', space=vmem, size = 0x2000, scoped, tag = 'input window, operand 15, single buffered']
    #allocation27 [shape = 's32[1]{0}', space=sflag, size = 0x4, scoped, tag = 'scoped memory for unet_forward.1']
    #allocation28 [shape = 'u8[32768]{0}', space=vmem, size = 0x8000, scoped, tag = 'output window, operand 0']
    %21 = vsyncpa [#allocation3], 0
    %s22 = scalar_lea.sflag [#allocation3], 1
    %23 = vsyncpa %s22, 0
    %24 = vsyncpa [#allocation6], 0
    %25 = vsyncpa [#allocation9], 0
    %26 = vsyncpa [#allocation12], 0
    %27 = vsyncpa [#allocation15], 0
    %28 = vsyncpa [#allocation18], 0
    %29 = vsyncpa [#allocation21], 0
    %30 = vsyncpa [#allocation24], 0
    %31 = vsyncpa [#allocation27], 0
    %32 = vsyncpa [#allocation4], 0
    %s33 = scalar_lea.sflag [#allocation4], 1
    %34 = vsyncpa %s33, 0
    loop: start=0, step=1, limit=4
    $region2: #{unet_forward.1} parent=1 // loop_pre_header
      _
    $region3: #{unet_forward.1} parent=1 // loop_header
      %s36 = sphi 0, %s40
      %p37 = scmp.ge.s32.totalorder %s36, 4
      %s46 = sphi 0, %s48
      %s49 = sphi 0, %s46
      %s50 = sphi 0, %s49
      %s66 = sphi 0, %s50
      %s70 = sphi 0, %s70
      %s72 = sphi 0, %s70
      %s73 = sphi 0, %s72
      %s87 = sphi 0, %s73
      %s91 = sphi 0, %s91
      %s93 = sphi 0, %s91
      %s94 = sphi 0, %s93
      %s108 = sphi 0, %s94
      %s112 = sphi 0, %s112
      %s114 = sphi 0, %s112
      %s115 = sphi 0, %s114
      %s129 = sphi 0, %s115
      %s133 = sphi 0, %s133
      %s135 = sphi 0, %s133
      %s136 = sphi 0, %s135
      %s150 = sphi 0, %s136
      %s154 = sphi 0, %s154
      %s156 = sphi 0, %s154
      %s157 = sphi 0, %s156
      %s171 = sphi 0, %s157
      %s175 = sphi 0, %s175
      %s177 = sphi 0, %s175
      %s178 = sphi 0, %s177
      %s192 = sphi 0, %s178
      %s196 = sphi 0, %s196
      %s198 = sphi 0, %s196
      %s199 = sphi 0, %s198
      %s213 = sphi 0, %s199
      %s217 = sphi 0, %s217
      %s219 = sphi 0, %s217
      %s220 = sphi 0, %s219
      %s234 = sphi 0, %s220
      %s238 = sphi 0, %s238
      %s240 = sphi 0, %s238
      %s241 = sphi 0, %s240
      %s255 = sphi 0, %s241
      %s259 = sphi 0, %s259
      %s261 = sphi 0, %s259
      %s262 = sphi 0, %s261
      %s276 = sphi 0, %s262
      %s280 = sphi 0, %s280
      %s282 = sphi 0, %s280
      %s283 = sphi 0, %s282
      %s297 = sphi 0, %s283
      %s301 = sphi 0, %s301
      %s303 = sphi 0, %s301
      %s304 = sphi 0, %s303
      %s318 = sphi 0, %s304
      %s322 = sphi 0, %s322
      %s324 = sphi 0, %s322
      %s325 = sphi 0, %s324
      %s339 = sphi 0, %s325
      %s343 = sphi 0, %s343
      %s345 = sphi 0, %s343
      %s346 = sphi 0, %s345
      %s360 = sphi 0, %s346
      %s364 = sphi 0, %s364
      %s366 = sphi 0, %s364
      %s367 = sphi 0, %s366
      %s381 = sphi 0, %s367
      %s387 = sphi 0, %s389
      %s390 = sphi 0, %s387
      %s391 = sphi 0, %s390
      %s407 = sphi 0, %s391
    $region4: #{unet_forward.1} parent=1 // loop_header_branch
      %39 = sbr.rel (%p37) target = $region8
    $region5: #{unet_forward.1} parent=1 // loop_body
      %s41 = ssub.s32 %s36, 1
      %s42 = ssub.s32 %s36, 2
      %s43 = sadd.s32 %s36, 1
      %s44 = ssub.s32 %s36, %s43
      %p45 = scmp.eq.s32.totalorder %s44, 0
      %s47 = sadd.s32 %s46, 1
      %s48 = scalar_select %p45, %s46, %s47
      %p51 = pneg %p45
      %p52 = scmp.eq.s32.totalorder %s36, 1
      %p53 = por %p51, %p52
      %p54 = scmp.ne.s32.totalorder %s46, %s49
      %p55 = scmp.eq.s32.totalorder %s36, 0
      %p56 = por %p54, %p55
      %p57 = scmp.ne.s32.totalorder %s46, %s49
      %p58 = scmp.eq.s32.totalorder %s41, 1
      %p59 = por %p57, %p58
      %p60 = scmp.ne.s32.totalorder %s49, %s50
      %p61 = scmp.eq.s32.totalorder %s41, 0
      %p62 = por %p60, %p61
      %p63 = scmp.ne.s32.totalorder %s49, %s50
      %p64 = scmp.eq.s32.totalorder %s42, 1
      %p65 = por %p63, %p64
      %p67 = scmp.ne.s32.totalorder %s50, %s66
      %p68 = scmp.eq.s32.totalorder %s42, 0
      %p69 = por %p67, %p68
      %s71 = sadd.s32 %s70, 1
      %p74 = scmp.eq.s32.totalorder %s36, 1
      %p75 = scmp.ne.s32.totalorder %s70, %s72
      %p76 = scmp.eq.s32.totalorder %s36, 0
      %p77 = por %p75, %p76
      %p78 = scmp.ne.s32.totalorder %s70, %s72
      %p79 = scmp.eq.s32.totalorder %s41, 1
      %p80 = por %p78, %p79
      %p81 = scmp.ne.s32.totalorder %s72, %s73
      %p82 = scmp.eq.s32.totalorder %s41, 0
      %p83 = por %p81, %p82
      %p84 = scmp.ne.s32.totalorder %s72, %s73
      %p85 = scmp.eq.s32.totalorder %s42, 1
      %p86 = por %p84, %p85
      %p88 = scmp.ne.s32.totalorder %s73, %s87
      %p89 = scmp.eq.s32.totalorder %s42, 0
      %p90 = por %p88, %p89
      %s92 = sadd.s32 %s91, 1
      %p95 = scmp.eq.s32.totalorder %s36, 1
      %p96 = scmp.ne.s32.totalorder %s91, %s93
      %p97 = scmp.eq.s32.totalorder %s36, 0
      %p98 = por %p96, %p97
      %p99 = scmp.ne.s32.totalorder %s91, %s93
      %p100 = scmp.eq.s32.totalorder %s41, 1
      %p101 = por %p99, %p100
      %p102 = scmp.ne.s32.totalorder %s93, %s94
      %p103 = scmp.eq.s32.totalorder %s41, 0
      %p104 = por %p102, %p103
      %p105 = scmp.ne.s32.totalorder %s93, %s94
      %p106 = scmp.eq.s32.totalorder %s42, 1
      %p107 = por %p105, %p106
      %p109 = scmp.ne.s32.totalorder %s94, %s108
      %p110 = scmp.eq.s32.totalorder %s42, 0
      %p111 = por %p109, %p110
      %s113 = sadd.s32 %s112, 1
      %p116 = scmp.eq.s32.totalorder %s36, 1
      %p117 = scmp.ne.s32.totalorder %s112, %s114
      %p118 = scmp.eq.s32.totalorder %s36, 0
      %p119 = por %p117, %p118
      %p120 = scmp.ne.s32.totalorder %s112, %s114
      %p121 = scmp.eq.s32.totalorder %s41, 1
      %p122 = por %p120, %p121
      %p123 = scmp.ne.s32.totalorder %s114, %s115
      %p124 = scmp.eq.s32.totalorder %s41, 0
      %p125 = por %p123, %p124
      %p126 = scmp.ne.s32.totalorder %s114, %s115
      %p127 = scmp.eq.s32.totalorder %s42, 1
      %p128 = por %p126, %p127
      %p130 = scmp.ne.s32.totalorder %s115, %s129
      %p131 = scmp.eq.s32.totalorder %s42, 0
      %p132 = por %p130, %p131
      %s134 = sadd.s32 %s133, 1
      %p137 = scmp.eq.s32.totalorder %s36, 1
      %p138 = scmp.ne.s32.totalorder %s133, %s135
      %p139 = scmp.eq.s32.totalorder %s36, 0
      %p140 = por %p138, %p139
      %p141 = scmp.ne.s32.totalorder %s133, %s135
      %p142 = scmp.eq.s32.totalorder %s41, 1
      %p143 = por %p141, %p142
      %p144 = scmp.ne.s32.totalorder %s135, %s136
      %p145 = scmp.eq.s32.totalorder %s41, 0
      %p146 = por %p144, %p145
      %p147 = scmp.ne.s32.totalorder %s135, %s136
      %p148 = scmp.eq.s32.totalorder %s42, 1
      %p149 = por %p147, %p148
      %p151 = scmp.ne.s32.totalorder %s136, %s150
      %p152 = scmp.eq.s32.totalorder %s42, 0
      %p153 = por %p151, %p152
      %s155 = sadd.s32 %s154, 1
      %p158 = scmp.eq.s32.totalorder %s36, 1
      %p159 = scmp.ne.s32.totalorder %s154, %s156
      %p160 = scmp.eq.s32.totalorder %s36, 0
      %p161 = por %p159, %p160
      %p162 = scmp.ne.s32.totalorder %s154, %s156
      %p163 = scmp.eq.s32.totalorder %s41, 1
      %p164 = por %p162, %p163
      %p165 = scmp.ne.s32.totalorder %s156, %s157
      %p166 = scmp.eq.s32.totalorder %s41, 0
      %p167 = por %p165, %p166
      %p168 = scmp.ne.s32.totalorder %s156, %s157
      %p169 = scmp.eq.s32.totalorder %s42, 1
      %p170 = por %p168, %p169
      %p172 = scmp.ne.s32.totalorder %s157, %s171
      %p173 = scmp.eq.s32.totalorder %s42, 0
      %p174 = por %p172, %p173
      %s176 = sadd.s32 %s175, 1
      %p179 = scmp.eq.s32.totalorder %s36, 1
      %p180 = scmp.ne.s32.totalorder %s175, %s177
      %p181 = scmp.eq.s32.totalorder %s36, 0
      %p182 = por %p180, %p181
      %p183 = scmp.ne.s32.totalorder %s175, %s177
      %p184 = scmp.eq.s32.totalorder %s41, 1
      %p185 = por %p183, %p184
      %p186 = scmp.ne.s32.totalorder %s177, %s178
      %p187 = scmp.eq.s32.totalorder %s41, 0
      %p188 = por %p186, %p187
      %p189 = scmp.ne.s32.totalorder %s177, %s178
      %p190 = scmp.eq.s32.totalorder %s42, 1
      %p191 = por %p189, %p190
      %p193 = scmp.ne.s32.totalorder %s178, %s192
      %p194 = scmp.eq.s32.totalorder %s42, 0
      %p195 = por %p193, %p194
      %s197 = sadd.s32 %s196, 1
      %p200 = scmp.eq.s32.totalorder %s36, 1
      %p201 = scmp.ne.s32.totalorder %s196, %s198
      %p202 = scmp.eq.s32.totalorder %s36, 0
      %p203 = por %p201, %p202
      %p204 = scmp.ne.s32.totalorder %s196, %s198
      %p205 = scmp.eq.s32.totalorder %s41, 1
      %p206 = por %p204, %p205
      %p207 = scmp.ne.s32.totalorder %s198, %s199
      %p208 = scmp.eq.s32.totalorder %s41, 0
      %p209 = por %p207, %p208
      %p210 = scmp.ne.s32.totalorder %s198, %s199
      %p211 = scmp.eq.s32.totalorder %s42, 1
      %p212 = por %p210, %p211
      %p214 = scmp.ne.s32.totalorder %s199, %s213
      %p215 = scmp.eq.s32.totalorder %s42, 0
      %p216 = por %p214, %p215
      %s218 = sadd.s32 %s217, 1
      %p221 = scmp.eq.s32.totalorder %s36, 1
      %p222 = scmp.ne.s32.totalorder %s217, %s219
      %p223 = scmp.eq.s32.totalorder %s36, 0
      %p224 = por %p222, %p223
      %p225 = scmp.ne.s32.totalorder %s217, %s219
      %p226 = scmp.eq.s32.totalorder %s41, 1
      %p227 = por %p225, %p226
      %p228 = scmp.ne.s32.totalorder %s219, %s220
      %p229 = scmp.eq.s32.totalorder %s41, 0
      %p230 = por %p228, %p229
      %p231 = scmp.ne.s32.totalorder %s219, %s220
      %p232 = scmp.eq.s32.totalorder %s42, 1
      %p233 = por %p231, %p232
      %p235 = scmp.ne.s32.totalorder %s220, %s234
      %p236 = scmp.eq.s32.totalorder %s42, 0
      %p237 = por %p235, %p236
      %s239 = sadd.s32 %s238, 1
      %p242 = scmp.eq.s32.totalorder %s36, 1
      %p243 = scmp.ne.s32.totalorder %s238, %s240
      %p244 = scmp.eq.s32.totalorder %s36, 0
      %p245 = por %p243, %p244
      %p246 = scmp.ne.s32.totalorder %s238, %s240
      %p247 = scmp.eq.s32.totalorder %s41, 1
      %p248 = por %p246, %p247
      %p249 = scmp.ne.s32.totalorder %s240, %s241
      %p250 = scmp.eq.s32.totalorder %s41, 0
      %p251 = por %p249, %p250
      %p252 = scmp.ne.s32.totalorder %s240, %s241
      %p253 = scmp.eq.s32.totalorder %s42, 1
      %p254 = por %p252, %p253
      %p256 = scmp.ne.s32.totalorder %s241, %s255
      %p257 = scmp.eq.s32.totalorder %s42, 0
      %p258 = por %p256, %p257
      %s260 = sadd.s32 %s259, 1
      %p263 = scmp.eq.s32.totalorder %s36, 1
      %p264 = scmp.ne.s32.totalorder %s259, %s261
      %p265 = scmp.eq.s32.totalorder %s36, 0
      %p266 = por %p264, %p265
      %p267 = scmp.ne.s32.totalorder %s259, %s261
      %p268 = scmp.eq.s32.totalorder %s41, 1
      %p269 = por %p267, %p268
      %p270 = scmp.ne.s32.totalorder %s261, %s262
      %p271 = scmp.eq.s32.totalorder %s41, 0
      %p272 = por %p270, %p271
      %p273 = scmp.ne.s32.totalorder %s261, %s262
      %p274 = scmp.eq.s32.totalorder %s42, 1
      %p275 = por %p273, %p274
      %p277 = scmp.ne.s32.totalorder %s262, %s276
      %p278 = scmp.eq.s32.totalorder %s42, 0
      %p279 = por %p277, %p278
      %s281 = sadd.s32 %s280, 1
      %p284 = scmp.eq.s32.totalorder %s36, 1
      %p285 = scmp.ne.s32.totalorder %s280, %s282
      %p286 = scmp.eq.s32.totalorder %s36, 0
      %p287 = por %p285, %p286
      %p288 = scmp.ne.s32.totalorder %s280, %s282
      %p289 = scmp.eq.s32.totalorder %s41, 1
      %p290 = por %p288, %p289
      %p291 = scmp.ne.s32.totalorder %s282, %s283
      %p292 = scmp.eq.s32.totalorder %s41, 0
      %p293 = por %p291, %p292
      %p294 = scmp.ne.s32.totalorder %s282, %s283
      %p295 = scmp.eq.s32.totalorder %s42, 1
      %p296 = por %p294, %p295
      %p298 = scmp.ne.s32.totalorder %s283, %s297
      %p299 = scmp.eq.s32.totalorder %s42, 0
      %p300 = por %p298, %p299
      %s302 = sadd.s32 %s301, 1
      %p305 = scmp.eq.s32.totalorder %s36, 1
      %p306 = scmp.ne.s32.totalorder %s301, %s303
      %p307 = scmp.eq.s32.totalorder %s36, 0
      %p308 = por %p306, %p307
      %p309 = scmp.ne.s32.totalorder %s301, %s303
      %p310 = scmp.eq.s32.totalorder %s41, 1
      %p311 = por %p309, %p310
      %p312 = scmp.ne.s32.totalorder %s303, %s304
      %p313 = scmp.eq.s32.totalorder %s41, 0
      %p314 = por %p312, %p313
      %p315 = scmp.ne.s32.totalorder %s303, %s304
      %p316 = scmp.eq.s32.totalorder %s42, 1
      %p317 = por %p315, %p316
      %p319 = scmp.ne.s32.totalorder %s304, %s318
      %p320 = scmp.eq.s32.totalorder %s42, 0
      %p321 = por %p319, %p320
      %s323 = sadd.s32 %s322, 1
      %p326 = scmp.eq.s32.totalorder %s36, 1
      %p327 = scmp.ne.s32.totalorder %s322, %s324
      %p328 = scmp.eq.s32.totalorder %s36, 0
      %p329 = por %p327, %p328
      %p330 = scmp.ne.s32.totalorder %s322, %s324
      %p331 = scmp.eq.s32.totalorder %s41, 1
      %p332 = por %p330, %p331
      %p333 = scmp.ne.s32.totalorder %s324, %s325
      %p334 = scmp.eq.s32.totalorder %s41, 0
      %p335 = por %p333, %p334
      %p336 = scmp.ne.s32.totalorder %s324, %s325
      %p337 = scmp.eq.s32.totalorder %s42, 1
      %p338 = por %p336, %p337
      %p340 = scmp.ne.s32.totalorder %s325, %s339
      %p341 = scmp.eq.s32.totalorder %s42, 0
      %p342 = por %p340, %p341
      %s344 = sadd.s32 %s343, 1
      %p347 = scmp.eq.s32.totalorder %s36, 1
      %p348 = scmp.ne.s32.totalorder %s343, %s345
      %p349 = scmp.eq.s32.totalorder %s36, 0
      %p350 = por %p348, %p349
      %p351 = scmp.ne.s32.totalorder %s343, %s345
      %p352 = scmp.eq.s32.totalorder %s41, 1
      %p353 = por %p351, %p352
      %p354 = scmp.ne.s32.totalorder %s345, %s346
      %p355 = scmp.eq.s32.totalorder %s41, 0
      %p356 = por %p354, %p355
      %p357 = scmp.ne.s32.totalorder %s345, %s346
      %p358 = scmp.eq.s32.totalorder %s42, 1
      %p359 = por %p357, %p358
      %p361 = scmp.ne.s32.totalorder %s346, %s360
      %p362 = scmp.eq.s32.totalorder %s42, 0
      %p363 = por %p361, %p362
      %s365 = sadd.s32 %s364, 1
      %p368 = scmp.eq.s32.totalorder %s36, 1
      %p369 = scmp.ne.s32.totalorder %s364, %s366
      %p370 = scmp.eq.s32.totalorder %s36, 0
      %p371 = por %p369, %p370
      %p372 = scmp.ne.s32.totalorder %s364, %s366
      %p373 = scmp.eq.s32.totalorder %s41, 1
      %p374 = por %p372, %p373
      %p375 = scmp.ne.s32.totalorder %s366, %s367
      %p376 = scmp.eq.s32.totalorder %s41, 0
      %p377 = por %p375, %p376
      %p378 = scmp.ne.s32.totalorder %s366, %s367
      %p379 = scmp.eq.s32.totalorder %s42, 1
      %p380 = por %p378, %p379
      %p382 = scmp.ne.s32.totalorder %s367, %s381
      %p383 = scmp.eq.s32.totalorder %s42, 0
      %p384 = por %p382, %p383
      %s385 = ssub.s32 %s36, %s43
      %p386 = scmp.eq.s32.totalorder %s385, 0
      %s388 = sadd.s32 %s387, 1
      %s389 = scalar_select %p386, %s387, %s388
      %p392 = pneg %p386
      %p393 = scmp.eq.s32.totalorder %s36, 1
      %p394 = por %p392, %p393
      %p395 = scmp.ne.s32.totalorder %s387, %s390
      %p396 = scmp.eq.s32.totalorder %s36, 0
      %p397 = por %p395, %p396
      %p398 = scmp.ne.s32.totalorder %s387, %s390
      %p399 = scmp.eq.s32.totalorder %s41, 1
      %p400 = por %p398, %p399
      %p401 = scmp.ne.s32.totalorder %s390, %s391
      %p402 = scmp.eq.s32.totalorder %s41, 0
      %p403 = por %p401, %p402
      %p404 = scmp.ne.s32.totalorder %s390, %s391
      %p405 = scmp.eq.s32.totalorder %s42, 1
      %p406 = por %p404, %p405
      %p408 = scmp.ne.s32.totalorder %s391, %s407
      %p409 = scmp.eq.s32.totalorder %s42, 0
      %p410 = por %p408, %p409
      %p411 = scmp.le.s32.totalorder 1, %s36
      %p412 = scmp.lt.s32.totalorder %s36, 3
      %p413 = pnand %p411, %p412
      %p414 = pneg %p413
      // Predicated region
      $region9: #{unet_forward.1} parent=5 // pred_check
        _
      $region10: #{unet_forward.1} parent=5 // pred_check_branch
        %416 = sbr.rel (%p413) target = $region12
      $region11: #{unet_forward.1} parent=5 // pred_region
        %s417 = ssub.s32 %s36, 1
        // Predicated region
        $region13: #{unet_forward.1} parent=11 // pred_check
          %p418 = pneg %p83
        $region14: #{unet_forward.1} parent=11 // pred_check_branch
          %420 = sbr.rel (%p418) target = $region16
        $region15: #{unet_forward.1} parent=11 // pred_region
          %s422 = ssub.s32 320, 320
          %423 = vsyncadd [#allocation6], %s422
          %s424 = sshll.u32 [#allocation5], 4
          %s425 = int_to_ptr.vmem [resolvable:$true] %s424
          %430 = dma.hbm_to_vmem [thread:$0]  %s1, 320, %s425, [#allocation6], 64, 64, 4
        $region16: #{unet_forward.1} parent=11 // pred_fallthru
          _
        // Predicated region
        $region17: #{unet_forward.1} parent=11 // pred_check
          %p431 = pneg %p104
        $region18: #{unet_forward.1} parent=11 // pred_check_branch
          %433 = sbr.rel (%p431) target = $region20
        $region19: #{unet_forward.1} parent=11 // pred_region
          %s435 = ssub.s32 32, 32
          %436 = vsyncadd [#allocation6], %s435
          %s438 = sshll.u32 [#allocation7], 4
          %s439 = int_to_ptr.vmem [resolvable:$true] %s438
          %441 = dma.hbm_to_vmem [thread:$0]  %s2, 32, %s439, [#allocation6]
        $region20: #{unet_forward.1} parent=11 // pred_fallthru
          _
        // Predicated region
        $region21: #{unet_forward.1} parent=11 // pred_check
          %p442 = pneg %p125
        $region22: #{unet_forward.1} parent=11 // pred_check_branch
          %444 = sbr.rel (%p442) target = $region24
        $region23: #{unet_forward.1} parent=11 // pred_region
          %s446 = ssub.s32 4608, 4608
          %447 = vsyncadd [#allocation9], %s446
          %s448 = sshll.u32 [#allocation8], 4
          %s449 = int_to_ptr.vmem [resolvable:$true] %s448
          %454 = dma.hbm_to_vmem [thread:$0]  %s3, 4608, %s449, [#allocation9], 64, 64, 4
        $region24: #{unet_forward.1} parent=11 // pred_fallthru
          _
        // Predicated region
        $region25: #{unet_forward.1} parent=11 // pred_check
          %p455 = pneg %p146
        $region26: #{unet_forward.1} parent=11 // pred_check_branch
          %457 = sbr.rel (%p455) target = $region28
        $region27: #{unet_forward.1} parent=11 // pred_region
          %s459 = ssub.s32 32, 32
          %460 = vsyncadd [#allocation9], %s459
          %s462 = sshll.u32 [#allocation10], 4
          %s463 = int_to_ptr.vmem [resolvable:$true] %s462
          %465 = dma.hbm_to_vmem [thread:$0]  %s4, 32, %s463, [#allocation9]
        $region28: #{unet_forward.1} parent=11 // pred_fallthru
          _
        // Predicated region
        $region29: #{unet_forward.1} parent=11 // pred_check
          %p466 = pneg %p167
        $region30: #{unet_forward.1} parent=11 // pred_check_branch
          %468 = sbr.rel (%p466) target = $region32
        $region31: #{unet_forward.1} parent=11 // pred_region
          %s470 = ssub.s32 4608, 4608
          %471 = vsyncadd [#allocation12], %s470
          %s472 = sshll.u32 [#allocation11], 4
          %s473 = int_to_ptr.vmem [resolvable:$true] %s472
          %478 = dma.hbm_to_vmem [thread:$0]  %s5, 4608, %s473, [#allocation12], 64, 64, 4
        $region32: #{unet_forward.1} parent=11 // pred_fallthru
          _
        // Predicated region
        $region33: #{unet_forward.1} parent=11 // pred_check
          %p479 = pneg %p188
        $region34: #{unet_forward.1} parent=11 // pred_check_branch
          %481 = sbr.rel (%p479) target = $region36
        $region35: #{unet_forward.1} parent=11 // pred_region
          %s483 = ssub.s32 32, 32
          %484 = vsyncadd [#allocation12], %s483
          %s486 = sshll.u32 [#allocation13], 4
          %s487 = int_to_ptr.vmem [resolvable:$true] %s486
          %489 = dma.hbm_to_vmem [thread:$0]  %s6, 32, %s487, [#allocation12]
        $region36: #{unet_forward.1} parent=11 // pred_fallthru
          _
        // Predicated region
        $region37: #{unet_forward.1} parent=11 // pred_check
          %p490 = pneg %p209
        $region38: #{unet_forward.1} parent=11 // pred_check_branch
          %492 = sbr.rel (%p490) target = $region40
        $region39: #{unet_forward.1} parent=11 // pred_region
          %s494 = ssub.s32 9216, 9216
          %495 = vsyncadd [#allocation15], %s494
          %s496 = sshll.u32 [#allocation14], 4
          %s497 = int_to_ptr.vmem [resolvable:$true] %s496
          %502 = dma.hbm_to_vmem [thread:$0]  %s7, 9216, %s497, [#allocation15], 64, 64, 4
        $region40: #{unet_forward.1} parent=11 // pred_fallthru
          _
        // Predicated region
        $region41: #{unet_forward.1} parent=11 // pred_check
          %p503 = pneg %p230
        $region42: #{unet_forward.1} parent=11 // pred_check_branch
          %505 = sbr.rel (%p503) target = $region44
        $region43: #{unet_forward.1} parent=11 // pred_region
          %s507 = ssub.s32 32, 32
          %508 = vsyncadd [#allocation15], %s507
          %s510 = sshll.u32 [#allocation16], 4
          %s511 = int_to_ptr.vmem [resolvable:$true] %s510
          %513 = dma.hbm_to_vmem [thread:$0]  %s8, 32, %s511, [#allocation15]
        $region44: #{unet_forward.1} parent=11 // pred_fallthru
          _
        // Predicated region
        $region45: #{unet_forward.1} parent=11 // pred_check
          %p514 = pneg %p251
        $region46: #{unet_forward.1} parent=11 // pred_check_branch
          %516 = sbr.rel (%p514) target = $region48
        $region47: #{unet_forward.1} parent=11 // pred_region
          %s518 = ssub.s32 4096, 4096
          %519 = vsyncadd [#allocation18], %s518
          %s520 = sshll.u32 [#allocation17], 4
          %s521 = int_to_ptr.vmem [resolvable:$true] %s520
          %526 = dma.hbm_to_vmem [thread:$0]  %s9, 4096, %s521, [#allocation18], 128, 128, 8
        $region48: #{unet_forward.1} parent=11 // pred_fallthru
          _
        // Predicated region
        $region49: #{unet_forward.1} parent=11 // pred_check
          %p527 = pneg %p272
        $region50: #{unet_forward.1} parent=11 // pred_check_branch
          %529 = sbr.rel (%p527) target = $region52
        $region51: #{unet_forward.1} parent=11 // pred_region
          %s531 = ssub.s32 13824, 13824
          %532 = vsyncadd [#allocation18], %s531
          %s533 = sshll.u32 [#allocation19], 4
          %s534 = int_to_ptr.vmem [resolvable:$true] %s533
          %539 = dma.hbm_to_vmem [thread:$0]  %s10, 13824, %s534, [#allocation18], 64, 64, 4
        $region52: #{unet_forward.1} parent=11 // pred_fallthru
          _
        // Predicated region
        $region53: #{unet_forward.1} parent=11 // pred_check
          %p540 = pneg %p293
        $region54: #{unet_forward.1} parent=11 // pred_check_branch
          %542 = sbr.rel (%p540) target = $region56
        $region55: #{unet_forward.1} parent=11 // pred_region
          %s544 = ssub.s32 32, 32
          %545 = vsyncadd [#allocation21], %s544
          %s547 = sshll.u32 [#allocation20], 4
          %s548 = int_to_ptr.vmem [resolvable:$true] %s547
          %550 = dma.hbm_to_vmem [thread:$0]  %s11, 32, %s548, [#allocation21]
        $region56: #{unet_forward.1} parent=11 // pred_fallthru
          _
        // Predicated region
        $region57: #{unet_forward.1} parent=11 // pred_check
          %p551 = pneg %p314
        $region58: #{unet_forward.1} parent=11 // pred_check_branch
          %553 = sbr.rel (%p551) target = $region60
        $region59: #{unet_forward.1} parent=11 // pred_region
          %s555 = ssub.s32 6912, 6912
          %556 = vsyncadd [#allocation21], %s555
          %s557 = sshll.u32 [#allocation22], 4
          %s558 = int_to_ptr.vmem [resolvable:$true] %s557
          %563 = dma.hbm_to_vmem [thread:$0]  %s12, 6912, %s558, [#allocation21], 64, 64, 4
        $region60: #{unet_forward.1} parent=11 // pred_fallthru
          _
        // Predicated region
        $region61: #{unet_forward.1} parent=11 // pred_check
          %p564 = pneg %p335
        $region62: #{unet_forward.1} parent=11 // pred_check_branch
          %566 = sbr.rel (%p564) target = $region64
        $region63: #{unet_forward.1} parent=11 // pred_region
          %s568 = ssub.s32 32, 32
          %569 = vsyncadd [#allocation24], %s568
          %s571 = sshll.u32 [#allocation23], 4
          %s572 = int_to_ptr.vmem [resolvable:$true] %s571
          %574 = dma.hbm_to_vmem [thread:$0]  %s13, 32, %s572, [#allocation24]
        $region64: #{unet_forward.1} parent=11 // pred_fallthru
          _
        // Predicated region
        $region65: #{unet_forward.1} parent=11 // pred_check
          %p575 = pneg %p356
        $region66: #{unet_forward.1} parent=11 // pred_check_branch
          %577 = sbr.rel (%p575) target = $region68
        $region67: #{unet_forward.1} parent=11 // pred_region
          %s579 = ssub.s32 256, 256
          %580 = vsyncadd [#allocation24], %s579
          %s581 = sshll.u32 [#allocation25], 4
          %s582 = int_to_ptr.vmem [resolvable:$true] %s581
          %587 = dma.hbm_to_vmem [thread:$0]  %s14, 256, %s582, [#allocation24], 128, 128, 8
        $region68: #{unet_forward.1} parent=11 // pred_fallthru
          _
        // Predicated region
        $region69: #{unet_forward.1} parent=11 // pred_check
          %p588 = pneg %p377
        $region70: #{unet_forward.1} parent=11 // pred_check_branch
          %590 = sbr.rel (%p588) target = $region72
        $region71: #{unet_forward.1} parent=11 // pred_region
          %s592 = ssub.s32 256, 256
          %593 = vsyncadd [#allocation27], %s592
          %s594 = sshll.u32 [#allocation26], 4
          %s595 = int_to_ptr.vmem [resolvable:$true] %s594
          %600 = dma.hbm_to_vmem [thread:$0]  %s15, 256, %s595, [#allocation27], 128, 128, 8
        $region72: #{unet_forward.1} parent=11 // pred_fallthru
          _
      $region12: #{unet_forward.1} parent=5 // pred_fallthru
        _
      %p601 = scmp.lt.s32.totalorder %s36, 2
      // Predicated region
      $region73: #{unet_forward.1} parent=5 // pred_check
        %p602 = pneg %p601
      $region74: #{unet_forward.1} parent=5 // pred_check_branch
        %604 = sbr.rel (%p602) target = $region76
      $region75: #{unet_forward.1} parent=5 // pred_region
        // Predicated region
        $region77: #{unet_forward.1} parent=75 // pred_check
          %p605 = pneg %p56
        $region78: #{unet_forward.1} parent=75 // pred_check_branch
          %607 = sbr.rel (%p605) target = $region80
        $region79: #{unet_forward.1} parent=75 // pred_region
          %s608 = sand.u32 %s46, 1
          %s609 = scalar_lea.sflag [#allocation3], %s608
          %s610 = sand.u32 %s46, 1
          %s611 = smul.addr %s610, 256
          %s612 = scalar_lea.vmem [#allocation2], %s611
          %s614 = ssub.s32 4096, 4096
          %615 = vsyncadd %s609, %s614
          %s616 = smul.addr %s36, 32
          %s617 = smul.addr %s616, 128
          %s618 = scalar_lea.hbm %s0, %s617
          %s619 = sshll.u32 %s612, 4
          %s620 = int_to_ptr.vmem [resolvable:$true] %s619
          %625 = dma.hbm_to_vmem [thread:$0]  %s618, 4096, %s620, %s609, 128, 128, 8
        $region80: #{unet_forward.1} parent=75 // pred_fallthru
          _
      $region76: #{unet_forward.1} parent=5 // pred_fallthru
        _
      %p626 = scmp.le.s32.totalorder 1, %s36
      %p627 = scmp.lt.s32.totalorder %s36, 3
      %p628 = pnand %p626, %p627
      %p629 = pneg %p628
      // Predicated region
      $region81: #{unet_forward.1} parent=5 // pred_check
        _
      $region82: #{unet_forward.1} parent=5 // pred_check_branch
        %631 = sbr.rel (%p628) target = $region84
      $region83: #{unet_forward.1} parent=5 // pred_region
        %s632 = ssub.s32 %s36, 1
        %s633 = sand.u32 %s49, 1
        %s634 = scalar_lea.sflag [#allocation3], %s633
        %s635 = sand.u32 %s49, 1
        %s636 = smul.addr %s635, 256
        %s637 = scalar_lea.vmem [#allocation2], %s636
        // Predicated region
        $region85: #{unet_forward.1} parent=83 // pred_check
          %p638 = pneg %p62
        $region86: #{unet_forward.1} parent=83 // pred_check_branch
          %640 = sbr.rel (%p638) target = $region88
        $region87: #{unet_forward.1} parent=83 // pred_region
          %641 = dma.done %s634, 4096
        $region88: #{unet_forward.1} parent=83 // pred_fallthru
          _
        // Predicated region
        $region89: #{unet_forward.1} parent=83 // pred_check
          %p642 = pneg %p83
        $region90: #{unet_forward.1} parent=83 // pred_check_branch
          %644 = sbr.rel (%p642) target = $region92
        $region91: #{unet_forward.1} parent=83 // pred_region
          %645 = dma.done [#allocation6], 320
        $region92: #{unet_forward.1} parent=83 // pred_fallthru
          _
        // Predicated region
        $region93: #{unet_forward.1} parent=83 // pred_check
          %p646 = pneg %p104
        $region94: #{unet_forward.1} parent=83 // pred_check_branch
          %648 = sbr.rel (%p646) target = $region96
        $region95: #{unet_forward.1} parent=83 // pred_region
          %649 = dma.done [#allocation6], 32
        $region96: #{unet_forward.1} parent=83 // pred_fallthru
          _
        // Predicated region
        $region97: #{unet_forward.1} parent=83 // pred_check
          %p650 = pneg %p125
        $region98: #{unet_forward.1} parent=83 // pred_check_branch
          %652 = sbr.rel (%p650) target = $region100
        $region99: #{unet_forward.1} parent=83 // pred_region
          %653 = dma.done [#allocation9], 4608
        $region100: #{unet_forward.1} parent=83 // pred_fallthru
          _
        // Predicated region
        $region101: #{unet_forward.1} parent=83 // pred_check
          %p654 = pneg %p146
        $region102: #{unet_forward.1} parent=83 // pred_check_branch
          %656 = sbr.rel (%p654) target = $region104
        $region103: #{unet_forward.1} parent=83 // pred_region
          %657 = dma.done [#allocation9], 32
        $region104: #{unet_forward.1} parent=83 // pred_fallthru
          _
        // Predicated region
        $region105: #{unet_forward.1} parent=83 // pred_check
          %p658 = pneg %p167
        $region106: #{unet_forward.1} parent=83 // pred_check_branch
          %660 = sbr.rel (%p658) target = $region108
        $region107: #{unet_forward.1} parent=83 // pred_region
          %661 = dma.done [#allocation12], 4608
        $region108: #{unet_forward.1} parent=83 // pred_fallthru
          _
        // Predicated region
        $region109: #{unet_forward.1} parent=83 // pred_check
          %p662 = pneg %p188
        $region110: #{unet_forward.1} parent=83 // pred_check_branch
          %664 = sbr.rel (%p662) target = $region112
        $region111: #{unet_forward.1} parent=83 // pred_region
          %665 = dma.done [#allocation12], 32
        $region112: #{unet_forward.1} parent=83 // pred_fallthru
          _
        // Predicated region
        $region113: #{unet_forward.1} parent=83 // pred_check
          %p666 = pneg %p209
        $region114: #{unet_forward.1} parent=83 // pred_check_branch
          %668 = sbr.rel (%p666) target = $region116
        $region115: #{unet_forward.1} parent=83 // pred_region
          %669 = dma.done [#allocation15], 9216
        $region116: #{unet_forward.1} parent=83 // pred_fallthru
          _
        // Predicated region
        $region117: #{unet_forward.1} parent=83 // pred_check
          %p670 = pneg %p230
        $region118: #{unet_forward.1} parent=83 // pred_check_branch
          %672 = sbr.rel (%p670) target = $region120
        $region119: #{unet_forward.1} parent=83 // pred_region
          %673 = dma.done [#allocation15], 32
        $region120: #{unet_forward.1} parent=83 // pred_fallthru
          _
        // Predicated region
        $region121: #{unet_forward.1} parent=83 // pred_check
          %p674 = pneg %p251
        $region122: #{unet_forward.1} parent=83 // pred_check_branch
          %676 = sbr.rel (%p674) target = $region124
        $region123: #{unet_forward.1} parent=83 // pred_region
          %677 = dma.done [#allocation18], 4096
        $region124: #{unet_forward.1} parent=83 // pred_fallthru
          _
        // Predicated region
        $region125: #{unet_forward.1} parent=83 // pred_check
          %p678 = pneg %p272
        $region126: #{unet_forward.1} parent=83 // pred_check_branch
          %680 = sbr.rel (%p678) target = $region128
        $region127: #{unet_forward.1} parent=83 // pred_region
          %681 = dma.done [#allocation18], 13824
        $region128: #{unet_forward.1} parent=83 // pred_fallthru
          _
        // Predicated region
        $region129: #{unet_forward.1} parent=83 // pred_check
          %p682 = pneg %p293
        $region130: #{unet_forward.1} parent=83 // pred_check_branch
          %684 = sbr.rel (%p682) target = $region132
        $region131: #{unet_forward.1} parent=83 // pred_region
          %685 = dma.done [#allocation21], 32
        $region132: #{unet_forward.1} parent=83 // pred_fallthru
          _
        // Predicated region
        $region133: #{unet_forward.1} parent=83 // pred_check
          %p686 = pneg %p314
        $region134: #{unet_forward.1} parent=83 // pred_check_branch
          %688 = sbr.rel (%p686) target = $region136
        $region135: #{unet_forward.1} parent=83 // pred_region
          %689 = dma.done [#allocation21], 6912
        $region136: #{unet_forward.1} parent=83 // pred_fallthru
          _
        // Predicated region
        $region137: #{unet_forward.1} parent=83 // pred_check
          %p690 = pneg %p335
        $region138: #{unet_forward.1} parent=83 // pred_check_branch
          %692 = sbr.rel (%p690) target = $region140
        $region139: #{unet_forward.1} parent=83 // pred_region
          %693 = dma.done [#allocation24], 32
        $region140: #{unet_forward.1} parent=83 // pred_fallthru
          _
        // Predicated region
        $region141: #{unet_forward.1} parent=83 // pred_check
          %p694 = pneg %p356
        $region142: #{unet_forward.1} parent=83 // pred_check_branch
          %696 = sbr.rel (%p694) target = $region144
        $region143: #{unet_forward.1} parent=83 // pred_region
          %697 = dma.done [#allocation24], 256
        $region144: #{unet_forward.1} parent=83 // pred_fallthru
          _
        // Predicated region
        $region145: #{unet_forward.1} parent=83 // pred_check
          %p698 = pneg %p377
        $region146: #{unet_forward.1} parent=83 // pred_check_branch
          %700 = sbr.rel (%p698) target = $region148
        $region147: #{unet_forward.1} parent=83 // pred_region
          %701 = dma.done [#allocation27], 256
        $region148: #{unet_forward.1} parent=83 // pred_fallthru
          _
        %s702 = sand.u32 %s49, 1
        %s703 = scalar_lea.sflag [#allocation3], %s702
        %s704 = sand.u32 %s49, 1
        %s705 = smul.addr %s704, 256
        %s706 = scalar_lea.vmem [#allocation2], %s705
        %p707 = pneg %p62
        %p708 = pneg %p59
        %p709 = pneg %p83
        %p710 = pneg %p80
        %p711 = pneg %p104
        %p712 = pneg %p101
        %p713 = pneg %p125
        %p714 = pneg %p122
        %p715 = pneg %p146
        %p716 = pneg %p143
        %p717 = pneg %p167
        %p718 = pneg %p164
        %p719 = pneg %p188
        %p720 = pneg %p185
        %p721 = pneg %p209
        %p722 = pneg %p206
        %p723 = pneg %p230
        %p724 = pneg %p227
        %p725 = pneg %p251
        %p726 = pneg %p248
        %p727 = pneg %p272
        %p728 = pneg %p269
        %p729 = pneg %p293
        %p730 = pneg %p290
        %p731 = pneg %p314
        %p732 = pneg %p311
        %p733 = pneg %p335
        %p734 = pneg %p332
        %p735 = pneg %p356
        %p736 = pneg %p353
        %p737 = pneg %p377
        %p738 = pneg %p374
        %p739 = pneg %p403
        %p740 = pneg %p400
        %s741 = sand.u32 %s390, 1
        %s742 = scalar_lea.sflag [#allocation4], %s741
        %s743 = sand.u32 %s390, 1
        %s744 = smul.addr %s743, 32
        %s745 = scalar_lea.vmem [#allocation28], %s744
        %v747 = vld [vmem:[%s637] sm:$0xff]
        %v748 = vld [vmem:[%s637 + $0x8] sm:$0xff]
        %v749 = vld [vmem:[%s637 + $0x10] sm:$0xff]
        %v750 = vld [vmem:[%s637 + $0x18] sm:$0xff]
        %v751 = vld [vmem:[%s637 + $0x20] sm:$0xff]
        %v752 = vld [vmem:[%s637 + $0x28] sm:$0xff]
        %v753 = vld [vmem:[%s637 + $0x30] sm:$0xff]
        %v754 = vld [vmem:[%s637 + $0x38] sm:$0xff]
        %v755 = vld [vmem:[%s637 + $0x40] sm:$0xff]
        %v756 = vld [vmem:[%s637 + $0x48] sm:$0xff]
        %v757 = vld [vmem:[%s637 + $0x50] sm:$0xff]
        %v758 = vld [vmem:[%s637 + $0x58] sm:$0xff]
        %v759 = vld [vmem:[%s637 + $0x60] sm:$0xff]
        %v760 = vld [vmem:[%s637 + $0x68] sm:$0xff]
        %v761 = vld [vmem:[%s637 + $0x70] sm:$0xff]
        %v762 = vld [vmem:[%s637 + $0x78] sm:$0xff]
        %v763 = vld [vmem:[%s637 + $0x80] sm:$0xff]
        %v764 = vld [vmem:[%s637 + $0x88] sm:$0xff]
        %v765 = vld [vmem:[%s637 + $0x90] sm:$0xff]
        %v766 = vld [vmem:[%s637 + $0x98] sm:$0xff]
        %v767 = vld [vmem:[%s637 + $0xa0] sm:$0xff]
        %v768 = vld [vmem:[%s637 + $0xa8] sm:$0xff]
        %v769 = vld [vmem:[%s637 + $0xb0] sm:$0xff]
        %v770 = vld [vmem:[%s637 + $0xb8] sm:$0xff]
        %v771 = vld [vmem:[%s637 + $0xc0] sm:$0xff]
        %v772 = vld [vmem:[%s637 + $0xc8] sm:$0xff]
        %v773 = vld [vmem:[%s637 + $0xd0] sm:$0xff]
        %v774 = vld [vmem:[%s637 + $0xd8] sm:$0xff]
        %v775 = vld [vmem:[%s637 + $0xe0] sm:$0xff]
        %v776 = vld [vmem:[%s637 + $0xe8] sm:$0xff]
        %v777 = vld [vmem:[%s637 + $0xf0] sm:$0xff]
        %v778 = vld [vmem:[%s637 + $0xf8] sm:$0xff]
        %v779 = vpack.c.bf16 %v748, %v747
        %v780 = vpack.c.bf16 %v750, %v749
        %v781 = vpack.c.bf16 %v752, %v751
        %v782 = vpack.c.bf16 %v754, %v753
        %v783 = vpack.c.bf16 %v756, %v755
        %v784 = vpack.c.bf16 %v758, %v757
        %v785 = vpack.c.bf16 %v760, %v759
        %v786 = vpack.c.bf16 %v762, %v761
        %v787 = vpack.c.bf16 %v764, %v763
        %v788 = vpack.c.bf16 %v766, %v765
        %v789 = vpack.c.bf16 %v768, %v767
        %v790 = vpack.c.bf16 %v770, %v769
        %v791 = vpack.c.bf16 %v772, %v771
        %v792 = vpack.c.bf16 %v774, %v773
        %v793 = vpack.c.bf16 %v776, %v775
        %v794 = vpack.c.bf16 %v778, %v777
        %v796 = vshrl.u32 %v779, 16
        %v798 = vrot.slane %v796, 7
        %v799 = vshll.u32 %v779, 16
        %v801 = vor.u32 %v798, %v799
        %v803 = vshrl.u32 %v780, 16
        %v805 = vrot.slane %v803, 7
        %v806 = vshll.u32 %v780, 16
        %v808 = vor.u32 %v805, %v806
        %v810 = vshrl.u32 %v781, 16
        %v812 = vrot.slane %v810, 7
        %v813 = vshll.u32 %v781, 16
        %v815 = vor.u32 %v812, %v813
        %v817 = vshrl.u32 %v782, 16
        %v819 = vrot.slane %v817, 7
        %v820 = vshll.u32 %v782, 16
        %v822 = vor.u32 %v819, %v820
        %v824 = vshrl.u32 %v783, 16
        %v826 = vrot.slane %v824, 7
        %v827 = vshll.u32 %v783, 16
        %v829 = vor.u32 %v826, %v827
        %v831 = vshrl.u32 %v784, 16
        %v833 = vrot.slane %v831, 7
        %v834 = vshll.u32 %v784, 16
        %v836 = vor.u32 %v833, %v834
        %v838 = vshrl.u32 %v785, 16
        %v840 = vrot.slane %v838, 7
        %v841 = vshll.u32 %v785, 16
        %v843 = vor.u32 %v840, %v841
        %v845 = vshrl.u32 %v786, 16
        %v847 = vrot.slane %v845, 7
        %v848 = vshll.u32 %v786, 16
        %v850 = vor.u32 %v847, %v848
        %v852 = vshrl.u32 %v787, 16
        %v854 = vrot.slane %v852, 7
        %v855 = vshll.u32 %v787, 16
        %v857 = vor.u32 %v854, %v855
        %v859 = vshrl.u32 %v788, 16
        %v861 = vrot.slane %v859, 7
        %v862 = vshll.u32 %v788, 16
        %v864 = vor.u32 %v861, %v862
        %v866 = vshrl.u32 %v789, 16
        %v868 = vrot.slane %v866, 7
        %v869 = vshll.u32 %v789, 16
        %v871 = vor.u32 %v868, %v869
        %v873 = vshrl.u32 %v790, 16
        %v875 = vrot.slane %v873, 7
        %v876 = vshll.u32 %v790, 16
        %v878 = vor.u32 %v875, %v876
        %v880 = vshrl.u32 %v791, 16
        %v882 = vrot.slane %v880, 7
        %v883 = vshll.u32 %v791, 16
        %v885 = vor.u32 %v882, %v883
        %v887 = vshrl.u32 %v792, 16
        %v889 = vrot.slane %v887, 7
        %v890 = vshll.u32 %v792, 16
        %v892 = vor.u32 %v889, %v890
        %v894 = vshrl.u32 %v793, 16
        %v896 = vrot.slane %v894, 7
        %v897 = vshll.u32 %v793, 16
        %v899 = vor.u32 %v896, %v897
        %v901 = vshrl.u32 %v794, 16
        %v903 = vrot.slane %v901, 7
        %v904 = vshll.u32 %v794, 16
        %v906 = vor.u32 %v903, %v904
        %vm939 = vcmask 1040384
        %vm940 = vsmask.f32 256
        %vm941 = vmand %vm939, %vm940
        %v942 = vsel %vm941, 0, %v801
        %v943 = vsel %vm941, 0, %v808
        %v944 = vsel %vm941, 0, %v815
        %v945 = vsel %vm941, 0, %v822
        %v946 = vsel %vm941, 0, %v829
        %v947 = vsel %vm941, 0, %v836
        %v948 = vsel %vm941, 0, %v843
        %v949 = vsel %vm941, 0, %v850
        %v950 = vsel %vm941, 0, %v857
        %v951 = vsel %vm941, 0, %v864
        %v952 = vsel %vm941, 0, %v871
        %v953 = vsel %vm941, 0, %v878
        %v954 = vsel %vm941, 0, %v885
        %v955 = vsel %vm941, 0, %v892
        %v956 = vsel %vm941, 0, %v899
        %v957 = vsel %vm941, 0, %v906
        %v958 = vsel %vm941, %v798, 0
        %v959 = vsel %vm941, %v805, 0
        %v960 = vsel %vm941, %v812, 0
        %v961 = vsel %vm941, %v819, 0
        %v962 = vsel %vm941, %v826, 0
        %v963 = vsel %vm941, %v833, 0
        %v964 = vsel %vm941, %v840, 0
        %v965 = vsel %vm941, %v847, 0
        %v966 = vsel %vm941, %v854, 0
        %v967 = vsel %vm941, %v861, 0
        %v968 = vsel %vm941, %v868, 0
        %v969 = vsel %vm941, %v875, 0
        %v970 = vsel %vm941, %v882, 0
        %v971 = vsel %vm941, %v889, 0
        %v972 = vsel %vm941, %v896, 0
        %v973 = vsel %vm941, %v903, 0
        %vm974 = vsmask.f32 7424
        %v976 = vshrl.u32 0, 16
        %v978 = vshll.u32 0, 16
        %v980 = vrot.slane %v978, 1
        %v981 = vor.u32 %v976, %v980
        %v982 = vsel %vm974, %v981, %v980
        %v984 = vshrl.u32 %v942, 16
        %v986 = vshll.u32 %v942, 16
        %v988 = vrot.slane %v986, 1
        %v989 = vor.u32 %v984, %v988
        %v991 = vshll.u32 %v958, 16
        %v993 = vrot.slane %v991, 1
        %v994 = vsel %vm974, %v989, %v993
        %v996 = vshrl.u32 %v943, 16
        %v998 = vshll.u32 %v943, 16
        %v1000 = vrot.slane %v998, 1
        %v1001 = vor.u32 %v996, %v1000
        %v1003 = vshll.u32 %v959, 16
        %v1005 = vrot.slane %v1003, 1
        %v1006 = vsel %vm974, %v1001, %v1005
        %v1008 = vshrl.u32 %v944, 16
        %v1010 = vshll.u32 %v944, 16
        %v1012 = vrot.slane %v1010, 1
        %v1013 = vor.u32 %v1008, %v1012
        %v1015 = vshll.u32 %v960, 16
        %v1017 = vrot.slane %v1015, 1
        %v1018 = vsel %vm974, %v1013, %v1017
        %v1020 = vshrl.u32 %v945, 16
        %v1022 = vshll.u32 %v945, 16
        %v1024 = vrot.slane %v1022, 1
        %v1025 = vor.u32 %v1020, %v1024
        %v1027 = vshll.u32 %v961, 16
        %v1029 = vrot.slane %v1027, 1
        %v1030 = vsel %vm974, %v1025, %v1029
        %v1032 = vshrl.u32 %v946, 16
        %v1034 = vshll.u32 %v946, 16
        %v1036 = vrot.slane %v1034, 1
        %v1037 = vor.u32 %v1032, %v1036
        %v1039 = vshll.u32 %v962, 16
        %v1041 = vrot.slane %v1039, 1
        %v1042 = vsel %vm974, %v1037, %v1041
        %v1044 = vshrl.u32 %v947, 16
        %v1046 = vshll.u32 %v947, 16
        %v1048 = vrot.slane %v1046, 1
        %v1049 = vor.u32 %v1044, %v1048
        %v1051 = vshll.u32 %v963, 16
        %v1053 = vrot.slane %v1051, 1
        %v1054 = vsel %vm974, %v1049, %v1053
        %v1056 = vshrl.u32 %v948, 16
        %v1058 = vshll.u32 %v948, 16
        %v1060 = vrot.slane %v1058, 1
        %v1061 = vor.u32 %v1056, %v1060
        %v1063 = vshll.u32 %v964, 16
        %v1065 = vrot.slane %v1063, 1
        %v1066 = vsel %vm974, %v1061, %v1065
        %v1068 = vshrl.u32 %v949, 16
        %v1070 = vshll.u32 %v949, 16
        %v1072 = vrot.slane %v1070, 1
        %v1073 = vor.u32 %v1068, %v1072
        %v1075 = vshll.u32 %v965, 16
        %v1077 = vrot.slane %v1075, 1
        %v1078 = vsel %vm974, %v1073, %v1077
        %v1080 = vshrl.u32 %v950, 16
        %v1082 = vshll.u32 %v950, 16
        %v1084 = vrot.slane %v1082, 1
        %v1085 = vor.u32 %v1080, %v1084
        %v1087 = vshll.u32 %v966, 16
        %v1089 = vrot.slane %v1087, 1
        %v1090 = vsel %vm974, %v1085, %v1089
        %v1092 = vshrl.u32 %v951, 16
        %v1094 = vshll.u32 %v951, 16
        %v1096 = vrot.slane %v1094, 1
        %v1097 = vor.u32 %v1092, %v1096
        %v1099 = vshll.u32 %v967, 16
        %v1101 = vrot.slane %v1099, 1
        %v1102 = vsel %vm974, %v1097, %v1101
        %v1104 = vshrl.u32 %v952, 16
        %v1106 = vshll.u32 %v952, 16
        %v1108 = vrot.slane %v1106, 1
        %v1109 = vor.u32 %v1104, %v1108
        %v1111 = vshll.u32 %v968, 16
        %v1113 = vrot.slane %v1111, 1
        %v1114 = vsel %vm974, %v1109, %v1113
        %v1116 = vshrl.u32 %v953, 16
        %v1118 = vshll.u32 %v953, 16
        %v1120 = vrot.slane %v1118, 1
        %v1121 = vor.u32 %v1116, %v1120
        %v1123 = vshll.u32 %v969, 16
        %v1125 = vrot.slane %v1123, 1
        %v1126 = vsel %vm974, %v1121, %v1125
        %v1128 = vshrl.u32 %v954, 16
        %v1130 = vshll.u32 %v954, 16
        %v1132 = vrot.slane %v1130, 1
        %v1133 = vor.u32 %v1128, %v1132
        %v1135 = vshll.u32 %v970, 16
        %v1137 = vrot.slane %v1135, 1
        %v1138 = vsel %vm974, %v1133, %v1137
        %v1140 = vshrl.u32 %v955, 16
        %v1142 = vshll.u32 %v955, 16
        %v1144 = vrot.slane %v1142, 1
        %v1145 = vor.u32 %v1140, %v1144
        %v1147 = vshll.u32 %v971, 16
        %v1149 = vrot.slane %v1147, 1
        %v1150 = vsel %vm974, %v1145, %v1149
        %v1152 = vshrl.u32 %v956, 16
        %v1154 = vshll.u32 %v956, 16
        %v1156 = vrot.slane %v1154, 1
        %v1157 = vor.u32 %v1152, %v1156
        %v1159 = vshll.u32 %v972, 16
        %v1161 = vrot.slane %v1159, 1
        %v1162 = vsel %vm974, %v1157, %v1161
        %1163 = vrot.lane.b32.xlu0 %v982, 4
        %v1164 = vpop.permute.xlu0 %1163
        %1165 = vrot.lane.b32.xlu0 %v994, 4
        %v1166 = vpop.permute.xlu0 %1165
        %1167 = vrot.lane.b32.xlu0 %v1006, 4
        %v1168 = vpop.permute.xlu0 %1167
        %1169 = vrot.lane.b32.xlu0 %v1018, 4
        %v1170 = vpop.permute.xlu0 %1169
        %1171 = vrot.lane.b32.xlu0 %v1030, 4
        %v1172 = vpop.permute.xlu0 %1171
        %1173 = vrot.lane.b32.xlu0 %v1042, 4
        %v1174 = vpop.permute.xlu0 %1173
        %1175 = vrot.lane.b32.xlu0 %v1054, 4
        %v1176 = vpop.permute.xlu0 %1175
        %1177 = vrot.lane.b32.xlu0 %v1066, 4
        %v1178 = vpop.permute.xlu0 %1177
        %1179 = vrot.lane.b32.xlu0 %v1078, 4
        %v1180 = vpop.permute.xlu0 %1179
        %1181 = vrot.lane.b32.xlu0 %v1090, 4
        %v1182 = vpop.permute.xlu0 %1181
        %1183 = vrot.lane.b32.xlu0 %v1102, 4
        %v1184 = vpop.permute.xlu0 %1183
        %1185 = vrot.lane.b32.xlu0 %v1114, 4
        %v1186 = vpop.permute.xlu0 %1185
        %1187 = vrot.lane.b32.xlu0 %v1126, 4
        %v1188 = vpop.permute.xlu0 %1187
        %1189 = vrot.lane.b32.xlu0 %v1138, 4
        %v1190 = vpop.permute.xlu0 %1189
        %1191 = vrot.lane.b32.xlu0 %v1150, 4
        %v1192 = vpop.permute.xlu0 %1191
        %1193 = vrot.lane.b32.xlu0 %v1162, 4
        %v1194 = vpop.permute.xlu0 %1193
        %vm1226 = vcmask 1046528
        %v1227 = vrot.slane 0, 1
        %v1228 = vsel %vm1226, %v1227, %v1227
        %v1229 = vrot.slane %v942, 1
        %v1230 = vrot.slane %v958, 1
        %v1231 = vsel %vm1226, %v1229, %v1230
        %v1232 = vrot.slane %v943, 1
        %v1233 = vrot.slane %v959, 1
        %v1234 = vsel %vm1226, %v1232, %v1233
        %v1235 = vrot.slane %v944, 1
        %v1236 = vrot.slane %v960, 1
        %v1237 = vsel %vm1226, %v1235, %v1236
        %v1238 = vrot.slane %v945, 1
        %v1239 = vrot.slane %v961, 1
        %v1240 = vsel %vm1226, %v1238, %v1239
        %v1241 = vrot.slane %v946, 1
        %v1242 = vrot.slane %v962, 1
        %v1243 = vsel %vm1226, %v1241, %v1242
        %v1244 = vrot.slane %v947, 1
        %v1245 = vrot.slane %v963, 1
        %v1246 = vsel %vm1226, %v1244, %v1245
        %v1247 = vrot.slane %v948, 1
        %v1248 = vrot.slane %v964, 1
        %v1249 = vsel %vm1226, %v1247, %v1248
        %v1250 = vrot.slane %v949, 1
        %v1251 = vrot.slane %v965, 1
        %v1252 = vsel %vm1226, %v1250, %v1251
        %v1253 = vrot.slane %v950, 1
        %v1254 = vrot.slane %v966, 1
        %v1255 = vsel %vm1226, %v1253, %v1254
        %v1256 = vrot.slane %v951, 1
        %v1257 = vrot.slane %v967, 1
        %v1258 = vsel %vm1226, %v1256, %v1257
        %v1259 = vrot.slane %v952, 1
        %v1260 = vrot.slane %v968, 1
        %v1261 = vsel %vm1226, %v1259, %v1260
        %v1262 = vrot.slane %v953, 1
        %v1263 = vrot.slane %v969, 1
        %v1264 = vsel %vm1226, %v1262, %v1263
        %v1265 = vrot.slane %v954, 1
        %v1266 = vrot.slane %v970, 1
        %v1267 = vsel %vm1226, %v1265, %v1266
        %v1268 = vrot.slane %v955, 1
        %v1269 = vrot.slane %v971, 1
        %v1270 = vsel %vm1226, %v1268, %v1269
        %v1271 = vrot.slane %v956, 1
        %v1272 = vrot.slane %v972, 1
        %v1273 = vsel %vm1226, %v1271, %v1272
        %1274 = vrot.lane.b32.xlu0 %v1228, 8
        %v1275 = vpop.permute.xlu0 %1274
        %1276 = vrot.lane.b32.xlu0 %v1231, 8
        %v1277 = vpop.permute.xlu0 %1276
        %1278 = vrot.lane.b32.xlu0 %v1234, 8
        %v1279 = vpop.permute.xlu0 %1278
        %1280 = vrot.lane.b32.xlu0 %v1237, 8
        %v1281 = vpop.permute.xlu0 %1280
        %1282 = vrot.lane.b32.xlu0 %v1240, 8
        %v1283 = vpop.permute.xlu0 %1282
        %1284 = vrot.lane.b32.xlu0 %v1243, 8
        %v1285 = vpop.permute.xlu0 %1284
        %1286 = vrot.lane.b32.xlu0 %v1246, 8
        %v1287 = vpop.permute.xlu0 %1286
        %1288 = vrot.lane.b32.xlu0 %v1249, 8
        %v1289 = vpop.permute.xlu0 %1288
        %1290 = vrot.lane.b32.xlu0 %v1252, 8
        %v1291 = vpop.permute.xlu0 %1290
        %1292 = vrot.lane.b32.xlu0 %v1255, 8
        %v1293 = vpop.permute.xlu0 %1292
        %1294 = vrot.lane.b32.xlu0 %v1258, 8
        %v1295 = vpop.permute.xlu0 %1294
        %1296 = vrot.lane.b32.xlu0 %v1261, 8
        %v1297 = vpop.permute.xlu0 %1296
        %1298 = vrot.lane.b32.xlu0 %v1264, 8
        %v1299 = vpop.permute.xlu0 %1298
        %1300 = vrot.lane.b32.xlu0 %v1267, 8
        %v1301 = vpop.permute.xlu0 %1300
        %1302 = vrot.lane.b32.xlu0 %v1270, 8
        %v1303 = vpop.permute.xlu0 %1302
        %1304 = vrot.lane.b32.xlu0 %v1273, 8
        %v1305 = vpop.permute.xlu0 %1304
        %1307 = vrot.lane.b32.xlu0 %v942, 12
        %v1308 = vpop.permute.xlu0 %1307
        %1309 = vrot.lane.b32.xlu0 %v943, 12
        %v1310 = vpop.permute.xlu0 %1309
        %1311 = vrot.lane.b32.xlu0 %v944, 12
        %v1312 = vpop.permute.xlu0 %1311
        %1313 = vrot.lane.b32.xlu0 %v945, 12
        %v1314 = vpop.permute.xlu0 %1313
        %1315 = vrot.lane.b32.xlu0 %v946, 12
        %v1316 = vpop.permute.xlu0 %1315
        %1317 = vrot.lane.b32.xlu0 %v947, 12
        %v1318 = vpop.permute.xlu0 %1317
        %1319 = vrot.lane.b32.xlu0 %v948, 12
        %v1320 = vpop.permute.xlu0 %1319
        %1321 = vrot.lane.b32.xlu0 %v949, 12
        %v1322 = vpop.permute.xlu0 %1321
        %1323 = vrot.lane.b32.xlu0 %v950, 12
        %v1324 = vpop.permute.xlu0 %1323
        %1325 = vrot.lane.b32.xlu0 %v951, 12
        %v1326 = vpop.permute.xlu0 %1325
        %1327 = vrot.lane.b32.xlu0 %v952, 12
        %v1328 = vpop.permute.xlu0 %1327
        %1329 = vrot.lane.b32.xlu0 %v953, 12
        %v1330 = vpop.permute.xlu0 %1329
        %1331 = vrot.lane.b32.xlu0 %v954, 12
        %v1332 = vpop.permute.xlu0 %1331
        %1333 = vrot.lane.b32.xlu0 %v955, 12
        %v1334 = vpop.permute.xlu0 %1333
        %1335 = vrot.lane.b32.xlu0 %v956, 12
        %v1336 = vpop.permute.xlu0 %1335
        %1337 = vrot.lane.b32.xlu0 %v957, 12
        %v1338 = vpop.permute.xlu0 %1337
        %v1340 = vshrl.u32 %v957, 16
        %v1342 = vshll.u32 %v957, 16
        %v1344 = vrot.slane %v1342, 1
        %v1345 = vor.u32 %v1340, %v1344
        %v1347 = vshll.u32 %v973, 16
        %v1349 = vrot.slane %v1347, 1
        %v1350 = vsel %vm974, %v1345, %v1349
        %1351 = vrot.lane.b32.xlu0 %v994, 16
        %v1352 = vpop.permute.xlu0 %1351
        %1353 = vrot.lane.b32.xlu0 %v1006, 16
        %v1354 = vpop.permute.xlu0 %1353
        %1355 = vrot.lane.b32.xlu0 %v1018, 16
        %v1356 = vpop.permute.xlu0 %1355
        %1357 = vrot.lane.b32.xlu0 %v1030, 16
        %v1358 = vpop.permute.xlu0 %1357
        %1359 = vrot.lane.b32.xlu0 %v1042, 16
        %v1360 = vpop.permute.xlu0 %1359
        %1361 = vrot.lane.b32.xlu0 %v1054, 16
        %v1362 = vpop.permute.xlu0 %1361
        %1363 = vrot.lane.b32.xlu0 %v1066, 16
        %v1364 = vpop.permute.xlu0 %1363
        %1365 = vrot.lane.b32.xlu0 %v1078, 16
        %v1366 = vpop.permute.xlu0 %1365
        %1367 = vrot.lane.b32.xlu0 %v1090, 16
        %v1368 = vpop.permute.xlu0 %1367
        %1369 = vrot.lane.b32.xlu0 %v1102, 16
        %v1370 = vpop.permute.xlu0 %1369
        %1371 = vrot.lane.b32.xlu0 %v1114, 16
        %v1372 = vpop.permute.xlu0 %1371
        %1373 = vrot.lane.b32.xlu0 %v1126, 16
        %v1374 = vpop.permute.xlu0 %1373
        %1375 = vrot.lane.b32.xlu0 %v1138, 16
        %v1376 = vpop.permute.xlu0 %1375
        %1377 = vrot.lane.b32.xlu0 %v1150, 16
        %v1378 = vpop.permute.xlu0 %1377
        %1379 = vrot.lane.b32.xlu0 %v1162, 16
        %v1380 = vpop.permute.xlu0 %1379
        %1381 = vrot.lane.b32.xlu0 %v1350, 16
        %v1382 = vpop.permute.xlu0 %1381
        %v1384 = vrot.slane %v957, 1
        %v1385 = vrot.slane %v973, 1
        %v1386 = vsel %vm1226, %v1384, %v1385
        %1387 = vrot.lane.b32.xlu0 %v1231, 20
        %v1388 = vpop.permute.xlu0 %1387
        %1389 = vrot.lane.b32.xlu0 %v1234, 20
        %v1390 = vpop.permute.xlu0 %1389
        %1391 = vrot.lane.b32.xlu0 %v1237, 20
        %v1392 = vpop.permute.xlu0 %1391
        %1393 = vrot.lane.b32.xlu0 %v1240, 20
        %v1394 = vpop.permute.xlu0 %1393
        %1395 = vrot.lane.b32.xlu0 %v1243, 20
        %v1396 = vpop.permute.xlu0 %1395
        %1397 = vrot.lane.b32.xlu0 %v1246, 20
        %v1398 = vpop.permute.xlu0 %1397
        %1399 = vrot.lane.b32.xlu0 %v1249, 20
        %v1400 = vpop.permute.xlu0 %1399
        %1401 = vrot.lane.b32.xlu0 %v1252, 20
        %v1402 = vpop.permute.xlu0 %1401
        %1403 = vrot.lane.b32.xlu0 %v1255, 20
        %v1404 = vpop.permute.xlu0 %1403
        %1405 = vrot.lane.b32.xlu0 %v1258, 20
        %v1406 = vpop.permute.xlu0 %1405
        %1407 = vrot.lane.b32.xlu0 %v1261, 20
        %v1408 = vpop.permute.xlu0 %1407
        %1409 = vrot.lane.b32.xlu0 %v1264, 20
        %v1410 = vpop.permute.xlu0 %1409
        %1411 = vrot.lane.b32.xlu0 %v1267, 20
        %v1412 = vpop.permute.xlu0 %1411
        %1413 = vrot.lane.b32.xlu0 %v1270, 20
        %v1414 = vpop.permute.xlu0 %1413
        %1415 = vrot.lane.b32.xlu0 %v1273, 20
        %v1416 = vpop.permute.xlu0 %1415
        %1417 = vrot.lane.b32.xlu0 %v1386, 20
        %v1418 = vpop.permute.xlu0 %1417
        %1419 = vrot.lane.b32.xlu0 %v943, 24
        %v1420 = vpop.permute.xlu0 %1419
        %1421 = vrot.lane.b32.xlu0 %v944, 24
        %v1422 = vpop.permute.xlu0 %1421
        %1423 = vrot.lane.b32.xlu0 %v945, 24
        %v1424 = vpop.permute.xlu0 %1423
        %1425 = vrot.lane.b32.xlu0 %v946, 24
        %v1426 = vpop.permute.xlu0 %1425
        %1427 = vrot.lane.b32.xlu0 %v947, 24
        %v1428 = vpop.permute.xlu0 %1427
        %1429 = vrot.lane.b32.xlu0 %v948, 24
        %v1430 = vpop.permute.xlu0 %1429
        %1431 = vrot.lane.b32.xlu0 %v949, 24
        %v1432 = vpop.permute.xlu0 %1431
        %1433 = vrot.lane.b32.xlu0 %v950, 24
        %v1434 = vpop.permute.xlu0 %1433
        %1435 = vrot.lane.b32.xlu0 %v951, 24
        %v1436 = vpop.permute.xlu0 %1435
        %1437 = vrot.lane.b32.xlu0 %v952, 24
        %v1438 = vpop.permute.xlu0 %1437
        %1439 = vrot.lane.b32.xlu0 %v953, 24
        %v1440 = vpop.permute.xlu0 %1439
        %1441 = vrot.lane.b32.xlu0 %v954, 24
        %v1442 = vpop.permute.xlu0 %1441
        %1443 = vrot.lane.b32.xlu0 %v955, 24
        %v1444 = vpop.permute.xlu0 %1443
        %1445 = vrot.lane.b32.xlu0 %v956, 24
        %v1446 = vpop.permute.xlu0 %1445
        %1447 = vrot.lane.b32.xlu0 %v957, 24
        %v1448 = vpop.permute.xlu0 %1447
        %1449 = vrot.lane.b32.xlu0 0, 24
        %v1450 = vpop.permute.xlu0 %1449
        %1451 = vrot.lane.b32.xlu0 %v1006, 28
        %v1452 = vpop.permute.xlu0 %1451
        %1453 = vrot.lane.b32.xlu0 %v1018, 28
        %v1454 = vpop.permute.xlu0 %1453
        %1455 = vrot.lane.b32.xlu0 %v1030, 28
        %v1456 = vpop.permute.xlu0 %1455
        %1457 = vrot.lane.b32.xlu0 %v1042, 28
        %v1458 = vpop.permute.xlu0 %1457
        %1459 = vrot.lane.b32.xlu0 %v1054, 28
        %v1460 = vpop.permute.xlu0 %1459
        %1461 = vrot.lane.b32.xlu0 %v1066, 28
        %v1462 = vpop.permute.xlu0 %1461
        %1463 = vrot.lane.b32.xlu0 %v1078, 28
        %v1464 = vpop.permute.xlu0 %1463
        %1465 = vrot.lane.b32.xlu0 %v1090, 28
        %v1466 = vpop.permute.xlu0 %1465
        %1467 = vrot.lane.b32.xlu0 %v1102, 28
        %v1468 = vpop.permute.xlu0 %1467
        %1469 = vrot.lane.b32.xlu0 %v1114, 28
        %v1470 = vpop.permute.xlu0 %1469
        %1471 = vrot.lane.b32.xlu0 %v1126, 28
        %v1472 = vpop.permute.xlu0 %1471
        %1473 = vrot.lane.b32.xlu0 %v1138, 28
        %v1474 = vpop.permute.xlu0 %1473
        %1475 = vrot.lane.b32.xlu0 %v1150, 28
        %v1476 = vpop.permute.xlu0 %1475
        %1477 = vrot.lane.b32.xlu0 %v1162, 28
        %v1478 = vpop.permute.xlu0 %1477
        %1479 = vrot.lane.b32.xlu0 %v1350, 28
        %v1480 = vpop.permute.xlu0 %1479
        %1481 = vrot.lane.b32.xlu0 %v982, 28
        %v1482 = vpop.permute.xlu0 %1481
        %1483 = vrot.lane.b32.xlu0 %v1234, 32
        %v1484 = vpop.permute.xlu0 %1483
        %1485 = vrot.lane.b32.xlu0 %v1237, 32
        %v1486 = vpop.permute.xlu0 %1485
        %1487 = vrot.lane.b32.xlu0 %v1240, 32
        %v1488 = vpop.permute.xlu0 %1487
        %1489 = vrot.lane.b32.xlu0 %v1243, 32
        %v1490 = vpop.permute.xlu0 %1489
        %1491 = vrot.lane.b32.xlu0 %v1246, 32
        %v1492 = vpop.permute.xlu0 %1491
        %1493 = vrot.lane.b32.xlu0 %v1249, 32
        %v1494 = vpop.permute.xlu0 %1493
        %1495 = vrot.lane.b32.xlu0 %v1252, 32
        %v1496 = vpop.permute.xlu0 %1495
        %1497 = vrot.lane.b32.xlu0 %v1255, 32
        %v1498 = vpop.permute.xlu0 %1497
        %1499 = vrot.lane.b32.xlu0 %v1258, 32
        %v1500 = vpop.permute.xlu0 %1499
        %1501 = vrot.lane.b32.xlu0 %v1261, 32
        %v1502 = vpop.permute.xlu0 %1501
        %1503 = vrot.lane.b32.xlu0 %v1264, 32
        %v1504 = vpop.permute.xlu0 %1503
        %1505 = vrot.lane.b32.xlu0 %v1267, 32
        %v1506 = vpop.permute.xlu0 %1505
        %1507 = vrot.lane.b32.xlu0 %v1270, 32
        %v1508 = vpop.permute.xlu0 %1507
        %1509 = vrot.lane.b32.xlu0 %v1273, 32
        %v1510 = vpop.permute.xlu0 %1509
        %1511 = vrot.lane.b32.xlu0 %v1386, 32
        %v1512 = vpop.permute.xlu0 %1511
        %1513 = vrot.lane.b32.xlu0 %v1228, 32
        %v1514 = vpop.permute.xlu0 %1513
        %vm1515 = vcmask 31744
        %v1517 = vsel %vm1515, 0, %v1164
        %v1519 = vsel %vm1515, %v942, %v1166
        %v1521 = vsel %vm1515, %v943, %v1168
        %v1523 = vsel %vm1515, %v944, %v1170
        %v1525 = vsel %vm1515, %v945, %v1172
        %v1527 = vsel %vm1515, %v946, %v1174
        %v1529 = vsel %vm1515, %v947, %v1176
        %v1531 = vsel %vm1515, %v948, %v1178
        %v1533 = vsel %vm1515, %v949, %v1180
        %v1535 = vsel %vm1515, %v950, %v1182
        %v1537 = vsel %vm1515, %v951, %v1184
        %v1539 = vsel %vm1515, %v952, %v1186
        %v1541 = vsel %vm1515, %v953, %v1188
        %v1543 = vsel %vm1515, %v954, %v1190
        %v1545 = vsel %vm1515, %v955, %v1192
        %v1547 = vsel %vm1515, %v956, %v1194
        %vm1548 = vcmask 64512
        %v1550 = vsel %vm1548, %v1517, %v1275
        %v1552 = vsel %vm1548, %v1519, %v1277
        %v1554 = vsel %vm1548, %v1521, %v1279
        %v1556 = vsel %vm1548, %v1523, %v1281
        %v1558 = vsel %vm1548, %v1525, %v1283
        %v1560 = vsel %vm1548, %v1527, %v1285
        %v1562 = vsel %vm1548, %v1529, %v1287
        %v1564 = vsel %vm1548, %v1531, %v1289
        %v1566 = vsel %vm1548, %v1533, %v1291
        %v1568 = vsel %vm1548, %v1535, %v1293
        %v1570 = vsel %vm1548, %v1537, %v1295
        %v1572 = vsel %vm1548, %v1539, %v1297
        %v1574 = vsel %vm1548, %v1541, %v1299
        %v1576 = vsel %vm1548, %v1543, %v1301
        %v1578 = vsel %vm1548, %v1545, %v1303
        %v1580 = vsel %vm1548, %v1547, %v1305
        %vm1581 = vcmask 97280
        %v1583 = vsel %vm1581, %v1550, %v1308
        %v1585 = vsel %vm1581, %v1552, %v1310
        %v1587 = vsel %vm1581, %v1554, %v1312
        %v1589 = vsel %vm1581, %v1556, %v1314
        %v1591 = vsel %vm1581, %v1558, %v1316
        %v1593 = vsel %vm1581, %v1560, %v1318
        %v1595 = vsel %vm1581, %v1562, %v1320
        %v1597 = vsel %vm1581, %v1564, %v1322
        %v1599 = vsel %vm1581, %v1566, %v1324
        %v1601 = vsel %vm1581, %v1568, %v1326
        %v1603 = vsel %vm1581, %v1570, %v1328
        %v1605 = vsel %vm1581, %v1572, %v1330
        %v1607 = vsel %vm1581, %v1574, %v1332
        %v1609 = vsel %vm1581, %v1576, %v1334
        %v1611 = vsel %vm1581, %v1578, %v1336
        %v1613 = vsel %vm1581, %v1580, %v1338
        %vm1614 = vcmask 130048
        %v1616 = vsel %vm1614, %v1583, %v1352
        %v1618 = vsel %vm1614, %v1585, %v1354
        %v1620 = vsel %vm1614, %v1587, %v1356
        %v1622 = vsel %vm1614, %v1589, %v1358
        %v1624 = vsel %vm1614, %v1591, %v1360
        %v1626 = vsel %vm1614, %v1593, %v1362
        %v1628 = vsel %vm1614, %v1595, %v1364
        %v1630 = vsel %vm1614, %v1597, %v1366
        %v1632 = vsel %vm1614, %v1599, %v1368
        %v1634 = vsel %vm1614, %v1601, %v1370
        %v1636 = vsel %vm1614, %v1603, %v1372
        %v1638 = vsel %vm1614, %v1605, %v1374
        %v1640 = vsel %vm1614, %v1607, %v1376
        %v1642 = vsel %vm1614, %v1609, %v1378
        %v1644 = vsel %vm1614, %v1611, %v1380
        %v1646 = vsel %vm1614, %v1613, %v1382
        %vm1647 = vcmask 162816
        %v1649 = vsel %vm1647, %v1616, %v1388
        %v1651 = vsel %vm1647, %v1618, %v1390
        %v1653 = vsel %vm1647, %v1620, %v1392
        %v1655 = vsel %vm1647, %v1622, %v1394
        %v1657 = vsel %vm1647, %v1624, %v1396
        %v1659 = vsel %vm1647, %v1626, %v1398
        %v1661 = vsel %vm1647, %v1628, %v1400
        %v1663 = vsel %vm1647, %v1630, %v1402
        %v1665 = vsel %vm1647, %v1632, %v1404
        %v1667 = vsel %vm1647, %v1634, %v1406
        %v1669 = vsel %vm1647, %v1636, %v1408
        %v1671 = vsel %vm1647, %v1638, %v1410
        %v1673 = vsel %vm1647, %v1640, %v1412
        %v1675 = vsel %vm1647, %v1642, %v1414
        %v1677 = vsel %vm1647, %v1644, %v1416
        %v1679 = vsel %vm1647, %v1646, %v1418
        %vm1680 = vcmask 195584
        %v1682 = vsel %vm1680, %v1649, %v1420
        %v1684 = vsel %vm1680, %v1651, %v1422
        %v1686 = vsel %vm1680, %v1653, %v1424
        %v1688 = vsel %vm1680, %v1655, %v1426
        %v1690 = vsel %vm1680, %v1657, %v1428
        %v1692 = vsel %vm1680, %v1659, %v1430
        %v1694 = vsel %vm1680, %v1661, %v1432
        %v1696 = vsel %vm1680, %v1663, %v1434
        %v1698 = vsel %vm1680, %v1665, %v1436
        %v1700 = vsel %vm1680, %v1667, %v1438
        %v1702 = vsel %vm1680, %v1669, %v1440
        %v1704 = vsel %vm1680, %v1671, %v1442
        %v1706 = vsel %vm1680, %v1673, %v1444
        %v1708 = vsel %vm1680, %v1675, %v1446
        %v1710 = vsel %vm1680, %v1677, %v1448
        %v1712 = vsel %vm1680, %v1679, %v1450
        %vm1713 = vcmask 228352
        %v1715 = vsel %vm1713, %v1682, %v1452
        %v1717 = vsel %vm1713, %v1684, %v1454
        %v1719 = vsel %vm1713, %v1686, %v1456
        %v1721 = vsel %vm1713, %v1688, %v1458
        %v1723 = vsel %vm1713, %v1690, %v1460
        %v1725 = vsel %vm1713, %v1692, %v1462
        %v1727 = vsel %vm1713, %v1694, %v1464
        %v1729 = vsel %vm1713, %v1696, %v1466
        %v1731 = vsel %vm1713, %v1698, %v1468
        %v1733 = vsel %vm1713, %v1700, %v1470
        %v1735 = vsel %vm1713, %v1702, %v1472
        %v1737 = vsel %vm1713, %v1704, %v1474
        %v1739 = vsel %vm1713, %v1706, %v1476
        %v1741 = vsel %vm1713, %v1708, %v1478
        %v1743 = vsel %vm1713, %v1710, %v1480
        %v1745 = vsel %vm1713, %v1712, %v1482
        %vm1746 = vcmask 261120
        %v1748 = vsel %vm1746, %v1715, %v1484
        %v1750 = vsel %vm1746, %v1717, %v1486
        %v1752 = vsel %vm1746, %v1719, %v1488
        %v1754 = vsel %vm1746, %v1721, %v1490
        %v1756 = vsel %vm1746, %v1723, %v1492
        %v1758 = vsel %vm1746, %v1725, %v1494
        %v1760 = vsel %vm1746, %v1727, %v1496
        %v1762 = vsel %vm1746, %v1729, %v1498
        %v1764 = vsel %vm1746, %v1731, %v1500
        %v1766 = vsel %vm1746, %v1733, %v1502
        %v1768 = vsel %vm1746, %v1735, %v1504
        %v1770 = vsel %vm1746, %v1737, %v1506
        %v1772 = vsel %vm1746, %v1739, %v1508
        %v1774 = vsel %vm1746, %v1741, %v1510
        %v1776 = vsel %vm1746, %v1743, %v1512
        %v1778 = vsel %vm1746, %v1745, %v1514
        %v1779 = vld [vmem:[#allocation5] sm:$0xf]
        %v1780 = vld [vmem:[#allocation5 + $0x4] sm:$0xf]
        %v1781 = vld [vmem:[#allocation5 + $0x8] sm:$0xf]
        %v1782 = vld [vmem:[#allocation5 + $0xc] sm:$0xf]
        %v1783 = vld [vmem:[#allocation5 + $0x10] sm:$0x3]
        %v1789 = vunpack.c.l.b16 %v1779
        %v1790 = vunpack.c.l.b16 %v1780
        %v1791 = vunpack.c.l.b16 %v1781
        %v1792 = vunpack.c.l.b16 %v1782
        %v1793 = vunpack.c.l.b16 %v1783
        %v1794 = vpack.c.b16 %v1790, %v1789
        %v1795 = vpack.c.b16 %v1792, %v1791
        %v1796 = vpack.c.b16 %v1793, %v1793
        %vm1799 = vcmask 293888
        %v1800 = vsel %vm1799, %v1748, 0
        %v1802 = vsel %vm1799, %v1750, 0
        %v1804 = vsel %vm1799, %v1752, 0
        %v1806 = vsel %vm1799, %v1754, 0
        %v1808 = vsel %vm1799, %v1756, 0
        %v1810 = vsel %vm1799, %v1758, 0
        %v1812 = vsel %vm1799, %v1760, 0
        %v1814 = vsel %vm1799, %v1762, 0
        %v1816 = vsel %vm1799, %v1764, 0
        %v1818 = vsel %vm1799, %v1766, 0
        %v1820 = vsel %vm1799, %v1768, 0
        %v1822 = vsel %vm1799, %v1770, 0
        %v1824 = vsel %vm1799, %v1772, 0
        %v1826 = vsel %vm1799, %v1774, 0
        %v1828 = vsel %vm1799, %v1776, 0
        %v1830 = vsel %vm1799, %v1778, 0
        %vm1832 = vcmask 1041408
        %v1834 = vsel %vm1832, %v1796, 0
        %1836 = vmatprep.subr.bf16.mxu0 0
        %1837 = vmatpush1.bf16.msra.mxu0 %v1794
        %1838 = vmatprep.subr.bf16.mxu0 0
        %1839 = vmatpush1.bf16.msra.mxu0 %v1795
        %1840 = vmatprep.subr.bf16.mxu0 0
        %1841 = vmatpush1.bf16.msra.mxu0 %v1834
        %1842 = vmatprep.subr.bf16.mxu0 0
        %1843 = vmatpush1.bf16.msra.mxu0 0
        %1844 = vmatprep.subr.bf16.mxu0 0
        %1845 = vmatpush1.bf16.msra.mxu0 0
        %1846 = vmatprep.subr.bf16.mxu0 0
        %1847 = vmatpush1.bf16.msra.mxu0 0
        %1848 = vmatprep.subr.bf16.mxu0 0
        %1849 = vmatpush1.bf16.msra.mxu0 0
        %1850 = vmatprep.subr.bf16.mxu0 0
        %1851 = vmatpush1.bf16.msra.mxu0 0
        %1852 = vmatprep.subr.bf16.mxu0 0
        %1853 = vmatpush1.bf16.msra.mxu0 0
        %1854 = vmatprep.subr.bf16.mxu0 0
        %1855 = vmatpush1.bf16.msra.mxu0 0
        %1856 = vmatprep.subr.bf16.mxu0 0
        %1857 = vmatpush1.bf16.msra.mxu0 0
        %1858 = vmatprep.subr.bf16.mxu0 0
        %1859 = vmatpush1.bf16.msra.mxu0 0
        %1860 = vmatprep.subr.bf16.mxu0 0
        %1861 = vmatpush1.bf16.msra.mxu0 0
        %1862 = vmatprep.subr.bf16.mxu0 0
        %1863 = vmatpush1.bf16.msra.mxu0 0
        %1864 = vmatprep.subr.bf16.mxu0 0
        %1865 = vmatpush1.bf16.msra.mxu0 0
        %1866 = vmatprep.subr.bf16.mxu0 0
        %1867 = vmatpush1.bf16.msra.mxu0 0
        %1868 = vmatprep.mubr.bf16.mxu0 0
        %1869 = vmatmul.mubr.bf16.gmra.mrb[0].mxu0 %v1800
        %v1870 = vpop.f32.mrb[0].mxu0
        %v1871 = vadd.f32 0.0, %v1870
        %v1872 = vpop.f32.mrb[0].mxu0
        %v1873 = vpop.f32.mrb[0].mxu0
        %v1874 = vadd.f32 0.0, %v1873
        %v1875 = vpop.f32.mrb[0].mxu0
        %1876 = vmatprep.mubr.bf16.mxu0 0
        %1877 = vmatmul.mubr.bf16.gmra.mrb[0].mxu0 %v1802
        %v1878 = vpop.f32.mrb[0].mxu0
        %v1879 = vadd.f32 0.0, %v1878
        %v1880 = vpop.f32.mrb[0].mxu0
        %v1881 = vpop.f32.mrb[0].mxu0
        %v1882 = vadd.f32 0.0, %v1881
        %v1883 = vpop.f32.mrb[0].mxu0
        %1884 = vmatprep.mubr.bf16.mxu0 0
        %1885 = vmatmul.mubr.bf16.gmra.mrb[0].mxu0 %v1804
        %v1886 = vpop.f32.mrb[0].mxu0
        %v1887 = vadd.f32 0.0, %v1886
        %v1888 = vpop.f32.mrb[0].mxu0
        %v1889 = vpop.f32.mrb[0].mxu0
        %v1890 = vadd.f32 0.0, %v1889
        %v1891 = vpop.f32.mrb[0].mxu0
        %1892 = vmatprep.mubr.bf16.mxu0 0
        %1893 = vmatmul.mubr.bf16.gmra.mrb[0].mxu0 %v1806
        %v1894 = vpop.f32.mrb[0].mxu0
        %v1895 = vadd.f32 0.0, %v1894
        %v1896 = vpop.f32.mrb[0].mxu0
        %v1897 = vpop.f32.mrb[0].mxu0
        %v1898 = vadd.f32 0.0, %v1897
        %v1899 = vpop.f32.mrb[0].mxu0
        %1900 = vmatprep.mubr.bf16.mxu0 0
        %1901 = vmatmul.mubr.bf16.gmra.mrb[0].mxu0 %v1808
        %v1902 = vpop.f32.mrb[0].mxu0
        %v1903 = vadd.f32 0.0, %v1902
        %v1904 = vpop.f32.mrb[0].mxu0
        %v1905 = vpop.f32.mrb[0].mxu0
        %v1906 = vadd.f32 0.0, %v1905
        %v1907 = vpop.f32.mrb[0].mxu0
        %1908 = vmatprep.mubr.bf16.mxu0 0
        %1909 = vmatmul.mubr.bf16.gmra.mrb[0].mxu0 %v1810
        %v1910 = vpop.f32.mrb[0].mxu0
        %v1911 = vadd.f32 0.0, %v1910
        %v1912 = vpop.f32.mrb[0].mxu0
        %v1913 = vpop.f32.mrb[0].mxu0
        %v1914 = vadd.f32 0.0, %v1913
        %v1915 = vpop.f32.mrb[0].mxu0
        %1916 = vmatprep.mubr.bf16.mxu0 0
        %1917 = vmatmul.mubr.bf16.gmra.mrb[0].mxu0 %v1812
        %v1918 = vpop.f32.mrb[0].mxu0
        %v1919 = vadd.f32 0.0, %v1918
        %v1920 = vpop.f32.mrb[0].mxu0
        %v1921 = vpop.f32.mrb[0].mxu0
        %v1922 = vadd.f32 0.0, %v1921
        %v1923 = vpop.f32.mrb[0].mxu0
        %1924 = vmatprep.mubr.bf16.mxu0 0
        %1925 = vmatmul.mubr.bf16.gmra.mrb[0].mxu0 %v1814
        %v1926 = vpop.f32.mrb[0].mxu0
        %v1927 = vadd.f32 0.0, %v1926
        %v1928 = vpop.f32.mrb[0].mxu0
        %v1929 = vpop.f32.mrb[0].mxu0
        %v1930 = vadd.f32 0.0, %v1929
        %v1931 = vpop.f32.mrb[0].mxu0
        %1932 = vmatprep.mubr.bf16.mxu0 0
        %1933 = vmatmul.mubr.bf16.gmra.mrb[0].mxu0 %v1816
        %v1934 = vpop.f32.mrb[0].mxu0
        %v1935 = vadd.f32 0.0, %v1934
        %v1936 = vpop.f32.mrb[0].mxu0
        %v1937 = vpop.f32.mrb[0].mxu0
        %v1938 = vadd.f32 0.0, %v1937
        %v1939 = vpop.f32.mrb[0].mxu0
        %1940 = vmatprep.mubr.bf16.mxu0 0
        %1941 = vmatmul.mubr.bf16.gmra.mrb[0].mxu0 %v1818
        %v1942 = vpop.f32.mrb[0].mxu0
        %v1943 = vadd.f32 0.0, %v1942
        %v1944 = vpop.f32.mrb[0].mxu0
        %v1945 = vpop.f32.mrb[0].mxu0
        %v1946 = vadd.f32 0.0, %v1945
        %v1947 = vpop.f32.mrb[0].mxu0
        %1948 = vmatprep.mubr.bf16.mxu0 0
        %1949 = vmatmul.mubr.bf16.gmra.mrb[0].mxu0 %v1820
        %v1950 = vpop.f32.mrb[0].mxu0
        %v1951 = vadd.f32 0.0, %v1950
        %v1952 = vpop.f32.mrb[0].mxu0
        %v1953 = vpop.f32.mrb[0].mxu0
        %v1954 = vadd.f32 0.0, %v1953
        %v1955 = vpop.f32.mrb[0].mxu0
        %1956 = vmatprep.mubr.bf16.mxu0 0
        %1957 = vmatmul.mubr.bf16.gmra.mrb[0].mxu0 %v1822
        %v1958 = vpop.f32.mrb[0].mxu0
        %v1959 = vadd.f32 0.0, %v1958
        %v1960 = vpop.f32.mrb[0].mxu0
        %v1961 = vpop.f32.mrb[0].mxu0
        %v1962 = vadd.f32 0.0, %v1961
        %v1963 = vpop.f32.mrb[0].mxu0
        %1964 = vmatprep.mubr.bf16.mxu0 0
        %1965 = vmatmul.mubr.bf16.gmra.mrb[0].mxu0 %v1824
        %v1966 = vpop.f32.mrb[0].mxu0
        %v1967 = vadd.f32 0.0, %v1966
        %v1968 = vpop.f32.mrb[0].mxu0
        %v1969 = vpop.f32.mrb[0].mxu0
        %v1970 = vadd.f32 0.0, %v1969
        %v1971 = vpop.f32.mrb[0].mxu0
        %1972 = vmatprep.mubr.bf16.mxu0 0
        %1973 = vmatmul.mubr.bf16.gmra.mrb[0].mxu0 %v1826
        %v1974 = vpop.f32.mrb[0].mxu0
        %v1975 = vadd.f32 0.0, %v1974
        %v1976 = vpop.f32.mrb[0].mxu0
        %v1977 = vpop.f32.mrb[0].mxu0
        %v1978 = vadd.f32 0.0, %v1977
        %v1979 = vpop.f32.mrb[0].mxu0
        %1980 = vmatprep.mubr.bf16.mxu0 0
        %1981 = vmatmul.mubr.bf16.gmra.mrb[0].mxu0 %v1828
        %v1982 = vpop.f32.mrb[0].mxu0
        %v1983 = vadd.f32 0.0, %v1982
        %v1984 = vpop.f32.mrb[0].mxu0
        %v1985 = vpop.f32.mrb[0].mxu0
        %v1986 = vadd.f32 0.0, %v1985
        %v1987 = vpop.f32.mrb[0].mxu0
        %1988 = vmatprep.mubr.bf16.mxu0 0
        %1989 = vmatmul.mubr.bf16.gmra.mrb[0].mxu0 %v1830
        %v1990 = vpop.f32.mrb[0].mxu0
        %v1991 = vadd.f32 0.0, %v1990
        %v1992 = vpop.f32.mrb[0].mxu0
        %v1993 = vpop.f32.mrb[0].mxu0
        %v1994 = vadd.f32 0.0, %v1993
        %v1995 = vpop.f32.mrb[0].mxu0
        %1996 = vdwg.mxu0
        %v1997 = vld [vmem:[#allocation7] sm:$0x1]
        %v1998 = vlaneseq
        %v1999 = vshrl.u32 %v1998, 7
        %v2000 = vsub.s32 0, %v1999
        %v2001 = vrot.slane %v1997, %v2000
        %v2002 = vmul.f32 %v1871, %v2001
        %v2003 = vmul.f32 %v1874, %v2001
        %v2004 = vmul.f32 %v1879, %v2001
        %v2005 = vmul.f32 %v1882, %v2001
        %v2006 = vmul.f32 %v1887, %v2001
        %v2007 = vmul.f32 %v1890, %v2001
        %v2008 = vmul.f32 %v1895, %v2001
        %v2009 = vmul.f32 %v1898, %v2001
        %v2010 = vmul.f32 %v1903, %v2001
        %v2011 = vmul.f32 %v1906, %v2001
        %v2012 = vmul.f32 %v1911, %v2001
        %v2013 = vmul.f32 %v1914, %v2001
        %v2014 = vmul.f32 %v1919, %v2001
        %v2015 = vmul.f32 %v1922, %v2001
        %v2016 = vmul.f32 %v1927, %v2001
        %v2017 = vmul.f32 %v1930, %v2001
        %v2018 = vmul.f32 %v1935, %v2001
        %v2019 = vmul.f32 %v1938, %v2001
        %v2020 = vmul.f32 %v1943, %v2001
        %v2021 = vmul.f32 %v1946, %v2001
        %v2022 = vmul.f32 %v1951, %v2001
        %v2023 = vmul.f32 %v1954, %v2001
        %v2024 = vmul.f32 %v1959, %v2001
        %v2025 = vmul.f32 %v1962, %v2001
        %v2026 = vmul.f32 %v1967, %v2001
        %v2027 = vmul.f32 %v1970, %v2001
        %v2028 = vmul.f32 %v1975, %v2001
        %v2029 = vmul.f32 %v1978, %v2001
        %v2030 = vmul.f32 %v1983, %v2001
        %v2031 = vmul.f32 %v1986, %v2001
        %v2032 = vmul.f32 %v1991, %v2001
        %v2033 = vmul.f32 %v1994, %v2001
        %v2034 = vld [vmem:[#allocation7 + $0x1] sm:$0x1]
        %v2035 = vlaneseq
        %v2036 = vshrl.u32 %v2035, 7
        %v2037 = vsub.s32 0, %v2036
        %v2038 = vrot.slane %v2034, %v2037
        %v2039 = vadd.f32 %v2002, %v2038
        %v2040 = vadd.f32 %v2003, %v2038
        %v2041 = vadd.f32 %v2004, %v2038
        %v2042 = vadd.f32 %v2005, %v2038
        %v2043 = vadd.f32 %v2006, %v2038
        %v2044 = vadd.f32 %v2007, %v2038
        %v2045 = vadd.f32 %v2008, %v2038
        %v2046 = vadd.f32 %v2009, %v2038
        %v2047 = vadd.f32 %v2010, %v2038
        %v2048 = vadd.f32 %v2011, %v2038
        %v2049 = vadd.f32 %v2012, %v2038
        %v2050 = vadd.f32 %v2013, %v2038
        %v2051 = vadd.f32 %v2014, %v2038
        %v2052 = vadd.f32 %v2015, %v2038
        %v2053 = vadd.f32 %v2016, %v2038
        %v2054 = vadd.f32 %v2017, %v2038
        %v2055 = vadd.f32 %v2018, %v2038
        %v2056 = vadd.f32 %v2019, %v2038
        %v2057 = vadd.f32 %v2020, %v2038
        %v2058 = vadd.f32 %v2021, %v2038
        %v2059 = vadd.f32 %v2022, %v2038
        %v2060 = vadd.f32 %v2023, %v2038
        %v2061 = vadd.f32 %v2024, %v2038
        %v2062 = vadd.f32 %v2025, %v2038
        %v2063 = vadd.f32 %v2026, %v2038
        %v2064 = vadd.f32 %v2027, %v2038
        %v2065 = vadd.f32 %v2028, %v2038
        %v2066 = vadd.f32 %v2029, %v2038
        %v2067 = vadd.f32 %v2030, %v2038
        %v2068 = vadd.f32 %v2031, %v2038
        %v2069 = vadd.f32 %v2032, %v2038
        %v2070 = vadd.f32 %v2033, %v2038
        %v2071 = vmax.f32 %v2039, 0.0
        %v2072 = vmax.f32 %v2040, 0.0
        %v2073 = vmax.f32 %v2041, 0.0
        %v2074 = vmax.f32 %v2042, 0.0
        %v2075 = vmax.f32 %v2043, 0.0
        %v2076 = vmax.f32 %v2044, 0.0
        %v2077 = vmax.f32 %v2045, 0.0
        %v2078 = vmax.f32 %v2046, 0.0
        %v2079 = vmax.f32 %v2047, 0.0
        %v2080 = vmax.f32 %v2048, 0.0
        %v2081 = vmax.f32 %v2049, 0.0
        %v2082 = vmax.f32 %v2050, 0.0
        %v2083 = vmax.f32 %v2051, 0.0
        %v2084 = vmax.f32 %v2052, 0.0
        %v2085 = vmax.f32 %v2053, 0.0
        %v2086 = vmax.f32 %v2054, 0.0
        %v2087 = vmax.f32 %v2055, 0.0
        %v2088 = vmax.f32 %v2056, 0.0
        %v2089 = vmax.f32 %v2057, 0.0
        %v2090 = vmax.f32 %v2058, 0.0
        %v2091 = vmax.f32 %v2059, 0.0
        %v2092 = vmax.f32 %v2060, 0.0
        %v2093 = vmax.f32 %v2061, 0.0
        %v2094 = vmax.f32 %v2062, 0.0
        %v2095 = vmax.f32 %v2063, 0.0
        %v2096 = vmax.f32 %v2064, 0.0
        %v2097 = vmax.f32 %v2065, 0.0
        %v2098 = vmax.f32 %v2066, 0.0
        %v2099 = vmax.f32 %v2067, 0.0
        %v2100 = vmax.f32 %v2068, 0.0
        %v2101 = vmax.f32 %v2069, 0.0
        %v2102 = vmax.f32 %v2070, 0.0
        %v2103 = vpack.c.bf16 %v2072, %v2071
        %v2104 = vpack.c.bf16 %v2074, %v2073
        %v2105 = vpack.c.bf16 %v2076, %v2075
        %v2106 = vpack.c.bf16 %v2078, %v2077
        %v2107 = vpack.c.bf16 %v2080, %v2079
        %v2108 = vpack.c.bf16 %v2082, %v2081
        %v2109 = vpack.c.bf16 %v2084, %v2083
        %v2110 = vpack.c.bf16 %v2086, %v2085
        %v2111 = vpack.c.bf16 %v2088, %v2087
        %v2112 = vpack.c.bf16 %v2090, %v2089
        %v2113 = vpack.c.bf16 %v2092, %v2091
        %v2114 = vpack.c.bf16 %v2094, %v2093
        %v2115 = vpack.c.bf16 %v2096, %v2095
        %v2116 = vpack.c.bf16 %v2098, %v2097
        %v2117 = vpack.c.bf16 %v2100, %v2099
        %v2118 = vpack.c.bf16 %v2102, %v2101
        %v2120 = vshrl.u32 %v2103, 16
        %v2122 = vrot.slane %v2120, 7
        %v2123 = vshll.u32 %v2103, 16
        %v2125 = vor.u32 %v2122, %v2123
        %v2127 = vshrl.u32 %v2104, 16
        %v2129 = vrot.slane %v2127, 7
        %v2130 = vshll.u32 %v2104, 16
        %v2132 = vor.u32 %v2129, %v2130
        %v2134 = vshrl.u32 %v2105, 16
        %v2136 = vrot.slane %v2134, 7
        %v2137 = vshll.u32 %v2105, 16
        %v2139 = vor.u32 %v2136, %v2137
        %v2141 = vshrl.u32 %v2106, 16
        %v2143 = vrot.slane %v2141, 7
        %v2144 = vshll.u32 %v2106, 16
        %v2146 = vor.u32 %v2143, %v2144
        %v2148 = vshrl.u32 %v2107, 16
        %v2150 = vrot.slane %v2148, 7
        %v2151 = vshll.u32 %v2107, 16
        %v2153 = vor.u32 %v2150, %v2151
        %v2155 = vshrl.u32 %v2108, 16
        %v2157 = vrot.slane %v2155, 7
        %v2158 = vshll.u32 %v2108, 16
        %v2160 = vor.u32 %v2157, %v2158
        %v2162 = vshrl.u32 %v2109, 16
        %v2164 = vrot.slane %v2162, 7
        %v2165 = vshll.u32 %v2109, 16
        %v2167 = vor.u32 %v2164, %v2165
        %v2169 = vshrl.u32 %v2110, 16
        %v2171 = vrot.slane %v2169, 7
        %v2172 = vshll.u32 %v2110, 16
        %v2174 = vor.u32 %v2171, %v2172
        %v2176 = vshrl.u32 %v2111, 16
        %v2178 = vrot.slane %v2176, 7
        %v2179 = vshll.u32 %v2111, 16
        %v2181 = vor.u32 %v2178, %v2179
        %v2183 = vshrl.u32 %v2112, 16
        %v2185 = vrot.slane %v2183, 7
        %v2186 = vshll.u32 %v2112, 16
        %v2188 = vor.u32 %v2185, %v2186
        %v2190 = vshrl.u32 %v2113, 16
        %v2192 = vrot.slane %v2190, 7
        %v2193 = vshll.u32 %v2113, 16
        %v2195 = vor.u32 %v2192, %v2193
        %v2197 = vshrl.u32 %v2114, 16
        %v2199 = vrot.slane %v2197, 7
        %v2200 = vshll.u32 %v2114, 16
        %v2202 = vor.u32 %v2199, %v2200
        %v2204 = vshrl.u32 %v2115, 16
        %v2206 = vrot.slane %v2204, 7
        %v2207 = vshll.u32 %v2115, 16
        %v2209 = vor.u32 %v2206, %v2207
        %v2211 = vshrl.u32 %v2116, 16
        %v2213 = vrot.slane %v2211, 7
        %v2214 = vshll.u32 %v2116, 16
        %v2216 = vor.u32 %v2213, %v2214
        %v2218 = vshrl.u32 %v2117, 16
        %v2220 = vrot.slane %v2218, 7
        %v2221 = vshll.u32 %v2117, 16
        %v2223 = vor.u32 %v2220, %v2221
        %v2225 = vshrl.u32 %v2118, 16
        %v2227 = vrot.slane %v2225, 7
        %v2228 = vshll.u32 %v2118, 16
        %v2230 = vor.u32 %v2227, %v2228
        %v2263 = vsel %vm941, 0, %v2125
        %v2264 = vsel %vm941, 0, %v2132
        %v2265 = vsel %vm941, 0, %v2139
        %v2266 = vsel %vm941, 0, %v2146
        %v2267 = vsel %vm941, 0, %v2153
        %v2268 = vsel %vm941, 0, %v2160
        %v2269 = vsel %vm941, 0, %v2167
        %v2270 = vsel %vm941, 0, %v2174
        %v2271 = vsel %vm941, 0, %v2181
        %v2272 = vsel %vm941, 0, %v2188
        %v2273 = vsel %vm941, 0, %v2195
        %v2274 = vsel %vm941, 0, %v2202
        %v2275 = vsel %vm941, 0, %v2209
        %v2276 = vsel %vm941, 0, %v2216
        %v2277 = vsel %vm941, 0, %v2223
        %v2278 = vsel %vm941, 0, %v2230
        %v2279 = vsel %vm941, %v2122, 0
        %v2280 = vsel %vm941, %v2129, 0
        %v2281 = vsel %vm941, %v2136, 0
        %v2282 = vsel %vm941, %v2143, 0
        %v2283 = vsel %vm941, %v2150, 0
        %v2284 = vsel %vm941, %v2157, 0
        %v2285 = vsel %vm941, %v2164, 0
        %v2286 = vsel %vm941, %v2171, 0
        %v2287 = vsel %vm941, %v2178, 0
        %v2288 = vsel %vm941, %v2185, 0
        %v2289 = vsel %vm941, %v2192, 0
        %v2290 = vsel %vm941, %v2199, 0
        %v2291 = vsel %vm941, %v2206, 0
        %v2292 = vsel %vm941, %v2213, 0
        %v2293 = vsel %vm941, %v2220, 0
        %v2294 = vsel %vm941, %v2227, 0
        %v2296 = vshrl.u32 %v2263, 16
        %v2298 = vshll.u32 %v2263, 16
        %v2300 = vrot.slane %v2298, 1
        %v2301 = vor.u32 %v2296, %v2300
        %v2303 = vshll.u32 %v2279, 16
        %v2305 = vrot.slane %v2303, 1
        %v2306 = vsel %vm974, %v2301, %v2305
        %v2308 = vshrl.u32 %v2264, 16
        %v2310 = vshll.u32 %v2264, 16
        %v2312 = vrot.slane %v2310, 1
        %v2313 = vor.u32 %v2308, %v2312
        %v2315 = vshll.u32 %v2280, 16
        %v2317 = vrot.slane %v2315, 1
        %v2318 = vsel %vm974, %v2313, %v2317
        %v2320 = vshrl.u32 %v2265, 16
        %v2322 = vshll.u32 %v2265, 16
        %v2324 = vrot.slane %v2322, 1
        %v2325 = vor.u32 %v2320, %v2324
        %v2327 = vshll.u32 %v2281, 16
        %v2329 = vrot.slane %v2327, 1
        %v2330 = vsel %vm974, %v2325, %v2329
        %v2332 = vshrl.u32 %v2266, 16
        %v2334 = vshll.u32 %v2266, 16
        %v2336 = vrot.slane %v2334, 1
        %v2337 = vor.u32 %v2332, %v2336
        %v2339 = vshll.u32 %v2282, 16
        %v2341 = vrot.slane %v2339, 1
        %v2342 = vsel %vm974, %v2337, %v2341
        %v2344 = vshrl.u32 %v2267, 16
        %v2346 = vshll.u32 %v2267, 16
        %v2348 = vrot.slane %v2346, 1
        %v2349 = vor.u32 %v2344, %v2348
        %v2351 = vshll.u32 %v2283, 16
        %v2353 = vrot.slane %v2351, 1
        %v2354 = vsel %vm974, %v2349, %v2353
        %v2356 = vshrl.u32 %v2268, 16
        %v2358 = vshll.u32 %v2268, 16
        %v2360 = vrot.slane %v2358, 1
        %v2361 = vor.u32 %v2356, %v2360
        %v2363 = vshll.u32 %v2284, 16
        %v2365 = vrot.slane %v2363, 1
        %v2366 = vsel %vm974, %v2361, %v2365
        %v2368 = vshrl.u32 %v2269, 16
        %v2370 = vshll.u32 %v2269, 16
        %v2372 = vrot.slane %v2370, 1
        %v2373 = vor.u32 %v2368, %v2372
        %v2375 = vshll.u32 %v2285, 16
        %v2377 = vrot.slane %v2375, 1
        %v2378 = vsel %vm974, %v2373, %v2377
        %v2380 = vshrl.u32 %v2270, 16
        %v2382 = vshll.u32 %v2270, 16
        %v2384 = vrot.slane %v2382, 1
        %v2385 = vor.u32 %v2380, %v2384
        %v2387 = vshll.u32 %v2286, 16
        %v2389 = vrot.slane %v2387, 1
        %v2390 = vsel %vm974, %v2385, %v2389
        %v2392 = vshrl.u32 %v2271, 16
        %v2394 = vshll.u32 %v2271, 16
        %v2396 = vrot.slane %v2394, 1
        %v2397 = vor.u32 %v2392, %v2396
        %v2399 = vshll.u32 %v2287, 16
        %v2401 = vrot.slane %v2399, 1
        %v2402 = vsel %vm974, %v2397, %v2401
        %v2404 = vshrl.u32 %v2272, 16
        %v2406 = vshll.u32 %v2272, 16
        %v2408 = vrot.slane %v2406, 1
        %v2409 = vor.u32 %v2404, %v2408
        %v2411 = vshll.u32 %v2288, 16
        %v2413 = vrot.slane %v2411, 1
        %v2414 = vsel %vm974, %v2409, %v2413
        %v2416 = vshrl.u32 %v2273, 16
        %v2418 = vshll.u32 %v2273, 16
        %v2420 = vrot.slane %v2418, 1
        %v2421 = vor.u32 %v2416, %v2420
        %v2423 = vshll.u32 %v2289, 16
        %v2425 = vrot.slane %v2423, 1
        %v2426 = vsel %vm974, %v2421, %v2425
        %v2428 = vshrl.u32 %v2274, 16
        %v2430 = vshll.u32 %v2274, 16
        %v2432 = vrot.slane %v2430, 1
        %v2433 = vor.u32 %v2428, %v2432
        %v2435 = vshll.u32 %v2290, 16
        %v2437 = vrot.slane %v2435, 1
        %v2438 = vsel %vm974, %v2433, %v2437
        %v2440 = vshrl.u32 %v2275, 16
        %v2442 = vshll.u32 %v2275, 16
        %v2444 = vrot.slane %v2442, 1
        %v2445 = vor.u32 %v2440, %v2444
        %v2447 = vshll.u32 %v2291, 16
        %v2449 = vrot.slane %v2447, 1
        %v2450 = vsel %vm974, %v2445, %v2449
        %v2452 = vshrl.u32 %v2276, 16
        %v2454 = vshll.u32 %v2276, 16
        %v2456 = vrot.slane %v2454, 1
        %v2457 = vor.u32 %v2452, %v2456
        %v2459 = vshll.u32 %v2292, 16
        %v2461 = vrot.slane %v2459, 1
        %v2462 = vsel %vm974, %v2457, %v2461
        %v2464 = vshrl.u32 %v2277, 16
        %v2466 = vshll.u32 %v2277, 16
        %v2468 = vrot.slane %v2466, 1
        %v2469 = vor.u32 %v2464, %v2468
        %v2471 = vshll.u32 %v2293, 16
        %v2473 = vrot.slane %v2471, 1
        %v2474 = vsel %vm974, %v2469, %v2473
        %2475 = vrot.lane.b32.xlu0 %v982, 64
        %v2476 = vpop.permute.xlu0 %2475
        %2477 = vrot.lane.b32.xlu0 %v2306, 64
        %v2478 = vpop.permute.xlu0 %2477
        %2479 = vrot.lane.b32.xlu0 %v2318, 64
        %v2480 = vpop.permute.xlu0 %2479
        %2481 = vrot.lane.b32.xlu0 %v2330, 64
        %v2482 = vpop.permute.xlu0 %2481
        %2483 = vrot.lane.b32.xlu0 %v2342, 64
        %v2484 = vpop.permute.xlu0 %2483
        %2485 = vrot.lane.b32.xlu0 %v2354, 64
        %v2486 = vpop.permute.xlu0 %2485
        %2487 = vrot.lane.b32.xlu0 %v2366, 64
        %v2488 = vpop.permute.xlu0 %2487
        %2489 = vrot.lane.b32.xlu0 %v2378, 64
        %v2490 = vpop.permute.xlu0 %2489
        %2491 = vrot.lane.b32.xlu0 %v2390, 64
        %v2492 = vpop.permute.xlu0 %2491
        %2493 = vrot.lane.b32.xlu0 %v2402, 64
        %v2494 = vpop.permute.xlu0 %2493
        %2495 = vrot.lane.b32.xlu0 %v2414, 64
        %v2496 = vpop.permute.xlu0 %2495
        %2497 = vrot.lane.b32.xlu0 %v2426, 64
        %v2498 = vpop.permute.xlu0 %2497
        %2499 = vrot.lane.b32.xlu0 %v2438, 64
        %v2500 = vpop.permute.xlu0 %2499
        %2501 = vrot.lane.b32.xlu0 %v2450, 64
        %v2502 = vpop.permute.xlu0 %2501
        %2503 = vrot.lane.b32.xlu0 %v2462, 64
        %v2504 = vpop.permute.xlu0 %2503
        %2505 = vrot.lane.b32.xlu0 %v2474, 64
        %v2506 = vpop.permute.xlu0 %2505
        %v2537 = vrot.slane %v2263, 1
        %v2538 = vrot.slane %v2279, 1
        %v2539 = vsel %vm1226, %v2537, %v2538
        %v2540 = vrot.slane %v2264, 1
        %v2541 = vrot.slane %v2280, 1
        %v2542 = vsel %vm1226, %v2540, %v2541
        %v2543 = vrot.slane %v2265, 1
        %v2544 = vrot.slane %v2281, 1
        %v2545 = vsel %vm1226, %v2543, %v2544
        %v2546 = vrot.slane %v2266, 1
        %v2547 = vrot.slane %v2282, 1
        %v2548 = vsel %vm1226, %v2546, %v2547
        %v2549 = vrot.slane %v2267, 1
        %v2550 = vrot.slane %v2283, 1
        %v2551 = vsel %vm1226, %v2549, %v2550
        %v2552 = vrot.slane %v2268, 1
        %v2553 = vrot.slane %v2284, 1
        %v2554 = vsel %vm1226, %v2552, %v2553
        %v2555 = vrot.slane %v2269, 1
        %v2556 = vrot.slane %v2285, 1
        %v2557 = vsel %vm1226, %v2555, %v2556
        %v2558 = vrot.slane %v2270, 1
        %v2559 = vrot.slane %v2286, 1
        %v2560 = vsel %vm1226, %v2558, %v2559
        %v2561 = vrot.slane %v2271, 1
        %v2562 = vrot.slane %v2287, 1
        %v2563 = vsel %vm1226, %v2561, %v2562
        %v2564 = vrot.slane %v2272, 1
        %v2565 = vrot.slane %v2288, 1
        %v2566 = vsel %vm1226, %v2564, %v2565
        %v2567 = vrot.slane %v2273, 1
        %v2568 = vrot.slane %v2289, 1
        %v2569 = vsel %vm1226, %v2567, %v2568
        %v2570 = vrot.slane %v2274, 1
        %v2571 = vrot.slane %v2290, 1
        %v2572 = vsel %vm1226, %v2570, %v2571
        %v2573 = vrot.slane %v2275, 1
        %v2574 = vrot.slane %v2291, 1
        %v2575 = vsel %vm1226, %v2573, %v2574
        %v2576 = vrot.slane %v2276, 1
        %v2577 = vrot.slane %v2292, 1
        %v2578 = vsel %vm1226, %v2576, %v2577
        %v2579 = vrot.slane %v2277, 1
        %v2580 = vrot.slane %v2293, 1
        %v2581 = vsel %vm1226, %v2579, %v2580
        %2583 = vrot.lane.b32.xlu0 %v2263, 64
        %v2584 = vpop.permute.xlu0 %2583
        %2585 = vrot.lane.b32.xlu0 %v2264, 64
        %v2586 = vpop.permute.xlu0 %2585
        %2587 = vrot.lane.b32.xlu0 %v2265, 64
        %v2588 = vpop.permute.xlu0 %2587
        %2589 = vrot.lane.b32.xlu0 %v2266, 64
        %v2590 = vpop.permute.xlu0 %2589
        %2591 = vrot.lane.b32.xlu0 %v2267, 64
        %v2592 = vpop.permute.xlu0 %2591
        %2593 = vrot.lane.b32.xlu0 %v2268, 64
        %v2594 = vpop.permute.xlu0 %2593
        %2595 = vrot.lane.b32.xlu0 %v2269, 64
        %v2596 = vpop.permute.xlu0 %2595
        %2597 = vrot.lane.b32.xlu0 %v2270, 64
        %v2598 = vpop.permute.xlu0 %2597
        %2599 = vrot.lane.b32.xlu0 %v2271, 64
        %v2600 = vpop.permute.xlu0 %2599
        %2601 = vrot.lane.b32.xlu0 %v2272, 64
        %v2602 = vpop.permute.xlu0 %2601
        %2603 = vrot.lane.b32.xlu0 %v2273, 64
        %v2604 = vpop.permute.xlu0 %2603
        %2605 = vrot.lane.b32.xlu0 %v2274, 64
        %v2606 = vpop.permute.xlu0 %2605
        %2607 = vrot.lane.b32.xlu0 %v2275, 64
        %v2608 = vpop.permute.xlu0 %2607
        %2609 = vrot.lane.b32.xlu0 %v2276, 64
        %v2610 = vpop.permute.xlu0 %2609
        %2611 = vrot.lane.b32.xlu0 %v2277, 64
        %v2612 = vpop.permute.xlu0 %2611
        %2613 = vrot.lane.b32.xlu0 %v2278, 64
        %v2614 = vpop.permute.xlu0 %2613
        %v2616 = vshrl.u32 %v2278, 16
        %v2618 = vshll.u32 %v2278, 16
        %v2620 = vrot.slane %v2618, 1
        %v2621 = vor.u32 %v2616, %v2620
        %v2623 = vshll.u32 %v2294, 16
        %v2625 = vrot.slane %v2623, 1
        %v2626 = vsel %vm974, %v2621, %v2625
        %v2628 = vrot.slane %v2278, 1
        %v2629 = vrot.slane %v2294, 1
        %v2630 = vsel %vm1226, %v2628, %v2629
        %2631 = vrot.lane.b32.xlu0 %v2539, 64
        %v2632 = vpop.permute.xlu0 %2631
        %2633 = vrot.lane.b32.xlu0 %v2542, 64
        %v2634 = vpop.permute.xlu0 %2633
        %2635 = vrot.lane.b32.xlu0 %v2545, 64
        %v2636 = vpop.permute.xlu0 %2635
        %2637 = vrot.lane.b32.xlu0 %v2548, 64
        %v2638 = vpop.permute.xlu0 %2637
        %2639 = vrot.lane.b32.xlu0 %v2551, 64
        %v2640 = vpop.permute.xlu0 %2639
        %2641 = vrot.lane.b32.xlu0 %v2554, 64
        %v2642 = vpop.permute.xlu0 %2641
        %2643 = vrot.lane.b32.xlu0 %v2557, 64
        %v2644 = vpop.permute.xlu0 %2643
        %2645 = vrot.lane.b32.xlu0 %v2560, 64
        %v2646 = vpop.permute.xlu0 %2645
        %2647 = vrot.lane.b32.xlu0 %v2563, 64
        %v2648 = vpop.permute.xlu0 %2647
        %2649 = vrot.lane.b32.xlu0 %v2566, 64
        %v2650 = vpop.permute.xlu0 %2649
        %2651 = vrot.lane.b32.xlu0 %v2569, 64
        %v2652 = vpop.permute.xlu0 %2651
        %2653 = vrot.lane.b32.xlu0 %v2572, 64
        %v2654 = vpop.permute.xlu0 %2653
        %2655 = vrot.lane.b32.xlu0 %v2575, 64
        %v2656 = vpop.permute.xlu0 %2655
        %2657 = vrot.lane.b32.xlu0 %v2578, 64
        %v2658 = vpop.permute.xlu0 %2657
        %2659 = vrot.lane.b32.xlu0 %v2581, 64
        %v2660 = vpop.permute.xlu0 %2659
        %2661 = vrot.lane.b32.xlu0 %v2630, 64
        %v2662 = vpop.permute.xlu0 %2661
        %2663 = vrot.lane.b32.xlu0 %v2626, 64
        %v2664 = vpop.permute.xlu0 %2663
        %vm2665 = vcmask 523264
        %v2667 = vsel %vm2665, 0, %v2476
        %v2670 = vsel %vm2665, %v2263, %v2478
        %v2673 = vsel %vm2665, %v2264, %v2480
        %v2676 = vsel %vm2665, %v2265, %v2482
        %v2679 = vsel %vm2665, %v2266, %v2484
        %v2682 = vsel %vm2665, %v2267, %v2486
        %v2685 = vsel %vm2665, %v2268, %v2488
        %v2688 = vsel %vm2665, %v2269, %v2490
        %v2691 = vsel %vm2665, %v2270, %v2492
        %v2694 = vsel %vm2665, %v2271, %v2494
        %v2697 = vsel %vm2665, %v2272, %v2496
        %v2700 = vsel %vm2665, %v2273, %v2498
        %v2703 = vsel %vm2665, %v2274, %v2500
        %v2706 = vsel %vm2665, %v2275, %v2502
        %v2709 = vsel %vm2665, %v2276, %v2504
        %v2712 = vsel %vm2665, %v2277, %v2506
        %v2716 = vsel %vm2665, %v1228, %v2584
        %v2720 = vsel %vm2665, %v2539, %v2586
        %v2724 = vsel %vm2665, %v2542, %v2588
        %v2728 = vsel %vm2665, %v2545, %v2590
        %v2732 = vsel %vm2665, %v2548, %v2592
        %v2736 = vsel %vm2665, %v2551, %v2594
        %v2740 = vsel %vm2665, %v2554, %v2596
        %v2744 = vsel %vm2665, %v2557, %v2598
        %v2748 = vsel %vm2665, %v2560, %v2600
        %v2752 = vsel %vm2665, %v2563, %v2602
        %v2756 = vsel %vm2665, %v2566, %v2604
        %v2760 = vsel %vm2665, %v2569, %v2606
        %v2764 = vsel %vm2665, %v2572, %v2608
        %v2768 = vsel %vm2665, %v2575, %v2610
        %v2772 = vsel %vm2665, %v2578, %v2612
        %v2776 = vsel %vm2665, %v2581, %v2614
        %v2780 = vsel %vm2665, %v2306, %v2632
        %v2784 = vsel %vm2665, %v2318, %v2634
        %v2788 = vsel %vm2665, %v2330, %v2636
        %v2792 = vsel %vm2665, %v2342, %v2638
        %v2796 = vsel %vm2665, %v2354, %v2640
        %v2800 = vsel %vm2665, %v2366, %v2642
        %v2804 = vsel %vm2665, %v2378, %v2644
        %v2808 = vsel %vm2665, %v2390, %v2646
        %v2812 = vsel %vm2665, %v2402, %v2648
        %v2816 = vsel %vm2665, %v2414, %v2650
        %v2820 = vsel %vm2665, %v2426, %v2652
        %v2824 = vsel %vm2665, %v2438, %v2654
        %v2828 = vsel %vm2665, %v2450, %v2656
        %v2832 = vsel %vm2665, %v2462, %v2658
        %v2836 = vsel %vm2665, %v2474, %v2660
        %v2840 = vsel %vm2665, %v2626, %v2662
        %v2843 = vsel %vm2665, %v2278, %v2664
        %v2845 = vld [vmem:[#allocation8] sm:$0xf]
        %v2846 = vld [vmem:[#allocation8 + $0x4] sm:$0xf]
        %v2847 = vld [vmem:[#allocation8 + $0x8] sm:$0xf]
        %v2848 = vld [vmem:[#allocation8 + $0xc] sm:$0xf]
        %v2849 = vld [vmem:[#allocation8 + $0x10] sm:$0xf]
        %v2850 = vld [vmem:[#allocation8 + $0x14] sm:$0xf]
        %v2851 = vld [vmem:[#allocation8 + $0x18] sm:$0xf]
        %v2852 = vld [vmem:[#allocation8 + $0x1c] sm:$0xf]
        %v2853 = vld [vmem:[#allocation8 + $0x20] sm:$0xf]
        %v2854 = vld [vmem:[#allocation8 + $0x24] sm:$0xf]
        %v2855 = vld [vmem:[#allocation8 + $0x28] sm:$0xf]
        %v2856 = vld [vmem:[#allocation8 + $0x2c] sm:$0xf]
        %v2857 = vld [vmem:[#allocation8 + $0x30] sm:$0xf]
        %v2858 = vld [vmem:[#allocation8 + $0x34] sm:$0xf]
        %v2859 = vld [vmem:[#allocation8 + $0x38] sm:$0xf]
        %v2860 = vld [vmem:[#allocation8 + $0x3c] sm:$0xf]
        %v2861 = vld [vmem:[#allocation8 + $0x40] sm:$0xf]
        %v2862 = vld [vmem:[#allocation8 + $0x44] sm:$0xf]
        %v2863 = vld [vmem:[#allocation8 + $0x48] sm:$0xf]
        %v2864 = vld [vmem:[#allocation8 + $0x4c] sm:$0xf]
        %v2865 = vld [vmem:[#allocation8 + $0x50] sm:$0xf]
        %v2866 = vld [vmem:[#allocation8 + $0x54] sm:$0xf]
        %v2867 = vld [vmem:[#allocation8 + $0x58] sm:$0xf]
        %v2868 = vld [vmem:[#allocation8 + $0x5c] sm:$0xf]
        %v2869 = vld [vmem:[#allocation8 + $0x60] sm:$0xf]
        %v2870 = vld [vmem:[#allocation8 + $0x64] sm:$0xf]
        %v2871 = vld [vmem:[#allocation8 + $0x68] sm:$0xf]
        %v2872 = vld [vmem:[#allocation8 + $0x6c] sm:$0xf]
        %v2873 = vld [vmem:[#allocation8 + $0x70] sm:$0xf]
        %v2874 = vld [vmem:[#allocation8 + $0x74] sm:$0xf]
        %v2875 = vld [vmem:[#allocation8 + $0x78] sm:$0xf]
        %v2876 = vld [vmem:[#allocation8 + $0x7c] sm:$0xf]
        %v2877 = vld [vmem:[#allocation8 + $0x80] sm:$0xf]
        %v2878 = vld [vmem:[#allocation8 + $0x84] sm:$0xf]
        %v2879 = vld [vmem:[#allocation8 + $0x88] sm:$0xf]
        %v2880 = vld [vmem:[#allocation8 + $0x8c] sm:$0xf]
        %v2881 = vld [vmem:[#allocation8 + $0x90] sm:$0xf]
        %v2882 = vld [vmem:[#allocation8 + $0x94] sm:$0xf]
        %v2883 = vld [vmem:[#allocation8 + $0x98] sm:$0xf]
        %v2884 = vld [vmem:[#allocation8 + $0x9c] sm:$0xf]
        %v2885 = vld [vmem:[#allocation8 + $0xa0] sm:$0xf]
        %v2886 = vld [vmem:[#allocation8 + $0xa4] sm:$0xf]
        %v2887 = vld [vmem:[#allocation8 + $0xa8] sm:$0xf]
        %v2888 = vld [vmem:[#allocation8 + $0xac] sm:$0xf]
        %v2889 = vld [vmem:[#allocation8 + $0xb0] sm:$0xf]
        %v2890 = vld [vmem:[#allocation8 + $0xb4] sm:$0xf]
        %v2891 = vld [vmem:[#allocation8 + $0xb8] sm:$0xf]
        %v2892 = vld [vmem:[#allocation8 + $0xbc] sm:$0xf]
        %v2893 = vld [vmem:[#allocation8 + $0xc0] sm:$0xf]
        %v2894 = vld [vmem:[#allocation8 + $0xc4] sm:$0xf]
        %v2895 = vld [vmem:[#allocation8 + $0xc8] sm:$0xf]
        %v2896 = vld [vmem:[#allocation8 + $0xcc] sm:$0xf]
        %v2897 = vld [vmem:[#allocation8 + $0xd0] sm:$0xf]
        %v2898 = vld [vmem:[#allocation8 + $0xd4] sm:$0xf]
        %v2899 = vld [vmem:[#allocation8 + $0xd8] sm:$0xf]
        %v2900 = vld [vmem:[#allocation8 + $0xdc] sm:$0xf]
        %v2901 = vld [vmem:[#allocation8 + $0xe0] sm:$0xf]
        %v2902 = vld [vmem:[#allocation8 + $0xe4] sm:$0xf]
        %v2903 = vld [vmem:[#allocation8 + $0xe8] sm:$0xf]
        %v2904 = vld [vmem:[#allocation8 + $0xec] sm:$0xf]
        %v2905 = vld [vmem:[#allocation8 + $0xf0] sm:$0xf]
        %v2906 = vld [vmem:[#allocation8 + $0xf4] sm:$0xf]
        %v2907 = vld [vmem:[#allocation8 + $0xf8] sm:$0xf]
        %v2908 = vld [vmem:[#allocation8 + $0xfc] sm:$0xf]
        %v2909 = vld [vmem:[#allocation8 + $0x100] sm:$0xf]
        %v2910 = vld [vmem:[#allocation8 + $0x104] sm:$0xf]
        %v2911 = vld [vmem:[#allocation8 + $0x108] sm:$0xf]
        %v2912 = vld [vmem:[#allocation8 + $0x10c] sm:$0xf]
        %v2913 = vld [vmem:[#allocation8 + $0x110] sm:$0xf]
        %v2914 = vld [vmem:[#allocation8 + $0x114] sm:$0xf]
        %v2915 = vld [vmem:[#allocation8 + $0x118] sm:$0xf]
        %v2916 = vld [vmem:[#allocation8 + $0x11c] sm:$0xf]
        %v2989 = vunpack.c.l.b16 %v2845
        %v2990 = vunpack.c.l.b16 %v2846
        %v2991 = vunpack.c.l.b16 %v2847
        %v2992 = vunpack.c.l.b16 %v2848
        %v2993 = vunpack.c.l.b16 %v2849
        %v2994 = vunpack.c.l.b16 %v2850
        %v2995 = vunpack.c.l.b16 %v2851
        %v2996 = vunpack.c.l.b16 %v2852
        %v2997 = vunpack.c.l.b16 %v2853
        %v2998 = vunpack.c.l.b16 %v2854
        %v2999 = vunpack.c.l.b16 %v2855
        %v3000 = vunpack.c.l.b16 %v2856
        %v3001 = vunpack.c.l.b16 %v2857
        %v3002 = vunpack.c.l.b16 %v2858
        %v3003 = vunpack.c.l.b16 %v2859
        %v3004 = vunpack.c.l.b16 %v2860
        %v3005 = vunpack.c.l.b16 %v2861
        %v3006 = vunpack.c.l.b16 %v2862
        %v3007 = vunpack.c.l.b16 %v2863
        %v3008 = vunpack.c.l.b16 %v2864
        %v3009 = vunpack.c.l.b16 %v2865
        %v3010 = vunpack.c.l.b16 %v2866
        %v3011 = vunpack.c.l.b16 %v2867
        %v3012 = vunpack.c.l.b16 %v2868
        %v3013 = vunpack.c.l.b16 %v2869
        %v3014 = vunpack.c.l.b16 %v2870
        %v3015 = vunpack.c.l.b16 %v2871
        %v3016 = vunpack.c.l.b16 %v2872
        %v3017 = vunpack.c.l.b16 %v2873
        %v3018 = vunpack.c.l.b16 %v2874
        %v3019 = vunpack.c.l.b16 %v2875
        %v3020 = vunpack.c.l.b16 %v2876
        %v3021 = vunpack.c.l.b16 %v2877
        %v3022 = vunpack.c.l.b16 %v2878
        %v3023 = vunpack.c.l.b16 %v2879
        %v3024 = vunpack.c.l.b16 %v2880
        %v3025 = vunpack.c.l.b16 %v2881
        %v3026 = vunpack.c.l.b16 %v2882
        %v3027 = vunpack.c.l.b16 %v2883
        %v3028 = vunpack.c.l.b16 %v2884
        %v3029 = vunpack.c.l.b16 %v2885
        %v3030 = vunpack.c.l.b16 %v2886
        %v3031 = vunpack.c.l.b16 %v2887
        %v3032 = vunpack.c.l.b16 %v2888
        %v3033 = vunpack.c.l.b16 %v2889
        %v3034 = vunpack.c.l.b16 %v2890
        %v3035 = vunpack.c.l.b16 %v2891
        %v3036 = vunpack.c.l.b16 %v2892
        %v3037 = vunpack.c.l.b16 %v2893
        %v3038 = vunpack.c.l.b16 %v2894
        %v3039 = vunpack.c.l.b16 %v2895
        %v3040 = vunpack.c.l.b16 %v2896
        %v3041 = vunpack.c.l.b16 %v2897
        %v3042 = vunpack.c.l.b16 %v2898
        %v3043 = vunpack.c.l.b16 %v2899
        %v3044 = vunpack.c.l.b16 %v2900
        %v3045 = vunpack.c.l.b16 %v2901
        %v3046 = vunpack.c.l.b16 %v2902
        %v3047 = vunpack.c.l.b16 %v2903
        %v3048 = vunpack.c.l.b16 %v2904
        %v3049 = vunpack.c.l.b16 %v2905
        %v3050 = vunpack.c.l.b16 %v2906
        %v3051 = vunpack.c.l.b16 %v2907
        %v3052 = vunpack.c.l.b16 %v2908
        %v3053 = vunpack.c.l.b16 %v2909
        %v3054 = vunpack.c.l.b16 %v2910
        %v3055 = vunpack.c.l.b16 %v2911
        %v3056 = vunpack.c.l.b16 %v2912
        %v3057 = vunpack.c.l.b16 %v2913
        %v3058 = vunpack.c.l.b16 %v2914
        %v3059 = vunpack.c.l.b16 %v2915
        %v3060 = vunpack.c.l.b16 %v2916
        %v3061 = vpack.c.b16 %v2990, %v2989
        %v3062 = vpack.c.b16 %v2992, %v2991
        %v3063 = vpack.c.b16 %v2994, %v2993
        %v3064 = vpack.c.b16 %v2996, %v2995
        %v3065 = vpack.c.b16 %v2998, %v2997
        %v3066 = vpack.c.b16 %v3000, %v2999
        %v3067 = vpack.c.b16 %v3002, %v3001
        %v3068 = vpack.c.b16 %v3004, %v3003
        %v3069 = vpack.c.b16 %v3006, %v3005
        %v3070 = vpack.c.b16 %v3008, %v3007
        %v3071 = vpack.c.b16 %v3010, %v3009
        %v3072 = vpack.c.b16 %v3012, %v3011
        %v3073 = vpack.c.b16 %v3014, %v3013
        %v3074 = vpack.c.b16 %v3016, %v3015
        %v3075 = vpack.c.b16 %v3018, %v3017
        %v3076 = vpack.c.b16 %v3020, %v3019
        %v3077 = vpack.c.b16 %v3022, %v3021
        %v3078 = vpack.c.b16 %v3024, %v3023
        %v3079 = vpack.c.b16 %v3026, %v3025
        %v3080 = vpack.c.b16 %v3028, %v3027
        %v3081 = vpack.c.b16 %v3030, %v3029
        %v3082 = vpack.c.b16 %v3032, %v3031
        %v3083 = vpack.c.b16 %v3034, %v3033
        %v3084 = vpack.c.b16 %v3036, %v3035
        %v3085 = vpack.c.b16 %v3038, %v3037
        %v3086 = vpack.c.b16 %v3040, %v3039
        %v3087 = vpack.c.b16 %v3042, %v3041
        %v3088 = vpack.c.b16 %v3044, %v3043
        %v3089 = vpack.c.b16 %v3046, %v3045
        %v3090 = vpack.c.b16 %v3048, %v3047
        %v3091 = vpack.c.b16 %v3050, %v3049
        %v3092 = vpack.c.b16 %v3052, %v3051
        %v3093 = vpack.c.b16 %v3054, %v3053
        %v3094 = vpack.c.b16 %v3056, %v3055
        %v3095 = vpack.c.b16 %v3058, %v3057
        %v3096 = vpack.c.b16 %v3060, %v3059
        %v3133 = vsel %vm2665, %v2542, 0
        %v3135 = vsel %vm2665, %v2545, 0
        %v3137 = vsel %vm2665, %v2548, 0
        %v3139 = vsel %vm2665, %v2551, 0
        %v3141 = vsel %vm2665, %v2554, 0
        %v3143 = vsel %vm2665, %v2557, 0
        %v3145 = vsel %vm2665, %v2560, 0
        %v3147 = vsel %vm2665, %v2563, 0
        %v3149 = vsel %vm2665, %v2566, 0
        %v3151 = vsel %vm2665, %v2569, 0
        %v3153 = vsel %vm2665, %v2572, 0
        %v3155 = vsel %vm2665, %v2575, 0
        %v3157 = vsel %vm2665, %v2578, 0
        %v3159 = vsel %vm2665, %v2581, 0
        %v3162 = vsel %vm2665, %v2630, 0
        %v3164 = vsel %vm2665, %v1228, 0
        %3166 = vmatprep.subr.bf16.mxu0 0
        %3167 = vmatpush1.bf16.msra.mxu0 %v3061
        %3168 = vmatprep.subr.bf16.mxu0 0
        %3169 = vmatpush1.bf16.msra.mxu0 %v3062
        %3170 = vmatprep.subr.bf16.mxu0 0
        %3171 = vmatpush1.bf16.msra.mxu0 %v3063
        %3172 = vmatprep.subr.bf16.mxu0 0
        %3173 = vmatpush1.bf16.msra.mxu0 %v3064
        %3174 = vmatprep.subr.bf16.mxu0 0
        %3175 = vmatpush1.bf16.msra.mxu0 %v3065
        %3176 = vmatprep.subr.bf16.mxu0 0
        %3177 = vmatpush1.bf16.msra.mxu0 %v3066
        %3178 = vmatprep.subr.bf16.mxu0 0
        %3179 = vmatpush1.bf16.msra.mxu0 %v3067
        %3180 = vmatprep.subr.bf16.mxu0 0
        %3181 = vmatpush1.bf16.msra.mxu0 %v3068
        %3182 = vmatprep.subr.bf16.mxu0 0
        %3183 = vmatpush1.bf16.msra.mxu0 %v3069
        %3184 = vmatprep.subr.bf16.mxu0 0
        %3185 = vmatpush1.bf16.msra.mxu0 %v3070
        %3186 = vmatprep.subr.bf16.mxu0 0
        %3187 = vmatpush1.bf16.msra.mxu0 %v3071
        %3188 = vmatprep.subr.bf16.mxu0 0
        %3189 = vmatpush1.bf16.msra.mxu0 %v3072
        %3190 = vmatprep.subr.bf16.mxu0 0
        %3191 = vmatpush1.bf16.msra.mxu0 %v3073
        %3192 = vmatprep.subr.bf16.mxu0 0
        %3193 = vmatpush1.bf16.msra.mxu0 %v3074
        %3194 = vmatprep.subr.bf16.mxu0 0
        %3195 = vmatpush1.bf16.msra.mxu0 %v3075
        %3196 = vmatprep.subr.bf16.mxu0 0
        %3197 = vmatpush1.bf16.msra.mxu0 %v3076
        %3198 = vmatprep.mubr.bf16.mxu0 %v2716
        %3199 = vmatmul.mubr.bf16.gmra.mrb[0].mxu0 %v2667
        %v3200 = vpop.f32.mrb[0].mxu0
        %v3201 = vadd.f32 0.0, %v3200
        %v3202 = vpop.f32.mrb[0].mxu0
        %v3203 = vpop.f32.mrb[0].mxu0
        %v3204 = vadd.f32 0.0, %v3203
        %v3205 = vpop.f32.mrb[0].mxu0
        %3206 = vmatprep.mubr.bf16.mxu0 %v2720
        %3207 = vmatmul.mubr.bf16.gmra.mrb[0].mxu0 %v2670
        %v3208 = vpop.f32.mrb[0].mxu0
        %v3209 = vadd.f32 0.0, %v3208
        %v3210 = vpop.f32.mrb[0].mxu0
        %v3211 = vpop.f32.mrb[0].mxu0
        %v3212 = vadd.f32 0.0, %v3211
        %v3213 = vpop.f32.mrb[0].mxu0
        %3214 = vmatprep.mubr.bf16.mxu0 %v2724
        %3215 = vmatmul.mubr.bf16.gmra.mrb[0].mxu0 %v2673
        %v3216 = vpop.f32.mrb[0].mxu0
        %v3217 = vadd.f32 0.0, %v3216
        %v3218 = vpop.f32.mrb[0].mxu0
        %v3219 = vpop.f32.mrb[0].mxu0
        %v3220 = vadd.f32 0.0, %v3219
        %v3221 = vpop.f32.mrb[0].mxu0
        %3222 = vmatprep.mubr.bf16.mxu0 %v2728
        %3223 = vmatmul.mubr.bf16.gmra.mrb[0].mxu0 %v2676
        %v3224 = vpop.f32.mrb[0].mxu0
        %v3225 = vadd.f32 0.0, %v3224
        %v3226 = vpop.f32.mrb[0].mxu0
        %v3227 = vpop.f32.mrb[0].mxu0
        %v3228 = vadd.f32 0.0, %v3227
        %v3229 = vpop.f32.mrb[0].mxu0
        %3230 = vmatprep.mubr.bf16.mxu0 %v2732
        %3231 = vmatmul.mubr.bf16.gmra.mrb[0].mxu0 %v2679
        %v3232 = vpop.f32.mrb[0].mxu0
        %v3233 = vadd.f32 0.0, %v3232
        %v3234 = vpop.f32.mrb[0].mxu0
        %v3235 = vpop.f32.mrb[0].mxu0
        %v3236 = vadd.f32 0.0, %v3235
        %v3237 = vpop.f32.mrb[0].mxu0
        %3238 = vmatprep.mubr.bf16.mxu0 %v2736
        %3239 = vmatmul.mubr.bf16.gmra.mrb[0].mxu0 %v2682
        %v3240 = vpop.f32.mrb[0].mxu0
        %v3241 = vadd.f32 0.0, %v3240
        %v3242 = vpop.f32.mrb[0].mxu0
        %v3243 = vpop.f32.mrb[0].mxu0
        %v3244 = vadd.f32 0.0, %v3243
        %v3245 = vpop.f32.mrb[0].mxu0
        %3246 = vmatprep.mubr.bf16.mxu0 %v2740
        %3247 = vmatmul.mubr.bf16.gmra.mrb[0].mxu0 %v2685
        %v3248 = vpop.f32.mrb[0].mxu0
        %v3249 = vadd.f32 0.0, %v3248
        %v3250 = vpop.f32.mrb[0].mxu0
        %v3251 = vpop.f32.mrb[0].mxu0
        %v3252 = vadd.f32 0.0, %v3251
        %v3253 = vpop.f32.mrb[0].mxu0
        %3254 = vmatprep.mubr.bf16.mxu0 %v2744
        %3255 = vmatmul.mubr.bf16.gmra.mrb[0].mxu0 %v2688
        %v3256 = vpop.f32.mrb[0].mxu0
        %v3257 = vadd.f32 0.0, %v3256
        %v3258 = vpop.f32.mrb[0].mxu0
        %v3259 = vpop.f32.mrb[0].mxu0
        %v3260 = vadd.f32 0.0, %v3259
        %v3261 = vpop.f32.mrb[0].mxu0
        %3262 = vmatprep.mubr.bf16.mxu0 %v2748
        %3263 = vmatmul.mubr.bf16.gmra.mrb[0].mxu0 %v2691
        %v3264 = vpop.f32.mrb[0].mxu0
        %v3265 = vadd.f32 0.0, %v3264
        %v3266 = vpop.f32.mrb[0].mxu0
        %v3267 = vpop.f32.mrb[0].mxu0
        %v3268 = vadd.f32 0.0, %v3267
        %v3269 = vpop.f32.mrb[0].mxu0
        %3270 = vmatprep.mubr.bf16.mxu0 %v2752
        %3271 = vmatmul.mubr.bf16.gmra.mrb[0].mxu0 %v2694
        %v3272 = vpop.f32.mrb[0].mxu0
        %v3273 = vadd.f32 0.0, %v3272
        %v3274 = vpop.f32.mrb[0].mxu0
        %v3275 = vpop.f32.mrb[0].mxu0
        %v3276 = vadd.f32 0.0, %v3275
        %v3277 = vpop.f32.mrb[0].mxu0
        %3278 = vmatprep.mubr.bf16.mxu0 %v2756
        %3279 = vmatmul.mubr.bf16.gmra.mrb[0].mxu0 %v2697
        %v3280 = vpop.f32.mrb[0].mxu0
        %v3281 = vadd.f32 0.0, %v3280
        %v3282 = vpop.f32.mrb[0].mxu0
        %v3283 = vpop.f32.mrb[0].mxu0
        %v3284 = vadd.f32 0.0, %v3283
        %v3285 = vpop.f32.mrb[0].mxu0
        %3286 = vmatprep.mubr.bf16.mxu0 %v2760
        %3287 = vmatmul.mubr.bf16.gmra.mrb[0].mxu0 %v2700
        %v3288 = vpop.f32.mrb[0].mxu0
        %v3289 = vadd.f32 0.0, %v3288
        %v3290 = vpop.f32.mrb[0].mxu0
        %v3291 = vpop.f32.mrb[0].mxu0
        %v3292 = vadd.f32 0.0, %v3291
        %v3293 = vpop.f32.mrb[0].mxu0
        %3294 = vmatprep.mubr.bf16.mxu0 %v2764
        %3295 = vmatmul.mubr.bf16.gmra.mrb[0].mxu0 %v2703
        %v3296 = vpop.f32.mrb[0].mxu0
        %v3297 = vadd.f32 0.0, %v3296
        %v3298 = vpop.f32.mrb[0].mxu0
        %v3299 = vpop.f32.mrb[0].mxu0
        %v3300 = vadd.f32 0.0, %v3299
        %v3301 = vpop.f32.mrb[0].mxu0
        %3302 = vmatprep.mubr.bf16.mxu0 %v2768
        %3303 = vmatmul.mubr.bf16.gmra.mrb[0].mxu0 %v2706
        %v3304 = vpop.f32.mrb[0].mxu0
        %v3305 = vadd.f32 0.0, %v3304
        %v3306 = vpop.f32.mrb[0].mxu0
        %v3307 = vpop.f32.mrb[0].mxu0
        %v3308 = vadd.f32 0.0, %v3307
        %v3309 = vpop.f32.mrb[0].mxu0
        %3310 = vmatprep.mubr.bf16.mxu0 %v2772
        %3311 = vmatmul.mubr.bf16.gmra.mrb[0].mxu0 %v2709
        %v3312 = vpop.f32.mrb[0].mxu0
        %v3313 = vadd.f32 0.0, %v3312
        %v3314 = vpop.f32.mrb[0].mxu0
        %v3315 = vpop.f32.mrb[0].mxu0
        %v3316 = vadd.f32 0.0, %v3315
        %v3317 = vpop.f32.mrb[0].mxu0
        %3318 = vmatprep.mubr.bf16.mxu0 %v2776
        %3319 = vmatmul.mubr.bf16.gmra.mrb[0].mxu0 %v2712
        %v3320 = vpop.f32.mrb[0].mxu0
        %v3321 = vadd.f32 0.0, %v3320
        %v3322 = vpop.f32.mrb[0].mxu0
        %v3323 = vpop.f32.mrb[0].mxu0
        %v3324 = vadd.f32 0.0, %v3323
        %v3325 = vpop.f32.mrb[0].mxu0
        %3326 = vdwg.mxu0
        %3327 = vmatprep.subr.bf16.mxu0 0
        %3328 = vmatpush1.bf16.msra.mxu0 %v3077
        %3329 = vmatprep.subr.bf16.mxu0 0
        %3330 = vmatpush1.bf16.msra.mxu0 %v3078
        %3331 = vmatprep.subr.bf16.mxu0 0
        %3332 = vmatpush1.bf16.msra.mxu0 %v3079
        %3333 = vmatprep.subr.bf16.mxu0 0
        %3334 = vmatpush1.bf16.msra.mxu0 %v3080
        %3335 = vmatprep.subr.bf16.mxu0 0
        %3336 = vmatpush1.bf16.msra.mxu0 %v3081
        %3337 = vmatprep.subr.bf16.mxu0 0
        %3338 = vmatpush1.bf16.msra.mxu0 %v3082
        %3339 = vmatprep.subr.bf16.mxu0 0
        %3340 = vmatpush1.bf16.msra.mxu0 %v3083
        %3341 = vmatprep.subr.bf16.mxu0 0
        %3342 = vmatpush1.bf16.msra.mxu0 %v3084
        %3343 = vmatprep.subr.bf16.mxu0 0
        %3344 = vmatpush1.bf16.msra.mxu0 %v3085
        %3345 = vmatprep.subr.bf16.mxu0 0
        %3346 = vmatpush1.bf16.msra.mxu0 %v3086
        %3347 = vmatprep.subr.bf16.mxu0 0
        %3348 = vmatpush1.bf16.msra.mxu0 %v3087
        %3349 = vmatprep.subr.bf16.mxu0 0
        %3350 = vmatpush1.bf16.msra.mxu0 %v3088
        %3351 = vmatprep.subr.bf16.mxu0 0
        %3352 = vmatpush1.bf16.msra.mxu0 %v3089
        %3353 = vmatprep.subr.bf16.mxu0 0
        %3354 = vmatpush1.bf16.msra.mxu0 %v3090
        %3355 = vmatprep.subr.bf16.mxu0 0
        %3356 = vmatpush1.bf16.msra.mxu0 %v3091
        %3357 = vmatprep.subr.bf16.mxu0 0
        %3358 = vmatpush1.bf16.msra.mxu0 %v3092
        %3359 = vmatprep.mubr.bf16.mxu0 %v2673
        %3360 = vmatmul.mubr.bf16.gmra.mrb[0].mxu0 %v2780
        %v3361 = vpop.f32.mrb[0].mxu0
        %v3362 = vadd.f32 %v3201, %v3361
        %v3363 = vpop.f32.mrb[0].mxu0
        %v3364 = vpop.f32.mrb[0].mxu0
        %v3365 = vadd.f32 %v3204, %v3364
        %v3366 = vpop.f32.mrb[0].mxu0
        %3367 = vmatprep.mubr.bf16.mxu0 %v2676
        %3368 = vmatmul.mubr.bf16.gmra.mrb[0].mxu0 %v2784
        %v3369 = vpop.f32.mrb[0].mxu0
        %v3370 = vadd.f32 %v3209, %v3369
        %v3371 = vpop.f32.mrb[0].mxu0
        %v3372 = vpop.f32.mrb[0].mxu0
        %v3373 = vadd.f32 %v3212, %v3372
        %v3374 = vpop.f32.mrb[0].mxu0
        %3375 = vmatprep.mubr.bf16.mxu0 %v2679
        %3376 = vmatmul.mubr.bf16.gmra.mrb[0].mxu0 %v2788
        %v3377 = vpop.f32.mrb[0].mxu0
        %v3378 = vadd.f32 %v3217, %v3377
        %v3379 = vpop.f32.mrb[0].mxu0
        %v3380 = vpop.f32.mrb[0].mxu0
        %v3381 = vadd.f32 %v3220, %v3380
        %v3382 = vpop.f32.mrb[0].mxu0
        %3383 = vmatprep.mubr.bf16.mxu0 %v2682
        %3384 = vmatmul.mubr.bf16.gmra.mrb[0].mxu0 %v2792
        %v3385 = vpop.f32.mrb[0].mxu0
        %v3386 = vadd.f32 %v3225, %v3385
        %v3387 = vpop.f32.mrb[0].mxu0
        %v3388 = vpop.f32.mrb[0].mxu0
        %v3389 = vadd.f32 %v3228, %v3388
        %v3390 = vpop.f32.mrb[0].mxu0
        %3391 = vmatprep.mubr.bf16.mxu0 %v2685
        %3392 = vmatmul.mubr.bf16.gmra.mrb[0].mxu0 %v2796
        %v3393 = vpop.f32.mrb[0].mxu0
        %v3394 = vadd.f32 %v3233, %v3393
        %v3395 = vpop.f32.mrb[0].mxu0
        %v3396 = vpop.f32.mrb[0].mxu0
        %v3397 = vadd.f32 %v3236, %v3396
        %v3398 = vpop.f32.mrb[0].mxu0
        %3399 = vmatprep.mubr.bf16.mxu0 %v2688
        %3400 = vmatmul.mubr.bf16.gmra.mrb[0].mxu0 %v2800
        %v3401 = vpop.f32.mrb[0].mxu0
        %v3402 = vadd.f32 %v3241, %v3401
        %v3403 = vpop.f32.mrb[0].mxu0
        %v3404 = vpop.f32.mrb[0].mxu0
        %v3405 = vadd.f32 %v3244, %v3404
        %v3406 = vpop.f32.mrb[0].mxu0
        %3407 = vmatprep.mubr.bf16.mxu0 %v2691
        %3408 = vmatmul.mubr.bf16.gmra.mrb[0].mxu0 %v2804
        %v3409 = vpop.f32.mrb[0].mxu0
        %v3410 = vadd.f32 %v3249, %v3409
        %v3411 = vpop.f32.mrb[0].mxu0
        %v3412 = vpop.f32.mrb[0].mxu0
        %v3413 = vadd.f32 %v3252, %v3412
        %v3414 = vpop.f32.mrb[0].mxu0
        %3415 = vmatprep.mubr.bf16.mxu0 %v2694
        %3416 = vmatmul.mubr.bf16.gmra.mrb[0].mxu0 %v2808
        %v3417 = vpop.f32.mrb[0].mxu0
        %v3418 = vadd.f32 %v3257, %v3417
        %v3419 = vpop.f32.mrb[0].mxu0
        %v3420 = vpop.f32.mrb[0].mxu0
        %v3421 = vadd.f32 %v3260, %v3420
        %v3422 = vpop.f32.mrb[0].mxu0
        %3423 = vmatprep.mubr.bf16.mxu0 %v2697
        %3424 = vmatmul.mubr.bf16.gmra.mrb[0].mxu0 %v2812
        %v3425 = vpop.f32.mrb[0].mxu0
        %v3426 = vadd.f32 %v3265, %v3425
        %v3427 = vpop.f32.mrb[0].mxu0
        %v3428 = vpop.f32.mrb[0].mxu0
        %v3429 = vadd.f32 %v3268, %v3428
        %v3430 = vpop.f32.mrb[0].mxu0
        %3431 = vmatprep.mubr.bf16.mxu0 %v2700
        %3432 = vmatmul.mubr.bf16.gmra.mrb[0].mxu0 %v2816
        %v3433 = vpop.f32.mrb[0].mxu0
        %v3434 = vadd.f32 %v3273, %v3433
        %v3435 = vpop.f32.mrb[0].mxu0
        %v3436 = vpop.f32.mrb[0].mxu0
        %v3437 = vadd.f32 %v3276, %v3436
        %v3438 = vpop.f32.mrb[0].mxu0
        %3439 = vmatprep.mubr.bf16.mxu0 %v2703
        %3440 = vmatmul.mubr.bf16.gmra.mrb[0].mxu0 %v2820
        %v3441 = vpop.f32.mrb[0].mxu0
        %v3442 = vadd.f32 %v3281, %v3441
        %v3443 = vpop.f32.mrb[0].mxu0
        %v3444 = vpop.f32.mrb[0].mxu0
        %v3445 = vadd.f32 %v3284, %v3444
        %v3446 = vpop.f32.mrb[0].mxu0
        %3447 = vmatprep.mubr.bf16.mxu0 %v2706
        %3448 = vmatmul.mubr.bf16.gmra.mrb[0].mxu0 %v2824
        %v3449 = vpop.f32.mrb[0].mxu0
        %v3450 = vadd.f32 %v3289, %v3449
        %v3451 = vpop.f32.mrb[0].mxu0
        %v3452 = vpop.f32.mrb[0].mxu0
        %v3453 = vadd.f32 %v3292, %v3452
        %v3454 = vpop.f32.mrb[0].mxu0
        %3455 = vmatprep.mubr.bf16.mxu0 %v2709
        %3456 = vmatmul.mubr.bf16.gmra.mrb[0].mxu0 %v2828
        %v3457 = vpop.f32.mrb[0].mxu0
        %v3458 = vadd.f32 %v3297, %v3457
        %v3459 = vpop.f32.mrb[0].mxu0
        %v3460 = vpop.f32.mrb[0].mxu0
        %v3461 = vadd.f32 %v3300, %v3460
        %v3462 = vpop.f32.mrb[0].mxu0
        %3463 = vmatprep.mubr.bf16.mxu0 %v2712
        %3464 = vmatmul.mubr.bf16.gmra.mrb[0].mxu0 %v2832
        %v3465 = vpop.f32.mrb[0].mxu0
        %v3466 = vadd.f32 %v3305, %v3465
        %v3467 = vpop.f32.mrb[0].mxu0
        %v3468 = vpop.f32.mrb[0].mxu0
        %v3469 = vadd.f32 %v3308, %v3468
        %v3470 = vpop.f32.mrb[0].mxu0
        %3471 = vmatprep.mubr.bf16.mxu0 %v2843
        %3472 = vmatmul.mubr.bf16.gmra.mrb[0].mxu0 %v2836
        %v3473 = vpop.f32.mrb[0].mxu0
        %v3474 = vadd.f32 %v3313, %v3473
        %v3475 = vpop.f32.mrb[0].mxu0
        %v3476 = vpop.f32.mrb[0].mxu0
        %v3477 = vadd.f32 %v3316, %v3476
        %v3478 = vpop.f32.mrb[0].mxu0
        %3479 = vmatprep.mubr.bf16.mxu0 %v2667
        %3480 = vmatmul.mubr.bf16.gmra.mrb[0].mxu0 %v2840
        %v3481 = vpop.f32.mrb[0].mxu0
        %v3482 = vadd.f32 %v3321, %v3481
        %v3483 = vpop.f32.mrb[0].mxu0
        %v3484 = vpop.f32.mrb[0].mxu0
        %v3485 = vadd.f32 %v3324, %v3484
        %v3486 = vpop.f32.mrb[0].mxu0
        %3487 = vdwg.mxu0
        %3488 = vmatprep.subr.bf16.mxu0 0
        %3489 = vmatpush1.bf16.msra.mxu0 %v3093
        %3490 = vmatprep.subr.bf16.mxu0 0
        %3491 = vmatpush1.bf16.msra.mxu0 %v3094
        %3492 = vmatprep.subr.bf16.mxu0 0
        %3493 = vmatpush1.bf16.msra.mxu0 %v3095
        %3494 = vmatprep.subr.bf16.mxu0 0
        %3495 = vmatpush1.bf16.msra.mxu0 %v3096
        %3496 = vmatprep.subr.bf16.mxu0 0
        %3497 = vmatpush1.bf16.msra.mxu0 0
        %3498 = vmatprep.subr.bf16.mxu0 0
        %3499 = vmatpush1.bf16.msra.mxu0 0
        %3500 = vmatprep.subr.bf16.mxu0 0
        %3501 = vmatpush1.bf16.msra.mxu0 0
        %3502 = vmatprep.subr.bf16.mxu0 0
        %3503 = vmatpush1.bf16.msra.mxu0 0
        %3504 = vmatprep.subr.bf16.mxu0 0
        %3505 = vmatpush1.bf16.msra.mxu0 0
        %3506 = vmatprep.subr.bf16.mxu0 0
        %3507 = vmatpush1.bf16.msra.mxu0 0
        %3508 = vmatprep.subr.bf16.mxu0 0
        %3509 = vmatpush1.bf16.msra.mxu0 0
        %3510 = vmatprep.subr.bf16.mxu0 0
        %3511 = vmatpush1.bf16.msra.mxu0 0
        %3512 = vmatprep.subr.bf16.mxu0 0
        %3513 = vmatpush1.bf16.msra.mxu0 0
        %3514 = vmatprep.subr.bf16.mxu0 0
        %3515 = vmatpush1.bf16.msra.mxu0 0
        %3516 = vmatprep.subr.bf16.mxu0 0
        %3517 = vmatpush1.bf16.msra.mxu0 0
        %3518 = vmatprep.subr.bf16.mxu0 0
        %3519 = vmatpush1.bf16.msra.mxu0 0
        %3520 = vmatprep.mubr.bf16.mxu0 0
        %3521 = vmatmul.mubr.bf16.gmra.mrb[0].mxu0 %v3133
        %v3522 = vpop.f32.mrb[0].mxu0
        %v3523 = vadd.f32 %v3362, %v3522
        %v3524 = vpop.f32.mrb[0].mxu0
        %v3525 = vpop.f32.mrb[0].mxu0
        %v3526 = vadd.f32 %v3365, %v3525
        %v3527 = vpop.f32.mrb[0].mxu0
        %3528 = vmatprep.mubr.bf16.mxu0 0
        %3529 = vmatmul.mubr.bf16.gmra.mrb[0].mxu0 %v3135
        %v3530 = vpop.f32.mrb[0].mxu0
        %v3531 = vadd.f32 %v3370, %v3530
        %v3532 = vpop.f32.mrb[0].mxu0
        %v3533 = vpop.f32.mrb[0].mxu0
        %v3534 = vadd.f32 %v3373, %v3533
        %v3535 = vpop.f32.mrb[0].mxu0
        %3536 = vmatprep.mubr.bf16.mxu0 0
        %3537 = vmatmul.mubr.bf16.gmra.mrb[0].mxu0 %v3137
        %v3538 = vpop.f32.mrb[0].mxu0
        %v3539 = vadd.f32 %v3378, %v3538
        %v3540 = vpop.f32.mrb[0].mxu0
        %v3541 = vpop.f32.mrb[0].mxu0
        %v3542 = vadd.f32 %v3381, %v3541
        %v3543 = vpop.f32.mrb[0].mxu0
        %3544 = vmatprep.mubr.bf16.mxu0 0
        %3545 = vmatmul.mubr.bf16.gmra.mrb[0].mxu0 %v3139
        %v3546 = vpop.f32.mrb[0].mxu0
        %v3547 = vadd.f32 %v3386, %v3546
        %v3548 = vpop.f32.mrb[0].mxu0
        %v3549 = vpop.f32.mrb[0].mxu0
        %v3550 = vadd.f32 %v3389, %v3549
        %v3551 = vpop.f32.mrb[0].mxu0
        %3552 = vmatprep.mubr.bf16.mxu0 0
        %3553 = vmatmul.mubr.bf16.gmra.mrb[0].mxu0 %v3141
        %v3554 = vpop.f32.mrb[0].mxu0
        %v3555 = vadd.f32 %v3394, %v3554
        %v3556 = vpop.f32.mrb[0].mxu0
        %v3557 = vpop.f32.mrb[0].mxu0
        %v3558 = vadd.f32 %v3397, %v3557
        %v3559 = vpop.f32.mrb[0].mxu0
        %3560 = vmatprep.mubr.bf16.mxu0 0
        %3561 = vmatmul.mubr.bf16.gmra.mrb[0].mxu0 %v3143
        %v3562 = vpop.f32.mrb[0].mxu0
        %v3563 = vadd.f32 %v3402, %v3562
        %v3564 = vpop.f32.mrb[0].mxu0
        %v3565 = vpop.f32.mrb[0].mxu0
        %v3566 = vadd.f32 %v3405, %v3565
        %v3567 = vpop.f32.mrb[0].mxu0
        %3568 = vmatprep.mubr.bf16.mxu0 0
        %3569 = vmatmul.mubr.bf16.gmra.mrb[0].mxu0 %v3145
        %v3570 = vpop.f32.mrb[0].mxu0
        %v3571 = vadd.f32 %v3410, %v3570
        %v3572 = vpop.f32.mrb[0].mxu0
        %v3573 = vpop.f32.mrb[0].mxu0
        %v3574 = vadd.f32 %v3413, %v3573
        %v3575 = vpop.f32.mrb[0].mxu0
        %3576 = vmatprep.mubr.bf16.mxu0 0
        %3577 = vmatmul.mubr.bf16.gmra.mrb[0].mxu0 %v3147
        %v3578 = vpop.f32.mrb[0].mxu0
        %v3579 = vadd.f32 %v3418, %v3578
        %v3580 = vpop.f32.mrb[0].mxu0
        %v3581 = vpop.f32.mrb[0].mxu0
        %v3582 = vadd.f32 %v3421, %v3581
        %v3583 = vpop.f32.mrb[0].mxu0
        %3584 = vmatprep.mubr.bf16.mxu0 0
        %3585 = vmatmul.mubr.bf16.gmra.mrb[0].mxu0 %v3149
        %v3586 = vpop.f32.mrb[0].mxu0
        %v3587 = vadd.f32 %v3426, %v3586
        %v3588 = vpop.f32.mrb[0].mxu0
        %v3589 = vpop.f32.mrb[0].mxu0
        %v3590 = vadd.f32 %v3429, %v3589
        %v3591 = vpop.f32.mrb[0].mxu0
        %3592 = vmatprep.mubr.bf16.mxu0 0
        %3593 = vmatmul.mubr.bf16.gmra.mrb[0].mxu0 %v3151
        %v3594 = vpop.f32.mrb[0].mxu0
        %v3595 = vadd.f32 %v3434, %v3594
        %v3596 = vpop.f32.mrb[0].mxu0
        %v3597 = vpop.f32.mrb[0].mxu0
        %v3598 = vadd.f32 %v3437, %v3597
        %v3599 = vpop.f32.mrb[0].mxu0
        %3600 = vmatprep.mubr.bf16.mxu0 0
        %3601 = vmatmul.mubr.bf16.gmra.mrb[0].mxu0 %v3153
        %v3602 = vpop.f32.mrb[0].mxu0
        %v3603 = vadd.f32 %v3442, %v3602
        %v3604 = vpop.f32.mrb[0].mxu0
        %v3605 = vpop.f32.mrb[0].mxu0
        %v3606 = vadd.f32 %v3445, %v3605
        %v3607 = vpop.f32.mrb[0].mxu0
        %3608 = vmatprep.mubr.bf16.mxu0 0
        %3609 = vmatmul.mubr.bf16.gmra.mrb[0].mxu0 %v3155
        %v3610 = vpop.f32.mrb[0].mxu0
        %v3611 = vadd.f32 %v3450, %v3610
        %v3612 = vpop.f32.mrb[0].mxu0
        %v3613 = vpop.f32.mrb[0].mxu0
        %v3614 = vadd.f32 %v3453, %v3613
        %v3615 = vpop.f32.mrb[0].mxu0
        %3616 = vmatprep.mubr.bf16.mxu0 0
        %3617 = vmatmul.mubr.bf16.gmra.mrb[0].mxu0 %v3157
        %v3618 = vpop.f32.mrb[0].mxu0
        %v3619 = vadd.f32 %v3458, %v3618
        %v3620 = vpop.f32.mrb[0].mxu0
        %v3621 = vpop.f32.mrb[0].mxu0
        %v3622 = vadd.f32 %v3461, %v3621
        %v3623 = vpop.f32.mrb[0].mxu0
        %3624 = vmatprep.mubr.bf16.mxu0 0
        %3625 = vmatmul.mubr.bf16.gmra.mrb[0].mxu0 %v3159
        %v3626 = vpop.f32.mrb[0].mxu0
        %v3627 = vadd.f32 %v3466, %v3626
        %v3628 = vpop.f32.mrb[0].mxu0
        %v3629 = vpop.f32.mrb[0].mxu0
        %v3630 = vadd.f32 %v3469, %v3629
        %v3631 = vpop.f32.mrb[0].mxu0
        %3632 = vmatprep.mubr.bf16.mxu0 0
        %3633 = vmatmul.mubr.bf16.gmra.mrb[0].mxu0 %v3162
        %v3634 = vpop.f32.mrb[0].mxu0
        %v3635 = vadd.f32 %v3474, %v3634
        %v3636 = vpop.f32.mrb[0].mxu0
        %v3637 = vpop.f32.mrb[0].mxu0
        %v3638 = vadd.f32 %v3477, %v3637
        %v3639 = vpop.f32.mrb[0].mxu0
        %3640 = vmatprep.mubr.bf16.mxu0 0
        %3641 = vmatmul.mubr.bf16.gmra.mrb[0].mxu0 %v3164
        %v3642 = vpop.f32.mrb[0].mxu0
        %v3643 = vadd.f32 %v3482, %v3642
        %v3644 = vpop.f32.mrb[0].mxu0
        %v3645 = vpop.f32.mrb[0].mxu0
        %v3646 = vadd.f32 %v3485, %v3645
        %v3647 = vpop.f32.mrb[0].mxu0
        %3648 = vdwg.mxu0
        %v3649 = vld [vmem:[#allocation10] sm:$0x1]
        %v3650 = vlaneseq
        %v3651 = vshrl.u32 %v3650, 7
        %v3652 = vsub.s32 0, %v3651
        %v3653 = vrot.slane %v3649, %v3652
        %v3654 = vmul.f32 %v3523, %v3653
        %v3655 = vmul.f32 %v3526, %v3653
        %v3656 = vmul.f32 %v3531, %v3653
        %v3657 = vmul.f32 %v3534, %v3653
        %v3658 = vmul.f32 %v3539, %v3653
        %v3659 = vmul.f32 %v3542, %v3653
        %v3660 = vmul.f32 %v3547, %v3653
        %v3661 = vmul.f32 %v3550, %v3653
        %v3662 = vmul.f32 %v3555, %v3653
        %v3663 = vmul.f32 %v3558, %v3653
        %v3664 = vmul.f32 %v3563, %v3653
        %v3665 = vmul.f32 %v3566, %v3653
        %v3666 = vmul.f32 %v3571, %v3653
        %v3667 = vmul.f32 %v3574, %v3653
        %v3668 = vmul.f32 %v3579, %v3653
        %v3669 = vmul.f32 %v3582, %v3653
        %v3670 = vmul.f32 %v3587, %v3653
        %v3671 = vmul.f32 %v3590, %v3653
        %v3672 = vmul.f32 %v3595, %v3653
        %v3673 = vmul.f32 %v3598, %v3653
        %v3674 = vmul.f32 %v3603, %v3653
        %v3675 = vmul.f32 %v3606, %v3653
        %v3676 = vmul.f32 %v3611, %v3653
        %v3677 = vmul.f32 %v3614, %v3653
        %v3678 = vmul.f32 %v3619, %v3653
        %v3679 = vmul.f32 %v3622, %v3653
        %v3680 = vmul.f32 %v3627, %v3653
        %v3681 = vmul.f32 %v3630, %v3653
        %v3682 = vmul.f32 %v3635, %v3653
        %v3683 = vmul.f32 %v3638, %v3653
        %v3684 = vmul.f32 %v3643, %v3653
        %v3685 = vmul.f32 %v3646, %v3653
        %v3686 = vld [vmem:[#allocation10 + $0x1] sm:$0x1]
        %v3687 = vlaneseq
        %v3688 = vshrl.u32 %v3687, 7
        %v3689 = vsub.s32 0, %v3688
        %v3690 = vrot.slane %v3686, %v3689
        %v3691 = vadd.f32 %v3654, %v3690
        %v3692 = vadd.f32 %v3655, %v3690
        %v3693 = vadd.f32 %v3656, %v3690
        %v3694 = vadd.f32 %v3657, %v3690
        %v3695 = vadd.f32 %v3658, %v3690
        %v3696 = vadd.f32 %v3659, %v3690
        %v3697 = vadd.f32 %v3660, %v3690
        %v3698 = vadd.f32 %v3661, %v3690
        %v3699 = vadd.f32 %v3662, %v3690
        %v3700 = vadd.f32 %v3663, %v3690
        %v3701 = vadd.f32 %v3664, %v3690
        %v3702 = vadd.f32 %v3665, %v3690
        %v3703 = vadd.f32 %v3666, %v3690
        %v3704 = vadd.f32 %v3667, %v3690
        %v3705 = vadd.f32 %v3668, %v3690
        %v3706 = vadd.f32 %v3669, %v3690
        %v3707 = vadd.f32 %v3670, %v3690
        %v3708 = vadd.f32 %v3671, %v3690
        %v3709 = vadd.f32 %v3672, %v3690
        %v3710 = vadd.f32 %v3673, %v3690
        %v3711 = vadd.f32 %v3674, %v3690
        %v3712 = vadd.f32 %v3675, %v3690
        %v3713 = vadd.f32 %v3676, %v3690
        %v3714 = vadd.f32 %v3677, %v3690
        %v3715 = vadd.f32 %v3678, %v3690
        %v3716 = vadd.f32 %v3679, %v3690
        %v3717 = vadd.f32 %v3680, %v3690
        %v3718 = vadd.f32 %v3681, %v3690
        %v3719 = vadd.f32 %v3682, %v3690
        %v3720 = vadd.f32 %v3683, %v3690
        %v3721 = vadd.f32 %v3684, %v3690
        %v3722 = vadd.f32 %v3685, %v3690
        %v3723 = vmax.f32 %v3691, 0.0
        %v3724 = vmax.f32 %v3692, 0.0
        %v3725 = vmax.f32 %v3693, 0.0
        %v3726 = vmax.f32 %v3694, 0.0
        %v3727 = vmax.f32 %v3695, 0.0
        %v3728 = vmax.f32 %v3696, 0.0
        %v3729 = vmax.f32 %v3697, 0.0
        %v3730 = vmax.f32 %v3698, 0.0
        %v3731 = vmax.f32 %v3699, 0.0
        %v3732 = vmax.f32 %v3700, 0.0
        %v3733 = vmax.f32 %v3701, 0.0
        %v3734 = vmax.f32 %v3702, 0.0
        %v3735 = vmax.f32 %v3703, 0.0
        %v3736 = vmax.f32 %v3704, 0.0
        %v3737 = vmax.f32 %v3705, 0.0
        %v3738 = vmax.f32 %v3706, 0.0
        %v3739 = vmax.f32 %v3707, 0.0
        %v3740 = vmax.f32 %v3708, 0.0
        %v3741 = vmax.f32 %v3709, 0.0
        %v3742 = vmax.f32 %v3710, 0.0
        %v3743 = vmax.f32 %v3711, 0.0
        %v3744 = vmax.f32 %v3712, 0.0
        %v3745 = vmax.f32 %v3713, 0.0
        %v3746 = vmax.f32 %v3714, 0.0
        %v3747 = vmax.f32 %v3715, 0.0
        %v3748 = vmax.f32 %v3716, 0.0
        %v3749 = vmax.f32 %v3717, 0.0
        %v3750 = vmax.f32 %v3718, 0.0
        %v3751 = vmax.f32 %v3719, 0.0
        %v3752 = vmax.f32 %v3720, 0.0
        %v3753 = vmax.f32 %v3721, 0.0
        %v3754 = vmax.f32 %v3722, 0.0
        %v3755 = vsel %vm2665, %v3723, -inf
        %v3756 = vsel %vm2665, %v3725, -inf
        %v3757 = vmax.f32 %v3755, %v3756
        %v3758 = vsel %vm2665, %v3724, -inf
        %v3759 = vsel %vm2665, %v3726, -inf
        %v3760 = vmax.f32 %v3758, %v3759
        %v3761 = vsel %vm2665, %v3727, -inf
        %v3762 = vsel %vm2665, %v3729, -inf
        %v3763 = vmax.f32 %v3761, %v3762
        %v3764 = vsel %vm2665, %v3728, -inf
        %v3765 = vsel %vm2665, %v3730, -inf
        %v3766 = vmax.f32 %v3764, %v3765
        %v3767 = vsel %vm2665, %v3731, -inf
        %v3768 = vsel %vm2665, %v3733, -inf
        %v3769 = vmax.f32 %v3767, %v3768
        %v3770 = vsel %vm2665, %v3732, -inf
        %v3771 = vsel %vm2665, %v3734, -inf
        %v3772 = vmax.f32 %v3770, %v3771
        %v3773 = vsel %vm2665, %v3735, -inf
        %v3774 = vsel %vm2665, %v3737, -inf
        %v3775 = vmax.f32 %v3773, %v3774
        %v3776 = vsel %vm2665, %v3736, -inf
        %v3777 = vsel %vm2665, %v3738, -inf
        %v3778 = vmax.f32 %v3776, %v3777
        %v3779 = vsel %vm2665, %v3739, -inf
        %v3780 = vsel %vm2665, %v3741, -inf
        %v3781 = vmax.f32 %v3779, %v3780
        %v3782 = vsel %vm2665, %v3740, -inf
        %v3783 = vsel %vm2665, %v3742, -inf
        %v3784 = vmax.f32 %v3782, %v3783
        %v3785 = vsel %vm2665, %v3743, -inf
        %v3786 = vsel %vm2665, %v3745, -inf
        %v3787 = vmax.f32 %v3785, %v3786
        %v3788 = vsel %vm2665, %v3744, -inf
        %v3789 = vsel %vm2665, %v3746, -inf
        %v3790 = vmax.f32 %v3788, %v3789
        %v3791 = vsel %vm2665, %v3747, -inf
        %v3792 = vsel %vm2665, %v3749, -inf
        %v3793 = vmax.f32 %v3791, %v3792
        %v3794 = vsel %vm2665, %v3748, -inf
        %v3795 = vsel %vm2665, %v3750, -inf
        %v3796 = vmax.f32 %v3794, %v3795
        %v3797 = vsel %vm2665, %v3751, -inf
        %v3798 = vsel %vm2665, %v3753, -inf
        %v3799 = vmax.f32 %v3797, %v3798
        %v3800 = vsel %vm2665, %v3752, -inf
        %v3801 = vsel %vm2665, %v3754, -inf
        %v3802 = vmax.f32 %v3800, %v3801
        %v3819 = vcombine.high %v3757, %v3757
        %v3821 = vunpack.c.l.s4 1983009808
        %v3822 = vunpack.c.0.s8 %v3821
        %v3823 = vlaneseq
        %v3824 = vshrl.u32 %v3823, 7
        %v3825 = vsub.s32 %v3822, %v3824
        %v3826 = vrot.slane %v3757, %v3825
        %v3828 = vunpack.c.l.s4 1983009808
        %v3829 = vunpack.c.0.s8 %v3828
        %v3830 = vlaneseq
        %v3831 = vshrl.u32 %v3830, 7
        %v3832 = vsub.s32 %v3829, %v3831
        %v3833 = vrot.slane %v3819, %v3832
        %v3834 = vcombine.high %v3826, %v3826
        %v3835 = vcombine.high %v3833, %v3833
        %v3836 = vcombine.high %v3760, %v3760
        %v3838 = vunpack.c.l.s4 1983009808
        %v3839 = vunpack.c.0.s8 %v3838
        %v3840 = vlaneseq
        %v3841 = vshrl.u32 %v3840, 7
        %v3842 = vsub.s32 %v3839, %v3841
        %v3843 = vrot.slane %v3760, %v3842
        %v3845 = vunpack.c.l.s4 1983009808
        %v3846 = vunpack.c.0.s8 %v3845
        %v3847 = vlaneseq
        %v3848 = vshrl.u32 %v3847, 7
        %v3849 = vsub.s32 %v3846, %v3848
        %v3850 = vrot.slane %v3836, %v3849
        %v3851 = vcombine.high %v3843, %v3843
        %v3852 = vcombine.high %v3850, %v3850
        %v3853 = vcombine.high %v3763, %v3763
        %v3855 = vunpack.c.l.s4 1983009808
        %v3856 = vunpack.c.0.s8 %v3855
        %v3857 = vlaneseq
        %v3858 = vshrl.u32 %v3857, 7
        %v3859 = vsub.s32 %v3856, %v3858
        %v3860 = vrot.slane %v3763, %v3859
        %v3862 = vunpack.c.l.s4 1983009808
        %v3863 = vunpack.c.0.s8 %v3862
        %v3864 = vlaneseq
        %v3865 = vshrl.u32 %v3864, 7
        %v3866 = vsub.s32 %v3863, %v3865
        %v3867 = vrot.slane %v3853, %v3866
        %v3868 = vcombine.high %v3860, %v3860
        %v3869 = vcombine.high %v3867, %v3867
        %v3870 = vcombine.high %v3766, %v3766
        %v3872 = vunpack.c.l.s4 1983009808
        %v3873 = vunpack.c.0.s8 %v3872
        %v3874 = vlaneseq
        %v3875 = vshrl.u32 %v3874, 7
        %v3876 = vsub.s32 %v3873, %v3875
        %v3877 = vrot.slane %v3766, %v3876
        %v3879 = vunpack.c.l.s4 1983009808
        %v3880 = vunpack.c.0.s8 %v3879
        %v3881 = vlaneseq
        %v3882 = vshrl.u32 %v3881, 7
        %v3883 = vsub.s32 %v3880, %v3882
        %v3884 = vrot.slane %v3870, %v3883
        %v3885 = vcombine.high %v3877, %v3877
        %v3886 = vcombine.high %v3884, %v3884
        %v3887 = vcombine.high %v3769, %v3769
        %v3889 = vunpack.c.l.s4 1983009808
        %v3890 = vunpack.c.0.s8 %v3889
        %v3891 = vlaneseq
        %v3892 = vshrl.u32 %v3891, 7
        %v3893 = vsub.s32 %v3890, %v3892
        %v3894 = vrot.slane %v3769, %v3893
        %v3896 = vunpack.c.l.s4 1983009808
        %v3897 = vunpack.c.0.s8 %v3896
        %v3898 = vlaneseq
        %v3899 = vshrl.u32 %v3898, 7
        %v3900 = vsub.s32 %v3897, %v3899
        %v3901 = vrot.slane %v3887, %v3900
        %v3902 = vcombine.high %v3894, %v3894
        %v3903 = vcombine.high %v3901, %v3901
        %v3904 = vcombine.high %v3772, %v3772
        %v3906 = vunpack.c.l.s4 1983009808
        %v3907 = vunpack.c.0.s8 %v3906
        %v3908 = vlaneseq
        %v3909 = vshrl.u32 %v3908, 7
        %v3910 = vsub.s32 %v3907, %v3909
        %v3911 = vrot.slane %v3772, %v3910
        %v3913 = vunpack.c.l.s4 1983009808
        %v3914 = vunpack.c.0.s8 %v3913
        %v3915 = vlaneseq
        %v3916 = vshrl.u32 %v3915, 7
        %v3917 = vsub.s32 %v3914, %v3916
        %v3918 = vrot.slane %v3904, %v3917
        %v3919 = vcombine.high %v3911, %v3911
        %v3920 = vcombine.high %v3918, %v3918
        %v3921 = vcombine.high %v3775, %v3775
        %v3923 = vunpack.c.l.s4 1983009808
        %v3924 = vunpack.c.0.s8 %v3923
        %v3925 = vlaneseq
        %v3926 = vshrl.u32 %v3925, 7
        %v3927 = vsub.s32 %v3924, %v3926
        %v3928 = vrot.slane %v3775, %v3927
        %v3930 = vunpack.c.l.s4 1983009808
        %v3931 = vunpack.c.0.s8 %v3930
        %v3932 = vlaneseq
        %v3933 = vshrl.u32 %v3932, 7
        %v3934 = vsub.s32 %v3931, %v3933
        %v3935 = vrot.slane %v3921, %v3934
        %v3936 = vcombine.high %v3928, %v3928
        %v3937 = vcombine.high %v3935, %v3935
        %v3938 = vcombine.high %v3778, %v3778
        %v3940 = vunpack.c.l.s4 1983009808
        %v3941 = vunpack.c.0.s8 %v3940
        %v3942 = vlaneseq
        %v3943 = vshrl.u32 %v3942, 7
        %v3944 = vsub.s32 %v3941, %v3943
        %v3945 = vrot.slane %v3778, %v3944
        %v3947 = vunpack.c.l.s4 1983009808
        %v3948 = vunpack.c.0.s8 %v3947
        %v3949 = vlaneseq
        %v3950 = vshrl.u32 %v3949, 7
        %v3951 = vsub.s32 %v3948, %v3950
        %v3952 = vrot.slane %v3938, %v3951
        %v3953 = vcombine.high %v3945, %v3945
        %v3954 = vcombine.high %v3952, %v3952
        %v3955 = vcombine.high %v3781, %v3781
        %v3957 = vunpack.c.l.s4 1983009808
        %v3958 = vunpack.c.0.s8 %v3957
        %v3959 = vlaneseq
        %v3960 = vshrl.u32 %v3959, 7
        %v3961 = vsub.s32 %v3958, %v3960
        %v3962 = vrot.slane %v3781, %v3961
        %v3964 = vunpack.c.l.s4 1983009808
        %v3965 = vunpack.c.0.s8 %v3964
        %v3966 = vlaneseq
        %v3967 = vshrl.u32 %v3966, 7
        %v3968 = vsub.s32 %v3965, %v3967
        %v3969 = vrot.slane %v3955, %v3968
        %v3970 = vcombine.high %v3962, %v3962
        %v3971 = vcombine.high %v3969, %v3969
        %v3972 = vcombine.high %v3784, %v3784
        %v3974 = vunpack.c.l.s4 1983009808
        %v3975 = vunpack.c.0.s8 %v3974
        %v3976 = vlaneseq
        %v3977 = vshrl.u32 %v3976, 7
        %v3978 = vsub.s32 %v3975, %v3977
        %v3979 = vrot.slane %v3784, %v3978
        %v3981 = vunpack.c.l.s4 1983009808
        %v3982 = vunpack.c.0.s8 %v3981
        %v3983 = vlaneseq
        %v3984 = vshrl.u32 %v3983, 7
        %v3985 = vsub.s32 %v3982, %v3984
        %v3986 = vrot.slane %v3972, %v3985
        %v3987 = vcombine.high %v3979, %v3979
        %v3988 = vcombine.high %v3986, %v3986
        %v3989 = vcombine.high %v3787, %v3787
        %v3991 = vunpack.c.l.s4 1983009808
        %v3992 = vunpack.c.0.s8 %v3991
        %v3993 = vlaneseq
        %v3994 = vshrl.u32 %v3993, 7
        %v3995 = vsub.s32 %v3992, %v3994
        %v3996 = vrot.slane %v3787, %v3995
        %v3998 = vunpack.c.l.s4 1983009808
        %v3999 = vunpack.c.0.s8 %v3998
        %v4000 = vlaneseq
        %v4001 = vshrl.u32 %v4000, 7
        %v4002 = vsub.s32 %v3999, %v4001
        %v4003 = vrot.slane %v3989, %v4002
        %v4004 = vcombine.high %v3996, %v3996
        %v4005 = vcombine.high %v4003, %v4003
        %v4006 = vcombine.high %v3790, %v3790
        %v4008 = vunpack.c.l.s4 1983009808
        %v4009 = vunpack.c.0.s8 %v4008
        %v4010 = vlaneseq
        %v4011 = vshrl.u32 %v4010, 7
        %v4012 = vsub.s32 %v4009, %v4011
        %v4013 = vrot.slane %v3790, %v4012
        %v4015 = vunpack.c.l.s4 1983009808
        %v4016 = vunpack.c.0.s8 %v4015
        %v4017 = vlaneseq
        %v4018 = vshrl.u32 %v4017, 7
        %v4019 = vsub.s32 %v4016, %v4018
        %v4020 = vrot.slane %v4006, %v4019
        %v4021 = vcombine.high %v4013, %v4013
        %v4022 = vcombine.high %v4020, %v4020
        %v4023 = vcombine.high %v3793, %v3793
        %v4025 = vunpack.c.l.s4 1983009808
        %v4026 = vunpack.c.0.s8 %v4025
        %v4027 = vlaneseq
        %v4028 = vshrl.u32 %v4027, 7
        %v4029 = vsub.s32 %v4026, %v4028
        %v4030 = vrot.slane %v3793, %v4029
        %v4032 = vunpack.c.l.s4 1983009808
        %v4033 = vunpack.c.0.s8 %v4032
        %v4034 = vlaneseq
        %v4035 = vshrl.u32 %v4034, 7
        %v4036 = vsub.s32 %v4033, %v4035
        %v4037 = vrot.slane %v4023, %v4036
        %v4038 = vcombine.high %v4030, %v4030
        %v4039 = vcombine.high %v4037, %v4037
        %v4040 = vcombine.high %v3796, %v3796
        %v4042 = vunpack.c.l.s4 1983009808
        %v4043 = vunpack.c.0.s8 %v4042
        %v4044 = vlaneseq
        %v4045 = vshrl.u32 %v4044, 7
        %v4046 = vsub.s32 %v4043, %v4045
        %v4047 = vrot.slane %v3796, %v4046
        %v4049 = vunpack.c.l.s4 1983009808
        %v4050 = vunpack.c.0.s8 %v4049
        %v4051 = vlaneseq
        %v4052 = vshrl.u32 %v4051, 7
        %v4053 = vsub.s32 %v4050, %v4052
        %v4054 = vrot.slane %v4040, %v4053
        %v4055 = vcombine.high %v4047, %v4047
        %v4056 = vcombine.high %v4054, %v4054
        %v4057 = vcombine.high %v3799, %v3799
        %v4059 = vunpack.c.l.s4 1983009808
        %v4060 = vunpack.c.0.s8 %v4059
        %v4061 = vlaneseq
        %v4062 = vshrl.u32 %v4061, 7
        %v4063 = vsub.s32 %v4060, %v4062
        %v4064 = vrot.slane %v3799, %v4063
        %v4066 = vunpack.c.l.s4 1983009808
        %v4067 = vunpack.c.0.s8 %v4066
        %v4068 = vlaneseq
        %v4069 = vshrl.u32 %v4068, 7
        %v4070 = vsub.s32 %v4067, %v4069
        %v4071 = vrot.slane %v4057, %v4070
        %v4072 = vcombine.high %v4064, %v4064
        %v4073 = vcombine.high %v4071, %v4071
        %v4074 = vcombine.high %v3802, %v3802
        %v4076 = vunpack.c.l.s4 1983009808
        %v4077 = vunpack.c.0.s8 %v4076
        %v4078 = vlaneseq
        %v4079 = vshrl.u32 %v4078, 7
        %v4080 = vsub.s32 %v4077, %v4079
        %v4081 = vrot.slane %v3802, %v4080
        %v4083 = vunpack.c.l.s4 1983009808
        %v4084 = vunpack.c.0.s8 %v4083
        %v4085 = vlaneseq
        %v4086 = vshrl.u32 %v4085, 7
        %v4087 = vsub.s32 %v4084, %v4086
        %v4088 = vrot.slane %v4074, %v4087
        %v4089 = vcombine.high %v4081, %v4081
        %v4090 = vcombine.high %v4088, %v4088
        %vm4155 = vcmask 517120
        %v4156 = vsel %vm4155, %v3826, -inf
        %v4157 = vrot.slane %v4156, 4
        %v4158 = vmax.f32 %v4156, %v4157
        %v4159 = vrot.slane %v4158, 2
        %v4160 = vmax.f32 %v4158, %v4159
        %v4161 = vrot.slane %v4160, 1
        %v4162 = vmax.f32 %v4160, %v4161
        %v4163 = vsel %vm4155, %v3834, -inf
        %v4164 = vrot.slane %v4163, 4
        %v4165 = vmax.f32 %v4163, %v4164
        %v4166 = vrot.slane %v4165, 2
        %v4167 = vmax.f32 %v4165, %v4166
        %v4168 = vrot.slane %v4167, 1
        %v4169 = vmax.f32 %v4167, %v4168
        %v4170 = vsel %vm4155, %v3833, -inf
        %v4171 = vrot.slane %v4170, 4
        %v4172 = vmax.f32 %v4170, %v4171
        %v4173 = vrot.slane %v4172, 2
        %v4174 = vmax.f32 %v4172, %v4173
        %v4175 = vrot.slane %v4174, 1
        %v4176 = vmax.f32 %v4174, %v4175
        %v4177 = vsel %vm4155, %v3835, -inf
        %v4178 = vrot.slane %v4177, 4
        %v4179 = vmax.f32 %v4177, %v4178
        %v4180 = vrot.slane %v4179, 2
        %v4181 = vmax.f32 %v4179, %v4180
        %v4182 = vrot.slane %v4181, 1
        %v4183 = vmax.f32 %v4181, %v4182
        %v4184 = vsel %vm4155, %v3843, -inf
        %v4185 = vrot.slane %v4184, 4
        %v4186 = vmax.f32 %v4184, %v4185
        %v4187 = vrot.slane %v4186, 2
        %v4188 = vmax.f32 %v4186, %v4187
        %v4189 = vrot.slane %v4188, 1
        %v4190 = vmax.f32 %v4188, %v4189
        %v4191 = vsel %vm4155, %v3851, -inf
        %v4192 = vrot.slane %v4191, 4
        %v4193 = vmax.f32 %v4191, %v4192
        %v4194 = vrot.slane %v4193, 2
        %v4195 = vmax.f32 %v4193, %v4194
        %v4196 = vrot.slane %v4195, 1
        %v4197 = vmax.f32 %v4195, %v4196
        %v4198 = vsel %vm4155, %v3850, -inf
        %v4199 = vrot.slane %v4198, 4
        %v4200 = vmax.f32 %v4198, %v4199
        %v4201 = vrot.slane %v4200, 2
        %v4202 = vmax.f32 %v4200, %v4201
        %v4203 = vrot.slane %v4202, 1
        %v4204 = vmax.f32 %v4202, %v4203
        %v4205 = vsel %vm4155, %v3852, -inf
        %v4206 = vrot.slane %v4205, 4
        %v4207 = vmax.f32 %v4205, %v4206
        %v4208 = vrot.slane %v4207, 2
        %v4209 = vmax.f32 %v4207, %v4208
        %v4210 = vrot.slane %v4209, 1
        %v4211 = vmax.f32 %v4209, %v4210
        %v4212 = vsel %vm4155, %v3860, -inf
        %v4213 = vrot.slane %v4212, 4
        %v4214 = vmax.f32 %v4212, %v4213
        %v4215 = vrot.slane %v4214, 2
        %v4216 = vmax.f32 %v4214, %v4215
        %v4217 = vrot.slane %v4216, 1
        %v4218 = vmax.f32 %v4216, %v4217
        %v4219 = vsel %vm4155, %v3868, -inf
        %v4220 = vrot.slane %v4219, 4
        %v4221 = vmax.f32 %v4219, %v4220
        %v4222 = vrot.slane %v4221, 2
        %v4223 = vmax.f32 %v4221, %v4222
        %v4224 = vrot.slane %v4223, 1
        %v4225 = vmax.f32 %v4223, %v4224
        %v4226 = vsel %vm4155, %v3867, -inf
        %v4227 = vrot.slane %v4226, 4
        %v4228 = vmax.f32 %v4226, %v4227
        %v4229 = vrot.slane %v4228, 2
        %v4230 = vmax.f32 %v4228, %v4229
        %v4231 = vrot.slane %v4230, 1
        %v4232 = vmax.f32 %v4230, %v4231
        %v4233 = vsel %vm4155, %v3869, -inf
        %v4234 = vrot.slane %v4233, 4
        %v4235 = vmax.f32 %v4233, %v4234
        %v4236 = vrot.slane %v4235, 2
        %v4237 = vmax.f32 %v4235, %v4236
        %v4238 = vrot.slane %v4237, 1
        %v4239 = vmax.f32 %v4237, %v4238
        %v4240 = vsel %vm4155, %v3877, -inf
        %v4241 = vrot.slane %v4240, 4
        %v4242 = vmax.f32 %v4240, %v4241
        %v4243 = vrot.slane %v4242, 2
        %v4244 = vmax.f32 %v4242, %v4243
        %v4245 = vrot.slane %v4244, 1
        %v4246 = vmax.f32 %v4244, %v4245
        %v4247 = vsel %vm4155, %v3885, -inf
        %v4248 = vrot.slane %v4247, 4
        %v4249 = vmax.f32 %v4247, %v4248
        %v4250 = vrot.slane %v4249, 2
        %v4251 = vmax.f32 %v4249, %v4250
        %v4252 = vrot.slane %v4251, 1
        %v4253 = vmax.f32 %v4251, %v4252
        %v4254 = vsel %vm4155, %v3884, -inf
        %v4255 = vrot.slane %v4254, 4
        %v4256 = vmax.f32 %v4254, %v4255
        %v4257 = vrot.slane %v4256, 2
        %v4258 = vmax.f32 %v4256, %v4257
        %v4259 = vrot.slane %v4258, 1
        %v4260 = vmax.f32 %v4258, %v4259
        %v4261 = vsel %vm4155, %v3886, -inf
        %v4262 = vrot.slane %v4261, 4
        %v4263 = vmax.f32 %v4261, %v4262
        %v4264 = vrot.slane %v4263, 2
        %v4265 = vmax.f32 %v4263, %v4264
        %v4266 = vrot.slane %v4265, 1
        %v4267 = vmax.f32 %v4265, %v4266
        %v4268 = vsel %vm4155, %v3894, -inf
        %v4269 = vrot.slane %v4268, 4
        %v4270 = vmax.f32 %v4268, %v4269
        %v4271 = vrot.slane %v4270, 2
        %v4272 = vmax.f32 %v4270, %v4271
        %v4273 = vrot.slane %v4272, 1
        %v4274 = vmax.f32 %v4272, %v4273
        %v4275 = vsel %vm4155, %v3902, -inf
        %v4276 = vrot.slane %v4275, 4
        %v4277 = vmax.f32 %v4275, %v4276
        %v4278 = vrot.slane %v4277, 2
        %v4279 = vmax.f32 %v4277, %v4278
        %v4280 = vrot.slane %v4279, 1
        %v4281 = vmax.f32 %v4279, %v4280
        %v4282 = vsel %vm4155, %v3901, -inf
        %v4283 = vrot.slane %v4282, 4
        %v4284 = vmax.f32 %v4282, %v4283
        %v4285 = vrot.slane %v4284, 2
        %v4286 = vmax.f32 %v4284, %v4285
        %v4287 = vrot.slane %v4286, 1
        %v4288 = vmax.f32 %v4286, %v4287
        %v4289 = vsel %vm4155, %v3903, -inf
        %v4290 = vrot.slane %v4289, 4
        %v4291 = vmax.f32 %v4289, %v4290
        %v4292 = vrot.slane %v4291, 2
        %v4293 = vmax.f32 %v4291, %v4292
        %v4294 = vrot.slane %v4293, 1
        %v4295 = vmax.f32 %v4293, %v4294
        %v4296 = vsel %vm4155, %v3911, -inf
        %v4297 = vrot.slane %v4296, 4
        %v4298 = vmax.f32 %v4296, %v4297
        %v4299 = vrot.slane %v4298, 2
        %v4300 = vmax.f32 %v4298, %v4299
        %v4301 = vrot.slane %v4300, 1
        %v4302 = vmax.f32 %v4300, %v4301
        %v4303 = vsel %vm4155, %v3919, -inf
        %v4304 = vrot.slane %v4303, 4
        %v4305 = vmax.f32 %v4303, %v4304
        %v4306 = vrot.slane %v4305, 2
        %v4307 = vmax.f32 %v4305, %v4306
        %v4308 = vrot.slane %v4307, 1
        %v4309 = vmax.f32 %v4307, %v4308
        %v4310 = vsel %vm4155, %v3918, -inf
        %v4311 = vrot.slane %v4310, 4
        %v4312 = vmax.f32 %v4310, %v4311
        %v4313 = vrot.slane %v4312, 2
        %v4314 = vmax.f32 %v4312, %v4313
        %v4315 = vrot.slane %v4314, 1
        %v4316 = vmax.f32 %v4314, %v4315
        %v4317 = vsel %vm4155, %v3920, -inf
        %v4318 = vrot.slane %v4317, 4
        %v4319 = vmax.f32 %v4317, %v4318
        %v4320 = vrot.slane %v4319, 2
        %v4321 = vmax.f32 %v4319, %v4320
        %v4322 = vrot.slane %v4321, 1
        %v4323 = vmax.f32 %v4321, %v4322
        %v4324 = vsel %vm4155, %v3928, -inf
        %v4325 = vrot.slane %v4324, 4
        %v4326 = vmax.f32 %v4324, %v4325
        %v4327 = vrot.slane %v4326, 2
        %v4328 = vmax.f32 %v4326, %v4327
        %v4329 = vrot.slane %v4328, 1
        %v4330 = vmax.f32 %v4328, %v4329
        %v4331 = vsel %vm4155, %v3936, -inf
        %v4332 = vrot.slane %v4331, 4
        %v4333 = vmax.f32 %v4331, %v4332
        %v4334 = vrot.slane %v4333, 2
        %v4335 = vmax.f32 %v4333, %v4334
        %v4336 = vrot.slane %v4335, 1
        %v4337 = vmax.f32 %v4335, %v4336
        %v4338 = vsel %vm4155, %v3935, -inf
        %v4339 = vrot.slane %v4338, 4
        %v4340 = vmax.f32 %v4338, %v4339
        %v4341 = vrot.slane %v4340, 2
        %v4342 = vmax.f32 %v4340, %v4341
        %v4343 = vrot.slane %v4342, 1
        %v4344 = vmax.f32 %v4342, %v4343
        %v4345 = vsel %vm4155, %v3937, -inf
        %v4346 = vrot.slane %v4345, 4
        %v4347 = vmax.f32 %v4345, %v4346
        %v4348 = vrot.slane %v4347, 2
        %v4349 = vmax.f32 %v4347, %v4348
        %v4350 = vrot.slane %v4349, 1
        %v4351 = vmax.f32 %v4349, %v4350
        %v4352 = vsel %vm4155, %v3945, -inf
        %v4353 = vrot.slane %v4352, 4
        %v4354 = vmax.f32 %v4352, %v4353
        %v4355 = vrot.slane %v4354, 2
        %v4356 = vmax.f32 %v4354, %v4355
        %v4357 = vrot.slane %v4356, 1
        %v4358 = vmax.f32 %v4356, %v4357
        %v4359 = vsel %vm4155, %v3953, -inf
        %v4360 = vrot.slane %v4359, 4
        %v4361 = vmax.f32 %v4359, %v4360
        %v4362 = vrot.slane %v4361, 2
        %v4363 = vmax.f32 %v4361, %v4362
        %v4364 = vrot.slane %v4363, 1
        %v4365 = vmax.f32 %v4363, %v4364
        %v4366 = vsel %vm4155, %v3952, -inf
        %v4367 = vrot.slane %v4366, 4
        %v4368 = vmax.f32 %v4366, %v4367
        %v4369 = vrot.slane %v4368, 2
        %v4370 = vmax.f32 %v4368, %v4369
        %v4371 = vrot.slane %v4370, 1
        %v4372 = vmax.f32 %v4370, %v4371
        %v4373 = vsel %vm4155, %v3954, -inf
        %v4374 = vrot.slane %v4373, 4
        %v4375 = vmax.f32 %v4373, %v4374
        %v4376 = vrot.slane %v4375, 2
        %v4377 = vmax.f32 %v4375, %v4376
        %v4378 = vrot.slane %v4377, 1
        %v4379 = vmax.f32 %v4377, %v4378
        %v4380 = vsel %vm4155, %v3962, -inf
        %v4381 = vrot.slane %v4380, 4
        %v4382 = vmax.f32 %v4380, %v4381
        %v4383 = vrot.slane %v4382, 2
        %v4384 = vmax.f32 %v4382, %v4383
        %v4385 = vrot.slane %v4384, 1
        %v4386 = vmax.f32 %v4384, %v4385
        %v4387 = vsel %vm4155, %v3970, -inf
        %v4388 = vrot.slane %v4387, 4
        %v4389 = vmax.f32 %v4387, %v4388
        %v4390 = vrot.slane %v4389, 2
        %v4391 = vmax.f32 %v4389, %v4390
        %v4392 = vrot.slane %v4391, 1
        %v4393 = vmax.f32 %v4391, %v4392
        %v4394 = vsel %vm4155, %v3969, -inf
        %v4395 = vrot.slane %v4394, 4
        %v4396 = vmax.f32 %v4394, %v4395
        %v4397 = vrot.slane %v4396, 2
        %v4398 = vmax.f32 %v4396, %v4397
        %v4399 = vrot.slane %v4398, 1
        %v4400 = vmax.f32 %v4398, %v4399
        %v4401 = vsel %vm4155, %v3971, -inf
        %v4402 = vrot.slane %v4401, 4
        %v4403 = vmax.f32 %v4401, %v4402
        %v4404 = vrot.slane %v4403, 2
        %v4405 = vmax.f32 %v4403, %v4404
        %v4406 = vrot.slane %v4405, 1
        %v4407 = vmax.f32 %v4405, %v4406
        %v4408 = vsel %vm4155, %v3979, -inf
        %v4409 = vrot.slane %v4408, 4
        %v4410 = vmax.f32 %v4408, %v4409
        %v4411 = vrot.slane %v4410, 2
        %v4412 = vmax.f32 %v4410, %v4411
        %v4413 = vrot.slane %v4412, 1
        %v4414 = vmax.f32 %v4412, %v4413
        %v4415 = vsel %vm4155, %v3987, -inf
        %v4416 = vrot.slane %v4415, 4
        %v4417 = vmax.f32 %v4415, %v4416
        %v4418 = vrot.slane %v4417, 2
        %v4419 = vmax.f32 %v4417, %v4418
        %v4420 = vrot.slane %v4419, 1
        %v4421 = vmax.f32 %v4419, %v4420
        %v4422 = vsel %vm4155, %v3986, -inf
        %v4423 = vrot.slane %v4422, 4
        %v4424 = vmax.f32 %v4422, %v4423
        %v4425 = vrot.slane %v4424, 2
        %v4426 = vmax.f32 %v4424, %v4425
        %v4427 = vrot.slane %v4426, 1
        %v4428 = vmax.f32 %v4426, %v4427
        %v4429 = vsel %vm4155, %v3988, -inf
        %v4430 = vrot.slane %v4429, 4
        %v4431 = vmax.f32 %v4429, %v4430
        %v4432 = vrot.slane %v4431, 2
        %v4433 = vmax.f32 %v4431, %v4432
        %v4434 = vrot.slane %v4433, 1
        %v4435 = vmax.f32 %v4433, %v4434
        %v4436 = vsel %vm4155, %v3996, -inf
        %v4437 = vrot.slane %v4436, 4
        %v4438 = vmax.f32 %v4436, %v4437
        %v4439 = vrot.slane %v4438, 2
        %v4440 = vmax.f32 %v4438, %v4439
        %v4441 = vrot.slane %v4440, 1
        %v4442 = vmax.f32 %v4440, %v4441
        %v4443 = vsel %vm4155, %v4004, -inf
        %v4444 = vrot.slane %v4443, 4
        %v4445 = vmax.f32 %v4443, %v4444
        %v4446 = vrot.slane %v4445, 2
        %v4447 = vmax.f32 %v4445, %v4446
        %v4448 = vrot.slane %v4447, 1
        %v4449 = vmax.f32 %v4447, %v4448
        %v4450 = vsel %vm4155, %v4003, -inf
        %v4451 = vrot.slane %v4450, 4
        %v4452 = vmax.f32 %v4450, %v4451
        %v4453 = vrot.slane %v4452, 2
        %v4454 = vmax.f32 %v4452, %v4453
        %v4455 = vrot.slane %v4454, 1
        %v4456 = vmax.f32 %v4454, %v4455
        %v4457 = vsel %vm4155, %v4005, -inf
        %v4458 = vrot.slane %v4457, 4
        %v4459 = vmax.f32 %v4457, %v4458
        %v4460 = vrot.slane %v4459, 2
        %v4461 = vmax.f32 %v4459, %v4460
        %v4462 = vrot.slane %v4461, 1
        %v4463 = vmax.f32 %v4461, %v4462
        %v4464 = vsel %vm4155, %v4013, -inf
        %v4465 = vrot.slane %v4464, 4
        %v4466 = vmax.f32 %v4464, %v4465
        %v4467 = vrot.slane %v4466, 2
        %v4468 = vmax.f32 %v4466, %v4467
        %v4469 = vrot.slane %v4468, 1
        %v4470 = vmax.f32 %v4468, %v4469
        %v4471 = vsel %vm4155, %v4021, -inf
        %v4472 = vrot.slane %v4471, 4
        %v4473 = vmax.f32 %v4471, %v4472
        %v4474 = vrot.slane %v4473, 2
        %v4475 = vmax.f32 %v4473, %v4474
        %v4476 = vrot.slane %v4475, 1
        %v4477 = vmax.f32 %v4475, %v4476
        %v4478 = vsel %vm4155, %v4020, -inf
        %v4479 = vrot.slane %v4478, 4
        %v4480 = vmax.f32 %v4478, %v4479
        %v4481 = vrot.slane %v4480, 2
        %v4482 = vmax.f32 %v4480, %v4481
        %v4483 = vrot.slane %v4482, 1
        %v4484 = vmax.f32 %v4482, %v4483
        %v4485 = vsel %vm4155, %v4022, -inf
        %v4486 = vrot.slane %v4485, 4
        %v4487 = vmax.f32 %v4485, %v4486
        %v4488 = vrot.slane %v4487, 2
        %v4489 = vmax.f32 %v4487, %v4488
        %v4490 = vrot.slane %v4489, 1
        %v4491 = vmax.f32 %v4489, %v4490
        %v4492 = vsel %vm4155, %v4030, -inf
        %v4493 = vrot.slane %v4492, 4
        %v4494 = vmax.f32 %v4492, %v4493
        %v4495 = vrot.slane %v4494, 2
        %v4496 = vmax.f32 %v4494, %v4495
        %v4497 = vrot.slane %v4496, 1
        %v4498 = vmax.f32 %v4496, %v4497
        %v4499 = vsel %vm4155, %v4038, -inf
        %v4500 = vrot.slane %v4499, 4
        %v4501 = vmax.f32 %v4499, %v4500
        %v4502 = vrot.slane %v4501, 2
        %v4503 = vmax.f32 %v4501, %v4502
        %v4504 = vrot.slane %v4503, 1
        %v4505 = vmax.f32 %v4503, %v4504
        %v4506 = vsel %vm4155, %v4037, -inf
        %v4507 = vrot.slane %v4506, 4
        %v4508 = vmax.f32 %v4506, %v4507
        %v4509 = vrot.slane %v4508, 2
        %v4510 = vmax.f32 %v4508, %v4509
        %v4511 = vrot.slane %v4510, 1
        %v4512 = vmax.f32 %v4510, %v4511
        %v4513 = vsel %vm4155, %v4039, -inf
        %v4514 = vrot.slane %v4513, 4
        %v4515 = vmax.f32 %v4513, %v4514
        %v4516 = vrot.slane %v4515, 2
        %v4517 = vmax.f32 %v4515, %v4516
        %v4518 = vrot.slane %v4517, 1
        %v4519 = vmax.f32 %v4517, %v4518
        %v4520 = vsel %vm4155, %v4047, -inf
        %v4521 = vrot.slane %v4520, 4
        %v4522 = vmax.f32 %v4520, %v4521
        %v4523 = vrot.slane %v4522, 2
        %v4524 = vmax.f32 %v4522, %v4523
        %v4525 = vrot.slane %v4524, 1
        %v4526 = vmax.f32 %v4524, %v4525
        %v4527 = vsel %vm4155, %v4055, -inf
        %v4528 = vrot.slane %v4527, 4
        %v4529 = vmax.f32 %v4527, %v4528
        %v4530 = vrot.slane %v4529, 2
        %v4531 = vmax.f32 %v4529, %v4530
        %v4532 = vrot.slane %v4531, 1
        %v4533 = vmax.f32 %v4531, %v4532
        %v4534 = vsel %vm4155, %v4054, -inf
        %v4535 = vrot.slane %v4534, 4
        %v4536 = vmax.f32 %v4534, %v4535
        %v4537 = vrot.slane %v4536, 2
        %v4538 = vmax.f32 %v4536, %v4537
        %v4539 = vrot.slane %v4538, 1
        %v4540 = vmax.f32 %v4538, %v4539
        %v4541 = vsel %vm4155, %v4056, -inf
        %v4542 = vrot.slane %v4541, 4
        %v4543 = vmax.f32 %v4541, %v4542
        %v4544 = vrot.slane %v4543, 2
        %v4545 = vmax.f32 %v4543, %v4544
        %v4546 = vrot.slane %v4545, 1
        %v4547 = vmax.f32 %v4545, %v4546
        %v4548 = vsel %vm4155, %v4064, -inf
        %v4549 = vrot.slane %v4548, 4
        %v4550 = vmax.f32 %v4548, %v4549
        %v4551 = vrot.slane %v4550, 2
        %v4552 = vmax.f32 %v4550, %v4551
        %v4553 = vrot.slane %v4552, 1
        %v4554 = vmax.f32 %v4552, %v4553
        %v4555 = vsel %vm4155, %v4072, -inf
        %v4556 = vrot.slane %v4555, 4
        %v4557 = vmax.f32 %v4555, %v4556
        %v4558 = vrot.slane %v4557, 2
        %v4559 = vmax.f32 %v4557, %v4558
        %v4560 = vrot.slane %v4559, 1
        %v4561 = vmax.f32 %v4559, %v4560
        %v4562 = vsel %vm4155, %v4071, -inf
        %v4563 = vrot.slane %v4562, 4
        %v4564 = vmax.f32 %v4562, %v4563
        %v4565 = vrot.slane %v4564, 2
        %v4566 = vmax.f32 %v4564, %v4565
        %v4567 = vrot.slane %v4566, 1
        %v4568 = vmax.f32 %v4566, %v4567
        %v4569 = vsel %vm4155, %v4073, -inf
        %v4570 = vrot.slane %v4569, 4
        %v4571 = vmax.f32 %v4569, %v4570
        %v4572 = vrot.slane %v4571, 2
        %v4573 = vmax.f32 %v4571, %v4572
        %v4574 = vrot.slane %v4573, 1
        %v4575 = vmax.f32 %v4573, %v4574
        %v4576 = vsel %vm4155, %v4081, -inf
        %v4577 = vrot.slane %v4576, 4
        %v4578 = vmax.f32 %v4576, %v4577
        %v4579 = vrot.slane %v4578, 2
        %v4580 = vmax.f32 %v4578, %v4579
        %v4581 = vrot.slane %v4580, 1
        %v4582 = vmax.f32 %v4580, %v4581
        %v4583 = vsel %vm4155, %v4089, -inf
        %v4584 = vrot.slane %v4583, 4
        %v4585 = vmax.f32 %v4583, %v4584
        %v4586 = vrot.slane %v4585, 2
        %v4587 = vmax.f32 %v4585, %v4586
        %v4588 = vrot.slane %v4587, 1
        %v4589 = vmax.f32 %v4587, %v4588
        %v4590 = vsel %vm4155, %v4088, -inf
        %v4591 = vrot.slane %v4590, 4
        %v4592 = vmax.f32 %v4590, %v4591
        %v4593 = vrot.slane %v4592, 2
        %v4594 = vmax.f32 %v4592, %v4593
        %v4595 = vrot.slane %v4594, 1
        %v4596 = vmax.f32 %v4594, %v4595
        %v4597 = vsel %vm4155, %v4090, -inf
        %v4598 = vrot.slane %v4597, 4
        %v4599 = vmax.f32 %v4597, %v4598
        %v4600 = vrot.slane %v4599, 2
        %v4601 = vmax.f32 %v4599, %v4600
        %v4602 = vrot.slane %v4601, 1
        %v4603 = vmax.f32 %v4601, %v4602
        %v4604 = vpack.c.bf16 %v4162, %v4162
        %v4605 = vpack.c.bf16 %v4169, %v4169
        %v4606 = vpack.c.bf16 %v4176, %v4176
        %v4607 = vpack.c.bf16 %v4183, %v4183
        %v4608 = vpack.c.bf16 %v4190, %v4190
        %v4609 = vpack.c.bf16 %v4197, %v4197
        %v4610 = vpack.c.bf16 %v4204, %v4204
        %v4611 = vpack.c.bf16 %v4211, %v4211
        %v4612 = vpack.c.bf16 %v4218, %v4218
        %v4613 = vpack.c.bf16 %v4225, %v4225
        %v4614 = vpack.c.bf16 %v4232, %v4232
        %v4615 = vpack.c.bf16 %v4239, %v4239
        %v4616 = vpack.c.bf16 %v4246, %v4246
        %v4617 = vpack.c.bf16 %v4253, %v4253
        %v4618 = vpack.c.bf16 %v4260, %v4260
        %v4619 = vpack.c.bf16 %v4267, %v4267
        %v4620 = vpack.c.bf16 %v4274, %v4274
        %v4621 = vpack.c.bf16 %v4281, %v4281
        %v4622 = vpack.c.bf16 %v4288, %v4288
        %v4623 = vpack.c.bf16 %v4295, %v4295
        %v4624 = vpack.c.bf16 %v4302, %v4302
        %v4625 = vpack.c.bf16 %v4309, %v4309
        %v4626 = vpack.c.bf16 %v4316, %v4316
        %v4627 = vpack.c.bf16 %v4323, %v4323
        %v4628 = vpack.c.bf16 %v4330, %v4330
        %v4629 = vpack.c.bf16 %v4337, %v4337
        %v4630 = vpack.c.bf16 %v4344, %v4344
        %v4631 = vpack.c.bf16 %v4351, %v4351
        %v4632 = vpack.c.bf16 %v4358, %v4358
        %v4633 = vpack.c.bf16 %v4365, %v4365
        %v4634 = vpack.c.bf16 %v4372, %v4372
        %v4635 = vpack.c.bf16 %v4379, %v4379
        %v4636 = vpack.c.bf16 %v4386, %v4386
        %v4637 = vpack.c.bf16 %v4393, %v4393
        %v4638 = vpack.c.bf16 %v4400, %v4400
        %v4639 = vpack.c.bf16 %v4407, %v4407
        %v4640 = vpack.c.bf16 %v4414, %v4414
        %v4641 = vpack.c.bf16 %v4421, %v4421
        %v4642 = vpack.c.bf16 %v4428, %v4428
        %v4643 = vpack.c.bf16 %v4435, %v4435
        %v4644 = vpack.c.bf16 %v4442, %v4442
        %v4645 = vpack.c.bf16 %v4449, %v4449
        %v4646 = vpack.c.bf16 %v4456, %v4456
        %v4647 = vpack.c.bf16 %v4463, %v4463
        %v4648 = vpack.c.bf16 %v4470, %v4470
        %v4649 = vpack.c.bf16 %v4477, %v4477
        %v4650 = vpack.c.bf16 %v4484, %v4484
        %v4651 = vpack.c.bf16 %v4491, %v4491
        %v4652 = vpack.c.bf16 %v4498, %v4498
        %v4653 = vpack.c.bf16 %v4505, %v4505
        %v4654 = vpack.c.bf16 %v4512, %v4512
        %v4655 = vpack.c.bf16 %v4519, %v4519
        %v4656 = vpack.c.bf16 %v4526, %v4526
        %v4657 = vpack.c.bf16 %v4533, %v4533
        %v4658 = vpack.c.bf16 %v4540, %v4540
        %v4659 = vpack.c.bf16 %v4547, %v4547
        %v4660 = vpack.c.bf16 %v4554, %v4554
        %v4661 = vpack.c.bf16 %v4561, %v4561
        %v4662 = vpack.c.bf16 %v4568, %v4568
        %v4663 = vpack.c.bf16 %v4575, %v4575
        %v4664 = vpack.c.bf16 %v4582, %v4582
        %v4665 = vpack.c.bf16 %v4589, %v4589
        %v4666 = vpack.c.bf16 %v4596, %v4596
        %v4667 = vpack.c.bf16 %v4603, %v4603
        %v4732 = vunpack.c.l.b16 %v4604
        %v4733 = vunpack.c.l.b16 %v4605
        %v4734 = vunpack.c.l.b16 %v4606
        %v4735 = vunpack.c.l.b16 %v4607
        %v4736 = vunpack.c.l.b16 %v4608
        %v4737 = vunpack.c.l.b16 %v4609
        %v4738 = vunpack.c.l.b16 %v4610
        %v4739 = vunpack.c.l.b16 %v4611
        %v4740 = vunpack.c.l.b16 %v4612
        %v4741 = vunpack.c.l.b16 %v4613
        %v4742 = vunpack.c.l.b16 %v4614
        %v4743 = vunpack.c.l.b16 %v4615
        %v4744 = vunpack.c.l.b16 %v4616
        %v4745 = vunpack.c.l.b16 %v4617
        %v4746 = vunpack.c.l.b16 %v4618
        %v4747 = vunpack.c.l.b16 %v4619
        %v4748 = vunpack.c.l.b16 %v4620
        %v4749 = vunpack.c.l.b16 %v4621
        %v4750 = vunpack.c.l.b16 %v4622
        %v4751 = vunpack.c.l.b16 %v4623
        %v4752 = vunpack.c.l.b16 %v4624
        %v4753 = vunpack.c.l.b16 %v4625
        %v4754 = vunpack.c.l.b16 %v4626
        %v4755 = vunpack.c.l.b16 %v4627
        %v4756 = vunpack.c.l.b16 %v4628
        %v4757 = vunpack.c.l.b16 %v4629
        %v4758 = vunpack.c.l.b16 %v4630
        %v4759 = vunpack.c.l.b16 %v4631
        %v4760 = vunpack.c.l.b16 %v4632
        %v4761 = vunpack.c.l.b16 %v4633
        %v4762 = vunpack.c.l.b16 %v4634
        %v4763 = vunpack.c.l.b16 %v4635
        %v4764 = vunpack.c.l.b16 %v4636
        %v4765 = vunpack.c.l.b16 %v4637
        %v4766 = vunpack.c.l.b16 %v4638
        %v4767 = vunpack.c.l.b16 %v4639
        %v4768 = vunpack.c.l.b16 %v4640
        %v4769 = vunpack.c.l.b16 %v4641
        %v4770 = vunpack.c.l.b16 %v4642
        %v4771 = vunpack.c.l.b16 %v4643
        %v4772 = vunpack.c.l.b16 %v4644
        %v4773 = vunpack.c.l.b16 %v4645
        %v4774 = vunpack.c.l.b16 %v4646
        %v4775 = vunpack.c.l.b16 %v4647
        %v4776 = vunpack.c.l.b16 %v4648
        %v4777 = vunpack.c.l.b16 %v4649
        %v4778 = vunpack.c.l.b16 %v4650
        %v4779 = vunpack.c.l.b16 %v4651
        %v4780 = vunpack.c.l.b16 %v4652
        %v4781 = vunpack.c.l.b16 %v4653
        %v4782 = vunpack.c.l.b16 %v4654
        %v4783 = vunpack.c.l.b16 %v4655
        %v4784 = vunpack.c.l.b16 %v4656
        %v4785 = vunpack.c.l.b16 %v4657
        %v4786 = vunpack.c.l.b16 %v4658
        %v4787 = vunpack.c.l.b16 %v4659
        %v4788 = vunpack.c.l.b16 %v4660
        %v4789 = vunpack.c.l.b16 %v4661
        %v4790 = vunpack.c.l.b16 %v4662
        %v4791 = vunpack.c.l.b16 %v4663
        %v4792 = vunpack.c.l.b16 %v4664
        %v4793 = vunpack.c.l.b16 %v4665
        %v4794 = vunpack.c.l.b16 %v4666
        %v4795 = vunpack.c.l.b16 %v4667
        %vm4796 = vcmask 1042434
        %v4797 = vsel %vm4796, %v4733, %v4732
        %vm4798 = vcmask 1043459
        %v4799 = vsel %vm4798, %v4734, %v4797
        %vm4800 = vcmask 1044484
        %v4801 = vsel %vm4800, %v4735, %v4799
        %vm4802 = vcmask 1045509
        %v4803 = vsel %vm4802, %v4736, %v4801
        %vm4804 = vcmask 1046534
        %v4805 = vsel %vm4804, %v4737, %v4803
        %vm4806 = vcmask 1047559
        %v4807 = vsel %vm4806, %v4738, %v4805
        %v4808 = vsel %vm4796, %v4741, %v4740
        %v4809 = vsel %vm4798, %v4742, %v4808
        %v4810 = vsel %vm4800, %v4743, %v4809
        %v4811 = vsel %vm4802, %v4744, %v4810
        %v4812 = vsel %vm4804, %v4745, %v4811
        %v4813 = vsel %vm4806, %v4746, %v4812
        %v4814 = vsel %vm4796, %v4749, %v4748
        %v4815 = vsel %vm4798, %v4750, %v4814
        %v4816 = vsel %vm4800, %v4751, %v4815
        %v4817 = vsel %vm4802, %v4752, %v4816
        %v4818 = vsel %vm4804, %v4753, %v4817
        %v4819 = vsel %vm4806, %v4754, %v4818
        %v4820 = vsel %vm4796, %v4757, %v4756
        %v4821 = vsel %vm4798, %v4758, %v4820
        %v4822 = vsel %vm4800, %v4759, %v4821
        %v4823 = vsel %vm4802, %v4760, %v4822
        %v4824 = vsel %vm4804, %v4761, %v4823
        %v4825 = vsel %vm4806, %v4762, %v4824
        %v4826 = vsel %vm4796, %v4765, %v4764
        %v4827 = vsel %vm4798, %v4766, %v4826
        %v4828 = vsel %vm4800, %v4767, %v4827
        %v4829 = vsel %vm4802, %v4768, %v4828
        %v4830 = vsel %vm4804, %v4769, %v4829
        %v4831 = vsel %vm4806, %v4770, %v4830
        %v4832 = vsel %vm4796, %v4773, %v4772
        %v4833 = vsel %vm4798, %v4774, %v4832
        %v4834 = vsel %vm4800, %v4775, %v4833
        %v4835 = vsel %vm4802, %v4776, %v4834
        %v4836 = vsel %vm4804, %v4777, %v4835
        %v4837 = vsel %vm4806, %v4778, %v4836
        %v4838 = vsel %vm4796, %v4781, %v4780
        %v4839 = vsel %vm4798, %v4782, %v4838
        %v4840 = vsel %vm4800, %v4783, %v4839
        %v4841 = vsel %vm4802, %v4784, %v4840
        %v4842 = vsel %vm4804, %v4785, %v4841
        %v4843 = vsel %vm4806, %v4786, %v4842
        %v4844 = vsel %vm4796, %v4789, %v4788
        %v4845 = vsel %vm4798, %v4790, %v4844
        %v4846 = vsel %vm4800, %v4791, %v4845
        %v4847 = vsel %vm4802, %v4792, %v4846
        %v4848 = vsel %vm4804, %v4793, %v4847
        %v4849 = vsel %vm4806, %v4794, %v4848
        %v4850 = vpack.c.b16 %v4739, %v4807
        %v4851 = vpack.c.b16 %v4747, %v4813
        %v4852 = vpack.c.b16 %v4755, %v4819
        %v4853 = vpack.c.b16 %v4763, %v4825
        %v4854 = vpack.c.b16 %v4771, %v4831
        %v4855 = vpack.c.b16 %v4779, %v4837
        %v4856 = vpack.c.b16 %v4787, %v4843
        %v4857 = vpack.c.b16 %v4795, %v4849
        %v4866 = vsel %vm941, 0, %v4850
        %v4867 = vsel %vm941, 0, %v4851
        %v4868 = vsel %vm941, 0, %v4852
        %v4869 = vsel %vm941, 0, %v4853
        %v4870 = vsel %vm941, 0, %v4854
        %v4871 = vsel %vm941, 0, %v4855
        %v4872 = vsel %vm941, 0, %v4856
        %v4873 = vsel %vm941, 0, %v4857
        %vm4874 = vcmask 1044480
        %vm4875 = vsmask.f32 4352
        %vm4876 = vmand %vm4874, %vm4875
        %v4877 = vsel %vm4876, %v4866, 0
        %v4878 = vsel %vm4876, %v4867, 0
        %v4879 = vsel %vm4876, %v4868, 0
        %v4880 = vsel %vm4876, %v4869, 0
        %v4881 = vsel %vm4876, %v4870, 0
        %v4882 = vsel %vm4876, %v4871, 0
        %v4883 = vsel %vm4876, %v4872, 0
        %v4884 = vsel %vm4876, %v4873, 0
        %v4886 = vshrl.u32 %v4877, 16
        %v4888 = vshll.u32 %v4877, 16
        %v4890 = vrot.slane %v4888, 1
        %v4891 = vor.u32 %v4886, %v4890
        %v4893 = vshrl.u32 %v4878, 16
        %v4895 = vshll.u32 %v4878, 16
        %v4897 = vrot.slane %v4895, 1
        %v4898 = vor.u32 %v4893, %v4897
        %v4900 = vshrl.u32 %v4879, 16
        %v4902 = vshll.u32 %v4879, 16
        %v4904 = vrot.slane %v4902, 1
        %v4905 = vor.u32 %v4900, %v4904
        %v4907 = vshrl.u32 %v4880, 16
        %v4909 = vshll.u32 %v4880, 16
        %v4911 = vrot.slane %v4909, 1
        %v4912 = vor.u32 %v4907, %v4911
        %v4914 = vshrl.u32 %v4881, 16
        %v4916 = vshll.u32 %v4881, 16
        %v4918 = vrot.slane %v4916, 1
        %v4919 = vor.u32 %v4914, %v4918
        %v4921 = vshrl.u32 %v4882, 16
        %v4923 = vshll.u32 %v4882, 16
        %v4925 = vrot.slane %v4923, 1
        %v4926 = vor.u32 %v4921, %v4925
        %v4928 = vshrl.u32 %v4883, 16
        %v4930 = vshll.u32 %v4883, 16
        %v4932 = vrot.slane %v4930, 1
        %v4933 = vor.u32 %v4928, %v4932
        %4934 = vrot.lane.b32.xlu0 %v981, 64
        %v4935 = vpop.permute.xlu0 %4934
        %4936 = vrot.lane.b32.xlu0 %v4891, 64
        %v4937 = vpop.permute.xlu0 %4936
        %4938 = vrot.lane.b32.xlu0 %v4898, 64
        %v4939 = vpop.permute.xlu0 %4938
        %4940 = vrot.lane.b32.xlu0 %v4905, 64
        %v4941 = vpop.permute.xlu0 %4940
        %4942 = vrot.lane.b32.xlu0 %v4912, 64
        %v4943 = vpop.permute.xlu0 %4942
        %4944 = vrot.lane.b32.xlu0 %v4919, 64
        %v4945 = vpop.permute.xlu0 %4944
        %4946 = vrot.lane.b32.xlu0 %v4926, 64
        %v4947 = vpop.permute.xlu0 %4946
        %4948 = vrot.lane.b32.xlu0 %v4933, 64
        %v4949 = vpop.permute.xlu0 %4948
        %v4957 = vrot.slane %v4877, 1
        %v4958 = vrot.slane %v4878, 1
        %v4959 = vrot.slane %v4879, 1
        %v4960 = vrot.slane %v4880, 1
        %v4961 = vrot.slane %v4881, 1
        %v4962 = vrot.slane %v4882, 1
        %v4963 = vrot.slane %v4883, 1
        %4965 = vrot.lane.b32.xlu0 %v4877, 64
        %v4966 = vpop.permute.xlu0 %4965
        %4967 = vrot.lane.b32.xlu0 %v4878, 64
        %v4968 = vpop.permute.xlu0 %4967
        %4969 = vrot.lane.b32.xlu0 %v4879, 64
        %v4970 = vpop.permute.xlu0 %4969
        %4971 = vrot.lane.b32.xlu0 %v4880, 64
        %v4972 = vpop.permute.xlu0 %4971
        %4973 = vrot.lane.b32.xlu0 %v4881, 64
        %v4974 = vpop.permute.xlu0 %4973
        %4975 = vrot.lane.b32.xlu0 %v4882, 64
        %v4976 = vpop.permute.xlu0 %4975
        %4977 = vrot.lane.b32.xlu0 %v4883, 64
        %v4978 = vpop.permute.xlu0 %4977
        %4979 = vrot.lane.b32.xlu0 %v4884, 64
        %v4980 = vpop.permute.xlu0 %4979
        %v4982 = vshrl.u32 %v4884, 16
        %v4984 = vshll.u32 %v4884, 16
        %v4986 = vrot.slane %v4984, 1
        %v4987 = vor.u32 %v4982, %v4986
        %v4988 = vrot.slane %v4884, 1
        %4989 = vrot.lane.b32.xlu0 %v4957, 64
        %v4990 = vpop.permute.xlu0 %4989
        %4991 = vrot.lane.b32.xlu0 %v4958, 64
        %v4992 = vpop.permute.xlu0 %4991
        %4993 = vrot.lane.b32.xlu0 %v4959, 64
        %v4994 = vpop.permute.xlu0 %4993
        %4995 = vrot.lane.b32.xlu0 %v4960, 64
        %v4996 = vpop.permute.xlu0 %4995
        %4997 = vrot.lane.b32.xlu0 %v4961, 64
        %v4998 = vpop.permute.xlu0 %4997
        %4999 = vrot.lane.b32.xlu0 %v4962, 64
        %v5000 = vpop.permute.xlu0 %4999
        %5001 = vrot.lane.b32.xlu0 %v4963, 64
        %v5002 = vpop.permute.xlu0 %5001
        %5003 = vrot.lane.b32.xlu0 %v4988, 64
        %v5004 = vpop.permute.xlu0 %5003
        %5005 = vrot.lane.b32.xlu0 %v4987, 64
        %v5006 = vpop.permute.xlu0 %5005
        %v5008 = vsel %vm2665, 0, %v4935
        %v5010 = vsel %vm2665, %v4877, %v4937
        %v5012 = vsel %vm2665, %v4878, %v4939
        %v5014 = vsel %vm2665, %v4879, %v4941
        %v5016 = vsel %vm2665, %v4880, %v4943
        %v5018 = vsel %vm2665, %v4881, %v4945
        %v5020 = vsel %vm2665, %v4882, %v4947
        %v5022 = vsel %vm2665, %v4883, %v4949
        %v5025 = vsel %vm2665, %v1227, %v4966
        %v5028 = vsel %vm2665, %v4957, %v4968
        %v5031 = vsel %vm2665, %v4958, %v4970
        %v5034 = vsel %vm2665, %v4959, %v4972
        %v5037 = vsel %vm2665, %v4960, %v4974
        %v5040 = vsel %vm2665, %v4961, %v4976
        %v5043 = vsel %vm2665, %v4962, %v4978
        %v5046 = vsel %vm2665, %v4963, %v4980
        %v5049 = vsel %vm2665, %v4891, %v4990
        %v5052 = vsel %vm2665, %v4898, %v4992
        %v5055 = vsel %vm2665, %v4905, %v4994
        %v5058 = vsel %vm2665, %v4912, %v4996
        %v5061 = vsel %vm2665, %v4919, %v4998
        %v5064 = vsel %vm2665, %v4926, %v5000
        %v5067 = vsel %vm2665, %v4933, %v5002
        %v5070 = vsel %vm2665, %v4987, %v5004
        %v5072 = vsel %vm2665, %v4884, %v5006
        %v5098 = vunpack.c.l.b16 %v5008
        %v5099 = vunpack.c.l.b16 %v5025
        %v5100 = vunpack.c.l.b16 %v5049
        %v5101 = vunpack.c.l.b16 %v5012
        %v5102 = vunpack.c.l.b16 %v4958
        %v5103 = vunpack.c.l.b16 %v5010
        %v5104 = vunpack.c.l.b16 %v5028
        %v5105 = vunpack.c.l.b16 %v5052
        %v5106 = vunpack.c.l.b16 %v5014
        %v5107 = vunpack.c.l.b16 %v4959
        %v5108 = vunpack.c.l.b16 %v5031
        %v5109 = vunpack.c.l.b16 %v5055
        %v5110 = vunpack.c.l.b16 %v5016
        %v5111 = vunpack.c.l.b16 %v4960
        %v5112 = vunpack.c.l.b16 %v5034
        %v5113 = vunpack.c.l.b16 %v5058
        %v5114 = vunpack.c.l.b16 %v5018
        %v5115 = vunpack.c.l.b16 %v4961
        %v5116 = vunpack.c.l.b16 %v5037
        %v5117 = vunpack.c.l.b16 %v5061
        %v5118 = vunpack.c.l.b16 %v5020
        %v5119 = vunpack.c.l.b16 %v4962
        %v5120 = vunpack.c.l.b16 %v5040
        %v5121 = vunpack.c.l.b16 %v5064
        %v5122 = vunpack.c.l.b16 %v5022
        %v5123 = vunpack.c.l.b16 %v4963
        %v5124 = vunpack.c.l.b16 %v5043
        %v5125 = vunpack.c.l.b16 %v5067
        %v5126 = vunpack.c.l.b16 %v5072
        %v5127 = vunpack.c.l.b16 %v4988
        %v5128 = vunpack.c.l.b16 %v5046
        %v5129 = vunpack.c.l.b16 %v5070
        %v5130 = vunpack.c.l.b16 %v1227
        %v5131 = vld [vmem:[#allocation11] sm:$0xf]
        %v5132 = vld [vmem:[#allocation11 + $0x4] sm:$0xf]
        %v5133 = vld [vmem:[#allocation11 + $0x8] sm:$0xf]
        %v5134 = vld [vmem:[#allocation11 + $0xc] sm:$0xf]
        %v5135 = vld [vmem:[#allocation11 + $0x10] sm:$0xf]
        %v5136 = vld [vmem:[#allocation11 + $0x14] sm:$0xf]
        %v5137 = vld [vmem:[#allocation11 + $0x18] sm:$0xf]
        %v5138 = vld [vmem:[#allocation11 + $0x1c] sm:$0xf]
        %v5139 = vld [vmem:[#allocation11 + $0x20] sm:$0xf]
        %v5140 = vld [vmem:[#allocation11 + $0x24] sm:$0xf]
        %v5141 = vld [vmem:[#allocation11 + $0x28] sm:$0xf]
        %v5142 = vld [vmem:[#allocation11 + $0x2c] sm:$0xf]
        %v5143 = vld [vmem:[#allocation11 + $0x30] sm:$0xf]
        %v5144 = vld [vmem:[#allocation11 + $0x34] sm:$0xf]
        %v5145 = vld [vmem:[#allocation11 + $0x38] sm:$0xf]
        %v5146 = vld [vmem:[#allocation11 + $0x3c] sm:$0xf]
        %v5147 = vld [vmem:[#allocation11 + $0x40] sm:$0xf]
        %v5148 = vld [vmem:[#allocation11 + $0x44] sm:$0xf]
        %v5149 = vld [vmem:[#allocation11 + $0x48] sm:$0xf]
        %v5150 = vld [vmem:[#allocation11 + $0x4c] sm:$0xf]
        %v5151 = vld [vmem:[#allocation11 + $0x50] sm:$0xf]
        %v5152 = vld [vmem:[#allocation11 + $0x54] sm:$0xf]
        %v5153 = vld [vmem:[#allocation11 + $0x58] sm:$0xf]
        %v5154 = vld [vmem:[#allocation11 + $0x5c] sm:$0xf]
        %v5155 = vld [vmem:[#allocation11 + $0x60] sm:$0xf]
        %v5156 = vld [vmem:[#allocation11 + $0x64] sm:$0xf]
        %v5157 = vld [vmem:[#allocation11 + $0x68] sm:$0xf]
        %v5158 = vld [vmem:[#allocation11 + $0x6c] sm:$0xf]
        %v5159 = vld [vmem:[#allocation11 + $0x70] sm:$0xf]
        %v5160 = vld [vmem:[#allocation11 + $0x74] sm:$0xf]
        %v5161 = vld [vmem:[#allocation11 + $0x78] sm:$0xf]
        %v5162 = vld [vmem:[#allocation11 + $0x7c] sm:$0xf]
        %v5163 = vld [vmem:[#allocation11 + $0x80] sm:$0xf]
        %v5164 = vld [vmem:[#allocation11 + $0x84] sm:$0xf]
        %v5165 = vld [vmem:[#allocation11 + $0x88] sm:$0xf]
        %v5166 = vld [vmem:[#allocation11 + $0x8c] sm:$0xf]
        %v5167 = vld [vmem:[#allocation11 + $0x90] sm:$0xf]
        %v5168 = vld [vmem:[#allocation11 + $0x94] sm:$0xf]
        %v5169 = vld [vmem:[#allocation11 + $0x98] sm:$0xf]
        %v5170 = vld [vmem:[#allocation11 + $0x9c] sm:$0xf]
        %v5171 = vld [vmem:[#allocation11 + $0xa0] sm:$0xf]
        %v5172 = vld [vmem:[#allocation11 + $0xa4] sm:$0xf]
        %v5173 = vld [vmem:[#allocation11 + $0xa8] sm:$0xf]
        %v5174 = vld [vmem:[#allocation11 + $0xac] sm:$0xf]
        %v5175 = vld [vmem:[#allocation11 + $0xb0] sm:$0xf]
        %v5176 = vld [vmem:[#allocation11 + $0xb4] sm:$0xf]
        %v5177 = vld [vmem:[#allocation11 + $0xb8] sm:$0xf]
        %v5178 = vld [vmem:[#allocation11 + $0xbc] sm:$0xf]
        %v5179 = vld [vmem:[#allocation11 + $0xc0] sm:$0xf]
        %v5180 = vld [vmem:[#allocation11 + $0xc4] sm:$0xf]
        %v5181 = vld [vmem:[#allocation11 + $0xc8] sm:$0xf]
        %v5182 = vld [vmem:[#allocation11 + $0xcc] sm:$0xf]
        %v5183 = vld [vmem:[#allocation11 + $0xd0] sm:$0xf]
        %v5184 = vld [vmem:[#allocation11 + $0xd4] sm:$0xf]
        %v5185 = vld [vmem:[#allocation11 + $0xd8] sm:$0xf]
        %v5186 = vld [vmem:[#allocation11 + $0xdc] sm:$0xf]
        %v5187 = vld [vmem:[#allocation11 + $0xe0] sm:$0xf]
        %v5188 = vld [vmem:[#allocation11 + $0xe4] sm:$0xf]
        %v5189 = vld [vmem:[#allocation11 + $0xe8] sm:$0xf]
        %v5190 = vld [vmem:[#allocation11 + $0xec] sm:$0xf]
        %v5191 = vld [vmem:[#allocation11 + $0xf0] sm:$0xf]
        %v5192 = vld [vmem:[#allocation11 + $0xf4] sm:$0xf]
        %v5193 = vld [vmem:[#allocation11 + $0xf8] sm:$0xf]
        %v5194 = vld [vmem:[#allocation11 + $0xfc] sm:$0xf]
        %v5195 = vld [vmem:[#allocation11 + $0x100] sm:$0xf]
        %v5196 = vld [vmem:[#allocation11 + $0x104] sm:$0xf]
        %v5197 = vld [vmem:[#allocation11 + $0x108] sm:$0xf]
        %v5198 = vld [vmem:[#allocation11 + $0x10c] sm:$0xf]
        %v5199 = vld [vmem:[#allocation11 + $0x110] sm:$0xf]
        %v5200 = vld [vmem:[#allocation11 + $0x114] sm:$0xf]
        %v5201 = vld [vmem:[#allocation11 + $0x118] sm:$0xf]
        %v5202 = vld [vmem:[#allocation11 + $0x11c] sm:$0xf]
        %v5203 = vpack.c.b16 %v5103, %v5098
        %v5204 = vpack.c.b16 %v5104, %v5099
        %v5205 = vpack.c.b16 %v5105, %v5100
        %v5206 = vpack.c.b16 %v5106, %v5101
        %v5207 = vpack.c.b16 %v5107, %v5102
        %v5208 = vpack.c.b16 %v5112, %v5108
        %v5209 = vpack.c.b16 %v5113, %v5109
        %v5210 = vpack.c.b16 %v5114, %v5110
        %v5211 = vpack.c.b16 %v5115, %v5111
        %v5212 = vpack.c.b16 %v5120, %v5116
        %v5213 = vpack.c.b16 %v5121, %v5117
        %v5214 = vpack.c.b16 %v5122, %v5118
        %v5215 = vpack.c.b16 %v5123, %v5119
        %v5216 = vpack.c.b16 %v5128, %v5124
        %v5217 = vpack.c.b16 %v5129, %v5125
        %v5218 = vpack.c.b16 %v5098, %v5126
        %v5219 = vpack.c.b16 %v5130, %v5127
        %v5305 = vunpack.c.l.b16 %v5131
        %v5306 = vunpack.c.l.b16 %v5132
        %v5307 = vunpack.c.l.b16 %v5133
        %v5308 = vunpack.c.l.b16 %v5134
        %v5309 = vunpack.c.l.b16 %v5135
        %v5310 = vunpack.c.l.b16 %v5136
        %v5311 = vunpack.c.l.b16 %v5137
        %v5312 = vunpack.c.l.b16 %v5138
        %v5313 = vunpack.c.l.b16 %v5139
        %v5314 = vunpack.c.l.b16 %v5140
        %v5315 = vunpack.c.l.b16 %v5141
        %v5316 = vunpack.c.l.b16 %v5142
        %v5317 = vunpack.c.l.b16 %v5143
        %v5318 = vunpack.c.l.b16 %v5144
        %v5319 = vunpack.c.l.b16 %v5145
        %v5320 = vunpack.c.l.b16 %v5146
        %v5321 = vunpack.c.l.b16 %v5147
        %v5322 = vunpack.c.l.b16 %v5148
        %v5323 = vunpack.c.l.b16 %v5149
        %v5324 = vunpack.c.l.b16 %v5150
        %v5325 = vunpack.c.l.b16 %v5151
        %v5326 = vunpack.c.l.b16 %v5152
        %v5327 = vunpack.c.l.b16 %v5153
        %v5328 = vunpack.c.l.b16 %v5154
        %v5329 = vunpack.c.l.b16 %v5155
        %v5330 = vunpack.c.l.b16 %v5156
        %v5331 = vunpack.c.l.b16 %v5157
        %v5332 = vunpack.c.l.b16 %v5158
        %v5333 = vunpack.c.l.b16 %v5159
        %v5334 = vunpack.c.l.b16 %v5160
        %v5335 = vunpack.c.l.b16 %v5161
        %v5336 = vunpack.c.l.b16 %v5162
        %v5337 = vunpack.c.l.b16 %v5163
        %v5338 = vunpack.c.l.b16 %v5164
        %v5339 = vunpack.c.l.b16 %v5165
        %v5340 = vunpack.c.l.b16 %v5166
        %v5341 = vunpack.c.l.b16 %v5167
        %v5342 = vunpack.c.l.b16 %v5168
        %v5343 = vunpack.c.l.b16 %v5169
        %v5344 = vunpack.c.l.b16 %v5170
        %v5345 = vunpack.c.l.b16 %v5171
        %v5346 = vunpack.c.l.b16 %v5172
        %v5347 = vunpack.c.l.b16 %v5173
        %v5348 = vunpack.c.l.b16 %v5174
        %v5349 = vunpack.c.l.b16 %v5175
        %v5350 = vunpack.c.l.b16 %v5176
        %v5351 = vunpack.c.l.b16 %v5177
        %v5352 = vunpack.c.l.b16 %v5178
        %v5353 = vunpack.c.l.b16 %v5179
        %v5354 = vunpack.c.l.b16 %v5180
        %v5355 = vunpack.c.l.b16 %v5181
        %v5356 = vunpack.c.l.b16 %v5182
        %v5357 = vunpack.c.l.b16 %v5183
        %v5358 = vunpack.c.l.b16 %v5184
        %v5359 = vunpack.c.l.b16 %v5185
        %v5360 = vunpack.c.l.b16 %v5186
        %v5361 = vunpack.c.l.b16 %v5187
        %v5362 = vunpack.c.l.b16 %v5188
        %v5363 = vunpack.c.l.b16 %v5189
        %v5364 = vunpack.c.l.b16 %v5190
        %v5365 = vunpack.c.l.b16 %v5191
        %v5366 = vunpack.c.l.b16 %v5192
        %v5367 = vunpack.c.l.b16 %v5193
        %v5368 = vunpack.c.l.b16 %v5194
        %v5369 = vunpack.c.l.b16 %v5195
        %v5370 = vunpack.c.l.b16 %v5196
        %v5371 = vunpack.c.l.b16 %v5197
        %v5372 = vunpack.c.l.b16 %v5198
        %v5373 = vunpack.c.l.b16 %v5199
        %v5374 = vunpack.c.l.b16 %v5200
        %v5375 = vunpack.c.l.b16 %v5201
        %v5376 = vunpack.c.l.b16 %v5202
        %v5377 = vpack.c.b16 %v5306, %v5305
        %v5378 = vpack.c.b16 %v5308, %v5307
        %v5379 = vpack.c.b16 %v5310, %v5309
        %v5380 = vpack.c.b16 %v5312, %v5311
        %v5381 = vpack.c.b16 %v5314, %v5313
        %v5382 = vpack.c.b16 %v5316, %v5315
        %v5383 = vpack.c.b16 %v5318, %v5317
        %v5384 = vpack.c.b16 %v5320, %v5319
        %v5385 = vpack.c.b16 %v5322, %v5321
        %v5386 = vpack.c.b16 %v5324, %v5323
        %v5387 = vpack.c.b16 %v5326, %v5325
        %v5388 = vpack.c.b16 %v5328, %v5327
        %v5389 = vpack.c.b16 %v5330, %v5329
        %v5390 = vpack.c.b16 %v5332, %v5331
        %v5391 = vpack.c.b16 %v5334, %v5333
        %v5392 = vpack.c.b16 %v5336, %v5335
        %v5393 = vpack.c.b16 %v5338, %v5337
        %v5394 = vpack.c.b16 %v5340, %v5339
        %v5395 = vpack.c.b16 %v5342, %v5341
        %v5396 = vpack.c.b16 %v5344, %v5343
        %v5397 = vpack.c.b16 %v5346, %v5345
        %v5398 = vpack.c.b16 %v5348, %v5347
        %v5399 = vpack.c.b16 %v5350, %v5349
        %v5400 = vpack.c.b16 %v5352, %v5351
        %v5401 = vpack.c.b16 %v5354, %v5353
        %v5402 = vpack.c.b16 %v5356, %v5355
        %v5403 = vpack.c.b16 %v5358, %v5357
        %v5404 = vpack.c.b16 %v5360, %v5359
        %v5405 = vpack.c.b16 %v5362, %v5361
        %v5406 = vpack.c.b16 %v5364, %v5363
        %v5407 = vpack.c.b16 %v5366, %v5365
        %v5408 = vpack.c.b16 %v5368, %v5367
        %v5409 = vpack.c.b16 %v5370, %v5369
        %v5410 = vpack.c.b16 %v5372, %v5371
        %v5411 = vpack.c.b16 %v5374, %v5373
        %v5412 = vpack.c.b16 %v5376, %v5375
        %v5450 = vsel %vm2665, %v5207, 0
        %v5453 = vsel %vm2665, %v5211, 0
        %v5456 = vsel %vm2665, %v5215, 0
        %v5459 = vsel %vm2665, %v5219, 0
        %5461 = vmatprep.subr.bf16.mxu0 0
        %5462 = vmatpush1.bf16.msra.mxu0 %v5377
        %5463 = vmatprep.subr.bf16.mxu0 0
        %5464 = vmatpush1.bf16.msra.mxu0 %v5378
        %5465 = vmatprep.subr.bf16.mxu0 0
        %5466 = vmatpush1.bf16.msra.mxu0 %v5379
        %5467 = vmatprep.subr.bf16.mxu0 0
        %5468 = vmatpush1.bf16.msra.mxu0 %v5380
        %5469 = vmatprep.subr.bf16.mxu0 0
        %5470 = vmatpush1.bf16.msra.mxu0 %v5381
        %5471 = vmatprep.subr.bf16.mxu0 0
        %5472 = vmatpush1.bf16.msra.mxu0 %v5382
        %5473 = vmatprep.subr.bf16.mxu0 0
        %5474 = vmatpush1.bf16.msra.mxu0 %v5383
        %5475 = vmatprep.subr.bf16.mxu0 0
        %5476 = vmatpush1.bf16.msra.mxu0 %v5384
        %5477 = vmatprep.subr.bf16.mxu0 0
        %5478 = vmatpush1.bf16.msra.mxu0 %v5385
        %5479 = vmatprep.subr.bf16.mxu0 0
        %5480 = vmatpush1.bf16.msra.mxu0 %v5386
        %5481 = vmatprep.subr.bf16.mxu0 0
        %5482 = vmatpush1.bf16.msra.mxu0 %v5387
        %5483 = vmatprep.subr.bf16.mxu0 0
        %5484 = vmatpush1.bf16.msra.mxu0 %v5388
        %5485 = vmatprep.subr.bf16.mxu0 0
        %5486 = vmatpush1.bf16.msra.mxu0 %v5389
        %5487 = vmatprep.subr.bf16.mxu0 0
        %5488 = vmatpush1.bf16.msra.mxu0 %v5390
        %5489 = vmatprep.subr.bf16.mxu0 0
        %5490 = vmatpush1.bf16.msra.mxu0 %v5391
        %5491 = vmatprep.subr.bf16.mxu0 0
        %5492 = vmatpush1.bf16.msra.mxu0 %v5392
        %5493 = vmatprep.mubr.bf16.mxu0 %v5204
        %5494 = vmatmul.mubr.bf16.gmra.mrb[0].mxu0 %v5203
        %v5495 = vpop.f32.mrb[0].mxu0
        %v5496 = vadd.f32 0.0, %v5495
        %v5497 = vpop.f32.mrb[0].mxu0
        %v5498 = vpop.f32.mrb[0].mxu0
        %v5499 = vadd.f32 0.0, %v5498
        %v5500 = vpop.f32.mrb[0].mxu0
        %5501 = vmatprep.mubr.bf16.mxu0 %v5208
        %5502 = vmatmul.mubr.bf16.gmra.mrb[0].mxu0 %v5206
        %v5503 = vpop.f32.mrb[0].mxu0
        %v5504 = vadd.f32 0.0, %v5503
        %v5505 = vpop.f32.mrb[0].mxu0
        %v5506 = vpop.f32.mrb[0].mxu0
        %v5507 = vadd.f32 0.0, %v5506
        %v5508 = vpop.f32.mrb[0].mxu0
        %5509 = vmatprep.mubr.bf16.mxu0 %v5212
        %5510 = vmatmul.mubr.bf16.gmra.mrb[0].mxu0 %v5210
        %v5511 = vpop.f32.mrb[0].mxu0
        %v5512 = vadd.f32 0.0, %v5511
        %v5513 = vpop.f32.mrb[0].mxu0
        %v5514 = vpop.f32.mrb[0].mxu0
        %v5515 = vadd.f32 0.0, %v5514
        %v5516 = vpop.f32.mrb[0].mxu0
        %5517 = vmatprep.mubr.bf16.mxu0 %v5216
        %5518 = vmatmul.mubr.bf16.gmra.mrb[0].mxu0 %v5214
        %v5519 = vpop.f32.mrb[0].mxu0
        %v5520 = vadd.f32 0.0, %v5519
        %v5521 = vpop.f32.mrb[0].mxu0
        %v5522 = vpop.f32.mrb[0].mxu0
        %v5523 = vadd.f32 0.0, %v5522
        %v5524 = vpop.f32.mrb[0].mxu0
        %5525 = vdwg.mxu0
        %5526 = vmatprep.subr.bf16.mxu0 0
        %5527 = vmatpush1.bf16.msra.mxu0 %v5393
        %5528 = vmatprep.subr.bf16.mxu0 0
        %5529 = vmatpush1.bf16.msra.mxu0 %v5394
        %5530 = vmatprep.subr.bf16.mxu0 0
        %5531 = vmatpush1.bf16.msra.mxu0 %v5395
        %5532 = vmatprep.subr.bf16.mxu0 0
        %5533 = vmatpush1.bf16.msra.mxu0 %v5396
        %5534 = vmatprep.subr.bf16.mxu0 0
        %5535 = vmatpush1.bf16.msra.mxu0 %v5397
        %5536 = vmatprep.subr.bf16.mxu0 0
        %5537 = vmatpush1.bf16.msra.mxu0 %v5398
        %5538 = vmatprep.subr.bf16.mxu0 0
        %5539 = vmatpush1.bf16.msra.mxu0 %v5399
        %5540 = vmatprep.subr.bf16.mxu0 0
        %5541 = vmatpush1.bf16.msra.mxu0 %v5400
        %5542 = vmatprep.subr.bf16.mxu0 0
        %5543 = vmatpush1.bf16.msra.mxu0 %v5401
        %5544 = vmatprep.subr.bf16.mxu0 0
        %5545 = vmatpush1.bf16.msra.mxu0 %v5402
        %5546 = vmatprep.subr.bf16.mxu0 0
        %5547 = vmatpush1.bf16.msra.mxu0 %v5403
        %5548 = vmatprep.subr.bf16.mxu0 0
        %5549 = vmatpush1.bf16.msra.mxu0 %v5404
        %5550 = vmatprep.subr.bf16.mxu0 0
        %5551 = vmatpush1.bf16.msra.mxu0 %v5405
        %5552 = vmatprep.subr.bf16.mxu0 0
        %5553 = vmatpush1.bf16.msra.mxu0 %v5406
        %5554 = vmatprep.subr.bf16.mxu0 0
        %5555 = vmatpush1.bf16.msra.mxu0 %v5407
        %5556 = vmatprep.subr.bf16.mxu0 0
        %5557 = vmatpush1.bf16.msra.mxu0 %v5408
        %5558 = vmatprep.mubr.bf16.mxu0 %v5206
        %5559 = vmatmul.mubr.bf16.gmra.mrb[0].mxu0 %v5205
        %v5560 = vpop.f32.mrb[0].mxu0
        %v5561 = vadd.f32 %v5496, %v5560
        %v5562 = vpop.f32.mrb[0].mxu0
        %v5563 = vpop.f32.mrb[0].mxu0
        %v5564 = vadd.f32 %v5499, %v5563
        %v5565 = vpop.f32.mrb[0].mxu0
        %5566 = vmatprep.mubr.bf16.mxu0 %v5210
        %5567 = vmatmul.mubr.bf16.gmra.mrb[0].mxu0 %v5209
        %v5568 = vpop.f32.mrb[0].mxu0
        %v5569 = vadd.f32 %v5504, %v5568
        %v5570 = vpop.f32.mrb[0].mxu0
        %v5571 = vpop.f32.mrb[0].mxu0
        %v5572 = vadd.f32 %v5507, %v5571
        %v5573 = vpop.f32.mrb[0].mxu0
        %5574 = vmatprep.mubr.bf16.mxu0 %v5214
        %5575 = vmatmul.mubr.bf16.gmra.mrb[0].mxu0 %v5213
        %v5576 = vpop.f32.mrb[0].mxu0
        %v5577 = vadd.f32 %v5512, %v5576
        %v5578 = vpop.f32.mrb[0].mxu0
        %v5579 = vpop.f32.mrb[0].mxu0
        %v5580 = vadd.f32 %v5515, %v5579
        %v5581 = vpop.f32.mrb[0].mxu0
        %5582 = vmatprep.mubr.bf16.mxu0 %v5218
        %5583 = vmatmul.mubr.bf16.gmra.mrb[0].mxu0 %v5217
        %v5584 = vpop.f32.mrb[0].mxu0
        %v5585 = vadd.f32 %v5520, %v5584
        %v5586 = vpop.f32.mrb[0].mxu0
        %v5587 = vpop.f32.mrb[0].mxu0
        %v5588 = vadd.f32 %v5523, %v5587
        %v5589 = vpop.f32.mrb[0].mxu0
        %5590 = vdwg.mxu0
        %5591 = vmatprep.subr.bf16.mxu0 0
        %5592 = vmatpush1.bf16.msra.mxu0 %v5409
        %5593 = vmatprep.subr.bf16.mxu0 0
        %5594 = vmatpush1.bf16.msra.mxu0 %v5410
        %5595 = vmatprep.subr.bf16.mxu0 0
        %5596 = vmatpush1.bf16.msra.mxu0 %v5411
        %5597 = vmatprep.subr.bf16.mxu0 0
        %5598 = vmatpush1.bf16.msra.mxu0 %v5412
        %5599 = vmatprep.subr.bf16.mxu0 0
        %5600 = vmatpush1.bf16.msra.mxu0 0
        %5601 = vmatprep.subr.bf16.mxu0 0
        %5602 = vmatpush1.bf16.msra.mxu0 0
        %5603 = vmatprep.subr.bf16.mxu0 0
        %5604 = vmatpush1.bf16.msra.mxu0 0
        %5605 = vmatprep.subr.bf16.mxu0 0
        %5606 = vmatpush1.bf16.msra.mxu0 0
        %5607 = vmatprep.subr.bf16.mxu0 0
        %5608 = vmatpush1.bf16.msra.mxu0 0
        %5609 = vmatprep.subr.bf16.mxu0 0
        %5610 = vmatpush1.bf16.msra.mxu0 0
        %5611 = vmatprep.subr.bf16.mxu0 0
        %5612 = vmatpush1.bf16.msra.mxu0 0
        %5613 = vmatprep.subr.bf16.mxu0 0
        %5614 = vmatpush1.bf16.msra.mxu0 0
        %5615 = vmatprep.subr.bf16.mxu0 0
        %5616 = vmatpush1.bf16.msra.mxu0 0
        %5617 = vmatprep.subr.bf16.mxu0 0
        %5618 = vmatpush1.bf16.msra.mxu0 0
        %5619 = vmatprep.subr.bf16.mxu0 0
        %5620 = vmatpush1.bf16.msra.mxu0 0
        %5621 = vmatprep.subr.bf16.mxu0 0
        %5622 = vmatpush1.bf16.msra.mxu0 0
        %5623 = vmatprep.mubr.bf16.mxu0 0
        %5624 = vmatmul.mubr.bf16.gmra.mrb[0].mxu0 %v5450
        %v5625 = vpop.f32.mrb[0].mxu0
        %v5626 = vadd.f32 %v5561, %v5625
        %v5627 = vpop.f32.mrb[0].mxu0
        %v5628 = vpop.f32.mrb[0].mxu0
        %v5629 = vadd.f32 %v5564, %v5628
        %v5630 = vpop.f32.mrb[0].mxu0
        %5631 = vmatprep.mubr.bf16.mxu0 0
        %5632 = vmatmul.mubr.bf16.gmra.mrb[0].mxu0 %v5453
        %v5633 = vpop.f32.mrb[0].mxu0
        %v5634 = vadd.f32 %v5569, %v5633
        %v5635 = vpop.f32.mrb[0].mxu0
        %v5636 = vpop.f32.mrb[0].mxu0
        %v5637 = vadd.f32 %v5572, %v5636
        %v5638 = vpop.f32.mrb[0].mxu0
        %5639 = vmatprep.mubr.bf16.mxu0 0
        %5640 = vmatmul.mubr.bf16.gmra.mrb[0].mxu0 %v5456
        %v5641 = vpop.f32.mrb[0].mxu0
        %v5642 = vadd.f32 %v5577, %v5641
        %v5643 = vpop.f32.mrb[0].mxu0
        %v5644 = vpop.f32.mrb[0].mxu0
        %v5645 = vadd.f32 %v5580, %v5644
        %v5646 = vpop.f32.mrb[0].mxu0
        %5647 = vmatprep.mubr.bf16.mxu0 0
        %5648 = vmatmul.mubr.bf16.gmra.mrb[0].mxu0 %v5459
        %v5649 = vpop.f32.mrb[0].mxu0
        %v5650 = vadd.f32 %v5585, %v5649
        %v5651 = vpop.f32.mrb[0].mxu0
        %v5652 = vpop.f32.mrb[0].mxu0
        %v5653 = vadd.f32 %v5588, %v5652
        %v5654 = vpop.f32.mrb[0].mxu0
        %5655 = vdwg.mxu0
        %v5656 = vld [vmem:[#allocation13] sm:$0x1]
        %v5657 = vlaneseq
        %v5658 = vshrl.u32 %v5657, 7
        %v5659 = vsub.s32 0, %v5658
        %v5660 = vrot.slane %v5656, %v5659
        %v5661 = vmul.f32 %v5626, %v5660
        %v5662 = vmul.f32 %v5629, %v5660
        %v5663 = vmul.f32 %v5634, %v5660
        %v5664 = vmul.f32 %v5637, %v5660
        %v5665 = vmul.f32 %v5642, %v5660
        %v5666 = vmul.f32 %v5645, %v5660
        %v5667 = vmul.f32 %v5650, %v5660
        %v5668 = vmul.f32 %v5653, %v5660
        %v5669 = vld [vmem:[#allocation13 + $0x1] sm:$0x1]
        %v5670 = vlaneseq
        %v5671 = vshrl.u32 %v5670, 7
        %v5672 = vsub.s32 0, %v5671
        %v5673 = vrot.slane %v5669, %v5672
        %v5674 = vadd.f32 %v5661, %v5673
        %v5675 = vadd.f32 %v5662, %v5673
        %v5676 = vadd.f32 %v5663, %v5673
        %v5677 = vadd.f32 %v5664, %v5673
        %v5678 = vadd.f32 %v5665, %v5673
        %v5679 = vadd.f32 %v5666, %v5673
        %v5680 = vadd.f32 %v5667, %v5673
        %v5681 = vadd.f32 %v5668, %v5673
        %v5682 = vmax.f32 %v5674, 0.0
        %v5683 = vmax.f32 %v5675, 0.0
        %v5684 = vmax.f32 %v5676, 0.0
        %v5685 = vmax.f32 %v5677, 0.0
        %v5686 = vmax.f32 %v5678, 0.0
        %v5687 = vmax.f32 %v5679, 0.0
        %v5688 = vmax.f32 %v5680, 0.0
        %v5689 = vmax.f32 %v5681, 0.0
        %v5690 = vpack.c.bf16 %v5682, %v5682
        %v5691 = vpack.c.bf16 %v5683, %v5683
        %v5692 = vpack.c.bf16 %v5684, %v5684
        %v5693 = vpack.c.bf16 %v5685, %v5685
        %v5694 = vpack.c.bf16 %v5686, %v5686
        %v5695 = vpack.c.bf16 %v5687, %v5687
        %v5696 = vpack.c.bf16 %v5688, %v5688
        %v5697 = vpack.c.bf16 %v5689, %v5689
        %v5699 = vshrl.u32 %v5690, 16
        %v5701 = vrot.slane %v5699, 7
        %v5702 = vshll.u32 %v5690, 16
        %v5704 = vor.u32 %v5701, %v5702
        %v5706 = vshrl.u32 %v5691, 16
        %v5708 = vrot.slane %v5706, 7
        %v5709 = vshll.u32 %v5691, 16
        %v5711 = vor.u32 %v5708, %v5709
        %v5713 = vshrl.u32 %v5692, 16
        %v5715 = vrot.slane %v5713, 7
        %v5716 = vshll.u32 %v5692, 16
        %v5718 = vor.u32 %v5715, %v5716
        %v5720 = vshrl.u32 %v5693, 16
        %v5722 = vrot.slane %v5720, 7
        %v5723 = vshll.u32 %v5693, 16
        %v5725 = vor.u32 %v5722, %v5723
        %v5727 = vshrl.u32 %v5694, 16
        %v5729 = vrot.slane %v5727, 7
        %v5730 = vshll.u32 %v5694, 16
        %v5732 = vor.u32 %v5729, %v5730
        %v5734 = vshrl.u32 %v5695, 16
        %v5736 = vrot.slane %v5734, 7
        %v5737 = vshll.u32 %v5695, 16
        %v5739 = vor.u32 %v5736, %v5737
        %v5741 = vshrl.u32 %v5696, 16
        %v5743 = vrot.slane %v5741, 7
        %v5744 = vshll.u32 %v5696, 16
        %v5746 = vor.u32 %v5743, %v5744
        %v5748 = vshrl.u32 %v5697, 16
        %v5750 = vrot.slane %v5748, 7
        %v5751 = vshll.u32 %v5697, 16
        %v5753 = vor.u32 %v5750, %v5751
        %v5762 = vsel %vm941, 0, %v5704
        %v5763 = vsel %vm941, 0, %v5711
        %v5764 = vsel %vm941, 0, %v5718
        %v5765 = vsel %vm941, 0, %v5725
        %v5766 = vsel %vm941, 0, %v5732
        %v5767 = vsel %vm941, 0, %v5739
        %v5768 = vsel %vm941, 0, %v5746
        %v5769 = vsel %vm941, 0, %v5753
        %v5770 = vsel %vm4876, %v5762, 0
        %v5771 = vsel %vm4876, %v5763, 0
        %v5772 = vsel %vm4876, %v5764, 0
        %v5773 = vsel %vm4876, %v5765, 0
        %v5774 = vsel %vm4876, %v5766, 0
        %v5775 = vsel %vm4876, %v5767, 0
        %v5776 = vsel %vm4876, %v5768, 0
        %v5777 = vsel %vm4876, %v5769, 0
        %v5779 = vshrl.u32 %v5770, 16
        %v5781 = vshll.u32 %v5770, 16
        %v5783 = vrot.slane %v5781, 1
        %v5784 = vor.u32 %v5779, %v5783
        %v5786 = vshrl.u32 %v5771, 16
        %v5788 = vshll.u32 %v5771, 16
        %v5790 = vrot.slane %v5788, 1
        %v5791 = vor.u32 %v5786, %v5790
        %v5793 = vshrl.u32 %v5772, 16
        %v5795 = vshll.u32 %v5772, 16
        %v5797 = vrot.slane %v5795, 1
        %v5798 = vor.u32 %v5793, %v5797
        %v5800 = vshrl.u32 %v5773, 16
        %v5802 = vshll.u32 %v5773, 16
        %v5804 = vrot.slane %v5802, 1
        %v5805 = vor.u32 %v5800, %v5804
        %v5807 = vshrl.u32 %v5774, 16
        %v5809 = vshll.u32 %v5774, 16
        %v5811 = vrot.slane %v5809, 1
        %v5812 = vor.u32 %v5807, %v5811
        %v5814 = vshrl.u32 %v5775, 16
        %v5816 = vshll.u32 %v5775, 16
        %v5818 = vrot.slane %v5816, 1
        %v5819 = vor.u32 %v5814, %v5818
        %v5821 = vshrl.u32 %v5776, 16
        %v5823 = vshll.u32 %v5776, 16
        %v5825 = vrot.slane %v5823, 1
        %v5826 = vor.u32 %v5821, %v5825
        %v5834 = vrot.slane %v5770, 1
        %v5835 = vrot.slane %v5771, 1
        %v5836 = vrot.slane %v5772, 1
        %v5837 = vrot.slane %v5773, 1
        %v5838 = vrot.slane %v5774, 1
        %v5839 = vrot.slane %v5775, 1
        %v5840 = vrot.slane %v5776, 1
        %v5842 = vshrl.u32 %v5777, 16
        %v5844 = vshll.u32 %v5777, 16
        %v5846 = vrot.slane %v5844, 1
        %v5847 = vor.u32 %v5842, %v5846
        %v5849 = vrot.slane %v5777, 1
        %v5850 = vunpack.c.l.b16 0
        %v5851 = vunpack.c.l.b16 %v981
        %v5852 = vunpack.c.l.b16 %v5770
        %v5853 = vunpack.c.l.b16 %v5784
        %v5854 = vunpack.c.l.b16 %v5834
        %v5855 = vunpack.c.l.b16 %v5771
        %v5856 = vunpack.c.l.b16 %v5791
        %v5857 = vunpack.c.l.b16 %v5835
        %v5858 = vunpack.c.l.b16 %v5772
        %v5859 = vunpack.c.l.b16 %v5798
        %v5860 = vunpack.c.l.b16 %v5836
        %v5861 = vunpack.c.l.b16 %v5773
        %v5862 = vunpack.c.l.b16 %v5805
        %v5863 = vunpack.c.l.b16 %v5837
        %v5864 = vunpack.c.l.b16 %v5774
        %v5865 = vunpack.c.l.b16 %v5812
        %v5866 = vunpack.c.l.b16 %v5838
        %v5867 = vunpack.c.l.b16 %v5775
        %v5868 = vunpack.c.l.b16 %v5819
        %v5869 = vunpack.c.l.b16 %v5839
        %v5870 = vunpack.c.l.b16 %v5776
        %v5871 = vunpack.c.l.b16 %v5826
        %v5872 = vunpack.c.l.b16 %v5840
        %v5873 = vunpack.c.l.b16 %v5777
        %v5874 = vunpack.c.l.b16 %v5847
        %v5875 = vunpack.c.l.b16 %v5849
        %v5876 = vld [vmem:[#allocation14] sm:$0xf]
        %v5877 = vld [vmem:[#allocation14 + $0x4] sm:$0xf]
        %v5878 = vld [vmem:[#allocation14 + $0x8] sm:$0xf]
        %v5879 = vld [vmem:[#allocation14 + $0xc] sm:$0xf]
        %v5880 = vld [vmem:[#allocation14 + $0x10] sm:$0xf]
        %v5881 = vld [vmem:[#allocation14 + $0x14] sm:$0xf]
        %v5882 = vld [vmem:[#allocation14 + $0x18] sm:$0xf]
        %v5883 = vld [vmem:[#allocation14 + $0x1c] sm:$0xf]
        %v5884 = vld [vmem:[#allocation14 + $0x20] sm:$0xf]
        %v5885 = vld [vmem:[#allocation14 + $0x24] sm:$0xf]
        %v5886 = vld [vmem:[#allocation14 + $0x28] sm:$0xf]
        %v5887 = vld [vmem:[#allocation14 + $0x2c] sm:$0xf]
        %v5888 = vld [vmem:[#allocation14 + $0x30] sm:$0xf]
        %v5889 = vld [vmem:[#allocation14 + $0x34] sm:$0xf]
        %v5890 = vld [vmem:[#allocation14 + $0x38] sm:$0xf]
        %v5891 = vld [vmem:[#allocation14 + $0x3c] sm:$0xf]
        %v5892 = vld [vmem:[#allocation14 + $0x40] sm:$0xf]
        %v5893 = vld [vmem:[#allocation14 + $0x44] sm:$0xf]
        %v5894 = vld [vmem:[#allocation14 + $0x48] sm:$0xf]
        %v5895 = vld [vmem:[#allocation14 + $0x4c] sm:$0xf]
        %v5896 = vld [vmem:[#allocation14 + $0x50] sm:$0xf]
        %v5897 = vld [vmem:[#allocation14 + $0x54] sm:$0xf]
        %v5898 = vld [vmem:[#allocation14 + $0x58] sm:$0xf]
        %v5899 = vld [vmem:[#allocation14 + $0x5c] sm:$0xf]
        %v5900 = vld [vmem:[#allocation14 + $0x60] sm:$0xf]
        %v5901 = vld [vmem:[#allocation14 + $0x64] sm:$0xf]
        %v5902 = vld [vmem:[#allocation14 + $0x68] sm:$0xf]
        %v5903 = vld [vmem:[#allocation14 + $0x6c] sm:$0xf]
        %v5904 = vld [vmem:[#allocation14 + $0x70] sm:$0xf]
        %v5905 = vld [vmem:[#allocation14 + $0x74] sm:$0xf]
        %v5906 = vld [vmem:[#allocation14 + $0x78] sm:$0xf]
        %v5907 = vld [vmem:[#allocation14 + $0x7c] sm:$0xf]
        %v5908 = vld [vmem:[#allocation14 + $0x80] sm:$0xf]
        %v5909 = vld [vmem:[#allocation14 + $0x84] sm:$0xf]
        %v5910 = vld [vmem:[#allocation14 + $0x88] sm:$0xf]
        %v5911 = vld [vmem:[#allocation14 + $0x8c] sm:$0xf]
        %v5912 = vld [vmem:[#allocation14 + $0x90] sm:$0xf]
        %v5913 = vld [vmem:[#allocation14 + $0x94] sm:$0xf]
        %v5914 = vld [vmem:[#allocation14 + $0x98] sm:$0xf]
        %v5915 = vld [vmem:[#allocation14 + $0x9c] sm:$0xf]
        %v5916 = vld [vmem:[#allocation14 + $0xa0] sm:$0xf]
        %v5917 = vld [vmem:[#allocation14 + $0xa4] sm:$0xf]
        %v5918 = vld [vmem:[#allocation14 + $0xa8] sm:$0xf]
        %v5919 = vld [vmem:[#allocation14 + $0xac] sm:$0xf]
        %v5920 = vld [vmem:[#allocation14 + $0xb0] sm:$0xf]
        %v5921 = vld [vmem:[#allocation14 + $0xb4] sm:$0xf]
        %v5922 = vld [vmem:[#allocation14 + $0xb8] sm:$0xf]
        %v5923 = vld [vmem:[#allocation14 + $0xbc] sm:$0xf]
        %v5924 = vld [vmem:[#allocation14 + $0xc0] sm:$0xf]
        %v5925 = vld [vmem:[#allocation14 + $0xc4] sm:$0xf]
        %v5926 = vld [vmem:[#allocation14 + $0xc8] sm:$0xf]
        %v5927 = vld [vmem:[#allocation14 + $0xcc] sm:$0xf]
        %v5928 = vld [vmem:[#allocation14 + $0xd0] sm:$0xf]
        %v5929 = vld [vmem:[#allocation14 + $0xd4] sm:$0xf]
        %v5930 = vld [vmem:[#allocation14 + $0xd8] sm:$0xf]
        %v5931 = vld [vmem:[#allocation14 + $0xdc] sm:$0xf]
        %v5932 = vld [vmem:[#allocation14 + $0xe0] sm:$0xf]
        %v5933 = vld [vmem:[#allocation14 + $0xe4] sm:$0xf]
        %v5934 = vld [vmem:[#allocation14 + $0xe8] sm:$0xf]
        %v5935 = vld [vmem:[#allocation14 + $0xec] sm:$0xf]
        %v5936 = vld [vmem:[#allocation14 + $0xf0] sm:$0xf]
        %v5937 = vld [vmem:[#allocation14 + $0xf4] sm:$0xf]
        %v5938 = vld [vmem:[#allocation14 + $0xf8] sm:$0xf]
        %v5939 = vld [vmem:[#allocation14 + $0xfc] sm:$0xf]
        %v5940 = vld [vmem:[#allocation14 + $0x100] sm:$0xf]
        %v5941 = vld [vmem:[#allocation14 + $0x104] sm:$0xf]
        %v5942 = vld [vmem:[#allocation14 + $0x108] sm:$0xf]
        %v5943 = vld [vmem:[#allocation14 + $0x10c] sm:$0xf]
        %v5944 = vld [vmem:[#allocation14 + $0x110] sm:$0xf]
        %v5945 = vld [vmem:[#allocation14 + $0x114] sm:$0xf]
        %v5946 = vld [vmem:[#allocation14 + $0x118] sm:$0xf]
        %v5947 = vld [vmem:[#allocation14 + $0x11c] sm:$0xf]
        %v5948 = vld [vmem:[#allocation14 + $0x120] sm:$0xf]
        %v5949 = vld [vmem:[#allocation14 + $0x124] sm:$0xf]
        %v5950 = vld [vmem:[#allocation14 + $0x128] sm:$0xf]
        %v5951 = vld [vmem:[#allocation14 + $0x12c] sm:$0xf]
        %v5952 = vld [vmem:[#allocation14 + $0x130] sm:$0xf]
        %v5953 = vld [vmem:[#allocation14 + $0x134] sm:$0xf]
        %v5954 = vld [vmem:[#allocation14 + $0x138] sm:$0xf]
        %v5955 = vld [vmem:[#allocation14 + $0x13c] sm:$0xf]
        %v5956 = vld [vmem:[#allocation14 + $0x140] sm:$0xf]
        %v5957 = vld [vmem:[#allocation14 + $0x144] sm:$0xf]
        %v5958 = vld [vmem:[#allocation14 + $0x148] sm:$0xf]
        %v5959 = vld [vmem:[#allocation14 + $0x14c] sm:$0xf]
        %v5960 = vld [vmem:[#allocation14 + $0x150] sm:$0xf]
        %v5961 = vld [vmem:[#allocation14 + $0x154] sm:$0xf]
        %v5962 = vld [vmem:[#allocation14 + $0x158] sm:$0xf]
        %v5963 = vld [vmem:[#allocation14 + $0x15c] sm:$0xf]
        %v5964 = vld [vmem:[#allocation14 + $0x160] sm:$0xf]
        %v5965 = vld [vmem:[#allocation14 + $0x164] sm:$0xf]
        %v5966 = vld [vmem:[#allocation14 + $0x168] sm:$0xf]
        %v5967 = vld [vmem:[#allocation14 + $0x16c] sm:$0xf]
        %v5968 = vld [vmem:[#allocation14 + $0x170] sm:$0xf]
        %v5969 = vld [vmem:[#allocation14 + $0x174] sm:$0xf]
        %v5970 = vld [vmem:[#allocation14 + $0x178] sm:$0xf]
        %v5971 = vld [vmem:[#allocation14 + $0x17c] sm:$0xf]
        %v5972 = vld [vmem:[#allocation14 + $0x180] sm:$0xf]
        %v5973 = vld [vmem:[#allocation14 + $0x184] sm:$0xf]
        %v5974 = vld [vmem:[#allocation14 + $0x188] sm:$0xf]
        %v5975 = vld [vmem:[#allocation14 + $0x18c] sm:$0xf]
        %v5976 = vld [vmem:[#allocation14 + $0x190] sm:$0xf]
        %v5977 = vld [vmem:[#allocation14 + $0x194] sm:$0xf]
        %v5978 = vld [vmem:[#allocation14 + $0x198] sm:$0xf]
        %v5979 = vld [vmem:[#allocation14 + $0x19c] sm:$0xf]
        %v5980 = vld [vmem:[#allocation14 + $0x1a0] sm:$0xf]
        %v5981 = vld [vmem:[#allocation14 + $0x1a4] sm:$0xf]
        %v5982 = vld [vmem:[#allocation14 + $0x1a8] sm:$0xf]
        %v5983 = vld [vmem:[#allocation14 + $0x1ac] sm:$0xf]
        %v5984 = vld [vmem:[#allocation14 + $0x1b0] sm:$0xf]
        %v5985 = vld [vmem:[#allocation14 + $0x1b4] sm:$0xf]
        %v5986 = vld [vmem:[#allocation14 + $0x1b8] sm:$0xf]
        %v5987 = vld [vmem:[#allocation14 + $0x1bc] sm:$0xf]
        %v5988 = vld [vmem:[#allocation14 + $0x1c0] sm:$0xf]
        %v5989 = vld [vmem:[#allocation14 + $0x1c4] sm:$0xf]
        %v5990 = vld [vmem:[#allocation14 + $0x1c8] sm:$0xf]
        %v5991 = vld [vmem:[#allocation14 + $0x1cc] sm:$0xf]
        %v5992 = vld [vmem:[#allocation14 + $0x1d0] sm:$0xf]
        %v5993 = vld [vmem:[#allocation14 + $0x1d4] sm:$0xf]
        %v5994 = vld [vmem:[#allocation14 + $0x1d8] sm:$0xf]
        %v5995 = vld [vmem:[#allocation14 + $0x1dc] sm:$0xf]
        %v5996 = vld [vmem:[#allocation14 + $0x1e0] sm:$0xf]
        %v5997 = vld [vmem:[#allocation14 + $0x1e4] sm:$0xf]
        %v5998 = vld [vmem:[#allocation14 + $0x1e8] sm:$0xf]
        %v5999 = vld [vmem:[#allocation14 + $0x1ec] sm:$0xf]
        %v6000 = vld [vmem:[#allocation14 + $0x1f0] sm:$0xf]
        %v6001 = vld [vmem:[#allocation14 + $0x1f4] sm:$0xf]
        %v6002 = vld [vmem:[#allocation14 + $0x1f8] sm:$0xf]
        %v6003 = vld [vmem:[#allocation14 + $0x1fc] sm:$0xf]
        %v6004 = vld [vmem:[#allocation14 + $0x200] sm:$0xf]
        %v6005 = vld [vmem:[#allocation14 + $0x204] sm:$0xf]
        %v6006 = vld [vmem:[#allocation14 + $0x208] sm:$0xf]
        %v6007 = vld [vmem:[#allocation14 + $0x20c] sm:$0xf]
        %v6008 = vld [vmem:[#allocation14 + $0x210] sm:$0xf]
        %v6009 = vld [vmem:[#allocation14 + $0x214] sm:$0xf]
        %v6010 = vld [vmem:[#allocation14 + $0x218] sm:$0xf]
        %v6011 = vld [vmem:[#allocation14 + $0x21c] sm:$0xf]
        %v6012 = vld [vmem:[#allocation14 + $0x220] sm:$0xf]
        %v6013 = vld [vmem:[#allocation14 + $0x224] sm:$0xf]
        %v6014 = vld [vmem:[#allocation14 + $0x228] sm:$0xf]
        %v6015 = vld [vmem:[#allocation14 + $0x22c] sm:$0xf]
        %v6016 = vld [vmem:[#allocation14 + $0x230] sm:$0xf]
        %v6017 = vld [vmem:[#allocation14 + $0x234] sm:$0xf]
        %v6018 = vld [vmem:[#allocation14 + $0x238] sm:$0xf]
        %v6019 = vld [vmem:[#allocation14 + $0x23c] sm:$0xf]
        %v6020 = vpack.c.b16 %v5852, %v5850
        %v6021 = vpack.c.b16 %v5853, %v5851
        %v6022 = vpack.c.b16 %v5854, %v5130
        %v6023 = vpack.c.b16 %v5855, %v5852
        %v6024 = vpack.c.b16 %v5856, %v5853
        %v6025 = vpack.c.b16 %v5857, %v5854
        %v6026 = vpack.c.b16 %v5858, %v5855
        %v6027 = vpack.c.b16 %v5859, %v5856
        %v6028 = vpack.c.b16 %v5860, %v5857
        %v6029 = vpack.c.b16 %v5861, %v5858
        %v6030 = vpack.c.b16 %v5862, %v5859
        %v6031 = vpack.c.b16 %v5863, %v5860
        %v6032 = vpack.c.b16 %v5864, %v5861
        %v6033 = vpack.c.b16 %v5865, %v5862
        %v6034 = vpack.c.b16 %v5866, %v5863
        %v6035 = vpack.c.b16 %v5867, %v5864
        %v6036 = vpack.c.b16 %v5868, %v5865
        %v6037 = vpack.c.b16 %v5869, %v5866
        %v6038 = vpack.c.b16 %v5870, %v5867
        %v6039 = vpack.c.b16 %v5871, %v5868
        %v6040 = vpack.c.b16 %v5872, %v5869
        %v6041 = vpack.c.b16 %v5873, %v5870
        %v6042 = vpack.c.b16 %v5874, %v5871
        %v6043 = vpack.c.b16 %v5875, %v5872
        %v6044 = vpack.c.b16 %v5850, %v5873
        %v6045 = vpack.c.b16 %v5851, %v5874
        %v6046 = vpack.c.b16 %v5130, %v5875
        %v6218 = vunpack.c.l.b16 %v5876
        %v6219 = vunpack.c.l.b16 %v5877
        %v6220 = vunpack.c.l.b16 %v5878
        %v6221 = vunpack.c.l.b16 %v5879
        %v6222 = vunpack.c.l.b16 %v5880
        %v6223 = vunpack.c.l.b16 %v5881
        %v6224 = vunpack.c.l.b16 %v5882
        %v6225 = vunpack.c.l.b16 %v5883
        %v6226 = vunpack.c.l.b16 %v5884
        %v6227 = vunpack.c.l.b16 %v5885
        %v6228 = vunpack.c.l.b16 %v5886
        %v6229 = vunpack.c.l.b16 %v5887
        %v6230 = vunpack.c.l.b16 %v5888
        %v6231 = vunpack.c.l.b16 %v5889
        %v6232 = vunpack.c.l.b16 %v5890
        %v6233 = vunpack.c.l.b16 %v5891
        %v6234 = vunpack.c.l.b16 %v5892
        %v6235 = vunpack.c.l.b16 %v5893
        %v6236 = vunpack.c.l.b16 %v5894
        %v6237 = vunpack.c.l.b16 %v5895
        %v6238 = vunpack.c.l.b16 %v5896
        %v6239 = vunpack.c.l.b16 %v5897
        %v6240 = vunpack.c.l.b16 %v5898
        %v6241 = vunpack.c.l.b16 %v5899
        %v6242 = vunpack.c.l.b16 %v5900
        %v6243 = vunpack.c.l.b16 %v5901
        %v6244 = vunpack.c.l.b16 %v5902
        %v6245 = vunpack.c.l.b16 %v5903
        %v6246 = vunpack.c.l.b16 %v5904
        %v6247 = vunpack.c.l.b16 %v5905
        %v6248 = vunpack.c.l.b16 %v5906
        %v6249 = vunpack.c.l.b16 %v5907
        %v6250 = vunpack.c.l.b16 %v5908
        %v6251 = vunpack.c.l.b16 %v5909
        %v6252 = vunpack.c.l.b16 %v5910
        %v6253 = vunpack.c.l.b16 %v5911
        %v6254 = vunpack.c.l.b16 %v5912
        %v6255 = vunpack.c.l.b16 %v5913
        %v6256 = vunpack.c.l.b16 %v5914
        %v6257 = vunpack.c.l.b16 %v5915
        %v6258 = vunpack.c.l.b16 %v5916
        %v6259 = vunpack.c.l.b16 %v5917
        %v6260 = vunpack.c.l.b16 %v5918
        %v6261 = vunpack.c.l.b16 %v5919
        %v6262 = vunpack.c.l.b16 %v5920
        %v6263 = vunpack.c.l.b16 %v5921
        %v6264 = vunpack.c.l.b16 %v5922
        %v6265 = vunpack.c.l.b16 %v5923
        %v6266 = vunpack.c.l.b16 %v5924
        %v6267 = vunpack.c.l.b16 %v5925
        %v6268 = vunpack.c.l.b16 %v5926
        %v6269 = vunpack.c.l.b16 %v5927
        %v6270 = vunpack.c.l.b16 %v5928
        %v6271 = vunpack.c.l.b16 %v5929
        %v6272 = vunpack.c.l.b16 %v5930
        %v6273 = vunpack.c.l.b16 %v5931
        %v6274 = vunpack.c.l.b16 %v5932
        %v6275 = vunpack.c.l.b16 %v5933
        %v6276 = vunpack.c.l.b16 %v5934
        %v6277 = vunpack.c.l.b16 %v5935
        %v6278 = vunpack.c.l.b16 %v5936
        %v6279 = vunpack.c.l.b16 %v5937
        %v6280 = vunpack.c.l.b16 %v5938
        %v6281 = vunpack.c.l.b16 %v5939
        %v6282 = vunpack.c.l.b16 %v5940
        %v6283 = vunpack.c.l.b16 %v5941
        %v6284 = vunpack.c.l.b16 %v5942
        %v6285 = vunpack.c.l.b16 %v5943
        %v6286 = vunpack.c.l.b16 %v5944
        %v6287 = vunpack.c.l.b16 %v5945
        %v6288 = vunpack.c.l.b16 %v5946
        %v6289 = vunpack.c.l.b16 %v5947
        %v6290 = vunpack.c.l.b16 %v5948
        %v6291 = vunpack.c.l.b16 %v5949
        %v6292 = vunpack.c.l.b16 %v5950
        %v6293 = vunpack.c.l.b16 %v5951
        %v6294 = vunpack.c.l.b16 %v5952
        %v6295 = vunpack.c.l.b16 %v5953
        %v6296 = vunpack.c.l.b16 %v5954
        %v6297 = vunpack.c.l.b16 %v5955
        %v6298 = vunpack.c.l.b16 %v5956
        %v6299 = vunpack.c.l.b16 %v5957
        %v6300 = vunpack.c.l.b16 %v5958
        %v6301 = vunpack.c.l.b16 %v5959
        %v6302 = vunpack.c.l.b16 %v5960
        %v6303 = vunpack.c.l.b16 %v5961
        %v6304 = vunpack.c.l.b16 %v5962
        %v6305 = vunpack.c.l.b16 %v5963
        %v6306 = vunpack.c.l.b16 %v5964
        %v6307 = vunpack.c.l.b16 %v5965
        %v6308 = vunpack.c.l.b16 %v5966
        %v6309 = vunpack.c.l.b16 %v5967
        %v6310 = vunpack.c.l.b16 %v5968
        %v6311 = vunpack.c.l.b16 %v5969
        %v6312 = vunpack.c.l.b16 %v5970
        %v6313 = vunpack.c.l.b16 %v5971
        %v6314 = vunpack.c.l.b16 %v5972
        %v6315 = vunpack.c.l.b16 %v5973
        %v6316 = vunpack.c.l.b16 %v5974
        %v6317 = vunpack.c.l.b16 %v5975
        %v6318 = vunpack.c.l.b16 %v5976
        %v6319 = vunpack.c.l.b16 %v5977
        %v6320 = vunpack.c.l.b16 %v5978
        %v6321 = vunpack.c.l.b16 %v5979
        %v6322 = vunpack.c.l.b16 %v5980
        %v6323 = vunpack.c.l.b16 %v5981
        %v6324 = vunpack.c.l.b16 %v5982
        %v6325 = vunpack.c.l.b16 %v5983
        %v6326 = vunpack.c.l.b16 %v5984
        %v6327 = vunpack.c.l.b16 %v5985
        %v6328 = vunpack.c.l.b16 %v5986
        %v6329 = vunpack.c.l.b16 %v5987
        %v6330 = vunpack.c.l.b16 %v5988
        %v6331 = vunpack.c.l.b16 %v5989
        %v6332 = vunpack.c.l.b16 %v5990
        %v6333 = vunpack.c.l.b16 %v5991
        %v6334 = vunpack.c.l.b16 %v5992
        %v6335 = vunpack.c.l.b16 %v5993
        %v6336 = vunpack.c.l.b16 %v5994
        %v6337 = vunpack.c.l.b16 %v5995
        %v6338 = vunpack.c.l.b16 %v5996
        %v6339 = vunpack.c.l.b16 %v5997
        %v6340 = vunpack.c.l.b16 %v5998
        %v6341 = vunpack.c.l.b16 %v5999
        %v6342 = vunpack.c.l.b16 %v6000
        %v6343 = vunpack.c.l.b16 %v6001
        %v6344 = vunpack.c.l.b16 %v6002
        %v6345 = vunpack.c.l.b16 %v6003
        %v6346 = vunpack.c.l.b16 %v6004
        %v6347 = vunpack.c.l.b16 %v6005
        %v6348 = vunpack.c.l.b16 %v6006
        %v6349 = vunpack.c.l.b16 %v6007
        %v6350 = vunpack.c.l.b16 %v6008
        %v6351 = vunpack.c.l.b16 %v6009
        %v6352 = vunpack.c.l.b16 %v6010
        %v6353 = vunpack.c.l.b16 %v6011
        %v6354 = vunpack.c.l.b16 %v6012
        %v6355 = vunpack.c.l.b16 %v6013
        %v6356 = vunpack.c.l.b16 %v6014
        %v6357 = vunpack.c.l.b16 %v6015
        %v6358 = vunpack.c.l.b16 %v6016
        %v6359 = vunpack.c.l.b16 %v6017
        %v6360 = vunpack.c.l.b16 %v6018
        %v6361 = vunpack.c.l.b16 %v6019
        %v6362 = vpack.c.b16 %v6219, %v6218
        %v6363 = vpack.c.b16 %v6221, %v6220
        %v6364 = vpack.c.b16 %v6223, %v6222
        %v6365 = vpack.c.b16 %v6225, %v6224
        %v6366 = vpack.c.b16 %v6227, %v6226
        %v6367 = vpack.c.b16 %v6229, %v6228
        %v6368 = vpack.c.b16 %v6231, %v6230
        %v6369 = vpack.c.b16 %v6233, %v6232
        %v6370 = vpack.c.b16 %v6235, %v6234
        %v6371 = vpack.c.b16 %v6237, %v6236
        %v6372 = vpack.c.b16 %v6239, %v6238
        %v6373 = vpack.c.b16 %v6241, %v6240
        %v6374 = vpack.c.b16 %v6243, %v6242
        %v6375 = vpack.c.b16 %v6245, %v6244
        %v6376 = vpack.c.b16 %v6247, %v6246
        %v6377 = vpack.c.b16 %v6249, %v6248
        %v6378 = vpack.c.b16 %v6251, %v6250
        %v6379 = vpack.c.b16 %v6253, %v6252
        %v6380 = vpack.c.b16 %v6255, %v6254
        %v6381 = vpack.c.b16 %v6257, %v6256
        %v6382 = vpack.c.b16 %v6259, %v6258
        %v6383 = vpack.c.b16 %v6261, %v6260
        %v6384 = vpack.c.b16 %v6263, %v6262
        %v6385 = vpack.c.b16 %v6265, %v6264
        %v6386 = vpack.c.b16 %v6267, %v6266
        %v6387 = vpack.c.b16 %v6269, %v6268
        %v6388 = vpack.c.b16 %v6271, %v6270
        %v6389 = vpack.c.b16 %v6273, %v6272
        %v6390 = vpack.c.b16 %v6275, %v6274
        %v6391 = vpack.c.b16 %v6277, %v6276
        %v6392 = vpack.c.b16 %v6279, %v6278
        %v6393 = vpack.c.b16 %v6281, %v6280
        %v6394 = vpack.c.b16 %v6283, %v6282
        %v6395 = vpack.c.b16 %v6285, %v6284
        %v6396 = vpack.c.b16 %v6287, %v6286
        %v6397 = vpack.c.b16 %v6289, %v6288
        %v6398 = vpack.c.b16 %v6291, %v6290
        %v6399 = vpack.c.b16 %v6293, %v6292
        %v6400 = vpack.c.b16 %v6295, %v6294
        %v6401 = vpack.c.b16 %v6297, %v6296
        %v6402 = vpack.c.b16 %v6299, %v6298
        %v6403 = vpack.c.b16 %v6301, %v6300
        %v6404 = vpack.c.b16 %v6303, %v6302
        %v6405 = vpack.c.b16 %v6305, %v6304
        %v6406 = vpack.c.b16 %v6307, %v6306
        %v6407 = vpack.c.b16 %v6309, %v6308
        %v6408 = vpack.c.b16 %v6311, %v6310
        %v6409 = vpack.c.b16 %v6313, %v6312
        %v6410 = vpack.c.b16 %v6315, %v6314
        %v6411 = vpack.c.b16 %v6317, %v6316
        %v6412 = vpack.c.b16 %v6319, %v6318
        %v6413 = vpack.c.b16 %v6321, %v6320
        %v6414 = vpack.c.b16 %v6323, %v6322
        %v6415 = vpack.c.b16 %v6325, %v6324
        %v6416 = vpack.c.b16 %v6327, %v6326
        %v6417 = vpack.c.b16 %v6329, %v6328
        %v6418 = vpack.c.b16 %v6331, %v6330
        %v6419 = vpack.c.b16 %v6333, %v6332
        %v6420 = vpack.c.b16 %v6335, %v6334
        %v6421 = vpack.c.b16 %v6337, %v6336
        %v6422 = vpack.c.b16 %v6339, %v6338
        %v6423 = vpack.c.b16 %v6341, %v6340
        %v6424 = vpack.c.b16 %v6343, %v6342
        %v6425 = vpack.c.b16 %v6345, %v6344
        %v6426 = vpack.c.b16 %v6347, %v6346
        %v6427 = vpack.c.b16 %v6349, %v6348
        %v6428 = vpack.c.b16 %v6351, %v6350
        %v6429 = vpack.c.b16 %v6353, %v6352
        %v6430 = vpack.c.b16 %v6355, %v6354
        %v6431 = vpack.c.b16 %v6357, %v6356
        %v6432 = vpack.c.b16 %v6359, %v6358
        %v6433 = vpack.c.b16 %v6361, %v6360
        %6506 = vmatprep.subr.bf16.mxu0 0
        %6507 = vmatpush1.bf16.msra.mxu0 %v6362
        %6508 = vmatprep.subr.bf16.mxu0 0
        %6509 = vmatpush1.bf16.msra.mxu0 %v6363
        %6510 = vmatprep.subr.bf16.mxu0 0
        %6511 = vmatpush1.bf16.msra.mxu0 %v6364
        %6512 = vmatprep.subr.bf16.mxu0 0
        %6513 = vmatpush1.bf16.msra.mxu0 %v6365
        %6514 = vmatprep.subr.bf16.mxu0 0
        %6515 = vmatpush1.bf16.msra.mxu0 %v6366
        %6516 = vmatprep.subr.bf16.mxu0 0
        %6517 = vmatpush1.bf16.msra.mxu0 %v6367
        %6518 = vmatprep.subr.bf16.mxu0 0
        %6519 = vmatpush1.bf16.msra.mxu0 %v6368
        %6520 = vmatprep.subr.bf16.mxu0 0
        %6521 = vmatpush1.bf16.msra.mxu0 %v6369
        %6522 = vmatprep.subr.bf16.mxu0 0
        %6523 = vmatpush1.bf16.msra.mxu0 %v6370
        %6524 = vmatprep.subr.bf16.mxu0 0
        %6525 = vmatpush1.bf16.msra.mxu0 %v6371
        %6526 = vmatprep.subr.bf16.mxu0 0
        %6527 = vmatpush1.bf16.msra.mxu0 %v6372
        %6528 = vmatprep.subr.bf16.mxu0 0
        %6529 = vmatpush1.bf16.msra.mxu0 %v6373
        %6530 = vmatprep.subr.bf16.mxu0 0
        %6531 = vmatpush1.bf16.msra.mxu0 %v6374
        %6532 = vmatprep.subr.bf16.mxu0 0
        %6533 = vmatpush1.bf16.msra.mxu0 %v6375
        %6534 = vmatprep.subr.bf16.mxu0 0
        %6535 = vmatpush1.bf16.msra.mxu0 %v6376
        %6536 = vmatprep.subr.bf16.mxu0 0
        %6537 = vmatpush1.bf16.msra.mxu0 %v6377
        %6538 = vmatprep.mubr.bf16.mxu0 %v6021
        %6539 = vmatmul.mubr.bf16.gmra.mrb[0].mxu0 %v6020
        %v6540 = vpop.f32.mrb[0].mxu0
        %v6541 = vadd.f32 0.0, %v6540
        %v6542 = vpop.f32.mrb[0].mxu0
        %v6543 = vpop.f32.mrb[0].mxu0
        %v6544 = vadd.f32 0.0, %v6543
        %v6545 = vpop.f32.mrb[0].mxu0
        %6546 = vmatprep.mubr.bf16.mxu0 %v6027
        %6547 = vmatmul.mubr.bf16.gmra.mrb[0].mxu0 %v6026
        %v6548 = vpop.f32.mrb[0].mxu0
        %v6549 = vadd.f32 0.0, %v6548
        %v6550 = vpop.f32.mrb[0].mxu0
        %v6551 = vpop.f32.mrb[0].mxu0
        %v6552 = vadd.f32 0.0, %v6551
        %v6553 = vpop.f32.mrb[0].mxu0
        %6554 = vmatprep.mubr.bf16.mxu0 %v6033
        %6555 = vmatmul.mubr.bf16.gmra.mrb[0].mxu0 %v6032
        %v6556 = vpop.f32.mrb[0].mxu0
        %v6557 = vadd.f32 0.0, %v6556
        %v6558 = vpop.f32.mrb[0].mxu0
        %v6559 = vpop.f32.mrb[0].mxu0
        %v6560 = vadd.f32 0.0, %v6559
        %v6561 = vpop.f32.mrb[0].mxu0
        %6562 = vmatprep.mubr.bf16.mxu0 %v6039
        %6563 = vmatmul.mubr.bf16.gmra.mrb[0].mxu0 %v6038
        %v6564 = vpop.f32.mrb[0].mxu0
        %v6565 = vadd.f32 0.0, %v6564
        %v6566 = vpop.f32.mrb[0].mxu0
        %v6567 = vpop.f32.mrb[0].mxu0
        %v6568 = vadd.f32 0.0, %v6567
        %v6569 = vpop.f32.mrb[0].mxu0
        %6570 = vdwg.mxu0
        %6571 = vmatprep.subr.bf16.mxu0 0
        %6572 = vmatpush1.bf16.msra.mxu0 %v6378
        %6573 = vmatprep.subr.bf16.mxu0 0
        %6574 = vmatpush1.bf16.msra.mxu0 %v6379
        %6575 = vmatprep.subr.bf16.mxu0 0
        %6576 = vmatpush1.bf16.msra.mxu0 %v6380
        %6577 = vmatprep.subr.bf16.mxu0 0
        %6578 = vmatpush1.bf16.msra.mxu0 %v6381
        %6579 = vmatprep.subr.bf16.mxu0 0
        %6580 = vmatpush1.bf16.msra.mxu0 %v6382
        %6581 = vmatprep.subr.bf16.mxu0 0
        %6582 = vmatpush1.bf16.msra.mxu0 %v6383
        %6583 = vmatprep.subr.bf16.mxu0 0
        %6584 = vmatpush1.bf16.msra.mxu0 %v6384
        %6585 = vmatprep.subr.bf16.mxu0 0
        %6586 = vmatpush1.bf16.msra.mxu0 %v6385
        %6587 = vmatprep.subr.bf16.mxu0 0
        %6588 = vmatpush1.bf16.msra.mxu0 %v6386
        %6589 = vmatprep.subr.bf16.mxu0 0
        %6590 = vmatpush1.bf16.msra.mxu0 %v6387
        %6591 = vmatprep.subr.bf16.mxu0 0
        %6592 = vmatpush1.bf16.msra.mxu0 %v6388
        %6593 = vmatprep.subr.bf16.mxu0 0
        %6594 = vmatpush1.bf16.msra.mxu0 %v6389
        %6595 = vmatprep.subr.bf16.mxu0 0
        %6596 = vmatpush1.bf16.msra.mxu0 %v6390
        %6597 = vmatprep.subr.bf16.mxu0 0
        %6598 = vmatpush1.bf16.msra.mxu0 %v6391
        %6599 = vmatprep.subr.bf16.mxu0 0
        %6600 = vmatpush1.bf16.msra.mxu0 %v6392
        %6601 = vmatprep.subr.bf16.mxu0 0
        %6602 = vmatpush1.bf16.msra.mxu0 %v6393
        %6603 = vmatprep.mubr.bf16.mxu0 %v6023
        %6604 = vmatmul.mubr.bf16.gmra.mrb[0].mxu0 %v6022
        %v6605 = vpop.f32.mrb[0].mxu0
        %v6606 = vadd.f32 %v6541, %v6605
        %v6607 = vpop.f32.mrb[0].mxu0
        %v6608 = vpop.f32.mrb[0].mxu0
        %v6609 = vadd.f32 %v6544, %v6608
        %v6610 = vpop.f32.mrb[0].mxu0
        %6611 = vmatprep.mubr.bf16.mxu0 %v6029
        %6612 = vmatmul.mubr.bf16.gmra.mrb[0].mxu0 %v6028
        %v6613 = vpop.f32.mrb[0].mxu0
        %v6614 = vadd.f32 %v6549, %v6613
        %v6615 = vpop.f32.mrb[0].mxu0
        %v6616 = vpop.f32.mrb[0].mxu0
        %v6617 = vadd.f32 %v6552, %v6616
        %v6618 = vpop.f32.mrb[0].mxu0
        %6619 = vmatprep.mubr.bf16.mxu0 %v6035
        %6620 = vmatmul.mubr.bf16.gmra.mrb[0].mxu0 %v6034
        %v6621 = vpop.f32.mrb[0].mxu0
        %v6622 = vadd.f32 %v6557, %v6621
        %v6623 = vpop.f32.mrb[0].mxu0
        %v6624 = vpop.f32.mrb[0].mxu0
        %v6625 = vadd.f32 %v6560, %v6624
        %v6626 = vpop.f32.mrb[0].mxu0
        %6627 = vmatprep.mubr.bf16.mxu0 %v6041
        %6628 = vmatmul.mubr.bf16.gmra.mrb[0].mxu0 %v6040
        %v6629 = vpop.f32.mrb[0].mxu0
        %v6630 = vadd.f32 %v6565, %v6629
        %v6631 = vpop.f32.mrb[0].mxu0
        %v6632 = vpop.f32.mrb[0].mxu0
        %v6633 = vadd.f32 %v6568, %v6632
        %v6634 = vpop.f32.mrb[0].mxu0
        %6635 = vdwg.mxu0
        %6636 = vmatprep.subr.bf16.mxu0 0
        %6637 = vmatpush1.bf16.msra.mxu0 %v6394
        %6638 = vmatprep.subr.bf16.mxu0 0
        %6639 = vmatpush1.bf16.msra.mxu0 %v6395
        %6640 = vmatprep.subr.bf16.mxu0 0
        %6641 = vmatpush1.bf16.msra.mxu0 %v6396
        %6642 = vmatprep.subr.bf16.mxu0 0
        %6643 = vmatpush1.bf16.msra.mxu0 %v6397
        %6644 = vmatprep.subr.bf16.mxu0 0
        %6645 = vmatpush1.bf16.msra.mxu0 %v6398
        %6646 = vmatprep.subr.bf16.mxu0 0
        %6647 = vmatpush1.bf16.msra.mxu0 %v6399
        %6648 = vmatprep.subr.bf16.mxu0 0
        %6649 = vmatpush1.bf16.msra.mxu0 %v6400
        %6650 = vmatprep.subr.bf16.mxu0 0
        %6651 = vmatpush1.bf16.msra.mxu0 %v6401
        %6652 = vmatprep.subr.bf16.mxu0 0
        %6653 = vmatpush1.bf16.msra.mxu0 %v6402
        %6654 = vmatprep.subr.bf16.mxu0 0
        %6655 = vmatpush1.bf16.msra.mxu0 %v6403
        %6656 = vmatprep.subr.bf16.mxu0 0
        %6657 = vmatpush1.bf16.msra.mxu0 %v6404
        %6658 = vmatprep.subr.bf16.mxu0 0
        %6659 = vmatpush1.bf16.msra.mxu0 %v6405
        %6660 = vmatprep.subr.bf16.mxu0 0
        %6661 = vmatpush1.bf16.msra.mxu0 %v6406
        %6662 = vmatprep.subr.bf16.mxu0 0
        %6663 = vmatpush1.bf16.msra.mxu0 %v6407
        %6664 = vmatprep.subr.bf16.mxu0 0
        %6665 = vmatpush1.bf16.msra.mxu0 %v6408
        %6666 = vmatprep.subr.bf16.mxu0 0
        %6667 = vmatpush1.bf16.msra.mxu0 %v6409
        %6668 = vmatprep.mubr.bf16.mxu0 %v6025
        %6669 = vmatmul.mubr.bf16.gmra.mrb[0].mxu0 %v6024
        %v6670 = vpop.f32.mrb[0].mxu0
        %v6671 = vadd.f32 %v6606, %v6670
        %v6672 = vpop.f32.mrb[0].mxu0
        %v6673 = vpop.f32.mrb[0].mxu0
        %v6674 = vadd.f32 %v6609, %v6673
        %v6675 = vpop.f32.mrb[0].mxu0
        %6676 = vmatprep.mubr.bf16.mxu0 %v6031
        %6677 = vmatmul.mubr.bf16.gmra.mrb[0].mxu0 %v6030
        %v6678 = vpop.f32.mrb[0].mxu0
        %v6679 = vadd.f32 %v6614, %v6678
        %v6680 = vpop.f32.mrb[0].mxu0
        %v6681 = vpop.f32.mrb[0].mxu0
        %v6682 = vadd.f32 %v6617, %v6681
        %v6683 = vpop.f32.mrb[0].mxu0
        %6684 = vmatprep.mubr.bf16.mxu0 %v6037
        %6685 = vmatmul.mubr.bf16.gmra.mrb[0].mxu0 %v6036
        %v6686 = vpop.f32.mrb[0].mxu0
        %v6687 = vadd.f32 %v6622, %v6686
        %v6688 = vpop.f32.mrb[0].mxu0
        %v6689 = vpop.f32.mrb[0].mxu0
        %v6690 = vadd.f32 %v6625, %v6689
        %v6691 = vpop.f32.mrb[0].mxu0
        %6692 = vmatprep.mubr.bf16.mxu0 %v6043
        %6693 = vmatmul.mubr.bf16.gmra.mrb[0].mxu0 %v6042
        %v6694 = vpop.f32.mrb[0].mxu0
        %v6695 = vadd.f32 %v6630, %v6694
        %v6696 = vpop.f32.mrb[0].mxu0
        %v6697 = vpop.f32.mrb[0].mxu0
        %v6698 = vadd.f32 %v6633, %v6697
        %v6699 = vpop.f32.mrb[0].mxu0
        %6700 = vdwg.mxu0
        %6701 = vmatprep.subr.bf16.mxu0 0
        %6702 = vmatpush1.bf16.msra.mxu0 %v6410
        %6703 = vmatprep.subr.bf16.mxu0 0
        %6704 = vmatpush1.bf16.msra.mxu0 %v6411
        %6705 = vmatprep.subr.bf16.mxu0 0
        %6706 = vmatpush1.bf16.msra.mxu0 %v6412
        %6707 = vmatprep.subr.bf16.mxu0 0
        %6708 = vmatpush1.bf16.msra.mxu0 %v6413
        %6709 = vmatprep.subr.bf16.mxu0 0
        %6710 = vmatpush1.bf16.msra.mxu0 %v6414
        %6711 = vmatprep.subr.bf16.mxu0 0
        %6712 = vmatpush1.bf16.msra.mxu0 %v6415
        %6713 = vmatprep.subr.bf16.mxu0 0
        %6714 = vmatpush1.bf16.msra.mxu0 %v6416
        %6715 = vmatprep.subr.bf16.mxu0 0
        %6716 = vmatpush1.bf16.msra.mxu0 %v6417
        %6717 = vmatprep.subr.bf16.mxu0 0
        %6718 = vmatpush1.bf16.msra.mxu0 %v6418
        %6719 = vmatprep.subr.bf16.mxu0 0
        %6720 = vmatpush1.bf16.msra.mxu0 %v6419
        %6721 = vmatprep.subr.bf16.mxu0 0
        %6722 = vmatpush1.bf16.msra.mxu0 %v6420
        %6723 = vmatprep.subr.bf16.mxu0 0
        %6724 = vmatpush1.bf16.msra.mxu0 %v6421
        %6725 = vmatprep.subr.bf16.mxu0 0
        %6726 = vmatpush1.bf16.msra.mxu0 %v6422
        %6727 = vmatprep.subr.bf16.mxu0 0
        %6728 = vmatpush1.bf16.msra.mxu0 %v6423
        %6729 = vmatprep.subr.bf16.mxu0 0
        %6730 = vmatpush1.bf16.msra.mxu0 %v6424
        %6731 = vmatprep.subr.bf16.mxu0 0
        %6732 = vmatpush1.bf16.msra.mxu0 %v6425
        %6733 = vmatprep.mubr.bf16.mxu0 %v6027
        %6734 = vmatmul.mubr.bf16.gmra.mrb[0].mxu0 %v6026
        %v6735 = vpop.f32.mrb[0].mxu0
        %v6736 = vadd.f32 %v6671, %v6735
        %v6737 = vpop.f32.mrb[0].mxu0
        %v6738 = vpop.f32.mrb[0].mxu0
        %v6739 = vadd.f32 %v6674, %v6738
        %v6740 = vpop.f32.mrb[0].mxu0
        %6741 = vmatprep.mubr.bf16.mxu0 %v6033
        %6742 = vmatmul.mubr.bf16.gmra.mrb[0].mxu0 %v6032
        %v6743 = vpop.f32.mrb[0].mxu0
        %v6744 = vadd.f32 %v6679, %v6743
        %v6745 = vpop.f32.mrb[0].mxu0
        %v6746 = vpop.f32.mrb[0].mxu0
        %v6747 = vadd.f32 %v6682, %v6746
        %v6748 = vpop.f32.mrb[0].mxu0
        %6749 = vmatprep.mubr.bf16.mxu0 %v6039
        %6750 = vmatmul.mubr.bf16.gmra.mrb[0].mxu0 %v6038
        %v6751 = vpop.f32.mrb[0].mxu0
        %v6752 = vadd.f32 %v6687, %v6751
        %v6753 = vpop.f32.mrb[0].mxu0
        %v6754 = vpop.f32.mrb[0].mxu0
        %v6755 = vadd.f32 %v6690, %v6754
        %v6756 = vpop.f32.mrb[0].mxu0
        %6757 = vmatprep.mubr.bf16.mxu0 %v6045
        %6758 = vmatmul.mubr.bf16.gmra.mrb[0].mxu0 %v6044
        %v6759 = vpop.f32.mrb[0].mxu0
        %v6760 = vadd.f32 %v6695, %v6759
        %v6761 = vpop.f32.mrb[0].mxu0
        %v6762 = vpop.f32.mrb[0].mxu0
        %v6763 = vadd.f32 %v6698, %v6762
        %v6764 = vpop.f32.mrb[0].mxu0
        %6765 = vdwg.mxu0
        %6766 = vmatprep.subr.bf16.mxu0 0
        %6767 = vmatpush1.bf16.msra.mxu0 %v6426
        %6768 = vmatprep.subr.bf16.mxu0 0
        %6769 = vmatpush1.bf16.msra.mxu0 %v6427
        %6770 = vmatprep.subr.bf16.mxu0 0
        %6771 = vmatpush1.bf16.msra.mxu0 %v6428
        %6772 = vmatprep.subr.bf16.mxu0 0
        %6773 = vmatpush1.bf16.msra.mxu0 %v6429
        %6774 = vmatprep.subr.bf16.mxu0 0
        %6775 = vmatpush1.bf16.msra.mxu0 %v6430
        %6776 = vmatprep.subr.bf16.mxu0 0
        %6777 = vmatpush1.bf16.msra.mxu0 %v6431
        %6778 = vmatprep.subr.bf16.mxu0 0
        %6779 = vmatpush1.bf16.msra.mxu0 %v6432
        %6780 = vmatprep.subr.bf16.mxu0 0
        %6781 = vmatpush1.bf16.msra.mxu0 %v6433
        %6782 = vmatprep.subr.bf16.mxu0 0
        %6783 = vmatpush1.bf16.msra.mxu0 0
        %6784 = vmatprep.subr.bf16.mxu0 0
        %6785 = vmatpush1.bf16.msra.mxu0 0
        %6786 = vmatprep.subr.bf16.mxu0 0
        %6787 = vmatpush1.bf16.msra.mxu0 0
        %6788 = vmatprep.subr.bf16.mxu0 0
        %6789 = vmatpush1.bf16.msra.mxu0 0
        %6790 = vmatprep.subr.bf16.mxu0 0
        %6791 = vmatpush1.bf16.msra.mxu0 0
        %6792 = vmatprep.subr.bf16.mxu0 0
        %6793 = vmatpush1.bf16.msra.mxu0 0
        %6794 = vmatprep.subr.bf16.mxu0 0
        %6795 = vmatpush1.bf16.msra.mxu0 0
        %6796 = vmatprep.subr.bf16.mxu0 0
        %6797 = vmatpush1.bf16.msra.mxu0 0
        %6798 = vmatprep.mubr.bf16.mxu0 0
        %6799 = vmatmul.mubr.bf16.gmra.mrb[0].mxu0 %v6028
        %v6800 = vpop.f32.mrb[0].mxu0
        %v6801 = vadd.f32 %v6736, %v6800
        %v6802 = vpop.f32.mrb[0].mxu0
        %v6803 = vpop.f32.mrb[0].mxu0
        %v6804 = vadd.f32 %v6739, %v6803
        %v6805 = vpop.f32.mrb[0].mxu0
        %6806 = vmatprep.mubr.bf16.mxu0 0
        %6807 = vmatmul.mubr.bf16.gmra.mrb[0].mxu0 %v6034
        %v6808 = vpop.f32.mrb[0].mxu0
        %v6809 = vadd.f32 %v6744, %v6808
        %v6810 = vpop.f32.mrb[0].mxu0
        %v6811 = vpop.f32.mrb[0].mxu0
        %v6812 = vadd.f32 %v6747, %v6811
        %v6813 = vpop.f32.mrb[0].mxu0
        %6814 = vmatprep.mubr.bf16.mxu0 0
        %6815 = vmatmul.mubr.bf16.gmra.mrb[0].mxu0 %v6040
        %v6816 = vpop.f32.mrb[0].mxu0
        %v6817 = vadd.f32 %v6752, %v6816
        %v6818 = vpop.f32.mrb[0].mxu0
        %v6819 = vpop.f32.mrb[0].mxu0
        %v6820 = vadd.f32 %v6755, %v6819
        %v6821 = vpop.f32.mrb[0].mxu0
        %6822 = vmatprep.mubr.bf16.mxu0 0
        %6823 = vmatmul.mubr.bf16.gmra.mrb[0].mxu0 %v6046
        %v6824 = vpop.f32.mrb[0].mxu0
        %v6825 = vadd.f32 %v6760, %v6824
        %v6826 = vpop.f32.mrb[0].mxu0
        %v6827 = vpop.f32.mrb[0].mxu0
        %v6828 = vadd.f32 %v6763, %v6827
        %v6829 = vpop.f32.mrb[0].mxu0
        %6830 = vdwg.mxu0
        %v6831 = vld [vmem:[#allocation16] sm:$0x1]
        %v6832 = vlaneseq
        %v6833 = vshrl.u32 %v6832, 7
        %v6834 = vsub.s32 0, %v6833
        %v6835 = vrot.slane %v6831, %v6834
        %v6836 = vmul.f32 %v6801, %v6835
        %v6837 = vmul.f32 %v6804, %v6835
        %v6838 = vmul.f32 %v6809, %v6835
        %v6839 = vmul.f32 %v6812, %v6835
        %v6840 = vmul.f32 %v6817, %v6835
        %v6841 = vmul.f32 %v6820, %v6835
        %v6842 = vmul.f32 %v6825, %v6835
        %v6843 = vmul.f32 %v6828, %v6835
        %v6844 = vld [vmem:[#allocation16 + $0x1] sm:$0x1]
        %v6845 = vlaneseq
        %v6846 = vshrl.u32 %v6845, 7
        %v6847 = vsub.s32 0, %v6846
        %v6848 = vrot.slane %v6844, %v6847
        %v6849 = vadd.f32 %v6836, %v6848
        %v6850 = vadd.f32 %v6837, %v6848
        %v6851 = vadd.f32 %v6838, %v6848
        %v6852 = vadd.f32 %v6839, %v6848
        %v6853 = vadd.f32 %v6840, %v6848
        %v6854 = vadd.f32 %v6841, %v6848
        %v6855 = vadd.f32 %v6842, %v6848
        %v6856 = vadd.f32 %v6843, %v6848
        %v6857 = vmax.f32 %v6849, 0.0
        %v6858 = vmax.f32 %v6850, 0.0
        %v6859 = vmax.f32 %v6851, 0.0
        %v6860 = vmax.f32 %v6852, 0.0
        %v6861 = vmax.f32 %v6853, 0.0
        %v6862 = vmax.f32 %v6854, 0.0
        %v6863 = vmax.f32 %v6855, 0.0
        %v6864 = vmax.f32 %v6856, 0.0
        %v6865 = vld [vmem:[#allocation17] sm:$0xff]
        %v6866 = vld [vmem:[#allocation17 + $0x8] sm:$0xff]
        %v6867 = vld [vmem:[#allocation17 + $0x10] sm:$0xff]
        %v6868 = vld [vmem:[#allocation17 + $0x18] sm:$0xff]
        %v6869 = vld [vmem:[#allocation17 + $0x20] sm:$0xff]
        %v6870 = vld [vmem:[#allocation17 + $0x28] sm:$0xff]
        %v6871 = vld [vmem:[#allocation17 + $0x30] sm:$0xff]
        %v6872 = vld [vmem:[#allocation17 + $0x38] sm:$0xff]
        %v6873 = vld [vmem:[#allocation17 + $0x40] sm:$0xff]
        %v6874 = vld [vmem:[#allocation17 + $0x48] sm:$0xff]
        %v6875 = vld [vmem:[#allocation17 + $0x50] sm:$0xff]
        %v6876 = vld [vmem:[#allocation17 + $0x58] sm:$0xff]
        %v6877 = vld [vmem:[#allocation17 + $0x60] sm:$0xff]
        %v6878 = vld [vmem:[#allocation17 + $0x68] sm:$0xff]
        %v6879 = vld [vmem:[#allocation17 + $0x70] sm:$0xff]
        %v6880 = vld [vmem:[#allocation17 + $0x78] sm:$0xff]
        %v6881 = vld [vmem:[#allocation17 + $0x80] sm:$0xff]
        %v6882 = vld [vmem:[#allocation17 + $0x88] sm:$0xff]
        %v6883 = vld [vmem:[#allocation17 + $0x90] sm:$0xff]
        %v6884 = vld [vmem:[#allocation17 + $0x98] sm:$0xff]
        %v6885 = vld [vmem:[#allocation17 + $0xa0] sm:$0xff]
        %v6886 = vld [vmem:[#allocation17 + $0xa8] sm:$0xff]
        %v6887 = vld [vmem:[#allocation17 + $0xb0] sm:$0xff]
        %v6888 = vld [vmem:[#allocation17 + $0xb8] sm:$0xff]
        %v6889 = vld [vmem:[#allocation17 + $0xc0] sm:$0xff]
        %v6890 = vld [vmem:[#allocation17 + $0xc8] sm:$0xff]
        %v6891 = vld [vmem:[#allocation17 + $0xd0] sm:$0xff]
        %v6892 = vld [vmem:[#allocation17 + $0xd8] sm:$0xff]
        %v6893 = vld [vmem:[#allocation17 + $0xe0] sm:$0xff]
        %v6894 = vld [vmem:[#allocation17 + $0xe8] sm:$0xff]
        %v6895 = vld [vmem:[#allocation17 + $0xf0] sm:$0xff]
        %v6896 = vld [vmem:[#allocation17 + $0xf8] sm:$0xff]
        %v6898 = vsel %vm2665, %v6865, 0
        %v6901 = vsel %vm2665, %v6866, 0
        %v6904 = vsel %vm2665, %v6867, 0
        %v6907 = vsel %vm2665, %v6868, 0
        %v6910 = vsel %vm2665, %v6869, 0
        %v6913 = vsel %vm2665, %v6870, 0
        %v6916 = vsel %vm2665, %v6871, 0
        %v6919 = vsel %vm2665, %v6872, 0
        %v6922 = vsel %vm2665, %v6873, 0
        %v6925 = vsel %vm2665, %v6874, 0
        %v6928 = vsel %vm2665, %v6875, 0
        %v6931 = vsel %vm2665, %v6876, 0
        %v6934 = vsel %vm2665, %v6877, 0
        %v6937 = vsel %vm2665, %v6878, 0
        %v6940 = vsel %vm2665, %v6879, 0
        %v6943 = vsel %vm2665, %v6880, 0
        %v6946 = vsel %vm2665, %v6881, 0
        %v6949 = vsel %vm2665, %v6882, 0
        %v6952 = vsel %vm2665, %v6883, 0
        %v6955 = vsel %vm2665, %v6884, 0
        %v6958 = vsel %vm2665, %v6885, 0
        %v6961 = vsel %vm2665, %v6886, 0
        %v6964 = vsel %vm2665, %v6887, 0
        %v6967 = vsel %vm2665, %v6888, 0
        %v6970 = vsel %vm2665, %v6889, 0
        %v6973 = vsel %vm2665, %v6890, 0
        %v6976 = vsel %vm2665, %v6891, 0
        %v6979 = vsel %vm2665, %v6892, 0
        %v6982 = vsel %vm2665, %v6893, 0
        %v6985 = vsel %vm2665, %v6894, 0
        %v6988 = vsel %vm2665, %v6895, 0
        %v6991 = vsel %vm2665, %v6896, 0
        %6993 = vmatprep.subr.mxu0 0.0
        %6994 = vmatpush1.msra.mxu0 %v6857
        %6995 = vmatprep.subr.mxu0 0.0
        %6996 = vmatpush1.msra.mxu0 %v6858
        %6997 = vmatprep.subr.mxu0 0.0
        %6998 = vmatpush1.msra.mxu0 %v6859
        %6999 = vmatprep.subr.mxu0 0.0
        %7000 = vmatpush1.msra.mxu0 %v6860
        %7001 = vmatprep.subr.mxu0 0.0
        %7002 = vmatpush1.msra.mxu0 %v6861
        %7003 = vmatprep.subr.mxu0 0.0
        %7004 = vmatpush1.msra.mxu0 %v6862
        %7005 = vmatprep.subr.mxu0 0.0
        %7006 = vmatpush1.msra.mxu0 %v6863
        %7007 = vmatprep.subr.mxu0 0.0
        %7008 = vmatpush1.msra.mxu0 %v6864
        %7009 = vmatprep.subr.mxu0 0.0
        %7010 = vmatpush1.msra.mxu0 0.0
        %7011 = vmatprep.subr.mxu0 0.0
        %7012 = vmatpush1.msra.mxu0 0.0
        %7013 = vmatprep.subr.mxu0 0.0
        %7014 = vmatpush1.msra.mxu0 0.0
        %7015 = vmatprep.subr.mxu0 0.0
        %7016 = vmatpush1.msra.mxu0 0.0
        %7017 = vmatprep.subr.mxu0 0.0
        %7018 = vmatpush1.msra.mxu0 0.0
        %7019 = vmatprep.subr.mxu0 0.0
        %7020 = vmatpush1.msra.mxu0 0.0
        %7021 = vmatprep.subr.mxu0 0.0
        %7022 = vmatpush1.msra.mxu0 0.0
        %7023 = vmatprep.subr.mxu0 0.0
        %7024 = vmatpush1.msra.mxu0 0.0
        %7025 = vmatprep.subr.mxu0 0.0
        %7026 = vmatpush1.msra.mxu0 0.0
        %7027 = vmatprep.subr.mxu0 0.0
        %7028 = vmatpush1.msra.mxu0 0.0
        %7029 = vmatprep.subr.mxu0 0.0
        %7030 = vmatpush1.msra.mxu0 0.0
        %7031 = vmatprep.subr.mxu0 0.0
        %7032 = vmatpush1.msra.mxu0 0.0
        %7033 = vmatprep.subr.mxu0 0.0
        %7034 = vmatpush1.msra.mxu0 0.0
        %7035 = vmatprep.subr.mxu0 0.0
        %7036 = vmatpush1.msra.mxu0 0.0
        %7037 = vmatprep.subr.mxu0 0.0
        %7038 = vmatpush1.msra.mxu0 0.0
        %7039 = vmatprep.subr.mxu0 0.0
        %7040 = vmatpush1.msra.mxu0 0.0
        %7041 = vmatprep.subr.mxu0 0.0
        %7042 = vmatpush1.msra.mxu0 0.0
        %7043 = vmatprep.subr.mxu0 0.0
        %7044 = vmatpush1.msra.mxu0 0.0
        %7045 = vmatprep.subr.mxu0 0.0
        %7046 = vmatpush1.msra.mxu0 0.0
        %7047 = vmatprep.subr.mxu0 0.0
        %7048 = vmatpush1.msra.mxu0 0.0
        %7049 = vmatprep.subr.mxu0 0.0
        %7050 = vmatpush1.msra.mxu0 0.0
        %7051 = vmatprep.subr.mxu0 0.0
        %7052 = vmatpush1.msra.mxu0 0.0
        %7053 = vmatprep.subr.mxu0 0.0
        %7054 = vmatpush1.msra.mxu0 0.0
        %7055 = vmatprep.subr.mxu0 0.0
        %7056 = vmatpush1.msra.mxu0 0.0
        %7057 = vmatprep.mubr.f32.mxu0 0.0
        %7058 = vmatmul.mubr.f32.gmra.mrb[0].mxu0 %v6898
        %v7059 = vpop.f32.mrb[0].mxu0
        %v7060 = vadd.f32 0.0, %v7059
        %v7061 = vpop.f32.mrb[0].mxu0
        %7062 = vmatprep.mubr.f32.mxu0 0.0
        %7063 = vmatmul.mubr.f32.gmra.mrb[0].mxu0 %v6901
        %v7064 = vpop.f32.mrb[0].mxu0
        %v7065 = vadd.f32 0.0, %v7064
        %v7066 = vpop.f32.mrb[0].mxu0
        %7067 = vmatprep.mubr.f32.mxu0 0.0
        %7068 = vmatmul.mubr.f32.gmra.mrb[0].mxu0 %v6904
        %v7069 = vpop.f32.mrb[0].mxu0
        %v7070 = vadd.f32 0.0, %v7069
        %v7071 = vpop.f32.mrb[0].mxu0
        %7072 = vmatprep.mubr.f32.mxu0 0.0
        %7073 = vmatmul.mubr.f32.gmra.mrb[0].mxu0 %v6907
        %v7074 = vpop.f32.mrb[0].mxu0
        %v7075 = vadd.f32 0.0, %v7074
        %v7076 = vpop.f32.mrb[0].mxu0
        %7077 = vmatprep.mubr.f32.mxu0 0.0
        %7078 = vmatmul.mubr.f32.gmra.mrb[0].mxu0 %v6910
        %v7079 = vpop.f32.mrb[0].mxu0
        %v7080 = vadd.f32 0.0, %v7079
        %v7081 = vpop.f32.mrb[0].mxu0
        %7082 = vmatprep.mubr.f32.mxu0 0.0
        %7083 = vmatmul.mubr.f32.gmra.mrb[0].mxu0 %v6913
        %v7084 = vpop.f32.mrb[0].mxu0
        %v7085 = vadd.f32 0.0, %v7084
        %v7086 = vpop.f32.mrb[0].mxu0
        %7087 = vmatprep.mubr.f32.mxu0 0.0
        %7088 = vmatmul.mubr.f32.gmra.mrb[0].mxu0 %v6916
        %v7089 = vpop.f32.mrb[0].mxu0
        %v7090 = vadd.f32 0.0, %v7089
        %v7091 = vpop.f32.mrb[0].mxu0
        %7092 = vmatprep.mubr.f32.mxu0 0.0
        %7093 = vmatmul.mubr.f32.gmra.mrb[0].mxu0 %v6919
        %v7094 = vpop.f32.mrb[0].mxu0
        %v7095 = vadd.f32 0.0, %v7094
        %v7096 = vpop.f32.mrb[0].mxu0
        %7097 = vmatprep.mubr.f32.mxu0 0.0
        %7098 = vmatmul.mubr.f32.gmra.mrb[0].mxu0 %v6922
        %v7099 = vpop.f32.mrb[0].mxu0
        %v7100 = vadd.f32 0.0, %v7099
        %v7101 = vpop.f32.mrb[0].mxu0
        %7102 = vmatprep.mubr.f32.mxu0 0.0
        %7103 = vmatmul.mubr.f32.gmra.mrb[0].mxu0 %v6925
        %v7104 = vpop.f32.mrb[0].mxu0
        %v7105 = vadd.f32 0.0, %v7104
        %v7106 = vpop.f32.mrb[0].mxu0
        %7107 = vmatprep.mubr.f32.mxu0 0.0
        %7108 = vmatmul.mubr.f32.gmra.mrb[0].mxu0 %v6928
        %v7109 = vpop.f32.mrb[0].mxu0
        %v7110 = vadd.f32 0.0, %v7109
        %v7111 = vpop.f32.mrb[0].mxu0
        %7112 = vmatprep.mubr.f32.mxu0 0.0
        %7113 = vmatmul.mubr.f32.gmra.mrb[0].mxu0 %v6931
        %v7114 = vpop.f32.mrb[0].mxu0
        %v7115 = vadd.f32 0.0, %v7114
        %v7116 = vpop.f32.mrb[0].mxu0
        %7117 = vmatprep.mubr.f32.mxu0 0.0
        %7118 = vmatmul.mubr.f32.gmra.mrb[0].mxu0 %v6934
        %v7119 = vpop.f32.mrb[0].mxu0
        %v7120 = vadd.f32 0.0, %v7119
        %v7121 = vpop.f32.mrb[0].mxu0
        %7122 = vmatprep.mubr.f32.mxu0 0.0
        %7123 = vmatmul.mubr.f32.gmra.mrb[0].mxu0 %v6937
        %v7124 = vpop.f32.mrb[0].mxu0
        %v7125 = vadd.f32 0.0, %v7124
        %v7126 = vpop.f32.mrb[0].mxu0
        %7127 = vmatprep.mubr.f32.mxu0 0.0
        %7128 = vmatmul.mubr.f32.gmra.mrb[0].mxu0 %v6940
        %v7129 = vpop.f32.mrb[0].mxu0
        %v7130 = vadd.f32 0.0, %v7129
        %v7131 = vpop.f32.mrb[0].mxu0
        %7132 = vmatprep.mubr.f32.mxu0 0.0
        %7133 = vmatmul.mubr.f32.gmra.mrb[0].mxu0 %v6943
        %v7134 = vpop.f32.mrb[0].mxu0
        %v7135 = vadd.f32 0.0, %v7134
        %v7136 = vpop.f32.mrb[0].mxu0
        %7137 = vmatprep.mubr.f32.mxu0 0.0
        %7138 = vmatmul.mubr.f32.gmra.mrb[0].mxu0 %v6946
        %v7139 = vpop.f32.mrb[0].mxu0
        %v7140 = vadd.f32 0.0, %v7139
        %v7141 = vpop.f32.mrb[0].mxu0
        %7142 = vmatprep.mubr.f32.mxu0 0.0
        %7143 = vmatmul.mubr.f32.gmra.mrb[0].mxu0 %v6949
        %v7144 = vpop.f32.mrb[0].mxu0
        %v7145 = vadd.f32 0.0, %v7144
        %v7146 = vpop.f32.mrb[0].mxu0
        %7147 = vmatprep.mubr.f32.mxu0 0.0
        %7148 = vmatmul.mubr.f32.gmra.mrb[0].mxu0 %v6952
        %v7149 = vpop.f32.mrb[0].mxu0
        %v7150 = vadd.f32 0.0, %v7149
        %v7151 = vpop.f32.mrb[0].mxu0
        %7152 = vmatprep.mubr.f32.mxu0 0.0
        %7153 = vmatmul.mubr.f32.gmra.mrb[0].mxu0 %v6955
        %v7154 = vpop.f32.mrb[0].mxu0
        %v7155 = vadd.f32 0.0, %v7154
        %v7156 = vpop.f32.mrb[0].mxu0
        %7157 = vmatprep.mubr.f32.mxu0 0.0
        %7158 = vmatmul.mubr.f32.gmra.mrb[0].mxu0 %v6958
        %v7159 = vpop.f32.mrb[0].mxu0
        %v7160 = vadd.f32 0.0, %v7159
        %v7161 = vpop.f32.mrb[0].mxu0
        %7162 = vmatprep.mubr.f32.mxu0 0.0
        %7163 = vmatmul.mubr.f32.gmra.mrb[0].mxu0 %v6961
        %v7164 = vpop.f32.mrb[0].mxu0
        %v7165 = vadd.f32 0.0, %v7164
        %v7166 = vpop.f32.mrb[0].mxu0
        %7167 = vmatprep.mubr.f32.mxu0 0.0
        %7168 = vmatmul.mubr.f32.gmra.mrb[0].mxu0 %v6964
        %v7169 = vpop.f32.mrb[0].mxu0
        %v7170 = vadd.f32 0.0, %v7169
        %v7171 = vpop.f32.mrb[0].mxu0
        %7172 = vmatprep.mubr.f32.mxu0 0.0
        %7173 = vmatmul.mubr.f32.gmra.mrb[0].mxu0 %v6967
        %v7174 = vpop.f32.mrb[0].mxu0
        %v7175 = vadd.f32 0.0, %v7174
        %v7176 = vpop.f32.mrb[0].mxu0
        %7177 = vmatprep.mubr.f32.mxu0 0.0
        %7178 = vmatmul.mubr.f32.gmra.mrb[0].mxu0 %v6970
        %v7179 = vpop.f32.mrb[0].mxu0
        %v7180 = vadd.f32 0.0, %v7179
        %v7181 = vpop.f32.mrb[0].mxu0
        %7182 = vmatprep.mubr.f32.mxu0 0.0
        %7183 = vmatmul.mubr.f32.gmra.mrb[0].mxu0 %v6973
        %v7184 = vpop.f32.mrb[0].mxu0
        %v7185 = vadd.f32 0.0, %v7184
        %v7186 = vpop.f32.mrb[0].mxu0
        %7187 = vmatprep.mubr.f32.mxu0 0.0
        %7188 = vmatmul.mubr.f32.gmra.mrb[0].mxu0 %v6976
        %v7189 = vpop.f32.mrb[0].mxu0
        %v7190 = vadd.f32 0.0, %v7189
        %v7191 = vpop.f32.mrb[0].mxu0
        %7192 = vmatprep.mubr.f32.mxu0 0.0
        %7193 = vmatmul.mubr.f32.gmra.mrb[0].mxu0 %v6979
        %v7194 = vpop.f32.mrb[0].mxu0
        %v7195 = vadd.f32 0.0, %v7194
        %v7196 = vpop.f32.mrb[0].mxu0
        %7197 = vmatprep.mubr.f32.mxu0 0.0
        %7198 = vmatmul.mubr.f32.gmra.mrb[0].mxu0 %v6982
        %v7199 = vpop.f32.mrb[0].mxu0
        %v7200 = vadd.f32 0.0, %v7199
        %v7201 = vpop.f32.mrb[0].mxu0
        %7202 = vmatprep.mubr.f32.mxu0 0.0
        %7203 = vmatmul.mubr.f32.gmra.mrb[0].mxu0 %v6985
        %v7204 = vpop.f32.mrb[0].mxu0
        %v7205 = vadd.f32 0.0, %v7204
        %v7206 = vpop.f32.mrb[0].mxu0
        %7207 = vmatprep.mubr.f32.mxu0 0.0
        %7208 = vmatmul.mubr.f32.gmra.mrb[0].mxu0 %v6988
        %v7209 = vpop.f32.mrb[0].mxu0
        %v7210 = vadd.f32 0.0, %v7209
        %v7211 = vpop.f32.mrb[0].mxu0
        %7212 = vmatprep.mubr.f32.mxu0 0.0
        %7213 = vmatmul.mubr.f32.gmra.mrb[0].mxu0 %v6991
        %v7214 = vpop.f32.mrb[0].mxu0
        %v7215 = vadd.f32 0.0, %v7214
        %v7216 = vpop.f32.mrb[0].mxu0
        %7217 = vdwg.mxu0
        %7250 = vrot.lane.b32.xlu0 %v7060, 64
        %v7251 = vpop.permute.xlu0 %7250
        %7252 = vrot.lane.b32.xlu0 %v7065, 64
        %v7253 = vpop.permute.xlu0 %7252
        %7254 = vrot.lane.b32.xlu0 %v7070, 64
        %v7255 = vpop.permute.xlu0 %7254
        %7256 = vrot.lane.b32.xlu0 %v7075, 64
        %v7257 = vpop.permute.xlu0 %7256
        %7258 = vrot.lane.b32.xlu0 %v7080, 64
        %v7259 = vpop.permute.xlu0 %7258
        %7260 = vrot.lane.b32.xlu0 %v7085, 64
        %v7261 = vpop.permute.xlu0 %7260
        %7262 = vrot.lane.b32.xlu0 %v7090, 64
        %v7263 = vpop.permute.xlu0 %7262
        %7264 = vrot.lane.b32.xlu0 %v7095, 64
        %v7265 = vpop.permute.xlu0 %7264
        %7266 = vrot.lane.b32.xlu0 %v7100, 64
        %v7267 = vpop.permute.xlu0 %7266
        %7268 = vrot.lane.b32.xlu0 %v7105, 64
        %v7269 = vpop.permute.xlu0 %7268
        %7270 = vrot.lane.b32.xlu0 %v7110, 64
        %v7271 = vpop.permute.xlu0 %7270
        %7272 = vrot.lane.b32.xlu0 %v7115, 64
        %v7273 = vpop.permute.xlu0 %7272
        %7274 = vrot.lane.b32.xlu0 %v7120, 64
        %v7275 = vpop.permute.xlu0 %7274
        %7276 = vrot.lane.b32.xlu0 %v7125, 64
        %v7277 = vpop.permute.xlu0 %7276
        %7278 = vrot.lane.b32.xlu0 %v7130, 64
        %v7279 = vpop.permute.xlu0 %7278
        %7280 = vrot.lane.b32.xlu0 %v7135, 64
        %v7281 = vpop.permute.xlu0 %7280
        %7282 = vrot.lane.b32.xlu0 %v7140, 64
        %v7283 = vpop.permute.xlu0 %7282
        %7284 = vrot.lane.b32.xlu0 %v7145, 64
        %v7285 = vpop.permute.xlu0 %7284
        %7286 = vrot.lane.b32.xlu0 %v7150, 64
        %v7287 = vpop.permute.xlu0 %7286
        %7288 = vrot.lane.b32.xlu0 %v7155, 64
        %v7289 = vpop.permute.xlu0 %7288
        %7290 = vrot.lane.b32.xlu0 %v7160, 64
        %v7291 = vpop.permute.xlu0 %7290
        %7292 = vrot.lane.b32.xlu0 %v7165, 64
        %v7293 = vpop.permute.xlu0 %7292
        %7294 = vrot.lane.b32.xlu0 %v7170, 64
        %v7295 = vpop.permute.xlu0 %7294
        %7296 = vrot.lane.b32.xlu0 %v7175, 64
        %v7297 = vpop.permute.xlu0 %7296
        %7298 = vrot.lane.b32.xlu0 %v7180, 64
        %v7299 = vpop.permute.xlu0 %7298
        %7300 = vrot.lane.b32.xlu0 %v7185, 64
        %v7301 = vpop.permute.xlu0 %7300
        %7302 = vrot.lane.b32.xlu0 %v7190, 64
        %v7303 = vpop.permute.xlu0 %7302
        %7304 = vrot.lane.b32.xlu0 %v7195, 64
        %v7305 = vpop.permute.xlu0 %7304
        %7306 = vrot.lane.b32.xlu0 %v7200, 64
        %v7307 = vpop.permute.xlu0 %7306
        %7308 = vrot.lane.b32.xlu0 %v7205, 64
        %v7309 = vpop.permute.xlu0 %7308
        %7310 = vrot.lane.b32.xlu0 %v7210, 64
        %v7311 = vpop.permute.xlu0 %7310
        %7312 = vrot.lane.b32.xlu0 %v7215, 64
        %v7313 = vpop.permute.xlu0 %7312
        %v7346 = vsel %vm2665, %v3723, %v7251
        %v7347 = vsel %vm2665, %v3724, %v7253
        %v7348 = vsel %vm2665, %v3725, %v7255
        %v7349 = vsel %vm2665, %v3726, %v7257
        %v7350 = vsel %vm2665, %v3727, %v7259
        %v7351 = vsel %vm2665, %v3728, %v7261
        %v7352 = vsel %vm2665, %v3729, %v7263
        %v7353 = vsel %vm2665, %v3730, %v7265
        %v7354 = vsel %vm2665, %v3731, %v7267
        %v7355 = vsel %vm2665, %v3732, %v7269
        %v7356 = vsel %vm2665, %v3733, %v7271
        %v7357 = vsel %vm2665, %v3734, %v7273
        %v7358 = vsel %vm2665, %v3735, %v7275
        %v7359 = vsel %vm2665, %v3736, %v7277
        %v7360 = vsel %vm2665, %v3737, %v7279
        %v7361 = vsel %vm2665, %v3738, %v7281
        %v7362 = vsel %vm2665, %v3739, %v7283
        %v7363 = vsel %vm2665, %v3740, %v7285
        %v7364 = vsel %vm2665, %v3741, %v7287
        %v7365 = vsel %vm2665, %v3742, %v7289
        %v7366 = vsel %vm2665, %v3743, %v7291
        %v7367 = vsel %vm2665, %v3744, %v7293
        %v7368 = vsel %vm2665, %v3745, %v7295
        %v7369 = vsel %vm2665, %v3746, %v7297
        %v7370 = vsel %vm2665, %v3747, %v7299
        %v7371 = vsel %vm2665, %v3748, %v7301
        %v7372 = vsel %vm2665, %v3749, %v7303
        %v7373 = vsel %vm2665, %v3750, %v7305
        %v7374 = vsel %vm2665, %v3751, %v7307
        %v7375 = vsel %vm2665, %v3752, %v7309
        %v7376 = vsel %vm2665, %v3753, %v7311
        %v7377 = vsel %vm2665, %v3754, %v7313
        %v7378 = vpack.c.bf16 %v7347, %v7346
        %v7379 = vpack.c.bf16 %v7253, %v7251
        %v7380 = vpack.c.bf16 %v7349, %v7348
        %v7381 = vpack.c.bf16 %v7257, %v7255
        %v7382 = vpack.c.bf16 %v7351, %v7350
        %v7383 = vpack.c.bf16 %v7261, %v7259
        %v7384 = vpack.c.bf16 %v7353, %v7352
        %v7385 = vpack.c.bf16 %v7265, %v7263
        %v7386 = vpack.c.bf16 %v7355, %v7354
        %v7387 = vpack.c.bf16 %v7269, %v7267
        %v7388 = vpack.c.bf16 %v7357, %v7356
        %v7389 = vpack.c.bf16 %v7273, %v7271
        %v7390 = vpack.c.bf16 %v7359, %v7358
        %v7391 = vpack.c.bf16 %v7277, %v7275
        %v7392 = vpack.c.bf16 %v7361, %v7360
        %v7393 = vpack.c.bf16 %v7281, %v7279
        %v7394 = vpack.c.bf16 %v7363, %v7362
        %v7395 = vpack.c.bf16 %v7285, %v7283
        %v7396 = vpack.c.bf16 %v7365, %v7364
        %v7397 = vpack.c.bf16 %v7289, %v7287
        %v7398 = vpack.c.bf16 %v7367, %v7366
        %v7399 = vpack.c.bf16 %v7293, %v7291
        %v7400 = vpack.c.bf16 %v7369, %v7368
        %v7401 = vpack.c.bf16 %v7297, %v7295
        %v7402 = vpack.c.bf16 %v7371, %v7370
        %v7403 = vpack.c.bf16 %v7301, %v7299
        %v7404 = vpack.c.bf16 %v7373, %v7372
        %v7405 = vpack.c.bf16 %v7305, %v7303
        %v7406 = vpack.c.bf16 %v7375, %v7374
        %v7407 = vpack.c.bf16 %v7309, %v7307
        %v7408 = vpack.c.bf16 %v7377, %v7376
        %v7409 = vpack.c.bf16 %v7313, %v7311
        %v7411 = vshrl.u32 %v7378, 16
        %v7413 = vrot.slane %v7411, 7
        %v7414 = vshll.u32 %v7378, 16
        %v7416 = vor.u32 %v7413, %v7414
        %v7418 = vshrl.u32 %v7379, 16
        %v7420 = vrot.slane %v7418, 7
        %v7421 = vshll.u32 %v7379, 16
        %v7423 = vor.u32 %v7420, %v7421
        %v7425 = vshrl.u32 %v7380, 16
        %v7427 = vrot.slane %v7425, 7
        %v7428 = vshll.u32 %v7380, 16
        %v7430 = vor.u32 %v7427, %v7428
        %v7432 = vshrl.u32 %v7381, 16
        %v7434 = vrot.slane %v7432, 7
        %v7435 = vshll.u32 %v7381, 16
        %v7437 = vor.u32 %v7434, %v7435
        %v7439 = vshrl.u32 %v7382, 16
        %v7441 = vrot.slane %v7439, 7
        %v7442 = vshll.u32 %v7382, 16
        %v7444 = vor.u32 %v7441, %v7442
        %v7446 = vshrl.u32 %v7383, 16
        %v7448 = vrot.slane %v7446, 7
        %v7449 = vshll.u32 %v7383, 16
        %v7451 = vor.u32 %v7448, %v7449
        %v7453 = vshrl.u32 %v7384, 16
        %v7455 = vrot.slane %v7453, 7
        %v7456 = vshll.u32 %v7384, 16
        %v7458 = vor.u32 %v7455, %v7456
        %v7460 = vshrl.u32 %v7385, 16
        %v7462 = vrot.slane %v7460, 7
        %v7463 = vshll.u32 %v7385, 16
        %v7465 = vor.u32 %v7462, %v7463
        %v7467 = vshrl.u32 %v7386, 16
        %v7469 = vrot.slane %v7467, 7
        %v7470 = vshll.u32 %v7386, 16
        %v7472 = vor.u32 %v7469, %v7470
        %v7474 = vshrl.u32 %v7387, 16
        %v7476 = vrot.slane %v7474, 7
        %v7477 = vshll.u32 %v7387, 16
        %v7479 = vor.u32 %v7476, %v7477
        %v7481 = vshrl.u32 %v7388, 16
        %v7483 = vrot.slane %v7481, 7
        %v7484 = vshll.u32 %v7388, 16
        %v7486 = vor.u32 %v7483, %v7484
        %v7488 = vshrl.u32 %v7389, 16
        %v7490 = vrot.slane %v7488, 7
        %v7491 = vshll.u32 %v7389, 16
        %v7493 = vor.u32 %v7490, %v7491
        %v7495 = vshrl.u32 %v7390, 16
        %v7497 = vrot.slane %v7495, 7
        %v7498 = vshll.u32 %v7390, 16
        %v7500 = vor.u32 %v7497, %v7498
        %v7502 = vshrl.u32 %v7391, 16
        %v7504 = vrot.slane %v7502, 7
        %v7505 = vshll.u32 %v7391, 16
        %v7507 = vor.u32 %v7504, %v7505
        %v7509 = vshrl.u32 %v7392, 16
        %v7511 = vrot.slane %v7509, 7
        %v7512 = vshll.u32 %v7392, 16
        %v7514 = vor.u32 %v7511, %v7512
        %v7516 = vshrl.u32 %v7393, 16
        %v7518 = vrot.slane %v7516, 7
        %v7519 = vshll.u32 %v7393, 16
        %v7521 = vor.u32 %v7518, %v7519
        %v7523 = vshrl.u32 %v7394, 16
        %v7525 = vrot.slane %v7523, 7
        %v7526 = vshll.u32 %v7394, 16
        %v7528 = vor.u32 %v7525, %v7526
        %v7530 = vshrl.u32 %v7395, 16
        %v7532 = vrot.slane %v7530, 7
        %v7533 = vshll.u32 %v7395, 16
        %v7535 = vor.u32 %v7532, %v7533
        %v7537 = vshrl.u32 %v7396, 16
        %v7539 = vrot.slane %v7537, 7
        %v7540 = vshll.u32 %v7396, 16
        %v7542 = vor.u32 %v7539, %v7540
        %v7544 = vshrl.u32 %v7397, 16
        %v7546 = vrot.slane %v7544, 7
        %v7547 = vshll.u32 %v7397, 16
        %v7549 = vor.u32 %v7546, %v7547
        %v7551 = vshrl.u32 %v7398, 16
        %v7553 = vrot.slane %v7551, 7
        %v7554 = vshll.u32 %v7398, 16
        %v7556 = vor.u32 %v7553, %v7554
        %v7558 = vshrl.u32 %v7399, 16
        %v7560 = vrot.slane %v7558, 7
        %v7561 = vshll.u32 %v7399, 16
        %v7563 = vor.u32 %v7560, %v7561
        %v7565 = vshrl.u32 %v7400, 16
        %v7567 = vrot.slane %v7565, 7
        %v7568 = vshll.u32 %v7400, 16
        %v7570 = vor.u32 %v7567, %v7568
        %v7572 = vshrl.u32 %v7401, 16
        %v7574 = vrot.slane %v7572, 7
        %v7575 = vshll.u32 %v7401, 16
        %v7577 = vor.u32 %v7574, %v7575
        %v7579 = vshrl.u32 %v7402, 16
        %v7581 = vrot.slane %v7579, 7
        %v7582 = vshll.u32 %v7402, 16
        %v7584 = vor.u32 %v7581, %v7582
        %v7586 = vshrl.u32 %v7403, 16
        %v7588 = vrot.slane %v7586, 7
        %v7589 = vshll.u32 %v7403, 16
        %v7591 = vor.u32 %v7588, %v7589
        %v7593 = vshrl.u32 %v7404, 16
        %v7595 = vrot.slane %v7593, 7
        %v7596 = vshll.u32 %v7404, 16
        %v7598 = vor.u32 %v7595, %v7596
        %v7600 = vshrl.u32 %v7405, 16
        %v7602 = vrot.slane %v7600, 7
        %v7603 = vshll.u32 %v7405, 16
        %v7605 = vor.u32 %v7602, %v7603
        %v7607 = vshrl.u32 %v7406, 16
        %v7609 = vrot.slane %v7607, 7
        %v7610 = vshll.u32 %v7406, 16
        %v7612 = vor.u32 %v7609, %v7610
        %v7614 = vshrl.u32 %v7407, 16
        %v7616 = vrot.slane %v7614, 7
        %v7617 = vshll.u32 %v7407, 16
        %v7619 = vor.u32 %v7616, %v7617
        %v7621 = vshrl.u32 %v7408, 16
        %v7623 = vrot.slane %v7621, 7
        %v7624 = vshll.u32 %v7408, 16
        %v7626 = vor.u32 %v7623, %v7624
        %v7628 = vshrl.u32 %v7409, 16
        %v7630 = vrot.slane %v7628, 7
        %v7631 = vshll.u32 %v7409, 16
        %v7633 = vor.u32 %v7630, %v7631
        %v7698 = vsel %vm941, 0, %v7416
        %v7699 = vsel %vm941, 0, %v7423
        %v7700 = vsel %vm941, 0, %v7430
        %v7701 = vsel %vm941, 0, %v7437
        %v7702 = vsel %vm941, 0, %v7444
        %v7703 = vsel %vm941, 0, %v7451
        %v7704 = vsel %vm941, 0, %v7458
        %v7705 = vsel %vm941, 0, %v7465
        %v7706 = vsel %vm941, 0, %v7472
        %v7707 = vsel %vm941, 0, %v7479
        %v7708 = vsel %vm941, 0, %v7486
        %v7709 = vsel %vm941, 0, %v7493
        %v7710 = vsel %vm941, 0, %v7500
        %v7711 = vsel %vm941, 0, %v7507
        %v7712 = vsel %vm941, 0, %v7514
        %v7713 = vsel %vm941, 0, %v7521
        %v7714 = vsel %vm941, 0, %v7528
        %v7715 = vsel %vm941, 0, %v7535
        %v7716 = vsel %vm941, 0, %v7542
        %v7717 = vsel %vm941, 0, %v7549
        %v7718 = vsel %vm941, 0, %v7556
        %v7719 = vsel %vm941, 0, %v7563
        %v7720 = vsel %vm941, 0, %v7570
        %v7721 = vsel %vm941, 0, %v7577
        %v7722 = vsel %vm941, 0, %v7584
        %v7723 = vsel %vm941, 0, %v7591
        %v7724 = vsel %vm941, 0, %v7598
        %v7725 = vsel %vm941, 0, %v7605
        %v7726 = vsel %vm941, 0, %v7612
        %v7727 = vsel %vm941, 0, %v7619
        %v7728 = vsel %vm941, 0, %v7626
        %v7729 = vsel %vm941, 0, %v7633
        %v7730 = vsel %vm941, %v7413, 0
        %v7731 = vsel %vm941, %v7420, 0
        %v7732 = vsel %vm941, %v7427, 0
        %v7733 = vsel %vm941, %v7434, 0
        %v7734 = vsel %vm941, %v7441, 0
        %v7735 = vsel %vm941, %v7448, 0
        %v7736 = vsel %vm941, %v7455, 0
        %v7737 = vsel %vm941, %v7462, 0
        %v7738 = vsel %vm941, %v7469, 0
        %v7739 = vsel %vm941, %v7476, 0
        %v7740 = vsel %vm941, %v7483, 0
        %v7741 = vsel %vm941, %v7490, 0
        %v7742 = vsel %vm941, %v7497, 0
        %v7743 = vsel %vm941, %v7504, 0
        %v7744 = vsel %vm941, %v7511, 0
        %v7745 = vsel %vm941, %v7518, 0
        %v7746 = vsel %vm941, %v7525, 0
        %v7747 = vsel %vm941, %v7532, 0
        %v7748 = vsel %vm941, %v7539, 0
        %v7749 = vsel %vm941, %v7546, 0
        %v7750 = vsel %vm941, %v7553, 0
        %v7751 = vsel %vm941, %v7560, 0
        %v7752 = vsel %vm941, %v7567, 0
        %v7753 = vsel %vm941, %v7574, 0
        %v7754 = vsel %vm941, %v7581, 0
        %v7755 = vsel %vm941, %v7588, 0
        %v7756 = vsel %vm941, %v7595, 0
        %v7757 = vsel %vm941, %v7602, 0
        %v7758 = vsel %vm941, %v7609, 0
        %v7759 = vsel %vm941, %v7616, 0
        %v7760 = vsel %vm941, %v7623, 0
        %v7761 = vsel %vm941, %v7630, 0
        %v7763 = vshrl.u32 %v7698, 16
        %v7765 = vshll.u32 %v7698, 16
        %v7767 = vrot.slane %v7765, 1
        %v7768 = vor.u32 %v7763, %v7767
        %v7770 = vshll.u32 %v7730, 16
        %v7772 = vrot.slane %v7770, 1
        %v7773 = vsel %vm974, %v7768, %v7772
        %v7775 = vshrl.u32 %v7699, 16
        %v7777 = vshll.u32 %v7699, 16
        %v7779 = vrot.slane %v7777, 1
        %v7780 = vor.u32 %v7775, %v7779
        %v7782 = vshll.u32 %v7731, 16
        %v7784 = vrot.slane %v7782, 1
        %v7785 = vsel %vm974, %v7780, %v7784
        %v7787 = vshrl.u32 %v7700, 16
        %v7789 = vshll.u32 %v7700, 16
        %v7791 = vrot.slane %v7789, 1
        %v7792 = vor.u32 %v7787, %v7791
        %v7794 = vshll.u32 %v7732, 16
        %v7796 = vrot.slane %v7794, 1
        %v7797 = vsel %vm974, %v7792, %v7796
        %v7799 = vshrl.u32 %v7701, 16
        %v7801 = vshll.u32 %v7701, 16
        %v7803 = vrot.slane %v7801, 1
        %v7804 = vor.u32 %v7799, %v7803
        %v7806 = vshll.u32 %v7733, 16
        %v7808 = vrot.slane %v7806, 1
        %v7809 = vsel %vm974, %v7804, %v7808
        %v7811 = vshrl.u32 %v7702, 16
        %v7813 = vshll.u32 %v7702, 16
        %v7815 = vrot.slane %v7813, 1
        %v7816 = vor.u32 %v7811, %v7815
        %v7818 = vshll.u32 %v7734, 16
        %v7820 = vrot.slane %v7818, 1
        %v7821 = vsel %vm974, %v7816, %v7820
        %v7823 = vshrl.u32 %v7703, 16
        %v7825 = vshll.u32 %v7703, 16
        %v7827 = vrot.slane %v7825, 1
        %v7828 = vor.u32 %v7823, %v7827
        %v7830 = vshll.u32 %v7735, 16
        %v7832 = vrot.slane %v7830, 1
        %v7833 = vsel %vm974, %v7828, %v7832
        %v7835 = vshrl.u32 %v7704, 16
        %v7837 = vshll.u32 %v7704, 16
        %v7839 = vrot.slane %v7837, 1
        %v7840 = vor.u32 %v7835, %v7839
        %v7842 = vshll.u32 %v7736, 16
        %v7844 = vrot.slane %v7842, 1
        %v7845 = vsel %vm974, %v7840, %v7844
        %v7847 = vshrl.u32 %v7705, 16
        %v7849 = vshll.u32 %v7705, 16
        %v7851 = vrot.slane %v7849, 1
        %v7852 = vor.u32 %v7847, %v7851
        %v7854 = vshll.u32 %v7737, 16
        %v7856 = vrot.slane %v7854, 1
        %v7857 = vsel %vm974, %v7852, %v7856
        %v7859 = vshrl.u32 %v7706, 16
        %v7861 = vshll.u32 %v7706, 16
        %v7863 = vrot.slane %v7861, 1
        %v7864 = vor.u32 %v7859, %v7863
        %v7866 = vshll.u32 %v7738, 16
        %v7868 = vrot.slane %v7866, 1
        %v7869 = vsel %vm974, %v7864, %v7868
        %v7871 = vshrl.u32 %v7707, 16
        %v7873 = vshll.u32 %v7707, 16
        %v7875 = vrot.slane %v7873, 1
        %v7876 = vor.u32 %v7871, %v7875
        %v7878 = vshll.u32 %v7739, 16
        %v7880 = vrot.slane %v7878, 1
        %v7881 = vsel %vm974, %v7876, %v7880
        %v7883 = vshrl.u32 %v7708, 16
        %v7885 = vshll.u32 %v7708, 16
        %v7887 = vrot.slane %v7885, 1
        %v7888 = vor.u32 %v7883, %v7887
        %v7890 = vshll.u32 %v7740, 16
        %v7892 = vrot.slane %v7890, 1
        %v7893 = vsel %vm974, %v7888, %v7892
        %v7895 = vshrl.u32 %v7709, 16
        %v7897 = vshll.u32 %v7709, 16
        %v7899 = vrot.slane %v7897, 1
        %v7900 = vor.u32 %v7895, %v7899
        %v7902 = vshll.u32 %v7741, 16
        %v7904 = vrot.slane %v7902, 1
        %v7905 = vsel %vm974, %v7900, %v7904
        %v7907 = vshrl.u32 %v7710, 16
        %v7909 = vshll.u32 %v7710, 16
        %v7911 = vrot.slane %v7909, 1
        %v7912 = vor.u32 %v7907, %v7911
        %v7914 = vshll.u32 %v7742, 16
        %v7916 = vrot.slane %v7914, 1
        %v7917 = vsel %vm974, %v7912, %v7916
        %v7919 = vshrl.u32 %v7711, 16
        %v7921 = vshll.u32 %v7711, 16
        %v7923 = vrot.slane %v7921, 1
        %v7924 = vor.u32 %v7919, %v7923
        %v7926 = vshll.u32 %v7743, 16
        %v7928 = vrot.slane %v7926, 1
        %v7929 = vsel %vm974, %v7924, %v7928
        %v7931 = vshrl.u32 %v7712, 16
        %v7933 = vshll.u32 %v7712, 16
        %v7935 = vrot.slane %v7933, 1
        %v7936 = vor.u32 %v7931, %v7935
        %v7938 = vshll.u32 %v7744, 16
        %v7940 = vrot.slane %v7938, 1
        %v7941 = vsel %vm974, %v7936, %v7940
        %v7943 = vshrl.u32 %v7713, 16
        %v7945 = vshll.u32 %v7713, 16
        %v7947 = vrot.slane %v7945, 1
        %v7948 = vor.u32 %v7943, %v7947
        %v7950 = vshll.u32 %v7745, 16
        %v7952 = vrot.slane %v7950, 1
        %v7953 = vsel %vm974, %v7948, %v7952
        %v7955 = vshrl.u32 %v7714, 16
        %v7957 = vshll.u32 %v7714, 16
        %v7959 = vrot.slane %v7957, 1
        %v7960 = vor.u32 %v7955, %v7959
        %v7962 = vshll.u32 %v7746, 16
        %v7964 = vrot.slane %v7962, 1
        %v7965 = vsel %vm974, %v7960, %v7964
        %v7967 = vshrl.u32 %v7715, 16
        %v7969 = vshll.u32 %v7715, 16
        %v7971 = vrot.slane %v7969, 1
        %v7972 = vor.u32 %v7967, %v7971
        %v7974 = vshll.u32 %v7747, 16
        %v7976 = vrot.slane %v7974, 1
        %v7977 = vsel %vm974, %v7972, %v7976
        %v7979 = vshrl.u32 %v7716, 16
        %v7981 = vshll.u32 %v7716, 16
        %v7983 = vrot.slane %v7981, 1
        %v7984 = vor.u32 %v7979, %v7983
        %v7986 = vshll.u32 %v7748, 16
        %v7988 = vrot.slane %v7986, 1
        %v7989 = vsel %vm974, %v7984, %v7988
        %v7991 = vshrl.u32 %v7717, 16
        %v7993 = vshll.u32 %v7717, 16
        %v7995 = vrot.slane %v7993, 1
        %v7996 = vor.u32 %v7991, %v7995
        %v7998 = vshll.u32 %v7749, 16
        %v8000 = vrot.slane %v7998, 1
        %v8001 = vsel %vm974, %v7996, %v8000
        %v8003 = vshrl.u32 %v7718, 16
        %v8005 = vshll.u32 %v7718, 16
        %v8007 = vrot.slane %v8005, 1
        %v8008 = vor.u32 %v8003, %v8007
        %v8010 = vshll.u32 %v7750, 16
        %v8012 = vrot.slane %v8010, 1
        %v8013 = vsel %vm974, %v8008, %v8012
        %v8015 = vshrl.u32 %v7719, 16
        %v8017 = vshll.u32 %v7719, 16
        %v8019 = vrot.slane %v8017, 1
        %v8020 = vor.u32 %v8015, %v8019
        %v8022 = vshll.u32 %v7751, 16
        %v8024 = vrot.slane %v8022, 1
        %v8025 = vsel %vm974, %v8020, %v8024
        %v8027 = vshrl.u32 %v7720, 16
        %v8029 = vshll.u32 %v7720, 16
        %v8031 = vrot.slane %v8029, 1
        %v8032 = vor.u32 %v8027, %v8031
        %v8034 = vshll.u32 %v7752, 16
        %v8036 = vrot.slane %v8034, 1
        %v8037 = vsel %vm974, %v8032, %v8036
        %v8039 = vshrl.u32 %v7721, 16
        %v8041 = vshll.u32 %v7721, 16
        %v8043 = vrot.slane %v8041, 1
        %v8044 = vor.u32 %v8039, %v8043
        %v8046 = vshll.u32 %v7753, 16
        %v8048 = vrot.slane %v8046, 1
        %v8049 = vsel %vm974, %v8044, %v8048
        %v8051 = vshrl.u32 %v7722, 16
        %v8053 = vshll.u32 %v7722, 16
        %v8055 = vrot.slane %v8053, 1
        %v8056 = vor.u32 %v8051, %v8055
        %v8058 = vshll.u32 %v7754, 16
        %v8060 = vrot.slane %v8058, 1
        %v8061 = vsel %vm974, %v8056, %v8060
        %v8063 = vshrl.u32 %v7723, 16
        %v8065 = vshll.u32 %v7723, 16
        %v8067 = vrot.slane %v8065, 1
        %v8068 = vor.u32 %v8063, %v8067
        %v8070 = vshll.u32 %v7755, 16
        %v8072 = vrot.slane %v8070, 1
        %v8073 = vsel %vm974, %v8068, %v8072
        %v8075 = vshrl.u32 %v7724, 16
        %v8077 = vshll.u32 %v7724, 16
        %v8079 = vrot.slane %v8077, 1
        %v8080 = vor.u32 %v8075, %v8079
        %v8082 = vshll.u32 %v7756, 16
        %v8084 = vrot.slane %v8082, 1
        %v8085 = vsel %vm974, %v8080, %v8084
        %v8087 = vshrl.u32 %v7725, 16
        %v8089 = vshll.u32 %v7725, 16
        %v8091 = vrot.slane %v8089, 1
        %v8092 = vor.u32 %v8087, %v8091
        %v8094 = vshll.u32 %v7757, 16
        %v8096 = vrot.slane %v8094, 1
        %v8097 = vsel %vm974, %v8092, %v8096
        %v8099 = vshrl.u32 %v7726, 16
        %v8101 = vshll.u32 %v7726, 16
        %v8103 = vrot.slane %v8101, 1
        %v8104 = vor.u32 %v8099, %v8103
        %v8106 = vshll.u32 %v7758, 16
        %v8108 = vrot.slane %v8106, 1
        %v8109 = vsel %vm974, %v8104, %v8108
        %v8111 = vshrl.u32 %v7727, 16
        %v8113 = vshll.u32 %v7727, 16
        %v8115 = vrot.slane %v8113, 1
        %v8116 = vor.u32 %v8111, %v8115
        %v8118 = vshll.u32 %v7759, 16
        %v8120 = vrot.slane %v8118, 1
        %v8121 = vsel %vm974, %v8116, %v8120
        %8122 = vrot.lane.b32.xlu0 %v7773, 64
        %v8123 = vpop.permute.xlu0 %8122
        %8124 = vrot.lane.b32.xlu0 %v7785, 64
        %v8125 = vpop.permute.xlu0 %8124
        %8126 = vrot.lane.b32.xlu0 %v7797, 64
        %v8127 = vpop.permute.xlu0 %8126
        %8128 = vrot.lane.b32.xlu0 %v7809, 64
        %v8129 = vpop.permute.xlu0 %8128
        %8130 = vrot.lane.b32.xlu0 %v7821, 64
        %v8131 = vpop.permute.xlu0 %8130
        %8132 = vrot.lane.b32.xlu0 %v7833, 64
        %v8133 = vpop.permute.xlu0 %8132
        %8134 = vrot.lane.b32.xlu0 %v7845, 64
        %v8135 = vpop.permute.xlu0 %8134
        %8136 = vrot.lane.b32.xlu0 %v7857, 64
        %v8137 = vpop.permute.xlu0 %8136
        %8138 = vrot.lane.b32.xlu0 %v7869, 64
        %v8139 = vpop.permute.xlu0 %8138
        %8140 = vrot.lane.b32.xlu0 %v7881, 64
        %v8141 = vpop.permute.xlu0 %8140
        %8142 = vrot.lane.b32.xlu0 %v7893, 64
        %v8143 = vpop.permute.xlu0 %8142
        %8144 = vrot.lane.b32.xlu0 %v7905, 64
        %v8145 = vpop.permute.xlu0 %8144
        %8146 = vrot.lane.b32.xlu0 %v7917, 64
        %v8147 = vpop.permute.xlu0 %8146
        %8148 = vrot.lane.b32.xlu0 %v7929, 64
        %v8149 = vpop.permute.xlu0 %8148
        %8150 = vrot.lane.b32.xlu0 %v7941, 64
        %v8151 = vpop.permute.xlu0 %8150
        %8152 = vrot.lane.b32.xlu0 %v7953, 64
        %v8153 = vpop.permute.xlu0 %8152
        %8154 = vrot.lane.b32.xlu0 %v7965, 64
        %v8155 = vpop.permute.xlu0 %8154
        %8156 = vrot.lane.b32.xlu0 %v7977, 64
        %v8157 = vpop.permute.xlu0 %8156
        %8158 = vrot.lane.b32.xlu0 %v7989, 64
        %v8159 = vpop.permute.xlu0 %8158
        %8160 = vrot.lane.b32.xlu0 %v8001, 64
        %v8161 = vpop.permute.xlu0 %8160
        %8162 = vrot.lane.b32.xlu0 %v8013, 64
        %v8163 = vpop.permute.xlu0 %8162
        %8164 = vrot.lane.b32.xlu0 %v8025, 64
        %v8165 = vpop.permute.xlu0 %8164
        %8166 = vrot.lane.b32.xlu0 %v8037, 64
        %v8167 = vpop.permute.xlu0 %8166
        %8168 = vrot.lane.b32.xlu0 %v8049, 64
        %v8169 = vpop.permute.xlu0 %8168
        %8170 = vrot.lane.b32.xlu0 %v8061, 64
        %v8171 = vpop.permute.xlu0 %8170
        %8172 = vrot.lane.b32.xlu0 %v8073, 64
        %v8173 = vpop.permute.xlu0 %8172
        %8174 = vrot.lane.b32.xlu0 %v8085, 64
        %v8175 = vpop.permute.xlu0 %8174
        %8176 = vrot.lane.b32.xlu0 %v8097, 64
        %v8177 = vpop.permute.xlu0 %8176
        %8178 = vrot.lane.b32.xlu0 %v8109, 64
        %v8179 = vpop.permute.xlu0 %8178
        %8180 = vrot.lane.b32.xlu0 %v8121, 64
        %v8181 = vpop.permute.xlu0 %8180
        %vm8182 = vcmask 523264
        %v8183 = vsel %vm8182, %v8123, %v8125
        %v8184 = vsel %vm8182, %v8127, %v8129
        %v8185 = vsel %vm8182, %v8131, %v8133
        %v8186 = vsel %vm8182, %v8135, %v8137
        %v8187 = vsel %vm8182, %v8139, %v8141
        %v8188 = vsel %vm8182, %v8143, %v8145
        %v8189 = vsel %vm8182, %v8147, %v8149
        %v8190 = vsel %vm8182, %v8151, %v8153
        %v8191 = vsel %vm8182, %v8155, %v8157
        %v8192 = vsel %vm8182, %v8159, %v8161
        %v8193 = vsel %vm8182, %v8163, %v8165
        %v8194 = vsel %vm8182, %v8167, %v8169
        %v8195 = vsel %vm8182, %v8171, %v8173
        %v8196 = vsel %vm8182, %v8175, %v8177
        %v8197 = vsel %vm8182, %v8179, %v8181
        %v8274 = vrot.slane %v7698, 1
        %v8275 = vrot.slane %v7730, 1
        %v8276 = vsel %vm1226, %v8274, %v8275
        %v8277 = vrot.slane %v7699, 1
        %v8278 = vrot.slane %v7731, 1
        %v8279 = vsel %vm1226, %v8277, %v8278
        %v8280 = vrot.slane %v7700, 1
        %v8281 = vrot.slane %v7732, 1
        %v8282 = vsel %vm1226, %v8280, %v8281
        %v8283 = vrot.slane %v7701, 1
        %v8284 = vrot.slane %v7733, 1
        %v8285 = vsel %vm1226, %v8283, %v8284
        %v8286 = vrot.slane %v7702, 1
        %v8287 = vrot.slane %v7734, 1
        %v8288 = vsel %vm1226, %v8286, %v8287
        %v8289 = vrot.slane %v7703, 1
        %v8290 = vrot.slane %v7735, 1
        %v8291 = vsel %vm1226, %v8289, %v8290
        %v8292 = vrot.slane %v7704, 1
        %v8293 = vrot.slane %v7736, 1
        %v8294 = vsel %vm1226, %v8292, %v8293
        %v8295 = vrot.slane %v7705, 1
        %v8296 = vrot.slane %v7737, 1
        %v8297 = vsel %vm1226, %v8295, %v8296
        %v8298 = vrot.slane %v7706, 1
        %v8299 = vrot.slane %v7738, 1
        %v8300 = vsel %vm1226, %v8298, %v8299
        %v8301 = vrot.slane %v7707, 1
        %v8302 = vrot.slane %v7739, 1
        %v8303 = vsel %vm1226, %v8301, %v8302
        %v8304 = vrot.slane %v7708, 1
        %v8305 = vrot.slane %v7740, 1
        %v8306 = vsel %vm1226, %v8304, %v8305
        %v8307 = vrot.slane %v7709, 1
        %v8308 = vrot.slane %v7741, 1
        %v8309 = vsel %vm1226, %v8307, %v8308
        %v8310 = vrot.slane %v7710, 1
        %v8311 = vrot.slane %v7742, 1
        %v8312 = vsel %vm1226, %v8310, %v8311
        %v8313 = vrot.slane %v7711, 1
        %v8314 = vrot.slane %v7743, 1
        %v8315 = vsel %vm1226, %v8313, %v8314
        %v8316 = vrot.slane %v7712, 1
        %v8317 = vrot.slane %v7744, 1
        %v8318 = vsel %vm1226, %v8316, %v8317
        %v8319 = vrot.slane %v7713, 1
        %v8320 = vrot.slane %v7745, 1
        %v8321 = vsel %vm1226, %v8319, %v8320
        %v8322 = vrot.slane %v7714, 1
        %v8323 = vrot.slane %v7746, 1
        %v8324 = vsel %vm1226, %v8322, %v8323
        %v8325 = vrot.slane %v7715, 1
        %v8326 = vrot.slane %v7747, 1
        %v8327 = vsel %vm1226, %v8325, %v8326
        %v8328 = vrot.slane %v7716, 1
        %v8329 = vrot.slane %v7748, 1
        %v8330 = vsel %vm1226, %v8328, %v8329
        %v8331 = vrot.slane %v7717, 1
        %v8332 = vrot.slane %v7749, 1
        %v8333 = vsel %vm1226, %v8331, %v8332
        %v8334 = vrot.slane %v7718, 1
        %v8335 = vrot.slane %v7750, 1
        %v8336 = vsel %vm1226, %v8334, %v8335
        %v8337 = vrot.slane %v7719, 1
        %v8338 = vrot.slane %v7751, 1
        %v8339 = vsel %vm1226, %v8337, %v8338
        %v8340 = vrot.slane %v7720, 1
        %v8341 = vrot.slane %v7752, 1
        %v8342 = vsel %vm1226, %v8340, %v8341
        %v8343 = vrot.slane %v7721, 1
        %v8344 = vrot.slane %v7753, 1
        %v8345 = vsel %vm1226, %v8343, %v8344
        %v8346 = vrot.slane %v7722, 1
        %v8347 = vrot.slane %v7754, 1
        %v8348 = vsel %vm1226, %v8346, %v8347
        %v8349 = vrot.slane %v7723, 1
        %v8350 = vrot.slane %v7755, 1
        %v8351 = vsel %vm1226, %v8349, %v8350
        %v8352 = vrot.slane %v7724, 1
        %v8353 = vrot.slane %v7756, 1
        %v8354 = vsel %vm1226, %v8352, %v8353
        %v8355 = vrot.slane %v7725, 1
        %v8356 = vrot.slane %v7757, 1
        %v8357 = vsel %vm1226, %v8355, %v8356
        %v8358 = vrot.slane %v7726, 1
        %v8359 = vrot.slane %v7758, 1
        %v8360 = vsel %vm1226, %v8358, %v8359
        %v8361 = vrot.slane %v7727, 1
        %v8362 = vrot.slane %v7759, 1
        %v8363 = vsel %vm1226, %v8361, %v8362
        %8382 = vrot.lane.b32.xlu0 %v7698, 64
        %v8383 = vpop.permute.xlu0 %8382
        %8384 = vrot.lane.b32.xlu0 %v7699, 64
        %v8385 = vpop.permute.xlu0 %8384
        %8386 = vrot.lane.b32.xlu0 %v7700, 64
        %v8387 = vpop.permute.xlu0 %8386
        %8388 = vrot.lane.b32.xlu0 %v7701, 64
        %v8389 = vpop.permute.xlu0 %8388
        %8390 = vrot.lane.b32.xlu0 %v7702, 64
        %v8391 = vpop.permute.xlu0 %8390
        %8392 = vrot.lane.b32.xlu0 %v7703, 64
        %v8393 = vpop.permute.xlu0 %8392
        %8394 = vrot.lane.b32.xlu0 %v7704, 64
        %v8395 = vpop.permute.xlu0 %8394
        %8396 = vrot.lane.b32.xlu0 %v7705, 64
        %v8397 = vpop.permute.xlu0 %8396
        %8398 = vrot.lane.b32.xlu0 %v7706, 64
        %v8399 = vpop.permute.xlu0 %8398
        %8400 = vrot.lane.b32.xlu0 %v7707, 64
        %v8401 = vpop.permute.xlu0 %8400
        %8402 = vrot.lane.b32.xlu0 %v7708, 64
        %v8403 = vpop.permute.xlu0 %8402
        %8404 = vrot.lane.b32.xlu0 %v7709, 64
        %v8405 = vpop.permute.xlu0 %8404
        %8406 = vrot.lane.b32.xlu0 %v7710, 64
        %v8407 = vpop.permute.xlu0 %8406
        %8408 = vrot.lane.b32.xlu0 %v7711, 64
        %v8409 = vpop.permute.xlu0 %8408
        %8410 = vrot.lane.b32.xlu0 %v7712, 64
        %v8411 = vpop.permute.xlu0 %8410
        %8412 = vrot.lane.b32.xlu0 %v7713, 64
        %v8413 = vpop.permute.xlu0 %8412
        %8414 = vrot.lane.b32.xlu0 %v7714, 64
        %v8415 = vpop.permute.xlu0 %8414
        %8416 = vrot.lane.b32.xlu0 %v7715, 64
        %v8417 = vpop.permute.xlu0 %8416
        %8418 = vrot.lane.b32.xlu0 %v7716, 64
        %v8419 = vpop.permute.xlu0 %8418
        %8420 = vrot.lane.b32.xlu0 %v7717, 64
        %v8421 = vpop.permute.xlu0 %8420
        %8422 = vrot.lane.b32.xlu0 %v7718, 64
        %v8423 = vpop.permute.xlu0 %8422
        %8424 = vrot.lane.b32.xlu0 %v7719, 64
        %v8425 = vpop.permute.xlu0 %8424
        %8426 = vrot.lane.b32.xlu0 %v7720, 64
        %v8427 = vpop.permute.xlu0 %8426
        %8428 = vrot.lane.b32.xlu0 %v7721, 64
        %v8429 = vpop.permute.xlu0 %8428
        %8430 = vrot.lane.b32.xlu0 %v7722, 64
        %v8431 = vpop.permute.xlu0 %8430
        %8432 = vrot.lane.b32.xlu0 %v7723, 64
        %v8433 = vpop.permute.xlu0 %8432
        %8434 = vrot.lane.b32.xlu0 %v7724, 64
        %v8435 = vpop.permute.xlu0 %8434
        %8436 = vrot.lane.b32.xlu0 %v7725, 64
        %v8437 = vpop.permute.xlu0 %8436
        %8438 = vrot.lane.b32.xlu0 %v7726, 64
        %v8439 = vpop.permute.xlu0 %8438
        %8440 = vrot.lane.b32.xlu0 %v7727, 64
        %v8441 = vpop.permute.xlu0 %8440
        %8442 = vrot.lane.b32.xlu0 %v7728, 64
        %v8443 = vpop.permute.xlu0 %8442
        %8444 = vrot.lane.b32.xlu0 %v7729, 64
        %v8445 = vpop.permute.xlu0 %8444
        %v8446 = vsel %vm8182, %v8383, %v8385
        %v8447 = vsel %vm8182, %v8387, %v8389
        %v8448 = vsel %vm8182, %v8391, %v8393
        %v8449 = vsel %vm8182, %v8395, %v8397
        %v8450 = vsel %vm8182, %v8399, %v8401
        %v8451 = vsel %vm8182, %v8403, %v8405
        %v8452 = vsel %vm8182, %v8407, %v8409
        %v8453 = vsel %vm8182, %v8411, %v8413
        %v8454 = vsel %vm8182, %v8415, %v8417
        %v8455 = vsel %vm8182, %v8419, %v8421
        %v8456 = vsel %vm8182, %v8423, %v8425
        %v8457 = vsel %vm8182, %v8427, %v8429
        %v8458 = vsel %vm8182, %v8431, %v8433
        %v8459 = vsel %vm8182, %v8435, %v8437
        %v8460 = vsel %vm8182, %v8439, %v8441
        %v8461 = vsel %vm8182, %v8443, %v8445
        %v8479 = vshrl.u32 %v7728, 16
        %v8481 = vshll.u32 %v7728, 16
        %v8483 = vrot.slane %v8481, 1
        %v8484 = vor.u32 %v8479, %v8483
        %v8486 = vshll.u32 %v7760, 16
        %v8488 = vrot.slane %v8486, 1
        %v8489 = vsel %vm974, %v8484, %v8488
        %v8491 = vshrl.u32 %v7729, 16
        %v8493 = vshll.u32 %v7729, 16
        %v8495 = vrot.slane %v8493, 1
        %v8496 = vor.u32 %v8491, %v8495
        %v8498 = vshll.u32 %v7761, 16
        %v8500 = vrot.slane %v8498, 1
        %v8501 = vsel %vm974, %v8496, %v8500
        %v8520 = vrot.slane %v7728, 1
        %v8521 = vrot.slane %v7760, 1
        %v8522 = vsel %vm1226, %v8520, %v8521
        %v8523 = vrot.slane %v7729, 1
        %v8524 = vrot.slane %v7761, 1
        %v8525 = vsel %vm1226, %v8523, %v8524
        %8526 = vrot.lane.b32.xlu0 %v8276, 64
        %v8527 = vpop.permute.xlu0 %8526
        %8528 = vrot.lane.b32.xlu0 %v8279, 64
        %v8529 = vpop.permute.xlu0 %8528
        %8530 = vrot.lane.b32.xlu0 %v8282, 64
        %v8531 = vpop.permute.xlu0 %8530
        %8532 = vrot.lane.b32.xlu0 %v8285, 64
        %v8533 = vpop.permute.xlu0 %8532
        %8534 = vrot.lane.b32.xlu0 %v8288, 64
        %v8535 = vpop.permute.xlu0 %8534
        %8536 = vrot.lane.b32.xlu0 %v8291, 64
        %v8537 = vpop.permute.xlu0 %8536
        %8538 = vrot.lane.b32.xlu0 %v8294, 64
        %v8539 = vpop.permute.xlu0 %8538
        %8540 = vrot.lane.b32.xlu0 %v8297, 64
        %v8541 = vpop.permute.xlu0 %8540
        %8542 = vrot.lane.b32.xlu0 %v8300, 64
        %v8543 = vpop.permute.xlu0 %8542
        %8544 = vrot.lane.b32.xlu0 %v8303, 64
        %v8545 = vpop.permute.xlu0 %8544
        %8546 = vrot.lane.b32.xlu0 %v8306, 64
        %v8547 = vpop.permute.xlu0 %8546
        %8548 = vrot.lane.b32.xlu0 %v8309, 64
        %v8549 = vpop.permute.xlu0 %8548
        %8550 = vrot.lane.b32.xlu0 %v8312, 64
        %v8551 = vpop.permute.xlu0 %8550
        %8552 = vrot.lane.b32.xlu0 %v8315, 64
        %v8553 = vpop.permute.xlu0 %8552
        %8554 = vrot.lane.b32.xlu0 %v8318, 64
        %v8555 = vpop.permute.xlu0 %8554
        %8556 = vrot.lane.b32.xlu0 %v8321, 64
        %v8557 = vpop.permute.xlu0 %8556
        %8558 = vrot.lane.b32.xlu0 %v8324, 64
        %v8559 = vpop.permute.xlu0 %8558
        %8560 = vrot.lane.b32.xlu0 %v8327, 64
        %v8561 = vpop.permute.xlu0 %8560
        %8562 = vrot.lane.b32.xlu0 %v8330, 64
        %v8563 = vpop.permute.xlu0 %8562
        %8564 = vrot.lane.b32.xlu0 %v8333, 64
        %v8565 = vpop.permute.xlu0 %8564
        %8566 = vrot.lane.b32.xlu0 %v8336, 64
        %v8567 = vpop.permute.xlu0 %8566
        %8568 = vrot.lane.b32.xlu0 %v8339, 64
        %v8569 = vpop.permute.xlu0 %8568
        %8570 = vrot.lane.b32.xlu0 %v8342, 64
        %v8571 = vpop.permute.xlu0 %8570
        %8572 = vrot.lane.b32.xlu0 %v8345, 64
        %v8573 = vpop.permute.xlu0 %8572
        %8574 = vrot.lane.b32.xlu0 %v8348, 64
        %v8575 = vpop.permute.xlu0 %8574
        %8576 = vrot.lane.b32.xlu0 %v8351, 64
        %v8577 = vpop.permute.xlu0 %8576
        %8578 = vrot.lane.b32.xlu0 %v8354, 64
        %v8579 = vpop.permute.xlu0 %8578
        %8580 = vrot.lane.b32.xlu0 %v8357, 64
        %v8581 = vpop.permute.xlu0 %8580
        %8582 = vrot.lane.b32.xlu0 %v8360, 64
        %v8583 = vpop.permute.xlu0 %8582
        %8584 = vrot.lane.b32.xlu0 %v8363, 64
        %v8585 = vpop.permute.xlu0 %8584
        %8586 = vrot.lane.b32.xlu0 %v8522, 64
        %v8587 = vpop.permute.xlu0 %8586
        %8588 = vrot.lane.b32.xlu0 %v8525, 64
        %v8589 = vpop.permute.xlu0 %8588
        %v8590 = vsel %vm8182, %v8527, %v8529
        %v8591 = vsel %vm8182, %v8531, %v8533
        %v8592 = vsel %vm8182, %v8535, %v8537
        %v8593 = vsel %vm8182, %v8539, %v8541
        %v8594 = vsel %vm8182, %v8543, %v8545
        %v8595 = vsel %vm8182, %v8547, %v8549
        %v8596 = vsel %vm8182, %v8551, %v8553
        %v8597 = vsel %vm8182, %v8555, %v8557
        %v8598 = vsel %vm8182, %v8559, %v8561
        %v8599 = vsel %vm8182, %v8563, %v8565
        %v8600 = vsel %vm8182, %v8567, %v8569
        %v8601 = vsel %vm8182, %v8571, %v8573
        %v8602 = vsel %vm8182, %v8575, %v8577
        %v8603 = vsel %vm8182, %v8579, %v8581
        %v8604 = vsel %vm8182, %v8583, %v8585
        %v8605 = vsel %vm8182, %v8587, %v8589
        %8622 = vrot.lane.b32.xlu0 %v8489, 64
        %v8623 = vpop.permute.xlu0 %8622
        %8624 = vrot.lane.b32.xlu0 %v8501, 64
        %v8625 = vpop.permute.xlu0 %8624
        %v8626 = vsel %vm8182, %v8623, %v8625
        %v8630 = vsel %vm2665, %v7699, %v8123
        %v8633 = vsel %vm2665, %v7701, %v8127
        %v8636 = vsel %vm2665, %v7703, %v8131
        %v8639 = vsel %vm2665, %v7705, %v8135
        %v8642 = vsel %vm2665, %v7707, %v8139
        %v8645 = vsel %vm2665, %v7709, %v8143
        %v8648 = vsel %vm2665, %v7711, %v8147
        %v8651 = vsel %vm2665, %v7713, %v8151
        %v8654 = vsel %vm2665, %v7715, %v8155
        %v8657 = vsel %vm2665, %v7717, %v8159
        %v8660 = vsel %vm2665, %v7719, %v8163
        %v8663 = vsel %vm2665, %v7721, %v8167
        %v8666 = vsel %vm2665, %v7723, %v8171
        %v8669 = vsel %vm2665, %v7725, %v8175
        %v8672 = vsel %vm2665, %v7727, %v8179
        %v8675 = vsel %vm2665, %v1228, %v8383
        %v8679 = vsel %vm2665, %v8279, %v8387
        %v8683 = vsel %vm2665, %v8285, %v8391
        %v8687 = vsel %vm2665, %v8291, %v8395
        %v8691 = vsel %vm2665, %v8297, %v8399
        %v8695 = vsel %vm2665, %v8303, %v8403
        %v8699 = vsel %vm2665, %v8309, %v8407
        %v8703 = vsel %vm2665, %v8315, %v8411
        %v8707 = vsel %vm2665, %v8321, %v8415
        %v8711 = vsel %vm2665, %v8327, %v8419
        %v8715 = vsel %vm2665, %v8333, %v8423
        %v8719 = vsel %vm2665, %v8339, %v8427
        %v8723 = vsel %vm2665, %v8345, %v8431
        %v8727 = vsel %vm2665, %v8351, %v8435
        %v8731 = vsel %vm2665, %v8357, %v8439
        %v8735 = vsel %vm2665, %v8363, %v8443
        %v8739 = vsel %vm2665, %v7785, %v8527
        %v8743 = vsel %vm2665, %v7809, %v8531
        %v8747 = vsel %vm2665, %v7833, %v8535
        %v8751 = vsel %vm2665, %v7857, %v8539
        %v8755 = vsel %vm2665, %v7881, %v8543
        %v8759 = vsel %vm2665, %v7905, %v8547
        %v8763 = vsel %vm2665, %v7929, %v8551
        %v8767 = vsel %vm2665, %v7953, %v8555
        %v8771 = vsel %vm2665, %v7977, %v8559
        %v8775 = vsel %vm2665, %v8001, %v8563
        %v8779 = vsel %vm2665, %v8025, %v8567
        %v8783 = vsel %vm2665, %v8049, %v8571
        %v8787 = vsel %vm2665, %v8073, %v8575
        %v8791 = vsel %vm2665, %v8097, %v8579
        %v8795 = vsel %vm2665, %v8121, %v8583
        %v8799 = vsel %vm2665, %v8501, %v8587
        %v8802 = vsel %vm2665, %v7729, %v8623
        %v8804 = vld [vmem:[#allocation19] sm:$0xf]
        %v8805 = vld [vmem:[#allocation19 + $0x4] sm:$0xf]
        %v8806 = vld [vmem:[#allocation19 + $0x8] sm:$0xf]
        %v8807 = vld [vmem:[#allocation19 + $0xc] sm:$0xf]
        %v8808 = vld [vmem:[#allocation19 + $0x10] sm:$0xf]
        %v8809 = vld [vmem:[#allocation19 + $0x14] sm:$0xf]
        %v8810 = vld [vmem:[#allocation19 + $0x18] sm:$0xf]
        %v8811 = vld [vmem:[#allocation19 + $0x1c] sm:$0xf]
        %v8812 = vld [vmem:[#allocation19 + $0x20] sm:$0xf]
        %v8813 = vld [vmem:[#allocation19 + $0x24] sm:$0xf]
        %v8814 = vld [vmem:[#allocation19 + $0x28] sm:$0xf]
        %v8815 = vld [vmem:[#allocation19 + $0x2c] sm:$0xf]
        %v8816 = vld [vmem:[#allocation19 + $0x30] sm:$0xf]
        %v8817 = vld [vmem:[#allocation19 + $0x34] sm:$0xf]
        %v8818 = vld [vmem:[#allocation19 + $0x38] sm:$0xf]
        %v8819 = vld [vmem:[#allocation19 + $0x3c] sm:$0xf]
        %v8820 = vld [vmem:[#allocation19 + $0x40] sm:$0xf]
        %v8821 = vld [vmem:[#allocation19 + $0x44] sm:$0xf]
        %v8822 = vld [vmem:[#allocation19 + $0x48] sm:$0xf]
        %v8823 = vld [vmem:[#allocation19 + $0x4c] sm:$0xf]
        %v8824 = vld [vmem:[#allocation19 + $0x50] sm:$0xf]
        %v8825 = vld [vmem:[#allocation19 + $0x54] sm:$0xf]
        %v8826 = vld [vmem:[#allocation19 + $0x58] sm:$0xf]
        %v8827 = vld [vmem:[#allocation19 + $0x5c] sm:$0xf]
        %v8828 = vld [vmem:[#allocation19 + $0x60] sm:$0xf]
        %v8829 = vld [vmem:[#allocation19 + $0x64] sm:$0xf]
        %v8830 = vld [vmem:[#allocation19 + $0x68] sm:$0xf]
        %v8831 = vld [vmem:[#allocation19 + $0x6c] sm:$0xf]
        %v8832 = vld [vmem:[#allocation19 + $0x70] sm:$0xf]
        %v8833 = vld [vmem:[#allocation19 + $0x74] sm:$0xf]
        %v8834 = vld [vmem:[#allocation19 + $0x78] sm:$0xf]
        %v8835 = vld [vmem:[#allocation19 + $0x7c] sm:$0xf]
        %v8836 = vld [vmem:[#allocation19 + $0x80] sm:$0xf]
        %v8837 = vld [vmem:[#allocation19 + $0x84] sm:$0xf]
        %v8838 = vld [vmem:[#allocation19 + $0x88] sm:$0xf]
        %v8839 = vld [vmem:[#allocation19 + $0x8c] sm:$0xf]
        %v8840 = vld [vmem:[#allocation19 + $0x90] sm:$0xf]
        %v8841 = vld [vmem:[#allocation19 + $0x94] sm:$0xf]
        %v8842 = vld [vmem:[#allocation19 + $0x98] sm:$0xf]
        %v8843 = vld [vmem:[#allocation19 + $0x9c] sm:$0xf]
        %v8844 = vld [vmem:[#allocation19 + $0xa0] sm:$0xf]
        %v8845 = vld [vmem:[#allocation19 + $0xa4] sm:$0xf]
        %v8846 = vld [vmem:[#allocation19 + $0xa8] sm:$0xf]
        %v8847 = vld [vmem:[#allocation19 + $0xac] sm:$0xf]
        %v8848 = vld [vmem:[#allocation19 + $0xb0] sm:$0xf]
        %v8849 = vld [vmem:[#allocation19 + $0xb4] sm:$0xf]
        %v8850 = vld [vmem:[#allocation19 + $0xb8] sm:$0xf]
        %v8851 = vld [vmem:[#allocation19 + $0xbc] sm:$0xf]
        %v8852 = vld [vmem:[#allocation19 + $0xc0] sm:$0xf]
        %v8853 = vld [vmem:[#allocation19 + $0xc4] sm:$0xf]
        %v8854 = vld [vmem:[#allocation19 + $0xc8] sm:$0xf]
        %v8855 = vld [vmem:[#allocation19 + $0xcc] sm:$0xf]
        %v8856 = vld [vmem:[#allocation19 + $0xd0] sm:$0xf]
        %v8857 = vld [vmem:[#allocation19 + $0xd4] sm:$0xf]
        %v8858 = vld [vmem:[#allocation19 + $0xd8] sm:$0xf]
        %v8859 = vld [vmem:[#allocation19 + $0xdc] sm:$0xf]
        %v8860 = vld [vmem:[#allocation19 + $0xe0] sm:$0xf]
        %v8861 = vld [vmem:[#allocation19 + $0xe4] sm:$0xf]
        %v8862 = vld [vmem:[#allocation19 + $0xe8] sm:$0xf]
        %v8863 = vld [vmem:[#allocation19 + $0xec] sm:$0xf]
        %v8864 = vld [vmem:[#allocation19 + $0xf0] sm:$0xf]
        %v8865 = vld [vmem:[#allocation19 + $0xf4] sm:$0xf]
        %v8866 = vld [vmem:[#allocation19 + $0xf8] sm:$0xf]
        %v8867 = vld [vmem:[#allocation19 + $0xfc] sm:$0xf]
        %v8868 = vld [vmem:[#allocation19 + $0x100] sm:$0xf]
        %v8869 = vld [vmem:[#allocation19 + $0x104] sm:$0xf]
        %v8870 = vld [vmem:[#allocation19 + $0x108] sm:$0xf]
        %v8871 = vld [vmem:[#allocation19 + $0x10c] sm:$0xf]
        %v8872 = vld [vmem:[#allocation19 + $0x110] sm:$0xf]
        %v8873 = vld [vmem:[#allocation19 + $0x114] sm:$0xf]
        %v8874 = vld [vmem:[#allocation19 + $0x118] sm:$0xf]
        %v8875 = vld [vmem:[#allocation19 + $0x11c] sm:$0xf]
        %v8876 = vld [vmem:[#allocation19 + $0x120] sm:$0xf]
        %v8877 = vld [vmem:[#allocation19 + $0x124] sm:$0xf]
        %v8878 = vld [vmem:[#allocation19 + $0x128] sm:$0xf]
        %v8879 = vld [vmem:[#allocation19 + $0x12c] sm:$0xf]
        %v8880 = vld [vmem:[#allocation19 + $0x130] sm:$0xf]
        %v8881 = vld [vmem:[#allocation19 + $0x134] sm:$0xf]
        %v8882 = vld [vmem:[#allocation19 + $0x138] sm:$0xf]
        %v8883 = vld [vmem:[#allocation19 + $0x13c] sm:$0xf]
        %v8884 = vld [vmem:[#allocation19 + $0x140] sm:$0xf]
        %v8885 = vld [vmem:[#allocation19 + $0x144] sm:$0xf]
        %v8886 = vld [vmem:[#allocation19 + $0x148] sm:$0xf]
        %v8887 = vld [vmem:[#allocation19 + $0x14c] sm:$0xf]
        %v8888 = vld [vmem:[#allocation19 + $0x150] sm:$0xf]
        %v8889 = vld [vmem:[#allocation19 + $0x154] sm:$0xf]
        %v8890 = vld [vmem:[#allocation19 + $0x158] sm:$0xf]
        %v8891 = vld [vmem:[#allocation19 + $0x15c] sm:$0xf]
        %v8892 = vld [vmem:[#allocation19 + $0x160] sm:$0xf]
        %v8893 = vld [vmem:[#allocation19 + $0x164] sm:$0xf]
        %v8894 = vld [vmem:[#allocation19 + $0x168] sm:$0xf]
        %v8895 = vld [vmem:[#allocation19 + $0x16c] sm:$0xf]
        %v8896 = vld [vmem:[#allocation19 + $0x170] sm:$0xf]
        %v8897 = vld [vmem:[#allocation19 + $0x174] sm:$0xf]
        %v8898 = vld [vmem:[#allocation19 + $0x178] sm:$0xf]
        %v8899 = vld [vmem:[#allocation19 + $0x17c] sm:$0xf]
        %v8900 = vld [vmem:[#allocation19 + $0x180] sm:$0xf]
        %v8901 = vld [vmem:[#allocation19 + $0x184] sm:$0xf]
        %v8902 = vld [vmem:[#allocation19 + $0x188] sm:$0xf]
        %v8903 = vld [vmem:[#allocation19 + $0x18c] sm:$0xf]
        %v8904 = vld [vmem:[#allocation19 + $0x190] sm:$0xf]
        %v8905 = vld [vmem:[#allocation19 + $0x194] sm:$0xf]
        %v8906 = vld [vmem:[#allocation19 + $0x198] sm:$0xf]
        %v8907 = vld [vmem:[#allocation19 + $0x19c] sm:$0xf]
        %v8908 = vld [vmem:[#allocation19 + $0x1a0] sm:$0xf]
        %v8909 = vld [vmem:[#allocation19 + $0x1a4] sm:$0xf]
        %v8910 = vld [vmem:[#allocation19 + $0x1a8] sm:$0xf]
        %v8911 = vld [vmem:[#allocation19 + $0x1ac] sm:$0xf]
        %v8912 = vld [vmem:[#allocation19 + $0x1b0] sm:$0xf]
        %v8913 = vld [vmem:[#allocation19 + $0x1b4] sm:$0xf]
        %v8914 = vld [vmem:[#allocation19 + $0x1b8] sm:$0xf]
        %v8915 = vld [vmem:[#allocation19 + $0x1bc] sm:$0xf]
        %v8916 = vld [vmem:[#allocation19 + $0x1c0] sm:$0xf]
        %v8917 = vld [vmem:[#allocation19 + $0x1c4] sm:$0xf]
        %v8918 = vld [vmem:[#allocation19 + $0x1c8] sm:$0xf]
        %v8919 = vld [vmem:[#allocation19 + $0x1cc] sm:$0xf]
        %v8920 = vld [vmem:[#allocation19 + $0x1d0] sm:$0xf]
        %v8921 = vld [vmem:[#allocation19 + $0x1d4] sm:$0xf]
        %v8922 = vld [vmem:[#allocation19 + $0x1d8] sm:$0xf]
        %v8923 = vld [vmem:[#allocation19 + $0x1dc] sm:$0xf]
        %v8924 = vld [vmem:[#allocation19 + $0x1e0] sm:$0xf]
        %v8925 = vld [vmem:[#allocation19 + $0x1e4] sm:$0xf]
        %v8926 = vld [vmem:[#allocation19 + $0x1e8] sm:$0xf]
        %v8927 = vld [vmem:[#allocation19 + $0x1ec] sm:$0xf]
        %v8928 = vld [vmem:[#allocation19 + $0x1f0] sm:$0xf]
        %v8929 = vld [vmem:[#allocation19 + $0x1f4] sm:$0xf]
        %v8930 = vld [vmem:[#allocation19 + $0x1f8] sm:$0xf]
        %v8931 = vld [vmem:[#allocation19 + $0x1fc] sm:$0xf]
        %v8932 = vld [vmem:[#allocation19 + $0x200] sm:$0xf]
        %v8933 = vld [vmem:[#allocation19 + $0x204] sm:$0xf]
        %v8934 = vld [vmem:[#allocation19 + $0x208] sm:$0xf]
        %v8935 = vld [vmem:[#allocation19 + $0x20c] sm:$0xf]
        %v8936 = vld [vmem:[#allocation19 + $0x210] sm:$0xf]
        %v8937 = vld [vmem:[#allocation19 + $0x214] sm:$0xf]
        %v8938 = vld [vmem:[#allocation19 + $0x218] sm:$0xf]
        %v8939 = vld [vmem:[#allocation19 + $0x21c] sm:$0xf]
        %v8940 = vld [vmem:[#allocation19 + $0x220] sm:$0xf]
        %v8941 = vld [vmem:[#allocation19 + $0x224] sm:$0xf]
        %v8942 = vld [vmem:[#allocation19 + $0x228] sm:$0xf]
        %v8943 = vld [vmem:[#allocation19 + $0x22c] sm:$0xf]
        %v8944 = vld [vmem:[#allocation19 + $0x230] sm:$0xf]
        %v8945 = vld [vmem:[#allocation19 + $0x234] sm:$0xf]
        %v8946 = vld [vmem:[#allocation19 + $0x238] sm:$0xf]
        %v8947 = vld [vmem:[#allocation19 + $0x23c] sm:$0xf]
        %v8948 = vld [vmem:[#allocation19 + $0x240] sm:$0xf]
        %v8949 = vld [vmem:[#allocation19 + $0x244] sm:$0xf]
        %v8950 = vld [vmem:[#allocation19 + $0x248] sm:$0xf]
        %v8951 = vld [vmem:[#allocation19 + $0x24c] sm:$0xf]
        %v8952 = vld [vmem:[#allocation19 + $0x250] sm:$0xf]
        %v8953 = vld [vmem:[#allocation19 + $0x254] sm:$0xf]
        %v8954 = vld [vmem:[#allocation19 + $0x258] sm:$0xf]
        %v8955 = vld [vmem:[#allocation19 + $0x25c] sm:$0xf]
        %v8956 = vld [vmem:[#allocation19 + $0x260] sm:$0xf]
        %v8957 = vld [vmem:[#allocation19 + $0x264] sm:$0xf]
        %v8958 = vld [vmem:[#allocation19 + $0x268] sm:$0xf]
        %v8959 = vld [vmem:[#allocation19 + $0x26c] sm:$0xf]
        %v8960 = vld [vmem:[#allocation19 + $0x270] sm:$0xf]
        %v8961 = vld [vmem:[#allocation19 + $0x274] sm:$0xf]
        %v8962 = vld [vmem:[#allocation19 + $0x278] sm:$0xf]
        %v8963 = vld [vmem:[#allocation19 + $0x27c] sm:$0xf]
        %v8964 = vld [vmem:[#allocation19 + $0x280] sm:$0xf]
        %v8965 = vld [vmem:[#allocation19 + $0x284] sm:$0xf]
        %v8966 = vld [vmem:[#allocation19 + $0x288] sm:$0xf]
        %v8967 = vld [vmem:[#allocation19 + $0x28c] sm:$0xf]
        %v8968 = vld [vmem:[#allocation19 + $0x290] sm:$0xf]
        %v8969 = vld [vmem:[#allocation19 + $0x294] sm:$0xf]
        %v8970 = vld [vmem:[#allocation19 + $0x298] sm:$0xf]
        %v8971 = vld [vmem:[#allocation19 + $0x29c] sm:$0xf]
        %v8972 = vld [vmem:[#allocation19 + $0x2a0] sm:$0xf]
        %v8973 = vld [vmem:[#allocation19 + $0x2a4] sm:$0xf]
        %v8974 = vld [vmem:[#allocation19 + $0x2a8] sm:$0xf]
        %v8975 = vld [vmem:[#allocation19 + $0x2ac] sm:$0xf]
        %v8976 = vld [vmem:[#allocation19 + $0x2b0] sm:$0xf]
        %v8977 = vld [vmem:[#allocation19 + $0x2b4] sm:$0xf]
        %v8978 = vld [vmem:[#allocation19 + $0x2b8] sm:$0xf]
        %v8979 = vld [vmem:[#allocation19 + $0x2bc] sm:$0xf]
        %v8980 = vld [vmem:[#allocation19 + $0x2c0] sm:$0xf]
        %v8981 = vld [vmem:[#allocation19 + $0x2c4] sm:$0xf]
        %v8982 = vld [vmem:[#allocation19 + $0x2c8] sm:$0xf]
        %v8983 = vld [vmem:[#allocation19 + $0x2cc] sm:$0xf]
        %v8984 = vld [vmem:[#allocation19 + $0x2d0] sm:$0xf]
        %v8985 = vld [vmem:[#allocation19 + $0x2d4] sm:$0xf]
        %v8986 = vld [vmem:[#allocation19 + $0x2d8] sm:$0xf]
        %v8987 = vld [vmem:[#allocation19 + $0x2dc] sm:$0xf]
        %v8988 = vld [vmem:[#allocation19 + $0x2e0] sm:$0xf]
        %v8989 = vld [vmem:[#allocation19 + $0x2e4] sm:$0xf]
        %v8990 = vld [vmem:[#allocation19 + $0x2e8] sm:$0xf]
        %v8991 = vld [vmem:[#allocation19 + $0x2ec] sm:$0xf]
        %v8992 = vld [vmem:[#allocation19 + $0x2f0] sm:$0xf]
        %v8993 = vld [vmem:[#allocation19 + $0x2f4] sm:$0xf]
        %v8994 = vld [vmem:[#allocation19 + $0x2f8] sm:$0xf]
        %v8995 = vld [vmem:[#allocation19 + $0x2fc] sm:$0xf]
        %v8996 = vld [vmem:[#allocation19 + $0x300] sm:$0xf]
        %v8997 = vld [vmem:[#allocation19 + $0x304] sm:$0xf]
        %v8998 = vld [vmem:[#allocation19 + $0x308] sm:$0xf]
        %v8999 = vld [vmem:[#allocation19 + $0x30c] sm:$0xf]
        %v9000 = vld [vmem:[#allocation19 + $0x310] sm:$0xf]
        %v9001 = vld [vmem:[#allocation19 + $0x314] sm:$0xf]
        %v9002 = vld [vmem:[#allocation19 + $0x318] sm:$0xf]
        %v9003 = vld [vmem:[#allocation19 + $0x31c] sm:$0xf]
        %v9004 = vld [vmem:[#allocation19 + $0x320] sm:$0xf]
        %v9005 = vld [vmem:[#allocation19 + $0x324] sm:$0xf]
        %v9006 = vld [vmem:[#allocation19 + $0x328] sm:$0xf]
        %v9007 = vld [vmem:[#allocation19 + $0x32c] sm:$0xf]
        %v9008 = vld [vmem:[#allocation19 + $0x330] sm:$0xf]
        %v9009 = vld [vmem:[#allocation19 + $0x334] sm:$0xf]
        %v9010 = vld [vmem:[#allocation19 + $0x338] sm:$0xf]
        %v9011 = vld [vmem:[#allocation19 + $0x33c] sm:$0xf]
        %v9012 = vld [vmem:[#allocation19 + $0x340] sm:$0xf]
        %v9013 = vld [vmem:[#allocation19 + $0x344] sm:$0xf]
        %v9014 = vld [vmem:[#allocation19 + $0x348] sm:$0xf]
        %v9015 = vld [vmem:[#allocation19 + $0x34c] sm:$0xf]
        %v9016 = vld [vmem:[#allocation19 + $0x350] sm:$0xf]
        %v9017 = vld [vmem:[#allocation19 + $0x354] sm:$0xf]
        %v9018 = vld [vmem:[#allocation19 + $0x358] sm:$0xf]
        %v9019 = vld [vmem:[#allocation19 + $0x35c] sm:$0xf]
        %v9236 = vunpack.c.l.b16 %v8804
        %v9237 = vunpack.c.l.b16 %v8805
        %v9238 = vunpack.c.l.b16 %v8806
        %v9239 = vunpack.c.l.b16 %v8807
        %v9240 = vunpack.c.l.b16 %v8808
        %v9241 = vunpack.c.l.b16 %v8809
        %v9242 = vunpack.c.l.b16 %v8810
        %v9243 = vunpack.c.l.b16 %v8811
        %v9244 = vunpack.c.l.b16 %v8812
        %v9245 = vunpack.c.l.b16 %v8813
        %v9246 = vunpack.c.l.b16 %v8814
        %v9247 = vunpack.c.l.b16 %v8815
        %v9248 = vunpack.c.l.b16 %v8816
        %v9249 = vunpack.c.l.b16 %v8817
        %v9250 = vunpack.c.l.b16 %v8818
        %v9251 = vunpack.c.l.b16 %v8819
        %v9252 = vunpack.c.l.b16 %v8820
        %v9253 = vunpack.c.l.b16 %v8821
        %v9254 = vunpack.c.l.b16 %v8822
        %v9255 = vunpack.c.l.b16 %v8823
        %v9256 = vunpack.c.l.b16 %v8824
        %v9257 = vunpack.c.l.b16 %v8825
        %v9258 = vunpack.c.l.b16 %v8826
        %v9259 = vunpack.c.l.b16 %v8827
        %v9260 = vunpack.c.l.b16 %v8828
        %v9261 = vunpack.c.l.b16 %v8829
        %v9262 = vunpack.c.l.b16 %v8830
        %v9263 = vunpack.c.l.b16 %v8831
        %v9264 = vunpack.c.l.b16 %v8832
        %v9265 = vunpack.c.l.b16 %v8833
        %v9266 = vunpack.c.l.b16 %v8834
        %v9267 = vunpack.c.l.b16 %v8835
        %v9268 = vunpack.c.l.b16 %v8836
        %v9269 = vunpack.c.l.b16 %v8837
        %v9270 = vunpack.c.l.b16 %v8838
        %v9271 = vunpack.c.l.b16 %v8839
        %v9272 = vunpack.c.l.b16 %v8840
        %v9273 = vunpack.c.l.b16 %v8841
        %v9274 = vunpack.c.l.b16 %v8842
        %v9275 = vunpack.c.l.b16 %v8843
        %v9276 = vunpack.c.l.b16 %v8844
        %v9277 = vunpack.c.l.b16 %v8845
        %v9278 = vunpack.c.l.b16 %v8846
        %v9279 = vunpack.c.l.b16 %v8847
        %v9280 = vunpack.c.l.b16 %v8848
        %v9281 = vunpack.c.l.b16 %v8849
        %v9282 = vunpack.c.l.b16 %v8850
        %v9283 = vunpack.c.l.b16 %v8851
        %v9284 = vunpack.c.l.b16 %v8852
        %v9285 = vunpack.c.l.b16 %v8853
        %v9286 = vunpack.c.l.b16 %v8854
        %v9287 = vunpack.c.l.b16 %v8855
        %v9288 = vunpack.c.l.b16 %v8856
        %v9289 = vunpack.c.l.b16 %v8857
        %v9290 = vunpack.c.l.b16 %v8858
        %v9291 = vunpack.c.l.b16 %v8859
        %v9292 = vunpack.c.l.b16 %v8860
        %v9293 = vunpack.c.l.b16 %v8861
        %v9294 = vunpack.c.l.b16 %v8862
        %v9295 = vunpack.c.l.b16 %v8863
        %v9296 = vunpack.c.l.b16 %v8864
        %v9297 = vunpack.c.l.b16 %v8865
        %v9298 = vunpack.c.l.b16 %v8866
        %v9299 = vunpack.c.l.b16 %v8867
        %v9300 = vunpack.c.l.b16 %v8868
        %v9301 = vunpack.c.l.b16 %v8869
        %v9302 = vunpack.c.l.b16 %v8870
        %v9303 = vunpack.c.l.b16 %v8871
        %v9304 = vunpack.c.l.b16 %v8872
        %v9305 = vunpack.c.l.b16 %v8873
        %v9306 = vunpack.c.l.b16 %v8874
        %v9307 = vunpack.c.l.b16 %v8875
        %v9308 = vunpack.c.l.b16 %v8876
        %v9309 = vunpack.c.l.b16 %v8877
        %v9310 = vunpack.c.l.b16 %v8878
        %v9311 = vunpack.c.l.b16 %v8879
        %v9312 = vunpack.c.l.b16 %v8880
        %v9313 = vunpack.c.l.b16 %v8881
        %v9314 = vunpack.c.l.b16 %v8882
        %v9315 = vunpack.c.l.b16 %v8883
        %v9316 = vunpack.c.l.b16 %v8884
        %v9317 = vunpack.c.l.b16 %v8885
        %v9318 = vunpack.c.l.b16 %v8886
        %v9319 = vunpack.c.l.b16 %v8887
        %v9320 = vunpack.c.l.b16 %v8888
        %v9321 = vunpack.c.l.b16 %v8889
        %v9322 = vunpack.c.l.b16 %v8890
        %v9323 = vunpack.c.l.b16 %v8891
        %v9324 = vunpack.c.l.b16 %v8892
        %v9325 = vunpack.c.l.b16 %v8893
        %v9326 = vunpack.c.l.b16 %v8894
        %v9327 = vunpack.c.l.b16 %v8895
        %v9328 = vunpack.c.l.b16 %v8896
        %v9329 = vunpack.c.l.b16 %v8897
        %v9330 = vunpack.c.l.b16 %v8898
        %v9331 = vunpack.c.l.b16 %v8899
        %v9332 = vunpack.c.l.b16 %v8900
        %v9333 = vunpack.c.l.b16 %v8901
        %v9334 = vunpack.c.l.b16 %v8902
        %v9335 = vunpack.c.l.b16 %v8903
        %v9336 = vunpack.c.l.b16 %v8904
        %v9337 = vunpack.c.l.b16 %v8905
        %v9338 = vunpack.c.l.b16 %v8906
        %v9339 = vunpack.c.l.b16 %v8907
        %v9340 = vunpack.c.l.b16 %v8908
        %v9341 = vunpack.c.l.b16 %v8909
        %v9342 = vunpack.c.l.b16 %v8910
        %v9343 = vunpack.c.l.b16 %v8911
        %v9344 = vunpack.c.l.b16 %v8912
        %v9345 = vunpack.c.l.b16 %v8913
        %v9346 = vunpack.c.l.b16 %v8914
        %v9347 = vunpack.c.l.b16 %v8915
        %v9348 = vunpack.c.l.b16 %v8916
        %v9349 = vunpack.c.l.b16 %v8917
        %v9350 = vunpack.c.l.b16 %v8918
        %v9351 = vunpack.c.l.b16 %v8919
        %v9352 = vunpack.c.l.b16 %v8920
        %v9353 = vunpack.c.l.b16 %v8921
        %v9354 = vunpack.c.l.b16 %v8922
        %v9355 = vunpack.c.l.b16 %v8923
        %v9356 = vunpack.c.l.b16 %v8924
        %v9357 = vunpack.c.l.b16 %v8925
        %v9358 = vunpack.c.l.b16 %v8926
        %v9359 = vunpack.c.l.b16 %v8927
        %v9360 = vunpack.c.l.b16 %v8928
        %v9361 = vunpack.c.l.b16 %v8929
        %v9362 = vunpack.c.l.b16 %v8930
        %v9363 = vunpack.c.l.b16 %v8931
        %v9364 = vunpack.c.l.b16 %v8932
        %v9365 = vunpack.c.l.b16 %v8933
        %v9366 = vunpack.c.l.b16 %v8934
        %v9367 = vunpack.c.l.b16 %v8935
        %v9368 = vunpack.c.l.b16 %v8936
        %v9369 = vunpack.c.l.b16 %v8937
        %v9370 = vunpack.c.l.b16 %v8938
        %v9371 = vunpack.c.l.b16 %v8939
        %v9372 = vunpack.c.l.b16 %v8940
        %v9373 = vunpack.c.l.b16 %v8941
        %v9374 = vunpack.c.l.b16 %v8942
        %v9375 = vunpack.c.l.b16 %v8943
        %v9376 = vunpack.c.l.b16 %v8944
        %v9377 = vunpack.c.l.b16 %v8945
        %v9378 = vunpack.c.l.b16 %v8946
        %v9379 = vunpack.c.l.b16 %v8947
        %v9380 = vunpack.c.l.b16 %v8948
        %v9381 = vunpack.c.l.b16 %v8949
        %v9382 = vunpack.c.l.b16 %v8950
        %v9383 = vunpack.c.l.b16 %v8951
        %v9384 = vunpack.c.l.b16 %v8952
        %v9385 = vunpack.c.l.b16 %v8953
        %v9386 = vunpack.c.l.b16 %v8954
        %v9387 = vunpack.c.l.b16 %v8955
        %v9388 = vunpack.c.l.b16 %v8956
        %v9389 = vunpack.c.l.b16 %v8957
        %v9390 = vunpack.c.l.b16 %v8958
        %v9391 = vunpack.c.l.b16 %v8959
        %v9392 = vunpack.c.l.b16 %v8960
        %v9393 = vunpack.c.l.b16 %v8961
        %v9394 = vunpack.c.l.b16 %v8962
        %v9395 = vunpack.c.l.b16 %v8963
        %v9396 = vunpack.c.l.b16 %v8964
        %v9397 = vunpack.c.l.b16 %v8965
        %v9398 = vunpack.c.l.b16 %v8966
        %v9399 = vunpack.c.l.b16 %v8967
        %v9400 = vunpack.c.l.b16 %v8968
        %v9401 = vunpack.c.l.b16 %v8969
        %v9402 = vunpack.c.l.b16 %v8970
        %v9403 = vunpack.c.l.b16 %v8971
        %v9404 = vunpack.c.l.b16 %v8972
        %v9405 = vunpack.c.l.b16 %v8973
        %v9406 = vunpack.c.l.b16 %v8974
        %v9407 = vunpack.c.l.b16 %v8975
        %v9408 = vunpack.c.l.b16 %v8976
        %v9409 = vunpack.c.l.b16 %v8977
        %v9410 = vunpack.c.l.b16 %v8978
        %v9411 = vunpack.c.l.b16 %v8979
        %v9412 = vunpack.c.l.b16 %v8980
        %v9413 = vunpack.c.l.b16 %v8981
        %v9414 = vunpack.c.l.b16 %v8982
        %v9415 = vunpack.c.l.b16 %v8983
        %v9416 = vunpack.c.l.b16 %v8984
        %v9417 = vunpack.c.l.b16 %v8985
        %v9418 = vunpack.c.l.b16 %v8986
        %v9419 = vunpack.c.l.b16 %v8987
        %v9420 = vunpack.c.l.b16 %v8988
        %v9421 = vunpack.c.l.b16 %v8989
        %v9422 = vunpack.c.l.b16 %v8990
        %v9423 = vunpack.c.l.b16 %v8991
        %v9424 = vunpack.c.l.b16 %v8992
        %v9425 = vunpack.c.l.b16 %v8993
        %v9426 = vunpack.c.l.b16 %v8994
        %v9427 = vunpack.c.l.b16 %v8995
        %v9428 = vunpack.c.l.b16 %v8996
        %v9429 = vunpack.c.l.b16 %v8997
        %v9430 = vunpack.c.l.b16 %v8998
        %v9431 = vunpack.c.l.b16 %v8999
        %v9432 = vunpack.c.l.b16 %v9000
        %v9433 = vunpack.c.l.b16 %v9001
        %v9434 = vunpack.c.l.b16 %v9002
        %v9435 = vunpack.c.l.b16 %v9003
        %v9436 = vunpack.c.l.b16 %v9004
        %v9437 = vunpack.c.l.b16 %v9005
        %v9438 = vunpack.c.l.b16 %v9006
        %v9439 = vunpack.c.l.b16 %v9007
        %v9440 = vunpack.c.l.b16 %v9008
        %v9441 = vunpack.c.l.b16 %v9009
        %v9442 = vunpack.c.l.b16 %v9010
        %v9443 = vunpack.c.l.b16 %v9011
        %v9444 = vunpack.c.l.b16 %v9012
        %v9445 = vunpack.c.l.b16 %v9013
        %v9446 = vunpack.c.l.b16 %v9014
        %v9447 = vunpack.c.l.b16 %v9015
        %v9448 = vunpack.c.l.b16 %v9016
        %v9449 = vunpack.c.l.b16 %v9017
        %v9450 = vunpack.c.l.b16 %v9018
        %v9451 = vunpack.c.l.b16 %v9019
        %v9452 = vpack.c.b16 %v9237, %v9236
        %v9453 = vpack.c.b16 %v9239, %v9238
        %v9454 = vpack.c.b16 %v9241, %v9240
        %v9455 = vpack.c.b16 %v9243, %v9242
        %v9456 = vpack.c.b16 %v9245, %v9244
        %v9457 = vpack.c.b16 %v9247, %v9246
        %v9458 = vpack.c.b16 %v9249, %v9248
        %v9459 = vpack.c.b16 %v9251, %v9250
        %v9460 = vpack.c.b16 %v9253, %v9252
        %v9461 = vpack.c.b16 %v9255, %v9254
        %v9462 = vpack.c.b16 %v9257, %v9256
        %v9463 = vpack.c.b16 %v9259, %v9258
        %v9464 = vpack.c.b16 %v9261, %v9260
        %v9465 = vpack.c.b16 %v9263, %v9262
        %v9466 = vpack.c.b16 %v9265, %v9264
        %v9467 = vpack.c.b16 %v9267, %v9266
        %v9468 = vpack.c.b16 %v9269, %v9268
        %v9469 = vpack.c.b16 %v9271, %v9270
        %v9470 = vpack.c.b16 %v9273, %v9272
        %v9471 = vpack.c.b16 %v9275, %v9274
        %v9472 = vpack.c.b16 %v9277, %v9276
        %v9473 = vpack.c.b16 %v9279, %v9278
        %v9474 = vpack.c.b16 %v9281, %v9280
        %v9475 = vpack.c.b16 %v9283, %v9282
        %v9476 = vpack.c.b16 %v9285, %v9284
        %v9477 = vpack.c.b16 %v9287, %v9286
        %v9478 = vpack.c.b16 %v9289, %v9288
        %v9479 = vpack.c.b16 %v9291, %v9290
        %v9480 = vpack.c.b16 %v9293, %v9292
        %v9481 = vpack.c.b16 %v9295, %v9294
        %v9482 = vpack.c.b16 %v9297, %v9296
        %v9483 = vpack.c.b16 %v9299, %v9298
        %v9484 = vpack.c.b16 %v9301, %v9300
        %v9485 = vpack.c.b16 %v9303, %v9302
        %v9486 = vpack.c.b16 %v9305, %v9304
        %v9487 = vpack.c.b16 %v9307, %v9306
        %v9488 = vpack.c.b16 %v9309, %v9308
        %v9489 = vpack.c.b16 %v9311, %v9310
        %v9490 = vpack.c.b16 %v9313, %v9312
        %v9491 = vpack.c.b16 %v9315, %v9314
        %v9492 = vpack.c.b16 %v9317, %v9316
        %v9493 = vpack.c.b16 %v9319, %v9318
        %v9494 = vpack.c.b16 %v9321, %v9320
        %v9495 = vpack.c.b16 %v9323, %v9322
        %v9496 = vpack.c.b16 %v9325, %v9324
        %v9497 = vpack.c.b16 %v9327, %v9326
        %v9498 = vpack.c.b16 %v9329, %v9328
        %v9499 = vpack.c.b16 %v9331, %v9330
        %v9500 = vpack.c.b16 %v9333, %v9332
        %v9501 = vpack.c.b16 %v9335, %v9334
        %v9502 = vpack.c.b16 %v9337, %v9336
        %v9503 = vpack.c.b16 %v9339, %v9338
        %v9504 = vpack.c.b16 %v9341, %v9340
        %v9505 = vpack.c.b16 %v9343, %v9342
        %v9506 = vpack.c.b16 %v9345, %v9344
        %v9507 = vpack.c.b16 %v9347, %v9346
        %v9508 = vpack.c.b16 %v9349, %v9348
        %v9509 = vpack.c.b16 %v9351, %v9350
        %v9510 = vpack.c.b16 %v9353, %v9352
        %v9511 = vpack.c.b16 %v9355, %v9354
        %v9512 = vpack.c.b16 %v9357, %v9356
        %v9513 = vpack.c.b16 %v9359, %v9358
        %v9514 = vpack.c.b16 %v9361, %v9360
        %v9515 = vpack.c.b16 %v9363, %v9362
        %v9516 = vpack.c.b16 %v9365, %v9364
        %v9517 = vpack.c.b16 %v9367, %v9366
        %v9518 = vpack.c.b16 %v9369, %v9368
        %v9519 = vpack.c.b16 %v9371, %v9370
        %v9520 = vpack.c.b16 %v9373, %v9372
        %v9521 = vpack.c.b16 %v9375, %v9374
        %v9522 = vpack.c.b16 %v9377, %v9376
        %v9523 = vpack.c.b16 %v9379, %v9378
        %v9524 = vpack.c.b16 %v9381, %v9380
        %v9525 = vpack.c.b16 %v9383, %v9382
        %v9526 = vpack.c.b16 %v9385, %v9384
        %v9527 = vpack.c.b16 %v9387, %v9386
        %v9528 = vpack.c.b16 %v9389, %v9388
        %v9529 = vpack.c.b16 %v9391, %v9390
        %v9530 = vpack.c.b16 %v9393, %v9392
        %v9531 = vpack.c.b16 %v9395, %v9394
        %v9532 = vpack.c.b16 %v9397, %v9396
        %v9533 = vpack.c.b16 %v9399, %v9398
        %v9534 = vpack.c.b16 %v9401, %v9400
        %v9535 = vpack.c.b16 %v9403, %v9402
        %v9536 = vpack.c.b16 %v9405, %v9404
        %v9537 = vpack.c.b16 %v9407, %v9406
        %v9538 = vpack.c.b16 %v9409, %v9408
        %v9539 = vpack.c.b16 %v9411, %v9410
        %v9540 = vpack.c.b16 %v9413, %v9412
        %v9541 = vpack.c.b16 %v9415, %v9414
        %v9542 = vpack.c.b16 %v9417, %v9416
        %v9543 = vpack.c.b16 %v9419, %v9418
        %v9544 = vpack.c.b16 %v9421, %v9420
        %v9545 = vpack.c.b16 %v9423, %v9422
        %v9546 = vpack.c.b16 %v9425, %v9424
        %v9547 = vpack.c.b16 %v9427, %v9426
        %v9548 = vpack.c.b16 %v9429, %v9428
        %v9549 = vpack.c.b16 %v9431, %v9430
        %v9550 = vpack.c.b16 %v9433, %v9432
        %v9551 = vpack.c.b16 %v9435, %v9434
        %v9552 = vpack.c.b16 %v9437, %v9436
        %v9553 = vpack.c.b16 %v9439, %v9438
        %v9554 = vpack.c.b16 %v9441, %v9440
        %v9555 = vpack.c.b16 %v9443, %v9442
        %v9556 = vpack.c.b16 %v9445, %v9444
        %v9557 = vpack.c.b16 %v9447, %v9446
        %v9558 = vpack.c.b16 %v9449, %v9448
        %v9559 = vpack.c.b16 %v9451, %v9450
        %v9668 = vsel %vm2665, %v8285, 0
        %v9670 = vsel %vm2665, %v8291, 0
        %v9672 = vsel %vm2665, %v8297, 0
        %v9674 = vsel %vm2665, %v8303, 0
        %v9676 = vsel %vm2665, %v8309, 0
        %v9678 = vsel %vm2665, %v8315, 0
        %v9680 = vsel %vm2665, %v8321, 0
        %v9682 = vsel %vm2665, %v8327, 0
        %v9684 = vsel %vm2665, %v8333, 0
        %v9686 = vsel %vm2665, %v8339, 0
        %v9688 = vsel %vm2665, %v8345, 0
        %v9690 = vsel %vm2665, %v8351, 0
        %v9692 = vsel %vm2665, %v8357, 0
        %v9694 = vsel %vm2665, %v8363, 0
        %v9697 = vsel %vm2665, %v8525, 0
        %9699 = vmatprep.subr.bf16.mxu0 0
        %9700 = vmatpush1.bf16.msra.mxu0 %v9452
        %9701 = vmatprep.subr.bf16.mxu0 0
        %9702 = vmatpush1.bf16.msra.mxu0 %v9453
        %9703 = vmatprep.subr.bf16.mxu0 0
        %9704 = vmatpush1.bf16.msra.mxu0 %v9454
        %9705 = vmatprep.subr.bf16.mxu0 0
        %9706 = vmatpush1.bf16.msra.mxu0 %v9455
        %9707 = vmatprep.subr.bf16.mxu0 0
        %9708 = vmatpush1.bf16.msra.mxu0 %v9456
        %9709 = vmatprep.subr.bf16.mxu0 0
        %9710 = vmatpush1.bf16.msra.mxu0 %v9457
        %9711 = vmatprep.subr.bf16.mxu0 0
        %9712 = vmatpush1.bf16.msra.mxu0 %v9458
        %9713 = vmatprep.subr.bf16.mxu0 0
        %9714 = vmatpush1.bf16.msra.mxu0 %v9459
        %9715 = vmatprep.subr.bf16.mxu0 0
        %9716 = vmatpush1.bf16.msra.mxu0 %v9460
        %9717 = vmatprep.subr.bf16.mxu0 0
        %9718 = vmatpush1.bf16.msra.mxu0 %v9461
        %9719 = vmatprep.subr.bf16.mxu0 0
        %9720 = vmatpush1.bf16.msra.mxu0 %v9462
        %9721 = vmatprep.subr.bf16.mxu0 0
        %9722 = vmatpush1.bf16.msra.mxu0 %v9463
        %9723 = vmatprep.subr.bf16.mxu0 0
        %9724 = vmatpush1.bf16.msra.mxu0 %v9464
        %9725 = vmatprep.subr.bf16.mxu0 0
        %9726 = vmatpush1.bf16.msra.mxu0 %v9465
        %9727 = vmatprep.subr.bf16.mxu0 0
        %9728 = vmatpush1.bf16.msra.mxu0 %v9466
        %9729 = vmatprep.subr.bf16.mxu0 0
        %9730 = vmatpush1.bf16.msra.mxu0 %v9467
        %9731 = vmatprep.mubr.bf16.mxu0 %v2667
        %9732 = vmatmul.mubr.bf16.gmra.mrb[0].mxu0 0
        %v9733 = vpop.f32.mrb[0].mxu0
        %v9734 = vadd.f32 0.0, %v9733
        %v9735 = vpop.f32.mrb[0].mxu0
        %v9736 = vpop.f32.mrb[0].mxu0
        %v9737 = vadd.f32 0.0, %v9736
        %v9738 = vpop.f32.mrb[0].mxu0
        %9739 = vmatprep.mubr.bf16.mxu0 %v8630
        %9740 = vmatmul.mubr.bf16.gmra.mrb[0].mxu0 %v7698
        %v9741 = vpop.f32.mrb[0].mxu0
        %v9742 = vadd.f32 0.0, %v9741
        %v9743 = vpop.f32.mrb[0].mxu0
        %v9744 = vpop.f32.mrb[0].mxu0
        %v9745 = vadd.f32 0.0, %v9744
        %v9746 = vpop.f32.mrb[0].mxu0
        %9747 = vmatprep.mubr.bf16.mxu0 %v8633
        %9748 = vmatmul.mubr.bf16.gmra.mrb[0].mxu0 %v7700
        %v9749 = vpop.f32.mrb[0].mxu0
        %v9750 = vadd.f32 0.0, %v9749
        %v9751 = vpop.f32.mrb[0].mxu0
        %v9752 = vpop.f32.mrb[0].mxu0
        %v9753 = vadd.f32 0.0, %v9752
        %v9754 = vpop.f32.mrb[0].mxu0
        %9755 = vmatprep.mubr.bf16.mxu0 %v8636
        %9756 = vmatmul.mubr.bf16.gmra.mrb[0].mxu0 %v7702
        %v9757 = vpop.f32.mrb[0].mxu0
        %v9758 = vadd.f32 0.0, %v9757
        %v9759 = vpop.f32.mrb[0].mxu0
        %v9760 = vpop.f32.mrb[0].mxu0
        %v9761 = vadd.f32 0.0, %v9760
        %v9762 = vpop.f32.mrb[0].mxu0
        %9763 = vmatprep.mubr.bf16.mxu0 %v8639
        %9764 = vmatmul.mubr.bf16.gmra.mrb[0].mxu0 %v7704
        %v9765 = vpop.f32.mrb[0].mxu0
        %v9766 = vadd.f32 0.0, %v9765
        %v9767 = vpop.f32.mrb[0].mxu0
        %v9768 = vpop.f32.mrb[0].mxu0
        %v9769 = vadd.f32 0.0, %v9768
        %v9770 = vpop.f32.mrb[0].mxu0
        %9771 = vmatprep.mubr.bf16.mxu0 %v8642
        %9772 = vmatmul.mubr.bf16.gmra.mrb[0].mxu0 %v7706
        %v9773 = vpop.f32.mrb[0].mxu0
        %v9774 = vadd.f32 0.0, %v9773
        %v9775 = vpop.f32.mrb[0].mxu0
        %v9776 = vpop.f32.mrb[0].mxu0
        %v9777 = vadd.f32 0.0, %v9776
        %v9778 = vpop.f32.mrb[0].mxu0
        %9779 = vmatprep.mubr.bf16.mxu0 %v8645
        %9780 = vmatmul.mubr.bf16.gmra.mrb[0].mxu0 %v7708
        %v9781 = vpop.f32.mrb[0].mxu0
        %v9782 = vadd.f32 0.0, %v9781
        %v9783 = vpop.f32.mrb[0].mxu0
        %v9784 = vpop.f32.mrb[0].mxu0
        %v9785 = vadd.f32 0.0, %v9784
        %v9786 = vpop.f32.mrb[0].mxu0
        %9787 = vmatprep.mubr.bf16.mxu0 %v8648
        %9788 = vmatmul.mubr.bf16.gmra.mrb[0].mxu0 %v7710
        %v9789 = vpop.f32.mrb[0].mxu0
        %v9790 = vadd.f32 0.0, %v9789
        %v9791 = vpop.f32.mrb[0].mxu0
        %v9792 = vpop.f32.mrb[0].mxu0
        %v9793 = vadd.f32 0.0, %v9792
        %v9794 = vpop.f32.mrb[0].mxu0
        %9795 = vmatprep.mubr.bf16.mxu0 %v8651
        %9796 = vmatmul.mubr.bf16.gmra.mrb[0].mxu0 %v7712
        %v9797 = vpop.f32.mrb[0].mxu0
        %v9798 = vadd.f32 0.0, %v9797
        %v9799 = vpop.f32.mrb[0].mxu0
        %v9800 = vpop.f32.mrb[0].mxu0
        %v9801 = vadd.f32 0.0, %v9800
        %v9802 = vpop.f32.mrb[0].mxu0
        %9803 = vmatprep.mubr.bf16.mxu0 %v8654
        %9804 = vmatmul.mubr.bf16.gmra.mrb[0].mxu0 %v7714
        %v9805 = vpop.f32.mrb[0].mxu0
        %v9806 = vadd.f32 0.0, %v9805
        %v9807 = vpop.f32.mrb[0].mxu0
        %v9808 = vpop.f32.mrb[0].mxu0
        %v9809 = vadd.f32 0.0, %v9808
        %v9810 = vpop.f32.mrb[0].mxu0
        %9811 = vmatprep.mubr.bf16.mxu0 %v8657
        %9812 = vmatmul.mubr.bf16.gmra.mrb[0].mxu0 %v7716
        %v9813 = vpop.f32.mrb[0].mxu0
        %v9814 = vadd.f32 0.0, %v9813
        %v9815 = vpop.f32.mrb[0].mxu0
        %v9816 = vpop.f32.mrb[0].mxu0
        %v9817 = vadd.f32 0.0, %v9816
        %v9818 = vpop.f32.mrb[0].mxu0
        %9819 = vmatprep.mubr.bf16.mxu0 %v8660
        %9820 = vmatmul.mubr.bf16.gmra.mrb[0].mxu0 %v7718
        %v9821 = vpop.f32.mrb[0].mxu0
        %v9822 = vadd.f32 0.0, %v9821
        %v9823 = vpop.f32.mrb[0].mxu0
        %v9824 = vpop.f32.mrb[0].mxu0
        %v9825 = vadd.f32 0.0, %v9824
        %v9826 = vpop.f32.mrb[0].mxu0
        %9827 = vmatprep.mubr.bf16.mxu0 %v8663
        %9828 = vmatmul.mubr.bf16.gmra.mrb[0].mxu0 %v7720
        %v9829 = vpop.f32.mrb[0].mxu0
        %v9830 = vadd.f32 0.0, %v9829
        %v9831 = vpop.f32.mrb[0].mxu0
        %v9832 = vpop.f32.mrb[0].mxu0
        %v9833 = vadd.f32 0.0, %v9832
        %v9834 = vpop.f32.mrb[0].mxu0
        %9835 = vmatprep.mubr.bf16.mxu0 %v8666
        %9836 = vmatmul.mubr.bf16.gmra.mrb[0].mxu0 %v7722
        %v9837 = vpop.f32.mrb[0].mxu0
        %v9838 = vadd.f32 0.0, %v9837
        %v9839 = vpop.f32.mrb[0].mxu0
        %v9840 = vpop.f32.mrb[0].mxu0
        %v9841 = vadd.f32 0.0, %v9840
        %v9842 = vpop.f32.mrb[0].mxu0
        %9843 = vmatprep.mubr.bf16.mxu0 %v8669
        %9844 = vmatmul.mubr.bf16.gmra.mrb[0].mxu0 %v7724
        %v9845 = vpop.f32.mrb[0].mxu0
        %v9846 = vadd.f32 0.0, %v9845
        %v9847 = vpop.f32.mrb[0].mxu0
        %v9848 = vpop.f32.mrb[0].mxu0
        %v9849 = vadd.f32 0.0, %v9848
        %v9850 = vpop.f32.mrb[0].mxu0
        %9851 = vmatprep.mubr.bf16.mxu0 %v8672
        %9852 = vmatmul.mubr.bf16.gmra.mrb[0].mxu0 %v7726
        %v9853 = vpop.f32.mrb[0].mxu0
        %v9854 = vadd.f32 0.0, %v9853
        %v9855 = vpop.f32.mrb[0].mxu0
        %v9856 = vpop.f32.mrb[0].mxu0
        %v9857 = vadd.f32 0.0, %v9856
        %v9858 = vpop.f32.mrb[0].mxu0
        %9859 = vdwg.mxu0
        %9860 = vmatprep.subr.bf16.mxu0 0
        %9861 = vmatpush1.bf16.msra.mxu0 %v9468
        %9862 = vmatprep.subr.bf16.mxu0 0
        %9863 = vmatpush1.bf16.msra.mxu0 %v9469
        %9864 = vmatprep.subr.bf16.mxu0 0
        %9865 = vmatpush1.bf16.msra.mxu0 %v9470
        %9866 = vmatprep.subr.bf16.mxu0 0
        %9867 = vmatpush1.bf16.msra.mxu0 %v9471
        %9868 = vmatprep.subr.bf16.mxu0 0
        %9869 = vmatpush1.bf16.msra.mxu0 %v9472
        %9870 = vmatprep.subr.bf16.mxu0 0
        %9871 = vmatpush1.bf16.msra.mxu0 %v9473
        %9872 = vmatprep.subr.bf16.mxu0 0
        %9873 = vmatpush1.bf16.msra.mxu0 %v9474
        %9874 = vmatprep.subr.bf16.mxu0 0
        %9875 = vmatpush1.bf16.msra.mxu0 %v9475
        %9876 = vmatprep.subr.bf16.mxu0 0
        %9877 = vmatpush1.bf16.msra.mxu0 %v9476
        %9878 = vmatprep.subr.bf16.mxu0 0
        %9879 = vmatpush1.bf16.msra.mxu0 %v9477
        %9880 = vmatprep.subr.bf16.mxu0 0
        %9881 = vmatpush1.bf16.msra.mxu0 %v9478
        %9882 = vmatprep.subr.bf16.mxu0 0
        %9883 = vmatpush1.bf16.msra.mxu0 %v9479
        %9884 = vmatprep.subr.bf16.mxu0 0
        %9885 = vmatpush1.bf16.msra.mxu0 %v9480
        %9886 = vmatprep.subr.bf16.mxu0 0
        %9887 = vmatpush1.bf16.msra.mxu0 %v9481
        %9888 = vmatprep.subr.bf16.mxu0 0
        %9889 = vmatpush1.bf16.msra.mxu0 %v9482
        %9890 = vmatprep.subr.bf16.mxu0 0
        %9891 = vmatpush1.bf16.msra.mxu0 %v9483
        %9892 = vmatprep.mubr.bf16.mxu0 %v1228
        %9893 = vmatmul.mubr.bf16.gmra.mrb[0].mxu0 %v2476
        %v9894 = vpop.f32.mrb[0].mxu0
        %v9895 = vadd.f32 %v9734, %v9894
        %v9896 = vpop.f32.mrb[0].mxu0
        %v9897 = vpop.f32.mrb[0].mxu0
        %v9898 = vadd.f32 %v9737, %v9897
        %v9899 = vpop.f32.mrb[0].mxu0
        %9900 = vmatprep.mubr.bf16.mxu0 %v8276
        %9901 = vmatmul.mubr.bf16.gmra.mrb[0].mxu0 %v8183
        %v9902 = vpop.f32.mrb[0].mxu0
        %v9903 = vadd.f32 %v9742, %v9902
        %v9904 = vpop.f32.mrb[0].mxu0
        %v9905 = vpop.f32.mrb[0].mxu0
        %v9906 = vadd.f32 %v9745, %v9905
        %v9907 = vpop.f32.mrb[0].mxu0
        %9908 = vmatprep.mubr.bf16.mxu0 %v8282
        %9909 = vmatmul.mubr.bf16.gmra.mrb[0].mxu0 %v8184
        %v9910 = vpop.f32.mrb[0].mxu0
        %v9911 = vadd.f32 %v9750, %v9910
        %v9912 = vpop.f32.mrb[0].mxu0
        %v9913 = vpop.f32.mrb[0].mxu0
        %v9914 = vadd.f32 %v9753, %v9913
        %v9915 = vpop.f32.mrb[0].mxu0
        %9916 = vmatprep.mubr.bf16.mxu0 %v8288
        %9917 = vmatmul.mubr.bf16.gmra.mrb[0].mxu0 %v8185
        %v9918 = vpop.f32.mrb[0].mxu0
        %v9919 = vadd.f32 %v9758, %v9918
        %v9920 = vpop.f32.mrb[0].mxu0
        %v9921 = vpop.f32.mrb[0].mxu0
        %v9922 = vadd.f32 %v9761, %v9921
        %v9923 = vpop.f32.mrb[0].mxu0
        %9924 = vmatprep.mubr.bf16.mxu0 %v8294
        %9925 = vmatmul.mubr.bf16.gmra.mrb[0].mxu0 %v8186
        %v9926 = vpop.f32.mrb[0].mxu0
        %v9927 = vadd.f32 %v9766, %v9926
        %v9928 = vpop.f32.mrb[0].mxu0
        %v9929 = vpop.f32.mrb[0].mxu0
        %v9930 = vadd.f32 %v9769, %v9929
        %v9931 = vpop.f32.mrb[0].mxu0
        %9932 = vmatprep.mubr.bf16.mxu0 %v8300
        %9933 = vmatmul.mubr.bf16.gmra.mrb[0].mxu0 %v8187
        %v9934 = vpop.f32.mrb[0].mxu0
        %v9935 = vadd.f32 %v9774, %v9934
        %v9936 = vpop.f32.mrb[0].mxu0
        %v9937 = vpop.f32.mrb[0].mxu0
        %v9938 = vadd.f32 %v9777, %v9937
        %v9939 = vpop.f32.mrb[0].mxu0
        %9940 = vmatprep.mubr.bf16.mxu0 %v8306
        %9941 = vmatmul.mubr.bf16.gmra.mrb[0].mxu0 %v8188
        %v9942 = vpop.f32.mrb[0].mxu0
        %v9943 = vadd.f32 %v9782, %v9942
        %v9944 = vpop.f32.mrb[0].mxu0
        %v9945 = vpop.f32.mrb[0].mxu0
        %v9946 = vadd.f32 %v9785, %v9945
        %v9947 = vpop.f32.mrb[0].mxu0
        %9948 = vmatprep.mubr.bf16.mxu0 %v8312
        %9949 = vmatmul.mubr.bf16.gmra.mrb[0].mxu0 %v8189
        %v9950 = vpop.f32.mrb[0].mxu0
        %v9951 = vadd.f32 %v9790, %v9950
        %v9952 = vpop.f32.mrb[0].mxu0
        %v9953 = vpop.f32.mrb[0].mxu0
        %v9954 = vadd.f32 %v9793, %v9953
        %v9955 = vpop.f32.mrb[0].mxu0
        %9956 = vmatprep.mubr.bf16.mxu0 %v8318
        %9957 = vmatmul.mubr.bf16.gmra.mrb[0].mxu0 %v8190
        %v9958 = vpop.f32.mrb[0].mxu0
        %v9959 = vadd.f32 %v9798, %v9958
        %v9960 = vpop.f32.mrb[0].mxu0
        %v9961 = vpop.f32.mrb[0].mxu0
        %v9962 = vadd.f32 %v9801, %v9961
        %v9963 = vpop.f32.mrb[0].mxu0
        %9964 = vmatprep.mubr.bf16.mxu0 %v8324
        %9965 = vmatmul.mubr.bf16.gmra.mrb[0].mxu0 %v8191
        %v9966 = vpop.f32.mrb[0].mxu0
        %v9967 = vadd.f32 %v9806, %v9966
        %v9968 = vpop.f32.mrb[0].mxu0
        %v9969 = vpop.f32.mrb[0].mxu0
        %v9970 = vadd.f32 %v9809, %v9969
        %v9971 = vpop.f32.mrb[0].mxu0
        %9972 = vmatprep.mubr.bf16.mxu0 %v8330
        %9973 = vmatmul.mubr.bf16.gmra.mrb[0].mxu0 %v8192
        %v9974 = vpop.f32.mrb[0].mxu0
        %v9975 = vadd.f32 %v9814, %v9974
        %v9976 = vpop.f32.mrb[0].mxu0
        %v9977 = vpop.f32.mrb[0].mxu0
        %v9978 = vadd.f32 %v9817, %v9977
        %v9979 = vpop.f32.mrb[0].mxu0
        %9980 = vmatprep.mubr.bf16.mxu0 %v8336
        %9981 = vmatmul.mubr.bf16.gmra.mrb[0].mxu0 %v8193
        %v9982 = vpop.f32.mrb[0].mxu0
        %v9983 = vadd.f32 %v9822, %v9982
        %v9984 = vpop.f32.mrb[0].mxu0
        %v9985 = vpop.f32.mrb[0].mxu0
        %v9986 = vadd.f32 %v9825, %v9985
        %v9987 = vpop.f32.mrb[0].mxu0
        %9988 = vmatprep.mubr.bf16.mxu0 %v8342
        %9989 = vmatmul.mubr.bf16.gmra.mrb[0].mxu0 %v8194
        %v9990 = vpop.f32.mrb[0].mxu0
        %v9991 = vadd.f32 %v9830, %v9990
        %v9992 = vpop.f32.mrb[0].mxu0
        %v9993 = vpop.f32.mrb[0].mxu0
        %v9994 = vadd.f32 %v9833, %v9993
        %v9995 = vpop.f32.mrb[0].mxu0
        %9996 = vmatprep.mubr.bf16.mxu0 %v8348
        %9997 = vmatmul.mubr.bf16.gmra.mrb[0].mxu0 %v8195
        %v9998 = vpop.f32.mrb[0].mxu0
        %v9999 = vadd.f32 %v9838, %v9998
        %v10000 = vpop.f32.mrb[0].mxu0
        %v10001 = vpop.f32.mrb[0].mxu0
        %v10002 = vadd.f32 %v9841, %v10001
        %v10003 = vpop.f32.mrb[0].mxu0
        %10004 = vmatprep.mubr.bf16.mxu0 %v8354
        %10005 = vmatmul.mubr.bf16.gmra.mrb[0].mxu0 %v8196
        %v10006 = vpop.f32.mrb[0].mxu0
        %v10007 = vadd.f32 %v9846, %v10006
        %v10008 = vpop.f32.mrb[0].mxu0
        %v10009 = vpop.f32.mrb[0].mxu0
        %v10010 = vadd.f32 %v9849, %v10009
        %v10011 = vpop.f32.mrb[0].mxu0
        %10012 = vmatprep.mubr.bf16.mxu0 %v8360
        %10013 = vmatmul.mubr.bf16.gmra.mrb[0].mxu0 %v8197
        %v10014 = vpop.f32.mrb[0].mxu0
        %v10015 = vadd.f32 %v9854, %v10014
        %v10016 = vpop.f32.mrb[0].mxu0
        %v10017 = vpop.f32.mrb[0].mxu0
        %v10018 = vadd.f32 %v9857, %v10017
        %v10019 = vpop.f32.mrb[0].mxu0
        %10020 = vdwg.mxu0
        %10021 = vmatprep.subr.bf16.mxu0 0
        %10022 = vmatpush1.bf16.msra.mxu0 %v9484
        %10023 = vmatprep.subr.bf16.mxu0 0
        %10024 = vmatpush1.bf16.msra.mxu0 %v9485
        %10025 = vmatprep.subr.bf16.mxu0 0
        %10026 = vmatpush1.bf16.msra.mxu0 %v9486
        %10027 = vmatprep.subr.bf16.mxu0 0
        %10028 = vmatpush1.bf16.msra.mxu0 %v9487
        %10029 = vmatprep.subr.bf16.mxu0 0
        %10030 = vmatpush1.bf16.msra.mxu0 %v9488
        %10031 = vmatprep.subr.bf16.mxu0 0
        %10032 = vmatpush1.bf16.msra.mxu0 %v9489
        %10033 = vmatprep.subr.bf16.mxu0 0
        %10034 = vmatpush1.bf16.msra.mxu0 %v9490
        %10035 = vmatprep.subr.bf16.mxu0 0
        %10036 = vmatpush1.bf16.msra.mxu0 %v9491
        %10037 = vmatprep.subr.bf16.mxu0 0
        %10038 = vmatpush1.bf16.msra.mxu0 %v9492
        %10039 = vmatprep.subr.bf16.mxu0 0
        %10040 = vmatpush1.bf16.msra.mxu0 %v9493
        %10041 = vmatprep.subr.bf16.mxu0 0
        %10042 = vmatpush1.bf16.msra.mxu0 %v9494
        %10043 = vmatprep.subr.bf16.mxu0 0
        %10044 = vmatpush1.bf16.msra.mxu0 %v9495
        %10045 = vmatprep.subr.bf16.mxu0 0
        %10046 = vmatpush1.bf16.msra.mxu0 %v9496
        %10047 = vmatprep.subr.bf16.mxu0 0
        %10048 = vmatpush1.bf16.msra.mxu0 %v9497
        %10049 = vmatprep.subr.bf16.mxu0 0
        %10050 = vmatpush1.bf16.msra.mxu0 %v9498
        %10051 = vmatprep.subr.bf16.mxu0 0
        %10052 = vmatpush1.bf16.msra.mxu0 %v9499
        %10053 = vmatprep.mubr.bf16.mxu0 %v8446
        %10054 = vmatmul.mubr.bf16.gmra.mrb[0].mxu0 %v8675
        %v10055 = vpop.f32.mrb[0].mxu0
        %v10056 = vadd.f32 %v9895, %v10055
        %v10057 = vpop.f32.mrb[0].mxu0
        %v10058 = vpop.f32.mrb[0].mxu0
        %v10059 = vadd.f32 %v9898, %v10058
        %v10060 = vpop.f32.mrb[0].mxu0
        %10061 = vmatprep.mubr.bf16.mxu0 %v8447
        %10062 = vmatmul.mubr.bf16.gmra.mrb[0].mxu0 %v8679
        %v10063 = vpop.f32.mrb[0].mxu0
        %v10064 = vadd.f32 %v9903, %v10063
        %v10065 = vpop.f32.mrb[0].mxu0
        %v10066 = vpop.f32.mrb[0].mxu0
        %v10067 = vadd.f32 %v9906, %v10066
        %v10068 = vpop.f32.mrb[0].mxu0
        %10069 = vmatprep.mubr.bf16.mxu0 %v8448
        %10070 = vmatmul.mubr.bf16.gmra.mrb[0].mxu0 %v8683
        %v10071 = vpop.f32.mrb[0].mxu0
        %v10072 = vadd.f32 %v9911, %v10071
        %v10073 = vpop.f32.mrb[0].mxu0
        %v10074 = vpop.f32.mrb[0].mxu0
        %v10075 = vadd.f32 %v9914, %v10074
        %v10076 = vpop.f32.mrb[0].mxu0
        %10077 = vmatprep.mubr.bf16.mxu0 %v8449
        %10078 = vmatmul.mubr.bf16.gmra.mrb[0].mxu0 %v8687
        %v10079 = vpop.f32.mrb[0].mxu0
        %v10080 = vadd.f32 %v9919, %v10079
        %v10081 = vpop.f32.mrb[0].mxu0
        %v10082 = vpop.f32.mrb[0].mxu0
        %v10083 = vadd.f32 %v9922, %v10082
        %v10084 = vpop.f32.mrb[0].mxu0
        %10085 = vmatprep.mubr.bf16.mxu0 %v8450
        %10086 = vmatmul.mubr.bf16.gmra.mrb[0].mxu0 %v8691
        %v10087 = vpop.f32.mrb[0].mxu0
        %v10088 = vadd.f32 %v9927, %v10087
        %v10089 = vpop.f32.mrb[0].mxu0
        %v10090 = vpop.f32.mrb[0].mxu0
        %v10091 = vadd.f32 %v9930, %v10090
        %v10092 = vpop.f32.mrb[0].mxu0
        %10093 = vmatprep.mubr.bf16.mxu0 %v8451
        %10094 = vmatmul.mubr.bf16.gmra.mrb[0].mxu0 %v8695
        %v10095 = vpop.f32.mrb[0].mxu0
        %v10096 = vadd.f32 %v9935, %v10095
        %v10097 = vpop.f32.mrb[0].mxu0
        %v10098 = vpop.f32.mrb[0].mxu0
        %v10099 = vadd.f32 %v9938, %v10098
        %v10100 = vpop.f32.mrb[0].mxu0
        %10101 = vmatprep.mubr.bf16.mxu0 %v8452
        %10102 = vmatmul.mubr.bf16.gmra.mrb[0].mxu0 %v8699
        %v10103 = vpop.f32.mrb[0].mxu0
        %v10104 = vadd.f32 %v9943, %v10103
        %v10105 = vpop.f32.mrb[0].mxu0
        %v10106 = vpop.f32.mrb[0].mxu0
        %v10107 = vadd.f32 %v9946, %v10106
        %v10108 = vpop.f32.mrb[0].mxu0
        %10109 = vmatprep.mubr.bf16.mxu0 %v8453
        %10110 = vmatmul.mubr.bf16.gmra.mrb[0].mxu0 %v8703
        %v10111 = vpop.f32.mrb[0].mxu0
        %v10112 = vadd.f32 %v9951, %v10111
        %v10113 = vpop.f32.mrb[0].mxu0
        %v10114 = vpop.f32.mrb[0].mxu0
        %v10115 = vadd.f32 %v9954, %v10114
        %v10116 = vpop.f32.mrb[0].mxu0
        %10117 = vmatprep.mubr.bf16.mxu0 %v8454
        %10118 = vmatmul.mubr.bf16.gmra.mrb[0].mxu0 %v8707
        %v10119 = vpop.f32.mrb[0].mxu0
        %v10120 = vadd.f32 %v9959, %v10119
        %v10121 = vpop.f32.mrb[0].mxu0
        %v10122 = vpop.f32.mrb[0].mxu0
        %v10123 = vadd.f32 %v9962, %v10122
        %v10124 = vpop.f32.mrb[0].mxu0
        %10125 = vmatprep.mubr.bf16.mxu0 %v8455
        %10126 = vmatmul.mubr.bf16.gmra.mrb[0].mxu0 %v8711
        %v10127 = vpop.f32.mrb[0].mxu0
        %v10128 = vadd.f32 %v9967, %v10127
        %v10129 = vpop.f32.mrb[0].mxu0
        %v10130 = vpop.f32.mrb[0].mxu0
        %v10131 = vadd.f32 %v9970, %v10130
        %v10132 = vpop.f32.mrb[0].mxu0
        %10133 = vmatprep.mubr.bf16.mxu0 %v8456
        %10134 = vmatmul.mubr.bf16.gmra.mrb[0].mxu0 %v8715
        %v10135 = vpop.f32.mrb[0].mxu0
        %v10136 = vadd.f32 %v9975, %v10135
        %v10137 = vpop.f32.mrb[0].mxu0
        %v10138 = vpop.f32.mrb[0].mxu0
        %v10139 = vadd.f32 %v9978, %v10138
        %v10140 = vpop.f32.mrb[0].mxu0
        %10141 = vmatprep.mubr.bf16.mxu0 %v8457
        %10142 = vmatmul.mubr.bf16.gmra.mrb[0].mxu0 %v8719
        %v10143 = vpop.f32.mrb[0].mxu0
        %v10144 = vadd.f32 %v9983, %v10143
        %v10145 = vpop.f32.mrb[0].mxu0
        %v10146 = vpop.f32.mrb[0].mxu0
        %v10147 = vadd.f32 %v9986, %v10146
        %v10148 = vpop.f32.mrb[0].mxu0
        %10149 = vmatprep.mubr.bf16.mxu0 %v8458
        %10150 = vmatmul.mubr.bf16.gmra.mrb[0].mxu0 %v8723
        %v10151 = vpop.f32.mrb[0].mxu0
        %v10152 = vadd.f32 %v9991, %v10151
        %v10153 = vpop.f32.mrb[0].mxu0
        %v10154 = vpop.f32.mrb[0].mxu0
        %v10155 = vadd.f32 %v9994, %v10154
        %v10156 = vpop.f32.mrb[0].mxu0
        %10157 = vmatprep.mubr.bf16.mxu0 %v8459
        %10158 = vmatmul.mubr.bf16.gmra.mrb[0].mxu0 %v8727
        %v10159 = vpop.f32.mrb[0].mxu0
        %v10160 = vadd.f32 %v9999, %v10159
        %v10161 = vpop.f32.mrb[0].mxu0
        %v10162 = vpop.f32.mrb[0].mxu0
        %v10163 = vadd.f32 %v10002, %v10162
        %v10164 = vpop.f32.mrb[0].mxu0
        %10165 = vmatprep.mubr.bf16.mxu0 %v8460
        %10166 = vmatmul.mubr.bf16.gmra.mrb[0].mxu0 %v8731
        %v10167 = vpop.f32.mrb[0].mxu0
        %v10168 = vadd.f32 %v10007, %v10167
        %v10169 = vpop.f32.mrb[0].mxu0
        %v10170 = vpop.f32.mrb[0].mxu0
        %v10171 = vadd.f32 %v10010, %v10170
        %v10172 = vpop.f32.mrb[0].mxu0
        %10173 = vmatprep.mubr.bf16.mxu0 %v8461
        %10174 = vmatmul.mubr.bf16.gmra.mrb[0].mxu0 %v8735
        %v10175 = vpop.f32.mrb[0].mxu0
        %v10176 = vadd.f32 %v10015, %v10175
        %v10177 = vpop.f32.mrb[0].mxu0
        %v10178 = vpop.f32.mrb[0].mxu0
        %v10179 = vadd.f32 %v10018, %v10178
        %v10180 = vpop.f32.mrb[0].mxu0
        %10181 = vdwg.mxu0
        %10182 = vmatprep.subr.bf16.mxu0 0
        %10183 = vmatpush1.bf16.msra.mxu0 %v9500
        %10184 = vmatprep.subr.bf16.mxu0 0
        %10185 = vmatpush1.bf16.msra.mxu0 %v9501
        %10186 = vmatprep.subr.bf16.mxu0 0
        %10187 = vmatpush1.bf16.msra.mxu0 %v9502
        %10188 = vmatprep.subr.bf16.mxu0 0
        %10189 = vmatpush1.bf16.msra.mxu0 %v9503
        %10190 = vmatprep.subr.bf16.mxu0 0
        %10191 = vmatpush1.bf16.msra.mxu0 %v9504
        %10192 = vmatprep.subr.bf16.mxu0 0
        %10193 = vmatpush1.bf16.msra.mxu0 %v9505
        %10194 = vmatprep.subr.bf16.mxu0 0
        %10195 = vmatpush1.bf16.msra.mxu0 %v9506
        %10196 = vmatprep.subr.bf16.mxu0 0
        %10197 = vmatpush1.bf16.msra.mxu0 %v9507
        %10198 = vmatprep.subr.bf16.mxu0 0
        %10199 = vmatpush1.bf16.msra.mxu0 %v9508
        %10200 = vmatprep.subr.bf16.mxu0 0
        %10201 = vmatpush1.bf16.msra.mxu0 %v9509
        %10202 = vmatprep.subr.bf16.mxu0 0
        %10203 = vmatpush1.bf16.msra.mxu0 %v9510
        %10204 = vmatprep.subr.bf16.mxu0 0
        %10205 = vmatpush1.bf16.msra.mxu0 %v9511
        %10206 = vmatprep.subr.bf16.mxu0 0
        %10207 = vmatpush1.bf16.msra.mxu0 %v9512
        %10208 = vmatprep.subr.bf16.mxu0 0
        %10209 = vmatpush1.bf16.msra.mxu0 %v9513
        %10210 = vmatprep.subr.bf16.mxu0 0
        %10211 = vmatpush1.bf16.msra.mxu0 %v9514
        %10212 = vmatprep.subr.bf16.mxu0 0
        %10213 = vmatpush1.bf16.msra.mxu0 %v9515
        %10214 = vmatprep.mubr.bf16.mxu0 %v8739
        %10215 = vmatmul.mubr.bf16.gmra.mrb[0].mxu0 %v7773
        %v10216 = vpop.f32.mrb[0].mxu0
        %v10217 = vadd.f32 %v10056, %v10216
        %v10218 = vpop.f32.mrb[0].mxu0
        %v10219 = vpop.f32.mrb[0].mxu0
        %v10220 = vadd.f32 %v10059, %v10219
        %v10221 = vpop.f32.mrb[0].mxu0
        %10222 = vmatprep.mubr.bf16.mxu0 %v8743
        %10223 = vmatmul.mubr.bf16.gmra.mrb[0].mxu0 %v7797
        %v10224 = vpop.f32.mrb[0].mxu0
        %v10225 = vadd.f32 %v10064, %v10224
        %v10226 = vpop.f32.mrb[0].mxu0
        %v10227 = vpop.f32.mrb[0].mxu0
        %v10228 = vadd.f32 %v10067, %v10227
        %v10229 = vpop.f32.mrb[0].mxu0
        %10230 = vmatprep.mubr.bf16.mxu0 %v8747
        %10231 = vmatmul.mubr.bf16.gmra.mrb[0].mxu0 %v7821
        %v10232 = vpop.f32.mrb[0].mxu0
        %v10233 = vadd.f32 %v10072, %v10232
        %v10234 = vpop.f32.mrb[0].mxu0
        %v10235 = vpop.f32.mrb[0].mxu0
        %v10236 = vadd.f32 %v10075, %v10235
        %v10237 = vpop.f32.mrb[0].mxu0
        %10238 = vmatprep.mubr.bf16.mxu0 %v8751
        %10239 = vmatmul.mubr.bf16.gmra.mrb[0].mxu0 %v7845
        %v10240 = vpop.f32.mrb[0].mxu0
        %v10241 = vadd.f32 %v10080, %v10240
        %v10242 = vpop.f32.mrb[0].mxu0
        %v10243 = vpop.f32.mrb[0].mxu0
        %v10244 = vadd.f32 %v10083, %v10243
        %v10245 = vpop.f32.mrb[0].mxu0
        %10246 = vmatprep.mubr.bf16.mxu0 %v8755
        %10247 = vmatmul.mubr.bf16.gmra.mrb[0].mxu0 %v7869
        %v10248 = vpop.f32.mrb[0].mxu0
        %v10249 = vadd.f32 %v10088, %v10248
        %v10250 = vpop.f32.mrb[0].mxu0
        %v10251 = vpop.f32.mrb[0].mxu0
        %v10252 = vadd.f32 %v10091, %v10251
        %v10253 = vpop.f32.mrb[0].mxu0
        %10254 = vmatprep.mubr.bf16.mxu0 %v8759
        %10255 = vmatmul.mubr.bf16.gmra.mrb[0].mxu0 %v7893
        %v10256 = vpop.f32.mrb[0].mxu0
        %v10257 = vadd.f32 %v10096, %v10256
        %v10258 = vpop.f32.mrb[0].mxu0
        %v10259 = vpop.f32.mrb[0].mxu0
        %v10260 = vadd.f32 %v10099, %v10259
        %v10261 = vpop.f32.mrb[0].mxu0
        %10262 = vmatprep.mubr.bf16.mxu0 %v8763
        %10263 = vmatmul.mubr.bf16.gmra.mrb[0].mxu0 %v7917
        %v10264 = vpop.f32.mrb[0].mxu0
        %v10265 = vadd.f32 %v10104, %v10264
        %v10266 = vpop.f32.mrb[0].mxu0
        %v10267 = vpop.f32.mrb[0].mxu0
        %v10268 = vadd.f32 %v10107, %v10267
        %v10269 = vpop.f32.mrb[0].mxu0
        %10270 = vmatprep.mubr.bf16.mxu0 %v8767
        %10271 = vmatmul.mubr.bf16.gmra.mrb[0].mxu0 %v7941
        %v10272 = vpop.f32.mrb[0].mxu0
        %v10273 = vadd.f32 %v10112, %v10272
        %v10274 = vpop.f32.mrb[0].mxu0
        %v10275 = vpop.f32.mrb[0].mxu0
        %v10276 = vadd.f32 %v10115, %v10275
        %v10277 = vpop.f32.mrb[0].mxu0
        %10278 = vmatprep.mubr.bf16.mxu0 %v8771
        %10279 = vmatmul.mubr.bf16.gmra.mrb[0].mxu0 %v7965
        %v10280 = vpop.f32.mrb[0].mxu0
        %v10281 = vadd.f32 %v10120, %v10280
        %v10282 = vpop.f32.mrb[0].mxu0
        %v10283 = vpop.f32.mrb[0].mxu0
        %v10284 = vadd.f32 %v10123, %v10283
        %v10285 = vpop.f32.mrb[0].mxu0
        %10286 = vmatprep.mubr.bf16.mxu0 %v8775
        %10287 = vmatmul.mubr.bf16.gmra.mrb[0].mxu0 %v7989
        %v10288 = vpop.f32.mrb[0].mxu0
        %v10289 = vadd.f32 %v10128, %v10288
        %v10290 = vpop.f32.mrb[0].mxu0
        %v10291 = vpop.f32.mrb[0].mxu0
        %v10292 = vadd.f32 %v10131, %v10291
        %v10293 = vpop.f32.mrb[0].mxu0
        %10294 = vmatprep.mubr.bf16.mxu0 %v8779
        %10295 = vmatmul.mubr.bf16.gmra.mrb[0].mxu0 %v8013
        %v10296 = vpop.f32.mrb[0].mxu0
        %v10297 = vadd.f32 %v10136, %v10296
        %v10298 = vpop.f32.mrb[0].mxu0
        %v10299 = vpop.f32.mrb[0].mxu0
        %v10300 = vadd.f32 %v10139, %v10299
        %v10301 = vpop.f32.mrb[0].mxu0
        %10302 = vmatprep.mubr.bf16.mxu0 %v8783
        %10303 = vmatmul.mubr.bf16.gmra.mrb[0].mxu0 %v8037
        %v10304 = vpop.f32.mrb[0].mxu0
        %v10305 = vadd.f32 %v10144, %v10304
        %v10306 = vpop.f32.mrb[0].mxu0
        %v10307 = vpop.f32.mrb[0].mxu0
        %v10308 = vadd.f32 %v10147, %v10307
        %v10309 = vpop.f32.mrb[0].mxu0
        %10310 = vmatprep.mubr.bf16.mxu0 %v8787
        %10311 = vmatmul.mubr.bf16.gmra.mrb[0].mxu0 %v8061
        %v10312 = vpop.f32.mrb[0].mxu0
        %v10313 = vadd.f32 %v10152, %v10312
        %v10314 = vpop.f32.mrb[0].mxu0
        %v10315 = vpop.f32.mrb[0].mxu0
        %v10316 = vadd.f32 %v10155, %v10315
        %v10317 = vpop.f32.mrb[0].mxu0
        %10318 = vmatprep.mubr.bf16.mxu0 %v8791
        %10319 = vmatmul.mubr.bf16.gmra.mrb[0].mxu0 %v8085
        %v10320 = vpop.f32.mrb[0].mxu0
        %v10321 = vadd.f32 %v10160, %v10320
        %v10322 = vpop.f32.mrb[0].mxu0
        %v10323 = vpop.f32.mrb[0].mxu0
        %v10324 = vadd.f32 %v10163, %v10323
        %v10325 = vpop.f32.mrb[0].mxu0
        %10326 = vmatprep.mubr.bf16.mxu0 %v8795
        %10327 = vmatmul.mubr.bf16.gmra.mrb[0].mxu0 %v8109
        %v10328 = vpop.f32.mrb[0].mxu0
        %v10329 = vadd.f32 %v10168, %v10328
        %v10330 = vpop.f32.mrb[0].mxu0
        %v10331 = vpop.f32.mrb[0].mxu0
        %v10332 = vadd.f32 %v10171, %v10331
        %v10333 = vpop.f32.mrb[0].mxu0
        %10334 = vmatprep.mubr.bf16.mxu0 %v8799
        %10335 = vmatmul.mubr.bf16.gmra.mrb[0].mxu0 %v8489
        %v10336 = vpop.f32.mrb[0].mxu0
        %v10337 = vadd.f32 %v10176, %v10336
        %v10338 = vpop.f32.mrb[0].mxu0
        %v10339 = vpop.f32.mrb[0].mxu0
        %v10340 = vadd.f32 %v10179, %v10339
        %v10341 = vpop.f32.mrb[0].mxu0
        %10342 = vdwg.mxu0
        %10343 = vmatprep.subr.bf16.mxu0 0
        %10344 = vmatpush1.bf16.msra.mxu0 %v9516
        %10345 = vmatprep.subr.bf16.mxu0 0
        %10346 = vmatpush1.bf16.msra.mxu0 %v9517
        %10347 = vmatprep.subr.bf16.mxu0 0
        %10348 = vmatpush1.bf16.msra.mxu0 %v9518
        %10349 = vmatprep.subr.bf16.mxu0 0
        %10350 = vmatpush1.bf16.msra.mxu0 %v9519
        %10351 = vmatprep.subr.bf16.mxu0 0
        %10352 = vmatpush1.bf16.msra.mxu0 %v9520
        %10353 = vmatprep.subr.bf16.mxu0 0
        %10354 = vmatpush1.bf16.msra.mxu0 %v9521
        %10355 = vmatprep.subr.bf16.mxu0 0
        %10356 = vmatpush1.bf16.msra.mxu0 %v9522
        %10357 = vmatprep.subr.bf16.mxu0 0
        %10358 = vmatpush1.bf16.msra.mxu0 %v9523
        %10359 = vmatprep.subr.bf16.mxu0 0
        %10360 = vmatpush1.bf16.msra.mxu0 %v9524
        %10361 = vmatprep.subr.bf16.mxu0 0
        %10362 = vmatpush1.bf16.msra.mxu0 %v9525
        %10363 = vmatprep.subr.bf16.mxu0 0
        %10364 = vmatpush1.bf16.msra.mxu0 %v9526
        %10365 = vmatprep.subr.bf16.mxu0 0
        %10366 = vmatpush1.bf16.msra.mxu0 %v9527
        %10367 = vmatprep.subr.bf16.mxu0 0
        %10368 = vmatpush1.bf16.msra.mxu0 %v9528
        %10369 = vmatprep.subr.bf16.mxu0 0
        %10370 = vmatpush1.bf16.msra.mxu0 %v9529
        %10371 = vmatprep.subr.bf16.mxu0 0
        %10372 = vmatpush1.bf16.msra.mxu0 %v9530
        %10373 = vmatprep.subr.bf16.mxu0 0
        %10374 = vmatpush1.bf16.msra.mxu0 %v9531
        %10375 = vmatprep.mubr.bf16.mxu0 %v7700
        %10376 = vmatmul.mubr.bf16.gmra.mrb[0].mxu0 %v8590
        %v10377 = vpop.f32.mrb[0].mxu0
        %v10378 = vadd.f32 %v10217, %v10377
        %v10379 = vpop.f32.mrb[0].mxu0
        %v10380 = vpop.f32.mrb[0].mxu0
        %v10381 = vadd.f32 %v10220, %v10380
        %v10382 = vpop.f32.mrb[0].mxu0
        %10383 = vmatprep.mubr.bf16.mxu0 %v7702
        %10384 = vmatmul.mubr.bf16.gmra.mrb[0].mxu0 %v8591
        %v10385 = vpop.f32.mrb[0].mxu0
        %v10386 = vadd.f32 %v10225, %v10385
        %v10387 = vpop.f32.mrb[0].mxu0
        %v10388 = vpop.f32.mrb[0].mxu0
        %v10389 = vadd.f32 %v10228, %v10388
        %v10390 = vpop.f32.mrb[0].mxu0
        %10391 = vmatprep.mubr.bf16.mxu0 %v7704
        %10392 = vmatmul.mubr.bf16.gmra.mrb[0].mxu0 %v8592
        %v10393 = vpop.f32.mrb[0].mxu0
        %v10394 = vadd.f32 %v10233, %v10393
        %v10395 = vpop.f32.mrb[0].mxu0
        %v10396 = vpop.f32.mrb[0].mxu0
        %v10397 = vadd.f32 %v10236, %v10396
        %v10398 = vpop.f32.mrb[0].mxu0
        %10399 = vmatprep.mubr.bf16.mxu0 %v7706
        %10400 = vmatmul.mubr.bf16.gmra.mrb[0].mxu0 %v8593
        %v10401 = vpop.f32.mrb[0].mxu0
        %v10402 = vadd.f32 %v10241, %v10401
        %v10403 = vpop.f32.mrb[0].mxu0
        %v10404 = vpop.f32.mrb[0].mxu0
        %v10405 = vadd.f32 %v10244, %v10404
        %v10406 = vpop.f32.mrb[0].mxu0
        %10407 = vmatprep.mubr.bf16.mxu0 %v7708
        %10408 = vmatmul.mubr.bf16.gmra.mrb[0].mxu0 %v8594
        %v10409 = vpop.f32.mrb[0].mxu0
        %v10410 = vadd.f32 %v10249, %v10409
        %v10411 = vpop.f32.mrb[0].mxu0
        %v10412 = vpop.f32.mrb[0].mxu0
        %v10413 = vadd.f32 %v10252, %v10412
        %v10414 = vpop.f32.mrb[0].mxu0
        %10415 = vmatprep.mubr.bf16.mxu0 %v7710
        %10416 = vmatmul.mubr.bf16.gmra.mrb[0].mxu0 %v8595
        %v10417 = vpop.f32.mrb[0].mxu0
        %v10418 = vadd.f32 %v10257, %v10417
        %v10419 = vpop.f32.mrb[0].mxu0
        %v10420 = vpop.f32.mrb[0].mxu0
        %v10421 = vadd.f32 %v10260, %v10420
        %v10422 = vpop.f32.mrb[0].mxu0
        %10423 = vmatprep.mubr.bf16.mxu0 %v7712
        %10424 = vmatmul.mubr.bf16.gmra.mrb[0].mxu0 %v8596
        %v10425 = vpop.f32.mrb[0].mxu0
        %v10426 = vadd.f32 %v10265, %v10425
        %v10427 = vpop.f32.mrb[0].mxu0
        %v10428 = vpop.f32.mrb[0].mxu0
        %v10429 = vadd.f32 %v10268, %v10428
        %v10430 = vpop.f32.mrb[0].mxu0
        %10431 = vmatprep.mubr.bf16.mxu0 %v7714
        %10432 = vmatmul.mubr.bf16.gmra.mrb[0].mxu0 %v8597
        %v10433 = vpop.f32.mrb[0].mxu0
        %v10434 = vadd.f32 %v10273, %v10433
        %v10435 = vpop.f32.mrb[0].mxu0
        %v10436 = vpop.f32.mrb[0].mxu0
        %v10437 = vadd.f32 %v10276, %v10436
        %v10438 = vpop.f32.mrb[0].mxu0
        %10439 = vmatprep.mubr.bf16.mxu0 %v7716
        %10440 = vmatmul.mubr.bf16.gmra.mrb[0].mxu0 %v8598
        %v10441 = vpop.f32.mrb[0].mxu0
        %v10442 = vadd.f32 %v10281, %v10441
        %v10443 = vpop.f32.mrb[0].mxu0
        %v10444 = vpop.f32.mrb[0].mxu0
        %v10445 = vadd.f32 %v10284, %v10444
        %v10446 = vpop.f32.mrb[0].mxu0
        %10447 = vmatprep.mubr.bf16.mxu0 %v7718
        %10448 = vmatmul.mubr.bf16.gmra.mrb[0].mxu0 %v8599
        %v10449 = vpop.f32.mrb[0].mxu0
        %v10450 = vadd.f32 %v10289, %v10449
        %v10451 = vpop.f32.mrb[0].mxu0
        %v10452 = vpop.f32.mrb[0].mxu0
        %v10453 = vadd.f32 %v10292, %v10452
        %v10454 = vpop.f32.mrb[0].mxu0
        %10455 = vmatprep.mubr.bf16.mxu0 %v7720
        %10456 = vmatmul.mubr.bf16.gmra.mrb[0].mxu0 %v8600
        %v10457 = vpop.f32.mrb[0].mxu0
        %v10458 = vadd.f32 %v10297, %v10457
        %v10459 = vpop.f32.mrb[0].mxu0
        %v10460 = vpop.f32.mrb[0].mxu0
        %v10461 = vadd.f32 %v10300, %v10460
        %v10462 = vpop.f32.mrb[0].mxu0
        %10463 = vmatprep.mubr.bf16.mxu0 %v7722
        %10464 = vmatmul.mubr.bf16.gmra.mrb[0].mxu0 %v8601
        %v10465 = vpop.f32.mrb[0].mxu0
        %v10466 = vadd.f32 %v10305, %v10465
        %v10467 = vpop.f32.mrb[0].mxu0
        %v10468 = vpop.f32.mrb[0].mxu0
        %v10469 = vadd.f32 %v10308, %v10468
        %v10470 = vpop.f32.mrb[0].mxu0
        %10471 = vmatprep.mubr.bf16.mxu0 %v7724
        %10472 = vmatmul.mubr.bf16.gmra.mrb[0].mxu0 %v8602
        %v10473 = vpop.f32.mrb[0].mxu0
        %v10474 = vadd.f32 %v10313, %v10473
        %v10475 = vpop.f32.mrb[0].mxu0
        %v10476 = vpop.f32.mrb[0].mxu0
        %v10477 = vadd.f32 %v10316, %v10476
        %v10478 = vpop.f32.mrb[0].mxu0
        %10479 = vmatprep.mubr.bf16.mxu0 %v7726
        %10480 = vmatmul.mubr.bf16.gmra.mrb[0].mxu0 %v8603
        %v10481 = vpop.f32.mrb[0].mxu0
        %v10482 = vadd.f32 %v10321, %v10481
        %v10483 = vpop.f32.mrb[0].mxu0
        %v10484 = vpop.f32.mrb[0].mxu0
        %v10485 = vadd.f32 %v10324, %v10484
        %v10486 = vpop.f32.mrb[0].mxu0
        %10487 = vmatprep.mubr.bf16.mxu0 %v7728
        %10488 = vmatmul.mubr.bf16.gmra.mrb[0].mxu0 %v8604
        %v10489 = vpop.f32.mrb[0].mxu0
        %v10490 = vadd.f32 %v10329, %v10489
        %v10491 = vpop.f32.mrb[0].mxu0
        %v10492 = vpop.f32.mrb[0].mxu0
        %v10493 = vadd.f32 %v10332, %v10492
        %v10494 = vpop.f32.mrb[0].mxu0
        %10495 = vmatprep.mubr.bf16.mxu0 0
        %10496 = vmatmul.mubr.bf16.gmra.mrb[0].mxu0 %v8605
        %v10497 = vpop.f32.mrb[0].mxu0
        %v10498 = vadd.f32 %v10337, %v10497
        %v10499 = vpop.f32.mrb[0].mxu0
        %v10500 = vpop.f32.mrb[0].mxu0
        %v10501 = vadd.f32 %v10340, %v10500
        %v10502 = vpop.f32.mrb[0].mxu0
        %10503 = vdwg.mxu0
        %10504 = vmatprep.subr.bf16.mxu0 0
        %10505 = vmatpush1.bf16.msra.mxu0 %v9532
        %10506 = vmatprep.subr.bf16.mxu0 0
        %10507 = vmatpush1.bf16.msra.mxu0 %v9533
        %10508 = vmatprep.subr.bf16.mxu0 0
        %10509 = vmatpush1.bf16.msra.mxu0 %v9534
        %10510 = vmatprep.subr.bf16.mxu0 0
        %10511 = vmatpush1.bf16.msra.mxu0 %v9535
        %10512 = vmatprep.subr.bf16.mxu0 0
        %10513 = vmatpush1.bf16.msra.mxu0 %v9536
        %10514 = vmatprep.subr.bf16.mxu0 0
        %10515 = vmatpush1.bf16.msra.mxu0 %v9537
        %10516 = vmatprep.subr.bf16.mxu0 0
        %10517 = vmatpush1.bf16.msra.mxu0 %v9538
        %10518 = vmatprep.subr.bf16.mxu0 0
        %10519 = vmatpush1.bf16.msra.mxu0 %v9539
        %10520 = vmatprep.subr.bf16.mxu0 0
        %10521 = vmatpush1.bf16.msra.mxu0 %v9540
        %10522 = vmatprep.subr.bf16.mxu0 0
        %10523 = vmatpush1.bf16.msra.mxu0 %v9541
        %10524 = vmatprep.subr.bf16.mxu0 0
        %10525 = vmatpush1.bf16.msra.mxu0 %v9542
        %10526 = vmatprep.subr.bf16.mxu0 0
        %10527 = vmatpush1.bf16.msra.mxu0 %v9543
        %10528 = vmatprep.subr.bf16.mxu0 0
        %10529 = vmatpush1.bf16.msra.mxu0 %v9544
        %10530 = vmatprep.subr.bf16.mxu0 0
        %10531 = vmatpush1.bf16.msra.mxu0 %v9545
        %10532 = vmatprep.subr.bf16.mxu0 0
        %10533 = vmatpush1.bf16.msra.mxu0 %v9546
        %10534 = vmatprep.subr.bf16.mxu0 0
        %10535 = vmatpush1.bf16.msra.mxu0 %v9547
        %10536 = vmatprep.mubr.bf16.mxu0 %v8184
        %10537 = vmatmul.mubr.bf16.gmra.mrb[0].mxu0 %v8633
        %v10538 = vpop.f32.mrb[0].mxu0
        %v10539 = vadd.f32 %v10378, %v10538
        %v10540 = vpop.f32.mrb[0].mxu0
        %v10541 = vpop.f32.mrb[0].mxu0
        %v10542 = vadd.f32 %v10381, %v10541
        %v10543 = vpop.f32.mrb[0].mxu0
        %10544 = vmatprep.mubr.bf16.mxu0 %v8185
        %10545 = vmatmul.mubr.bf16.gmra.mrb[0].mxu0 %v8636
        %v10546 = vpop.f32.mrb[0].mxu0
        %v10547 = vadd.f32 %v10386, %v10546
        %v10548 = vpop.f32.mrb[0].mxu0
        %v10549 = vpop.f32.mrb[0].mxu0
        %v10550 = vadd.f32 %v10389, %v10549
        %v10551 = vpop.f32.mrb[0].mxu0
        %10552 = vmatprep.mubr.bf16.mxu0 %v8186
        %10553 = vmatmul.mubr.bf16.gmra.mrb[0].mxu0 %v8639
        %v10554 = vpop.f32.mrb[0].mxu0
        %v10555 = vadd.f32 %v10394, %v10554
        %v10556 = vpop.f32.mrb[0].mxu0
        %v10557 = vpop.f32.mrb[0].mxu0
        %v10558 = vadd.f32 %v10397, %v10557
        %v10559 = vpop.f32.mrb[0].mxu0
        %10560 = vmatprep.mubr.bf16.mxu0 %v8187
        %10561 = vmatmul.mubr.bf16.gmra.mrb[0].mxu0 %v8642
        %v10562 = vpop.f32.mrb[0].mxu0
        %v10563 = vadd.f32 %v10402, %v10562
        %v10564 = vpop.f32.mrb[0].mxu0
        %v10565 = vpop.f32.mrb[0].mxu0
        %v10566 = vadd.f32 %v10405, %v10565
        %v10567 = vpop.f32.mrb[0].mxu0
        %10568 = vmatprep.mubr.bf16.mxu0 %v8188
        %10569 = vmatmul.mubr.bf16.gmra.mrb[0].mxu0 %v8645
        %v10570 = vpop.f32.mrb[0].mxu0
        %v10571 = vadd.f32 %v10410, %v10570
        %v10572 = vpop.f32.mrb[0].mxu0
        %v10573 = vpop.f32.mrb[0].mxu0
        %v10574 = vadd.f32 %v10413, %v10573
        %v10575 = vpop.f32.mrb[0].mxu0
        %10576 = vmatprep.mubr.bf16.mxu0 %v8189
        %10577 = vmatmul.mubr.bf16.gmra.mrb[0].mxu0 %v8648
        %v10578 = vpop.f32.mrb[0].mxu0
        %v10579 = vadd.f32 %v10418, %v10578
        %v10580 = vpop.f32.mrb[0].mxu0
        %v10581 = vpop.f32.mrb[0].mxu0
        %v10582 = vadd.f32 %v10421, %v10581
        %v10583 = vpop.f32.mrb[0].mxu0
        %10584 = vmatprep.mubr.bf16.mxu0 %v8190
        %10585 = vmatmul.mubr.bf16.gmra.mrb[0].mxu0 %v8651
        %v10586 = vpop.f32.mrb[0].mxu0
        %v10587 = vadd.f32 %v10426, %v10586
        %v10588 = vpop.f32.mrb[0].mxu0
        %v10589 = vpop.f32.mrb[0].mxu0
        %v10590 = vadd.f32 %v10429, %v10589
        %v10591 = vpop.f32.mrb[0].mxu0
        %10592 = vmatprep.mubr.bf16.mxu0 %v8191
        %10593 = vmatmul.mubr.bf16.gmra.mrb[0].mxu0 %v8654
        %v10594 = vpop.f32.mrb[0].mxu0
        %v10595 = vadd.f32 %v10434, %v10594
        %v10596 = vpop.f32.mrb[0].mxu0
        %v10597 = vpop.f32.mrb[0].mxu0
        %v10598 = vadd.f32 %v10437, %v10597
        %v10599 = vpop.f32.mrb[0].mxu0
        %10600 = vmatprep.mubr.bf16.mxu0 %v8192
        %10601 = vmatmul.mubr.bf16.gmra.mrb[0].mxu0 %v8657
        %v10602 = vpop.f32.mrb[0].mxu0
        %v10603 = vadd.f32 %v10442, %v10602
        %v10604 = vpop.f32.mrb[0].mxu0
        %v10605 = vpop.f32.mrb[0].mxu0
        %v10606 = vadd.f32 %v10445, %v10605
        %v10607 = vpop.f32.mrb[0].mxu0
        %10608 = vmatprep.mubr.bf16.mxu0 %v8193
        %10609 = vmatmul.mubr.bf16.gmra.mrb[0].mxu0 %v8660
        %v10610 = vpop.f32.mrb[0].mxu0
        %v10611 = vadd.f32 %v10450, %v10610
        %v10612 = vpop.f32.mrb[0].mxu0
        %v10613 = vpop.f32.mrb[0].mxu0
        %v10614 = vadd.f32 %v10453, %v10613
        %v10615 = vpop.f32.mrb[0].mxu0
        %10616 = vmatprep.mubr.bf16.mxu0 %v8194
        %10617 = vmatmul.mubr.bf16.gmra.mrb[0].mxu0 %v8663
        %v10618 = vpop.f32.mrb[0].mxu0
        %v10619 = vadd.f32 %v10458, %v10618
        %v10620 = vpop.f32.mrb[0].mxu0
        %v10621 = vpop.f32.mrb[0].mxu0
        %v10622 = vadd.f32 %v10461, %v10621
        %v10623 = vpop.f32.mrb[0].mxu0
        %10624 = vmatprep.mubr.bf16.mxu0 %v8195
        %10625 = vmatmul.mubr.bf16.gmra.mrb[0].mxu0 %v8666
        %v10626 = vpop.f32.mrb[0].mxu0
        %v10627 = vadd.f32 %v10466, %v10626
        %v10628 = vpop.f32.mrb[0].mxu0
        %v10629 = vpop.f32.mrb[0].mxu0
        %v10630 = vadd.f32 %v10469, %v10629
        %v10631 = vpop.f32.mrb[0].mxu0
        %10632 = vmatprep.mubr.bf16.mxu0 %v8196
        %10633 = vmatmul.mubr.bf16.gmra.mrb[0].mxu0 %v8669
        %v10634 = vpop.f32.mrb[0].mxu0
        %v10635 = vadd.f32 %v10474, %v10634
        %v10636 = vpop.f32.mrb[0].mxu0
        %v10637 = vpop.f32.mrb[0].mxu0
        %v10638 = vadd.f32 %v10477, %v10637
        %v10639 = vpop.f32.mrb[0].mxu0
        %10640 = vmatprep.mubr.bf16.mxu0 %v8197
        %10641 = vmatmul.mubr.bf16.gmra.mrb[0].mxu0 %v8672
        %v10642 = vpop.f32.mrb[0].mxu0
        %v10643 = vadd.f32 %v10482, %v10642
        %v10644 = vpop.f32.mrb[0].mxu0
        %v10645 = vpop.f32.mrb[0].mxu0
        %v10646 = vadd.f32 %v10485, %v10645
        %v10647 = vpop.f32.mrb[0].mxu0
        %10648 = vmatprep.mubr.bf16.mxu0 %v8626
        %10649 = vmatmul.mubr.bf16.gmra.mrb[0].mxu0 %v8802
        %v10650 = vpop.f32.mrb[0].mxu0
        %v10651 = vadd.f32 %v10490, %v10650
        %v10652 = vpop.f32.mrb[0].mxu0
        %v10653 = vpop.f32.mrb[0].mxu0
        %v10654 = vadd.f32 %v10493, %v10653
        %v10655 = vpop.f32.mrb[0].mxu0
        %10656 = vmatprep.mubr.bf16.mxu0 %v2476
        %10657 = vmatmul.mubr.bf16.gmra.mrb[0].mxu0 %v2667
        %v10658 = vpop.f32.mrb[0].mxu0
        %v10659 = vadd.f32 %v10498, %v10658
        %v10660 = vpop.f32.mrb[0].mxu0
        %v10661 = vpop.f32.mrb[0].mxu0
        %v10662 = vadd.f32 %v10501, %v10661
        %v10663 = vpop.f32.mrb[0].mxu0
        %10664 = vdwg.mxu0
        %10665 = vmatprep.subr.bf16.mxu0 0
        %10666 = vmatpush1.bf16.msra.mxu0 %v9548
        %10667 = vmatprep.subr.bf16.mxu0 0
        %10668 = vmatpush1.bf16.msra.mxu0 %v9549
        %10669 = vmatprep.subr.bf16.mxu0 0
        %10670 = vmatpush1.bf16.msra.mxu0 %v9550
        %10671 = vmatprep.subr.bf16.mxu0 0
        %10672 = vmatpush1.bf16.msra.mxu0 %v9551
        %10673 = vmatprep.subr.bf16.mxu0 0
        %10674 = vmatpush1.bf16.msra.mxu0 %v9552
        %10675 = vmatprep.subr.bf16.mxu0 0
        %10676 = vmatpush1.bf16.msra.mxu0 %v9553
        %10677 = vmatprep.subr.bf16.mxu0 0
        %10678 = vmatpush1.bf16.msra.mxu0 %v9554
        %10679 = vmatprep.subr.bf16.mxu0 0
        %10680 = vmatpush1.bf16.msra.mxu0 %v9555
        %10681 = vmatprep.subr.bf16.mxu0 0
        %10682 = vmatpush1.bf16.msra.mxu0 %v9556
        %10683 = vmatprep.subr.bf16.mxu0 0
        %10684 = vmatpush1.bf16.msra.mxu0 %v9557
        %10685 = vmatprep.subr.bf16.mxu0 0
        %10686 = vmatpush1.bf16.msra.mxu0 %v9558
        %10687 = vmatprep.subr.bf16.mxu0 0
        %10688 = vmatpush1.bf16.msra.mxu0 %v9559
        %10689 = vmatprep.subr.bf16.mxu0 0
        %10690 = vmatpush1.bf16.msra.mxu0 0
        %10691 = vmatprep.subr.bf16.mxu0 0
        %10692 = vmatpush1.bf16.msra.mxu0 0
        %10693 = vmatprep.subr.bf16.mxu0 0
        %10694 = vmatpush1.bf16.msra.mxu0 0
        %10695 = vmatprep.subr.bf16.mxu0 0
        %10696 = vmatpush1.bf16.msra.mxu0 0
        %10697 = vmatprep.mubr.bf16.mxu0 %v9668
        %10698 = vmatmul.mubr.bf16.gmra.mrb[0].mxu0 %v8282
        %v10699 = vpop.f32.mrb[0].mxu0
        %v10700 = vadd.f32 %v10539, %v10699
        %v10701 = vpop.f32.mrb[0].mxu0
        %v10702 = vpop.f32.mrb[0].mxu0
        %v10703 = vadd.f32 %v10542, %v10702
        %v10704 = vpop.f32.mrb[0].mxu0
        %10705 = vmatprep.mubr.bf16.mxu0 %v9670
        %10706 = vmatmul.mubr.bf16.gmra.mrb[0].mxu0 %v8288
        %v10707 = vpop.f32.mrb[0].mxu0
        %v10708 = vadd.f32 %v10547, %v10707
        %v10709 = vpop.f32.mrb[0].mxu0
        %v10710 = vpop.f32.mrb[0].mxu0
        %v10711 = vadd.f32 %v10550, %v10710
        %v10712 = vpop.f32.mrb[0].mxu0
        %10713 = vmatprep.mubr.bf16.mxu0 %v9672
        %10714 = vmatmul.mubr.bf16.gmra.mrb[0].mxu0 %v8294
        %v10715 = vpop.f32.mrb[0].mxu0
        %v10716 = vadd.f32 %v10555, %v10715
        %v10717 = vpop.f32.mrb[0].mxu0
        %v10718 = vpop.f32.mrb[0].mxu0
        %v10719 = vadd.f32 %v10558, %v10718
        %v10720 = vpop.f32.mrb[0].mxu0
        %10721 = vmatprep.mubr.bf16.mxu0 %v9674
        %10722 = vmatmul.mubr.bf16.gmra.mrb[0].mxu0 %v8300
        %v10723 = vpop.f32.mrb[0].mxu0
        %v10724 = vadd.f32 %v10563, %v10723
        %v10725 = vpop.f32.mrb[0].mxu0
        %v10726 = vpop.f32.mrb[0].mxu0
        %v10727 = vadd.f32 %v10566, %v10726
        %v10728 = vpop.f32.mrb[0].mxu0
        %10729 = vmatprep.mubr.bf16.mxu0 %v9676
        %10730 = vmatmul.mubr.bf16.gmra.mrb[0].mxu0 %v8306
        %v10731 = vpop.f32.mrb[0].mxu0
        %v10732 = vadd.f32 %v10571, %v10731
        %v10733 = vpop.f32.mrb[0].mxu0
        %v10734 = vpop.f32.mrb[0].mxu0
        %v10735 = vadd.f32 %v10574, %v10734
        %v10736 = vpop.f32.mrb[0].mxu0
        %10737 = vmatprep.mubr.bf16.mxu0 %v9678
        %10738 = vmatmul.mubr.bf16.gmra.mrb[0].mxu0 %v8312
        %v10739 = vpop.f32.mrb[0].mxu0
        %v10740 = vadd.f32 %v10579, %v10739
        %v10741 = vpop.f32.mrb[0].mxu0
        %v10742 = vpop.f32.mrb[0].mxu0
        %v10743 = vadd.f32 %v10582, %v10742
        %v10744 = vpop.f32.mrb[0].mxu0
        %10745 = vmatprep.mubr.bf16.mxu0 %v9680
        %10746 = vmatmul.mubr.bf16.gmra.mrb[0].mxu0 %v8318
        %v10747 = vpop.f32.mrb[0].mxu0
        %v10748 = vadd.f32 %v10587, %v10747
        %v10749 = vpop.f32.mrb[0].mxu0
        %v10750 = vpop.f32.mrb[0].mxu0
        %v10751 = vadd.f32 %v10590, %v10750
        %v10752 = vpop.f32.mrb[0].mxu0
        %10753 = vmatprep.mubr.bf16.mxu0 %v9682
        %10754 = vmatmul.mubr.bf16.gmra.mrb[0].mxu0 %v8324
        %v10755 = vpop.f32.mrb[0].mxu0
        %v10756 = vadd.f32 %v10595, %v10755
        %v10757 = vpop.f32.mrb[0].mxu0
        %v10758 = vpop.f32.mrb[0].mxu0
        %v10759 = vadd.f32 %v10598, %v10758
        %v10760 = vpop.f32.mrb[0].mxu0
        %10761 = vmatprep.mubr.bf16.mxu0 %v9684
        %10762 = vmatmul.mubr.bf16.gmra.mrb[0].mxu0 %v8330
        %v10763 = vpop.f32.mrb[0].mxu0
        %v10764 = vadd.f32 %v10603, %v10763
        %v10765 = vpop.f32.mrb[0].mxu0
        %v10766 = vpop.f32.mrb[0].mxu0
        %v10767 = vadd.f32 %v10606, %v10766
        %v10768 = vpop.f32.mrb[0].mxu0
        %10769 = vmatprep.mubr.bf16.mxu0 %v9686
        %10770 = vmatmul.mubr.bf16.gmra.mrb[0].mxu0 %v8336
        %v10771 = vpop.f32.mrb[0].mxu0
        %v10772 = vadd.f32 %v10611, %v10771
        %v10773 = vpop.f32.mrb[0].mxu0
        %v10774 = vpop.f32.mrb[0].mxu0
        %v10775 = vadd.f32 %v10614, %v10774
        %v10776 = vpop.f32.mrb[0].mxu0
        %10777 = vmatprep.mubr.bf16.mxu0 %v9688
        %10778 = vmatmul.mubr.bf16.gmra.mrb[0].mxu0 %v8342
        %v10779 = vpop.f32.mrb[0].mxu0
        %v10780 = vadd.f32 %v10619, %v10779
        %v10781 = vpop.f32.mrb[0].mxu0
        %v10782 = vpop.f32.mrb[0].mxu0
        %v10783 = vadd.f32 %v10622, %v10782
        %v10784 = vpop.f32.mrb[0].mxu0
        %10785 = vmatprep.mubr.bf16.mxu0 %v9690
        %10786 = vmatmul.mubr.bf16.gmra.mrb[0].mxu0 %v8348
        %v10787 = vpop.f32.mrb[0].mxu0
        %v10788 = vadd.f32 %v10627, %v10787
        %v10789 = vpop.f32.mrb[0].mxu0
        %v10790 = vpop.f32.mrb[0].mxu0
        %v10791 = vadd.f32 %v10630, %v10790
        %v10792 = vpop.f32.mrb[0].mxu0
        %10793 = vmatprep.mubr.bf16.mxu0 %v9692
        %10794 = vmatmul.mubr.bf16.gmra.mrb[0].mxu0 %v8354
        %v10795 = vpop.f32.mrb[0].mxu0
        %v10796 = vadd.f32 %v10635, %v10795
        %v10797 = vpop.f32.mrb[0].mxu0
        %v10798 = vpop.f32.mrb[0].mxu0
        %v10799 = vadd.f32 %v10638, %v10798
        %v10800 = vpop.f32.mrb[0].mxu0
        %10801 = vmatprep.mubr.bf16.mxu0 %v9694
        %10802 = vmatmul.mubr.bf16.gmra.mrb[0].mxu0 %v8360
        %v10803 = vpop.f32.mrb[0].mxu0
        %v10804 = vadd.f32 %v10643, %v10803
        %v10805 = vpop.f32.mrb[0].mxu0
        %v10806 = vpop.f32.mrb[0].mxu0
        %v10807 = vadd.f32 %v10646, %v10806
        %v10808 = vpop.f32.mrb[0].mxu0
        %10809 = vmatprep.mubr.bf16.mxu0 %v9697
        %10810 = vmatmul.mubr.bf16.gmra.mrb[0].mxu0 %v8522
        %v10811 = vpop.f32.mrb[0].mxu0
        %v10812 = vadd.f32 %v10651, %v10811
        %v10813 = vpop.f32.mrb[0].mxu0
        %v10814 = vpop.f32.mrb[0].mxu0
        %v10815 = vadd.f32 %v10654, %v10814
        %v10816 = vpop.f32.mrb[0].mxu0
        %10817 = vmatprep.mubr.bf16.mxu0 %v3164
        %10818 = vmatmul.mubr.bf16.gmra.mrb[0].mxu0 %v1228
        %v10819 = vpop.f32.mrb[0].mxu0
        %v10820 = vadd.f32 %v10659, %v10819
        %v10821 = vpop.f32.mrb[0].mxu0
        %v10822 = vpop.f32.mrb[0].mxu0
        %v10823 = vadd.f32 %v10662, %v10822
        %v10824 = vpop.f32.mrb[0].mxu0
        %10825 = vdwg.mxu0
        %v10826 = vld [vmem:[#allocation20] sm:$0x1]
        %v10827 = vlaneseq
        %v10828 = vshrl.u32 %v10827, 7
        %v10829 = vsub.s32 0, %v10828
        %v10830 = vrot.slane %v10826, %v10829
        %v10831 = vmul.f32 %v10700, %v10830
        %v10832 = vmul.f32 %v10703, %v10830
        %v10833 = vmul.f32 %v10708, %v10830
        %v10834 = vmul.f32 %v10711, %v10830
        %v10835 = vmul.f32 %v10716, %v10830
        %v10836 = vmul.f32 %v10719, %v10830
        %v10837 = vmul.f32 %v10724, %v10830
        %v10838 = vmul.f32 %v10727, %v10830
        %v10839 = vmul.f32 %v10732, %v10830
        %v10840 = vmul.f32 %v10735, %v10830
        %v10841 = vmul.f32 %v10740, %v10830
        %v10842 = vmul.f32 %v10743, %v10830
        %v10843 = vmul.f32 %v10748, %v10830
        %v10844 = vmul.f32 %v10751, %v10830
        %v10845 = vmul.f32 %v10756, %v10830
        %v10846 = vmul.f32 %v10759, %v10830
        %v10847 = vmul.f32 %v10764, %v10830
        %v10848 = vmul.f32 %v10767, %v10830
        %v10849 = vmul.f32 %v10772, %v10830
        %v10850 = vmul.f32 %v10775, %v10830
        %v10851 = vmul.f32 %v10780, %v10830
        %v10852 = vmul.f32 %v10783, %v10830
        %v10853 = vmul.f32 %v10788, %v10830
        %v10854 = vmul.f32 %v10791, %v10830
        %v10855 = vmul.f32 %v10796, %v10830
        %v10856 = vmul.f32 %v10799, %v10830
        %v10857 = vmul.f32 %v10804, %v10830
        %v10858 = vmul.f32 %v10807, %v10830
        %v10859 = vmul.f32 %v10812, %v10830
        %v10860 = vmul.f32 %v10815, %v10830
        %v10861 = vmul.f32 %v10820, %v10830
        %v10862 = vmul.f32 %v10823, %v10830
        %v10863 = vld [vmem:[#allocation20 + $0x1] sm:$0x1]
        %v10864 = vlaneseq
        %v10865 = vshrl.u32 %v10864, 7
        %v10866 = vsub.s32 0, %v10865
        %v10867 = vrot.slane %v10863, %v10866
        %v10868 = vadd.f32 %v10831, %v10867
        %v10869 = vadd.f32 %v10832, %v10867
        %v10870 = vadd.f32 %v10833, %v10867
        %v10871 = vadd.f32 %v10834, %v10867
        %v10872 = vadd.f32 %v10835, %v10867
        %v10873 = vadd.f32 %v10836, %v10867
        %v10874 = vadd.f32 %v10837, %v10867
        %v10875 = vadd.f32 %v10838, %v10867
        %v10876 = vadd.f32 %v10839, %v10867
        %v10877 = vadd.f32 %v10840, %v10867
        %v10878 = vadd.f32 %v10841, %v10867
        %v10879 = vadd.f32 %v10842, %v10867
        %v10880 = vadd.f32 %v10843, %v10867
        %v10881 = vadd.f32 %v10844, %v10867
        %v10882 = vadd.f32 %v10845, %v10867
        %v10883 = vadd.f32 %v10846, %v10867
        %v10884 = vadd.f32 %v10847, %v10867
        %v10885 = vadd.f32 %v10848, %v10867
        %v10886 = vadd.f32 %v10849, %v10867
        %v10887 = vadd.f32 %v10850, %v10867
        %v10888 = vadd.f32 %v10851, %v10867
        %v10889 = vadd.f32 %v10852, %v10867
        %v10890 = vadd.f32 %v10853, %v10867
        %v10891 = vadd.f32 %v10854, %v10867
        %v10892 = vadd.f32 %v10855, %v10867
        %v10893 = vadd.f32 %v10856, %v10867
        %v10894 = vadd.f32 %v10857, %v10867
        %v10895 = vadd.f32 %v10858, %v10867
        %v10896 = vadd.f32 %v10859, %v10867
        %v10897 = vadd.f32 %v10860, %v10867
        %v10898 = vadd.f32 %v10861, %v10867
        %v10899 = vadd.f32 %v10862, %v10867
        %v10900 = vmax.f32 %v10868, 0.0
        %v10901 = vmax.f32 %v10869, 0.0
        %v10902 = vmax.f32 %v10870, 0.0
        %v10903 = vmax.f32 %v10871, 0.0
        %v10904 = vmax.f32 %v10872, 0.0
        %v10905 = vmax.f32 %v10873, 0.0
        %v10906 = vmax.f32 %v10874, 0.0
        %v10907 = vmax.f32 %v10875, 0.0
        %v10908 = vmax.f32 %v10876, 0.0
        %v10909 = vmax.f32 %v10877, 0.0
        %v10910 = vmax.f32 %v10878, 0.0
        %v10911 = vmax.f32 %v10879, 0.0
        %v10912 = vmax.f32 %v10880, 0.0
        %v10913 = vmax.f32 %v10881, 0.0
        %v10914 = vmax.f32 %v10882, 0.0
        %v10915 = vmax.f32 %v10883, 0.0
        %v10916 = vmax.f32 %v10884, 0.0
        %v10917 = vmax.f32 %v10885, 0.0
        %v10918 = vmax.f32 %v10886, 0.0
        %v10919 = vmax.f32 %v10887, 0.0
        %v10920 = vmax.f32 %v10888, 0.0
        %v10921 = vmax.f32 %v10889, 0.0
        %v10922 = vmax.f32 %v10890, 0.0
        %v10923 = vmax.f32 %v10891, 0.0
        %v10924 = vmax.f32 %v10892, 0.0
        %v10925 = vmax.f32 %v10893, 0.0
        %v10926 = vmax.f32 %v10894, 0.0
        %v10927 = vmax.f32 %v10895, 0.0
        %v10928 = vmax.f32 %v10896, 0.0
        %v10929 = vmax.f32 %v10897, 0.0
        %v10930 = vmax.f32 %v10898, 0.0
        %v10931 = vmax.f32 %v10899, 0.0
        %v10932 = vpack.c.bf16 %v10901, %v10900
        %v10933 = vpack.c.bf16 %v10903, %v10902
        %v10934 = vpack.c.bf16 %v10905, %v10904
        %v10935 = vpack.c.bf16 %v10907, %v10906
        %v10936 = vpack.c.bf16 %v10909, %v10908
        %v10937 = vpack.c.bf16 %v10911, %v10910
        %v10938 = vpack.c.bf16 %v10913, %v10912
        %v10939 = vpack.c.bf16 %v10915, %v10914
        %v10940 = vpack.c.bf16 %v10917, %v10916
        %v10941 = vpack.c.bf16 %v10919, %v10918
        %v10942 = vpack.c.bf16 %v10921, %v10920
        %v10943 = vpack.c.bf16 %v10923, %v10922
        %v10944 = vpack.c.bf16 %v10925, %v10924
        %v10945 = vpack.c.bf16 %v10927, %v10926
        %v10946 = vpack.c.bf16 %v10929, %v10928
        %v10947 = vpack.c.bf16 %v10931, %v10930
        %v10949 = vshrl.u32 %v10932, 16
        %v10951 = vrot.slane %v10949, 7
        %v10952 = vshll.u32 %v10932, 16
        %v10954 = vor.u32 %v10951, %v10952
        %v10956 = vshrl.u32 %v10933, 16
        %v10958 = vrot.slane %v10956, 7
        %v10959 = vshll.u32 %v10933, 16
        %v10961 = vor.u32 %v10958, %v10959
        %v10963 = vshrl.u32 %v10934, 16
        %v10965 = vrot.slane %v10963, 7
        %v10966 = vshll.u32 %v10934, 16
        %v10968 = vor.u32 %v10965, %v10966
        %v10970 = vshrl.u32 %v10935, 16
        %v10972 = vrot.slane %v10970, 7
        %v10973 = vshll.u32 %v10935, 16
        %v10975 = vor.u32 %v10972, %v10973
        %v10977 = vshrl.u32 %v10936, 16
        %v10979 = vrot.slane %v10977, 7
        %v10980 = vshll.u32 %v10936, 16
        %v10982 = vor.u32 %v10979, %v10980
        %v10984 = vshrl.u32 %v10937, 16
        %v10986 = vrot.slane %v10984, 7
        %v10987 = vshll.u32 %v10937, 16
        %v10989 = vor.u32 %v10986, %v10987
        %v10991 = vshrl.u32 %v10938, 16
        %v10993 = vrot.slane %v10991, 7
        %v10994 = vshll.u32 %v10938, 16
        %v10996 = vor.u32 %v10993, %v10994
        %v10998 = vshrl.u32 %v10939, 16
        %v11000 = vrot.slane %v10998, 7
        %v11001 = vshll.u32 %v10939, 16
        %v11003 = vor.u32 %v11000, %v11001
        %v11005 = vshrl.u32 %v10940, 16
        %v11007 = vrot.slane %v11005, 7
        %v11008 = vshll.u32 %v10940, 16
        %v11010 = vor.u32 %v11007, %v11008
        %v11012 = vshrl.u32 %v10941, 16
        %v11014 = vrot.slane %v11012, 7
        %v11015 = vshll.u32 %v10941, 16
        %v11017 = vor.u32 %v11014, %v11015
        %v11019 = vshrl.u32 %v10942, 16
        %v11021 = vrot.slane %v11019, 7
        %v11022 = vshll.u32 %v10942, 16
        %v11024 = vor.u32 %v11021, %v11022
        %v11026 = vshrl.u32 %v10943, 16
        %v11028 = vrot.slane %v11026, 7
        %v11029 = vshll.u32 %v10943, 16
        %v11031 = vor.u32 %v11028, %v11029
        %v11033 = vshrl.u32 %v10944, 16
        %v11035 = vrot.slane %v11033, 7
        %v11036 = vshll.u32 %v10944, 16
        %v11038 = vor.u32 %v11035, %v11036
        %v11040 = vshrl.u32 %v10945, 16
        %v11042 = vrot.slane %v11040, 7
        %v11043 = vshll.u32 %v10945, 16
        %v11045 = vor.u32 %v11042, %v11043
        %v11047 = vshrl.u32 %v10946, 16
        %v11049 = vrot.slane %v11047, 7
        %v11050 = vshll.u32 %v10946, 16
        %v11052 = vor.u32 %v11049, %v11050
        %v11054 = vshrl.u32 %v10947, 16
        %v11056 = vrot.slane %v11054, 7
        %v11057 = vshll.u32 %v10947, 16
        %v11059 = vor.u32 %v11056, %v11057
        %v11092 = vsel %vm941, 0, %v10954
        %v11093 = vsel %vm941, 0, %v10961
        %v11094 = vsel %vm941, 0, %v10968
        %v11095 = vsel %vm941, 0, %v10975
        %v11096 = vsel %vm941, 0, %v10982
        %v11097 = vsel %vm941, 0, %v10989
        %v11098 = vsel %vm941, 0, %v10996
        %v11099 = vsel %vm941, 0, %v11003
        %v11100 = vsel %vm941, 0, %v11010
        %v11101 = vsel %vm941, 0, %v11017
        %v11102 = vsel %vm941, 0, %v11024
        %v11103 = vsel %vm941, 0, %v11031
        %v11104 = vsel %vm941, 0, %v11038
        %v11105 = vsel %vm941, 0, %v11045
        %v11106 = vsel %vm941, 0, %v11052
        %v11107 = vsel %vm941, 0, %v11059
        %v11108 = vsel %vm941, %v10951, 0
        %v11109 = vsel %vm941, %v10958, 0
        %v11110 = vsel %vm941, %v10965, 0
        %v11111 = vsel %vm941, %v10972, 0
        %v11112 = vsel %vm941, %v10979, 0
        %v11113 = vsel %vm941, %v10986, 0
        %v11114 = vsel %vm941, %v10993, 0
        %v11115 = vsel %vm941, %v11000, 0
        %v11116 = vsel %vm941, %v11007, 0
        %v11117 = vsel %vm941, %v11014, 0
        %v11118 = vsel %vm941, %v11021, 0
        %v11119 = vsel %vm941, %v11028, 0
        %v11120 = vsel %vm941, %v11035, 0
        %v11121 = vsel %vm941, %v11042, 0
        %v11122 = vsel %vm941, %v11049, 0
        %v11123 = vsel %vm941, %v11056, 0
        %v11125 = vshrl.u32 %v11092, 16
        %v11127 = vshll.u32 %v11092, 16
        %v11129 = vrot.slane %v11127, 1
        %v11130 = vor.u32 %v11125, %v11129
        %v11132 = vshll.u32 %v11108, 16
        %v11134 = vrot.slane %v11132, 1
        %v11135 = vsel %vm974, %v11130, %v11134
        %v11137 = vshrl.u32 %v11093, 16
        %v11139 = vshll.u32 %v11093, 16
        %v11141 = vrot.slane %v11139, 1
        %v11142 = vor.u32 %v11137, %v11141
        %v11144 = vshll.u32 %v11109, 16
        %v11146 = vrot.slane %v11144, 1
        %v11147 = vsel %vm974, %v11142, %v11146
        %v11149 = vshrl.u32 %v11094, 16
        %v11151 = vshll.u32 %v11094, 16
        %v11153 = vrot.slane %v11151, 1
        %v11154 = vor.u32 %v11149, %v11153
        %v11156 = vshll.u32 %v11110, 16
        %v11158 = vrot.slane %v11156, 1
        %v11159 = vsel %vm974, %v11154, %v11158
        %v11161 = vshrl.u32 %v11095, 16
        %v11163 = vshll.u32 %v11095, 16
        %v11165 = vrot.slane %v11163, 1
        %v11166 = vor.u32 %v11161, %v11165
        %v11168 = vshll.u32 %v11111, 16
        %v11170 = vrot.slane %v11168, 1
        %v11171 = vsel %vm974, %v11166, %v11170
        %v11173 = vshrl.u32 %v11096, 16
        %v11175 = vshll.u32 %v11096, 16
        %v11177 = vrot.slane %v11175, 1
        %v11178 = vor.u32 %v11173, %v11177
        %v11180 = vshll.u32 %v11112, 16
        %v11182 = vrot.slane %v11180, 1
        %v11183 = vsel %vm974, %v11178, %v11182
        %v11185 = vshrl.u32 %v11097, 16
        %v11187 = vshll.u32 %v11097, 16
        %v11189 = vrot.slane %v11187, 1
        %v11190 = vor.u32 %v11185, %v11189
        %v11192 = vshll.u32 %v11113, 16
        %v11194 = vrot.slane %v11192, 1
        %v11195 = vsel %vm974, %v11190, %v11194
        %v11197 = vshrl.u32 %v11098, 16
        %v11199 = vshll.u32 %v11098, 16
        %v11201 = vrot.slane %v11199, 1
        %v11202 = vor.u32 %v11197, %v11201
        %v11204 = vshll.u32 %v11114, 16
        %v11206 = vrot.slane %v11204, 1
        %v11207 = vsel %vm974, %v11202, %v11206
        %v11209 = vshrl.u32 %v11099, 16
        %v11211 = vshll.u32 %v11099, 16
        %v11213 = vrot.slane %v11211, 1
        %v11214 = vor.u32 %v11209, %v11213
        %v11216 = vshll.u32 %v11115, 16
        %v11218 = vrot.slane %v11216, 1
        %v11219 = vsel %vm974, %v11214, %v11218
        %v11221 = vshrl.u32 %v11100, 16
        %v11223 = vshll.u32 %v11100, 16
        %v11225 = vrot.slane %v11223, 1
        %v11226 = vor.u32 %v11221, %v11225
        %v11228 = vshll.u32 %v11116, 16
        %v11230 = vrot.slane %v11228, 1
        %v11231 = vsel %vm974, %v11226, %v11230
        %v11233 = vshrl.u32 %v11101, 16
        %v11235 = vshll.u32 %v11101, 16
        %v11237 = vrot.slane %v11235, 1
        %v11238 = vor.u32 %v11233, %v11237
        %v11240 = vshll.u32 %v11117, 16
        %v11242 = vrot.slane %v11240, 1
        %v11243 = vsel %vm974, %v11238, %v11242
        %v11245 = vshrl.u32 %v11102, 16
        %v11247 = vshll.u32 %v11102, 16
        %v11249 = vrot.slane %v11247, 1
        %v11250 = vor.u32 %v11245, %v11249
        %v11252 = vshll.u32 %v11118, 16
        %v11254 = vrot.slane %v11252, 1
        %v11255 = vsel %vm974, %v11250, %v11254
        %v11257 = vshrl.u32 %v11103, 16
        %v11259 = vshll.u32 %v11103, 16
        %v11261 = vrot.slane %v11259, 1
        %v11262 = vor.u32 %v11257, %v11261
        %v11264 = vshll.u32 %v11119, 16
        %v11266 = vrot.slane %v11264, 1
        %v11267 = vsel %vm974, %v11262, %v11266
        %v11269 = vshrl.u32 %v11104, 16
        %v11271 = vshll.u32 %v11104, 16
        %v11273 = vrot.slane %v11271, 1
        %v11274 = vor.u32 %v11269, %v11273
        %v11276 = vshll.u32 %v11120, 16
        %v11278 = vrot.slane %v11276, 1
        %v11279 = vsel %vm974, %v11274, %v11278
        %v11281 = vshrl.u32 %v11105, 16
        %v11283 = vshll.u32 %v11105, 16
        %v11285 = vrot.slane %v11283, 1
        %v11286 = vor.u32 %v11281, %v11285
        %v11288 = vshll.u32 %v11121, 16
        %v11290 = vrot.slane %v11288, 1
        %v11291 = vsel %vm974, %v11286, %v11290
        %v11293 = vshrl.u32 %v11106, 16
        %v11295 = vshll.u32 %v11106, 16
        %v11297 = vrot.slane %v11295, 1
        %v11298 = vor.u32 %v11293, %v11297
        %v11300 = vshll.u32 %v11122, 16
        %v11302 = vrot.slane %v11300, 1
        %v11303 = vsel %vm974, %v11298, %v11302
        %11304 = vrot.lane.b32.xlu0 %v982, 96
        %v11305 = vpop.permute.xlu0 %11304
        %11306 = vrot.lane.b32.xlu0 %v11135, 96
        %v11307 = vpop.permute.xlu0 %11306
        %11308 = vrot.lane.b32.xlu0 %v11147, 96
        %v11309 = vpop.permute.xlu0 %11308
        %11310 = vrot.lane.b32.xlu0 %v11159, 96
        %v11311 = vpop.permute.xlu0 %11310
        %11312 = vrot.lane.b32.xlu0 %v11171, 96
        %v11313 = vpop.permute.xlu0 %11312
        %11314 = vrot.lane.b32.xlu0 %v11183, 96
        %v11315 = vpop.permute.xlu0 %11314
        %11316 = vrot.lane.b32.xlu0 %v11195, 96
        %v11317 = vpop.permute.xlu0 %11316
        %11318 = vrot.lane.b32.xlu0 %v11207, 96
        %v11319 = vpop.permute.xlu0 %11318
        %11320 = vrot.lane.b32.xlu0 %v11219, 96
        %v11321 = vpop.permute.xlu0 %11320
        %11322 = vrot.lane.b32.xlu0 %v11231, 96
        %v11323 = vpop.permute.xlu0 %11322
        %11324 = vrot.lane.b32.xlu0 %v11243, 96
        %v11325 = vpop.permute.xlu0 %11324
        %11326 = vrot.lane.b32.xlu0 %v11255, 96
        %v11327 = vpop.permute.xlu0 %11326
        %11328 = vrot.lane.b32.xlu0 %v11267, 96
        %v11329 = vpop.permute.xlu0 %11328
        %11330 = vrot.lane.b32.xlu0 %v11279, 96
        %v11331 = vpop.permute.xlu0 %11330
        %11332 = vrot.lane.b32.xlu0 %v11291, 96
        %v11333 = vpop.permute.xlu0 %11332
        %11334 = vrot.lane.b32.xlu0 %v11303, 96
        %v11335 = vpop.permute.xlu0 %11334
        %v11366 = vrot.slane %v11092, 1
        %v11367 = vrot.slane %v11108, 1
        %v11368 = vsel %vm1226, %v11366, %v11367
        %v11369 = vrot.slane %v11093, 1
        %v11370 = vrot.slane %v11109, 1
        %v11371 = vsel %vm1226, %v11369, %v11370
        %v11372 = vrot.slane %v11094, 1
        %v11373 = vrot.slane %v11110, 1
        %v11374 = vsel %vm1226, %v11372, %v11373
        %v11375 = vrot.slane %v11095, 1
        %v11376 = vrot.slane %v11111, 1
        %v11377 = vsel %vm1226, %v11375, %v11376
        %v11378 = vrot.slane %v11096, 1
        %v11379 = vrot.slane %v11112, 1
        %v11380 = vsel %vm1226, %v11378, %v11379
        %v11381 = vrot.slane %v11097, 1
        %v11382 = vrot.slane %v11113, 1
        %v11383 = vsel %vm1226, %v11381, %v11382
        %v11384 = vrot.slane %v11098, 1
        %v11385 = vrot.slane %v11114, 1
        %v11386 = vsel %vm1226, %v11384, %v11385
        %v11387 = vrot.slane %v11099, 1
        %v11388 = vrot.slane %v11115, 1
        %v11389 = vsel %vm1226, %v11387, %v11388
        %v11390 = vrot.slane %v11100, 1
        %v11391 = vrot.slane %v11116, 1
        %v11392 = vsel %vm1226, %v11390, %v11391
        %v11393 = vrot.slane %v11101, 1
        %v11394 = vrot.slane %v11117, 1
        %v11395 = vsel %vm1226, %v11393, %v11394
        %v11396 = vrot.slane %v11102, 1
        %v11397 = vrot.slane %v11118, 1
        %v11398 = vsel %vm1226, %v11396, %v11397
        %v11399 = vrot.slane %v11103, 1
        %v11400 = vrot.slane %v11119, 1
        %v11401 = vsel %vm1226, %v11399, %v11400
        %v11402 = vrot.slane %v11104, 1
        %v11403 = vrot.slane %v11120, 1
        %v11404 = vsel %vm1226, %v11402, %v11403
        %v11405 = vrot.slane %v11105, 1
        %v11406 = vrot.slane %v11121, 1
        %v11407 = vsel %vm1226, %v11405, %v11406
        %v11408 = vrot.slane %v11106, 1
        %v11409 = vrot.slane %v11122, 1
        %v11410 = vsel %vm1226, %v11408, %v11409
        %11411 = vrot.lane.b32.xlu0 %v1228, 64
        %v11412 = vpop.permute.xlu0 %11411
        %11413 = vrot.lane.b32.xlu0 %v11368, 64
        %v11414 = vpop.permute.xlu0 %11413
        %11415 = vrot.lane.b32.xlu0 %v11371, 64
        %v11416 = vpop.permute.xlu0 %11415
        %11417 = vrot.lane.b32.xlu0 %v11374, 64
        %v11418 = vpop.permute.xlu0 %11417
        %11419 = vrot.lane.b32.xlu0 %v11377, 64
        %v11420 = vpop.permute.xlu0 %11419
        %11421 = vrot.lane.b32.xlu0 %v11380, 64
        %v11422 = vpop.permute.xlu0 %11421
        %11423 = vrot.lane.b32.xlu0 %v11383, 64
        %v11424 = vpop.permute.xlu0 %11423
        %11425 = vrot.lane.b32.xlu0 %v11386, 64
        %v11426 = vpop.permute.xlu0 %11425
        %11427 = vrot.lane.b32.xlu0 %v11389, 64
        %v11428 = vpop.permute.xlu0 %11427
        %11429 = vrot.lane.b32.xlu0 %v11392, 64
        %v11430 = vpop.permute.xlu0 %11429
        %11431 = vrot.lane.b32.xlu0 %v11395, 64
        %v11432 = vpop.permute.xlu0 %11431
        %11433 = vrot.lane.b32.xlu0 %v11398, 64
        %v11434 = vpop.permute.xlu0 %11433
        %11435 = vrot.lane.b32.xlu0 %v11401, 64
        %v11436 = vpop.permute.xlu0 %11435
        %11437 = vrot.lane.b32.xlu0 %v11404, 64
        %v11438 = vpop.permute.xlu0 %11437
        %11439 = vrot.lane.b32.xlu0 %v11407, 64
        %v11440 = vpop.permute.xlu0 %11439
        %11441 = vrot.lane.b32.xlu0 %v11410, 64
        %v11442 = vpop.permute.xlu0 %11441
        %11444 = vrot.lane.b32.xlu0 %v11092, 32
        %v11445 = vpop.permute.xlu0 %11444
        %11446 = vrot.lane.b32.xlu0 %v11093, 32
        %v11447 = vpop.permute.xlu0 %11446
        %11448 = vrot.lane.b32.xlu0 %v11094, 32
        %v11449 = vpop.permute.xlu0 %11448
        %11450 = vrot.lane.b32.xlu0 %v11095, 32
        %v11451 = vpop.permute.xlu0 %11450
        %11452 = vrot.lane.b32.xlu0 %v11096, 32
        %v11453 = vpop.permute.xlu0 %11452
        %11454 = vrot.lane.b32.xlu0 %v11097, 32
        %v11455 = vpop.permute.xlu0 %11454
        %11456 = vrot.lane.b32.xlu0 %v11098, 32
        %v11457 = vpop.permute.xlu0 %11456
        %11458 = vrot.lane.b32.xlu0 %v11099, 32
        %v11459 = vpop.permute.xlu0 %11458
        %11460 = vrot.lane.b32.xlu0 %v11100, 32
        %v11461 = vpop.permute.xlu0 %11460
        %11462 = vrot.lane.b32.xlu0 %v11101, 32
        %v11463 = vpop.permute.xlu0 %11462
        %11464 = vrot.lane.b32.xlu0 %v11102, 32
        %v11465 = vpop.permute.xlu0 %11464
        %11466 = vrot.lane.b32.xlu0 %v11103, 32
        %v11467 = vpop.permute.xlu0 %11466
        %11468 = vrot.lane.b32.xlu0 %v11104, 32
        %v11469 = vpop.permute.xlu0 %11468
        %11470 = vrot.lane.b32.xlu0 %v11105, 32
        %v11471 = vpop.permute.xlu0 %11470
        %11472 = vrot.lane.b32.xlu0 %v11106, 32
        %v11473 = vpop.permute.xlu0 %11472
        %11474 = vrot.lane.b32.xlu0 %v11107, 32
        %v11475 = vpop.permute.xlu0 %11474
        %v11477 = vshrl.u32 %v11107, 16
        %v11479 = vshll.u32 %v11107, 16
        %v11481 = vrot.slane %v11479, 1
        %v11482 = vor.u32 %v11477, %v11481
        %v11484 = vshll.u32 %v11123, 16
        %v11486 = vrot.slane %v11484, 1
        %v11487 = vsel %vm974, %v11482, %v11486
        %v11489 = vrot.slane %v11107, 1
        %v11490 = vrot.slane %v11123, 1
        %v11491 = vsel %vm1226, %v11489, %v11490
        %11492 = vrot.lane.b32.xlu0 %v11368, 96
        %v11493 = vpop.permute.xlu0 %11492
        %11494 = vrot.lane.b32.xlu0 %v11371, 96
        %v11495 = vpop.permute.xlu0 %11494
        %11496 = vrot.lane.b32.xlu0 %v11374, 96
        %v11497 = vpop.permute.xlu0 %11496
        %11498 = vrot.lane.b32.xlu0 %v11377, 96
        %v11499 = vpop.permute.xlu0 %11498
        %11500 = vrot.lane.b32.xlu0 %v11380, 96
        %v11501 = vpop.permute.xlu0 %11500
        %11502 = vrot.lane.b32.xlu0 %v11383, 96
        %v11503 = vpop.permute.xlu0 %11502
        %11504 = vrot.lane.b32.xlu0 %v11386, 96
        %v11505 = vpop.permute.xlu0 %11504
        %11506 = vrot.lane.b32.xlu0 %v11389, 96
        %v11507 = vpop.permute.xlu0 %11506
        %11508 = vrot.lane.b32.xlu0 %v11392, 96
        %v11509 = vpop.permute.xlu0 %11508
        %11510 = vrot.lane.b32.xlu0 %v11395, 96
        %v11511 = vpop.permute.xlu0 %11510
        %11512 = vrot.lane.b32.xlu0 %v11398, 96
        %v11513 = vpop.permute.xlu0 %11512
        %11514 = vrot.lane.b32.xlu0 %v11401, 96
        %v11515 = vpop.permute.xlu0 %11514
        %11516 = vrot.lane.b32.xlu0 %v11404, 96
        %v11517 = vpop.permute.xlu0 %11516
        %11518 = vrot.lane.b32.xlu0 %v11407, 96
        %v11519 = vpop.permute.xlu0 %11518
        %11520 = vrot.lane.b32.xlu0 %v11410, 96
        %v11521 = vpop.permute.xlu0 %11520
        %11522 = vrot.lane.b32.xlu0 %v11491, 96
        %v11523 = vpop.permute.xlu0 %11522
        %11524 = vrot.lane.b32.xlu0 %v11093, 64
        %v11525 = vpop.permute.xlu0 %11524
        %11526 = vrot.lane.b32.xlu0 %v11094, 64
        %v11527 = vpop.permute.xlu0 %11526
        %11528 = vrot.lane.b32.xlu0 %v11095, 64
        %v11529 = vpop.permute.xlu0 %11528
        %11530 = vrot.lane.b32.xlu0 %v11096, 64
        %v11531 = vpop.permute.xlu0 %11530
        %11532 = vrot.lane.b32.xlu0 %v11097, 64
        %v11533 = vpop.permute.xlu0 %11532
        %11534 = vrot.lane.b32.xlu0 %v11098, 64
        %v11535 = vpop.permute.xlu0 %11534
        %11536 = vrot.lane.b32.xlu0 %v11099, 64
        %v11537 = vpop.permute.xlu0 %11536
        %11538 = vrot.lane.b32.xlu0 %v11100, 64
        %v11539 = vpop.permute.xlu0 %11538
        %11540 = vrot.lane.b32.xlu0 %v11101, 64
        %v11541 = vpop.permute.xlu0 %11540
        %11542 = vrot.lane.b32.xlu0 %v11102, 64
        %v11543 = vpop.permute.xlu0 %11542
        %11544 = vrot.lane.b32.xlu0 %v11103, 64
        %v11545 = vpop.permute.xlu0 %11544
        %11546 = vrot.lane.b32.xlu0 %v11104, 64
        %v11547 = vpop.permute.xlu0 %11546
        %11548 = vrot.lane.b32.xlu0 %v11105, 64
        %v11549 = vpop.permute.xlu0 %11548
        %11550 = vrot.lane.b32.xlu0 %v11106, 64
        %v11551 = vpop.permute.xlu0 %11550
        %11552 = vrot.lane.b32.xlu0 %v11107, 64
        %v11553 = vpop.permute.xlu0 %11552
        %11554 = vrot.lane.b32.xlu0 0, 64
        %v11555 = vpop.permute.xlu0 %11554
        %11556 = vrot.lane.b32.xlu0 %v11147, 32
        %v11557 = vpop.permute.xlu0 %11556
        %11558 = vrot.lane.b32.xlu0 %v11159, 32
        %v11559 = vpop.permute.xlu0 %11558
        %11560 = vrot.lane.b32.xlu0 %v11171, 32
        %v11561 = vpop.permute.xlu0 %11560
        %11562 = vrot.lane.b32.xlu0 %v11183, 32
        %v11563 = vpop.permute.xlu0 %11562
        %11564 = vrot.lane.b32.xlu0 %v11195, 32
        %v11565 = vpop.permute.xlu0 %11564
        %11566 = vrot.lane.b32.xlu0 %v11207, 32
        %v11567 = vpop.permute.xlu0 %11566
        %11568 = vrot.lane.b32.xlu0 %v11219, 32
        %v11569 = vpop.permute.xlu0 %11568
        %11570 = vrot.lane.b32.xlu0 %v11231, 32
        %v11571 = vpop.permute.xlu0 %11570
        %11572 = vrot.lane.b32.xlu0 %v11243, 32
        %v11573 = vpop.permute.xlu0 %11572
        %11574 = vrot.lane.b32.xlu0 %v11255, 32
        %v11575 = vpop.permute.xlu0 %11574
        %11576 = vrot.lane.b32.xlu0 %v11267, 32
        %v11577 = vpop.permute.xlu0 %11576
        %11578 = vrot.lane.b32.xlu0 %v11279, 32
        %v11579 = vpop.permute.xlu0 %11578
        %11580 = vrot.lane.b32.xlu0 %v11291, 32
        %v11581 = vpop.permute.xlu0 %11580
        %11582 = vrot.lane.b32.xlu0 %v11303, 32
        %v11583 = vpop.permute.xlu0 %11582
        %11584 = vrot.lane.b32.xlu0 %v11487, 32
        %v11585 = vpop.permute.xlu0 %11584
        %11586 = vrot.lane.b32.xlu0 %v982, 32
        %v11587 = vpop.permute.xlu0 %11586
        %vm11588 = vcmask 785408
        %v11590 = vsel %vm11588, 0, %v11305
        %v11593 = vsel %vm11588, %v11092, %v11307
        %v11596 = vsel %vm11588, %v11093, %v11309
        %v11599 = vsel %vm11588, %v11094, %v11311
        %v11602 = vsel %vm11588, %v11095, %v11313
        %v11605 = vsel %vm11588, %v11096, %v11315
        %v11608 = vsel %vm11588, %v11097, %v11317
        %v11611 = vsel %vm11588, %v11098, %v11319
        %v11614 = vsel %vm11588, %v11099, %v11321
        %v11617 = vsel %vm11588, %v11100, %v11323
        %v11620 = vsel %vm11588, %v11101, %v11325
        %v11623 = vsel %vm11588, %v11102, %v11327
        %v11626 = vsel %vm11588, %v11103, %v11329
        %v11629 = vsel %vm11588, %v11104, %v11331
        %v11632 = vsel %vm11588, %v11105, %v11333
        %v11635 = vsel %vm11588, %v11106, %v11335
        %v11638 = vsel %vm2665, %v11305, %v11412
        %v11641 = vsel %vm2665, %v11307, %v11414
        %v11644 = vsel %vm2665, %v11309, %v11416
        %v11647 = vsel %vm2665, %v11311, %v11418
        %v11650 = vsel %vm2665, %v11313, %v11420
        %v11653 = vsel %vm2665, %v11315, %v11422
        %v11656 = vsel %vm2665, %v11317, %v11424
        %v11659 = vsel %vm2665, %v11319, %v11426
        %v11662 = vsel %vm2665, %v11321, %v11428
        %v11665 = vsel %vm2665, %v11323, %v11430
        %v11668 = vsel %vm2665, %v11325, %v11432
        %v11671 = vsel %vm2665, %v11327, %v11434
        %v11674 = vsel %vm2665, %v11329, %v11436
        %v11677 = vsel %vm2665, %v11331, %v11438
        %v11680 = vsel %vm2665, %v11333, %v11440
        %v11683 = vsel %vm2665, %v11335, %v11442
        %v11686 = vsel %vm1746, %v11412, %v11445
        %v11689 = vsel %vm1746, %v11414, %v11447
        %v11692 = vsel %vm1746, %v11416, %v11449
        %v11695 = vsel %vm1746, %v11418, %v11451
        %v11698 = vsel %vm1746, %v11420, %v11453
        %v11701 = vsel %vm1746, %v11422, %v11455
        %v11704 = vsel %vm1746, %v11424, %v11457
        %v11707 = vsel %vm1746, %v11426, %v11459
        %v11710 = vsel %vm1746, %v11428, %v11461
        %v11713 = vsel %vm1746, %v11430, %v11463
        %v11716 = vsel %vm1746, %v11432, %v11465
        %v11719 = vsel %vm1746, %v11434, %v11467
        %v11722 = vsel %vm1746, %v11436, %v11469
        %v11725 = vsel %vm1746, %v11438, %v11471
        %v11728 = vsel %vm1746, %v11440, %v11473
        %v11731 = vsel %vm1746, %v11442, %v11475
        %v11735 = vsel %vm11588, %v11135, %v11493
        %v11739 = vsel %vm11588, %v11147, %v11495
        %v11743 = vsel %vm11588, %v11159, %v11497
        %v11747 = vsel %vm11588, %v11171, %v11499
        %v11751 = vsel %vm11588, %v11183, %v11501
        %v11755 = vsel %vm11588, %v11195, %v11503
        %v11759 = vsel %vm11588, %v11207, %v11505
        %v11763 = vsel %vm11588, %v11219, %v11507
        %v11767 = vsel %vm11588, %v11231, %v11509
        %v11771 = vsel %vm11588, %v11243, %v11511
        %v11775 = vsel %vm11588, %v11255, %v11513
        %v11779 = vsel %vm11588, %v11267, %v11515
        %v11783 = vsel %vm11588, %v11279, %v11517
        %v11787 = vsel %vm11588, %v11291, %v11519
        %v11791 = vsel %vm11588, %v11303, %v11521
        %v11795 = vsel %vm11588, %v11487, %v11523
        %v11798 = vsel %vm2665, %v11493, %v11525
        %v11801 = vsel %vm2665, %v11495, %v11527
        %v11804 = vsel %vm2665, %v11497, %v11529
        %v11807 = vsel %vm2665, %v11499, %v11531
        %v11810 = vsel %vm2665, %v11501, %v11533
        %v11813 = vsel %vm2665, %v11503, %v11535
        %v11816 = vsel %vm2665, %v11505, %v11537
        %v11819 = vsel %vm2665, %v11507, %v11539
        %v11822 = vsel %vm2665, %v11509, %v11541
        %v11825 = vsel %vm2665, %v11511, %v11543
        %v11828 = vsel %vm2665, %v11513, %v11545
        %v11831 = vsel %vm2665, %v11515, %v11547
        %v11834 = vsel %vm2665, %v11517, %v11549
        %v11837 = vsel %vm2665, %v11519, %v11551
        %v11840 = vsel %vm2665, %v11521, %v11553
        %v11843 = vsel %vm2665, %v11523, %v11555
        %v11846 = vsel %vm1746, %v11525, %v11557
        %v11849 = vsel %vm1746, %v11527, %v11559
        %v11852 = vsel %vm1746, %v11529, %v11561
        %v11855 = vsel %vm1746, %v11531, %v11563
        %v11858 = vsel %vm1746, %v11533, %v11565
        %v11861 = vsel %vm1746, %v11535, %v11567
        %v11864 = vsel %vm1746, %v11537, %v11569
        %v11867 = vsel %vm1746, %v11539, %v11571
        %v11870 = vsel %vm1746, %v11541, %v11573
        %v11873 = vsel %vm1746, %v11543, %v11575
        %v11876 = vsel %vm1746, %v11545, %v11577
        %v11879 = vsel %vm1746, %v11547, %v11579
        %v11882 = vsel %vm1746, %v11549, %v11581
        %v11885 = vsel %vm1746, %v11551, %v11583
        %v11888 = vsel %vm1746, %v11553, %v11585
        %v11891 = vsel %vm1746, %v11555, %v11587
        %v11893 = vld [vmem:[#allocation22] sm:$0xf]
        %v11894 = vld [vmem:[#allocation22 + $0x4] sm:$0xf]
        %v11895 = vld [vmem:[#allocation22 + $0x8] sm:$0xf]
        %v11896 = vld [vmem:[#allocation22 + $0xc] sm:$0xf]
        %v11897 = vld [vmem:[#allocation22 + $0x10] sm:$0xf]
        %v11898 = vld [vmem:[#allocation22 + $0x14] sm:$0xf]
        %v11899 = vld [vmem:[#allocation22 + $0x18] sm:$0xf]
        %v11900 = vld [vmem:[#allocation22 + $0x1c] sm:$0xf]
        %v11901 = vld [vmem:[#allocation22 + $0x20] sm:$0xf]
        %v11902 = vld [vmem:[#allocation22 + $0x24] sm:$0xf]
        %v11903 = vld [vmem:[#allocation22 + $0x28] sm:$0xf]
        %v11904 = vld [vmem:[#allocation22 + $0x2c] sm:$0xf]
        %v11905 = vld [vmem:[#allocation22 + $0x30] sm:$0xf]
        %v11906 = vld [vmem:[#allocation22 + $0x34] sm:$0xf]
        %v11907 = vld [vmem:[#allocation22 + $0x38] sm:$0xf]
        %v11908 = vld [vmem:[#allocation22 + $0x3c] sm:$0xf]
        %v11909 = vld [vmem:[#allocation22 + $0x40] sm:$0xf]
        %v11910 = vld [vmem:[#allocation22 + $0x44] sm:$0xf]
        %v11911 = vld [vmem:[#allocation22 + $0x48] sm:$0xf]
        %v11912 = vld [vmem:[#allocation22 + $0x4c] sm:$0xf]
        %v11913 = vld [vmem:[#allocation22 + $0x50] sm:$0xf]
        %v11914 = vld [vmem:[#allocation22 + $0x54] sm:$0xf]
        %v11915 = vld [vmem:[#allocation22 + $0x58] sm:$0xf]
        %v11916 = vld [vmem:[#allocation22 + $0x5c] sm:$0xf]
        %v11917 = vld [vmem:[#allocation22 + $0x60] sm:$0xf]
        %v11918 = vld [vmem:[#allocation22 + $0x64] sm:$0xf]
        %v11919 = vld [vmem:[#allocation22 + $0x68] sm:$0xf]
        %v11920 = vld [vmem:[#allocation22 + $0x6c] sm:$0xf]
        %v11921 = vld [vmem:[#allocation22 + $0x70] sm:$0xf]
        %v11922 = vld [vmem:[#allocation22 + $0x74] sm:$0xf]
        %v11923 = vld [vmem:[#allocation22 + $0x78] sm:$0xf]
        %v11924 = vld [vmem:[#allocation22 + $0x7c] sm:$0xf]
        %v11925 = vld [vmem:[#allocation22 + $0x80] sm:$0xf]
        %v11926 = vld [vmem:[#allocation22 + $0x84] sm:$0xf]
        %v11927 = vld [vmem:[#allocation22 + $0x88] sm:$0xf]
        %v11928 = vld [vmem:[#allocation22 + $0x8c] sm:$0xf]
        %v11929 = vld [vmem:[#allocation22 + $0x90] sm:$0xf]
        %v11930 = vld [vmem:[#allocation22 + $0x94] sm:$0xf]
        %v11931 = vld [vmem:[#allocation22 + $0x98] sm:$0xf]
        %v11932 = vld [vmem:[#allocation22 + $0x9c] sm:$0xf]
        %v11933 = vld [vmem:[#allocation22 + $0xa0] sm:$0xf]
        %v11934 = vld [vmem:[#allocation22 + $0xa4] sm:$0xf]
        %v11935 = vld [vmem:[#allocation22 + $0xa8] sm:$0xf]
        %v11936 = vld [vmem:[#allocation22 + $0xac] sm:$0xf]
        %v11937 = vld [vmem:[#allocation22 + $0xb0] sm:$0xf]
        %v11938 = vld [vmem:[#allocation22 + $0xb4] sm:$0xf]
        %v11939 = vld [vmem:[#allocation22 + $0xb8] sm:$0xf]
        %v11940 = vld [vmem:[#allocation22 + $0xbc] sm:$0xf]
        %v11941 = vld [vmem:[#allocation22 + $0xc0] sm:$0xf]
        %v11942 = vld [vmem:[#allocation22 + $0xc4] sm:$0xf]
        %v11943 = vld [vmem:[#allocation22 + $0xc8] sm:$0xf]
        %v11944 = vld [vmem:[#allocation22 + $0xcc] sm:$0xf]
        %v11945 = vld [vmem:[#allocation22 + $0xd0] sm:$0xf]
        %v11946 = vld [vmem:[#allocation22 + $0xd4] sm:$0xf]
        %v11947 = vld [vmem:[#allocation22 + $0xd8] sm:$0xf]
        %v11948 = vld [vmem:[#allocation22 + $0xdc] sm:$0xf]
        %v11949 = vld [vmem:[#allocation22 + $0xe0] sm:$0xf]
        %v11950 = vld [vmem:[#allocation22 + $0xe4] sm:$0xf]
        %v11951 = vld [vmem:[#allocation22 + $0xe8] sm:$0xf]
        %v11952 = vld [vmem:[#allocation22 + $0xec] sm:$0xf]
        %v11953 = vld [vmem:[#allocation22 + $0xf0] sm:$0xf]
        %v11954 = vld [vmem:[#allocation22 + $0xf4] sm:$0xf]
        %v11955 = vld [vmem:[#allocation22 + $0xf8] sm:$0xf]
        %v11956 = vld [vmem:[#allocation22 + $0xfc] sm:$0xf]
        %v11957 = vld [vmem:[#allocation22 + $0x100] sm:$0xf]
        %v11958 = vld [vmem:[#allocation22 + $0x104] sm:$0xf]
        %v11959 = vld [vmem:[#allocation22 + $0x108] sm:$0xf]
        %v11960 = vld [vmem:[#allocation22 + $0x10c] sm:$0xf]
        %v11961 = vld [vmem:[#allocation22 + $0x110] sm:$0xf]
        %v11962 = vld [vmem:[#allocation22 + $0x114] sm:$0xf]
        %v11963 = vld [vmem:[#allocation22 + $0x118] sm:$0xf]
        %v11964 = vld [vmem:[#allocation22 + $0x11c] sm:$0xf]
        %v11965 = vld [vmem:[#allocation22 + $0x120] sm:$0xf]
        %v11966 = vld [vmem:[#allocation22 + $0x124] sm:$0xf]
        %v11967 = vld [vmem:[#allocation22 + $0x128] sm:$0xf]
        %v11968 = vld [vmem:[#allocation22 + $0x12c] sm:$0xf]
        %v11969 = vld [vmem:[#allocation22 + $0x130] sm:$0xf]
        %v11970 = vld [vmem:[#allocation22 + $0x134] sm:$0xf]
        %v11971 = vld [vmem:[#allocation22 + $0x138] sm:$0xf]
        %v11972 = vld [vmem:[#allocation22 + $0x13c] sm:$0xf]
        %v11973 = vld [vmem:[#allocation22 + $0x140] sm:$0xf]
        %v11974 = vld [vmem:[#allocation22 + $0x144] sm:$0xf]
        %v11975 = vld [vmem:[#allocation22 + $0x148] sm:$0xf]
        %v11976 = vld [vmem:[#allocation22 + $0x14c] sm:$0xf]
        %v11977 = vld [vmem:[#allocation22 + $0x150] sm:$0xf]
        %v11978 = vld [vmem:[#allocation22 + $0x154] sm:$0xf]
        %v11979 = vld [vmem:[#allocation22 + $0x158] sm:$0xf]
        %v11980 = vld [vmem:[#allocation22 + $0x15c] sm:$0xf]
        %v11981 = vld [vmem:[#allocation22 + $0x160] sm:$0xf]
        %v11982 = vld [vmem:[#allocation22 + $0x164] sm:$0xf]
        %v11983 = vld [vmem:[#allocation22 + $0x168] sm:$0xf]
        %v11984 = vld [vmem:[#allocation22 + $0x16c] sm:$0xf]
        %v11985 = vld [vmem:[#allocation22 + $0x170] sm:$0xf]
        %v11986 = vld [vmem:[#allocation22 + $0x174] sm:$0xf]
        %v11987 = vld [vmem:[#allocation22 + $0x178] sm:$0xf]
        %v11988 = vld [vmem:[#allocation22 + $0x17c] sm:$0xf]
        %v11989 = vld [vmem:[#allocation22 + $0x180] sm:$0xf]
        %v11990 = vld [vmem:[#allocation22 + $0x184] sm:$0xf]
        %v11991 = vld [vmem:[#allocation22 + $0x188] sm:$0xf]
        %v11992 = vld [vmem:[#allocation22 + $0x18c] sm:$0xf]
        %v11993 = vld [vmem:[#allocation22 + $0x190] sm:$0xf]
        %v11994 = vld [vmem:[#allocation22 + $0x194] sm:$0xf]
        %v11995 = vld [vmem:[#allocation22 + $0x198] sm:$0xf]
        %v11996 = vld [vmem:[#allocation22 + $0x19c] sm:$0xf]
        %v11997 = vld [vmem:[#allocation22 + $0x1a0] sm:$0xf]
        %v11998 = vld [vmem:[#allocation22 + $0x1a4] sm:$0xf]
        %v11999 = vld [vmem:[#allocation22 + $0x1a8] sm:$0xf]
        %v12000 = vld [vmem:[#allocation22 + $0x1ac] sm:$0xf]
        %v12109 = vunpack.c.l.b16 %v11893
        %v12110 = vunpack.c.l.b16 %v11894
        %v12111 = vunpack.c.l.b16 %v11895
        %v12112 = vunpack.c.l.b16 %v11896
        %v12113 = vunpack.c.l.b16 %v11897
        %v12114 = vunpack.c.l.b16 %v11898
        %v12115 = vunpack.c.l.b16 %v11899
        %v12116 = vunpack.c.l.b16 %v11900
        %v12117 = vunpack.c.l.b16 %v11901
        %v12118 = vunpack.c.l.b16 %v11902
        %v12119 = vunpack.c.l.b16 %v11903
        %v12120 = vunpack.c.l.b16 %v11904
        %v12121 = vunpack.c.l.b16 %v11905
        %v12122 = vunpack.c.l.b16 %v11906
        %v12123 = vunpack.c.l.b16 %v11907
        %v12124 = vunpack.c.l.b16 %v11908
        %v12125 = vunpack.c.l.b16 %v11909
        %v12126 = vunpack.c.l.b16 %v11910
        %v12127 = vunpack.c.l.b16 %v11911
        %v12128 = vunpack.c.l.b16 %v11912
        %v12129 = vunpack.c.l.b16 %v11913
        %v12130 = vunpack.c.l.b16 %v11914
        %v12131 = vunpack.c.l.b16 %v11915
        %v12132 = vunpack.c.l.b16 %v11916
        %v12133 = vunpack.c.l.b16 %v11917
        %v12134 = vunpack.c.l.b16 %v11918
        %v12135 = vunpack.c.l.b16 %v11919
        %v12136 = vunpack.c.l.b16 %v11920
        %v12137 = vunpack.c.l.b16 %v11921
        %v12138 = vunpack.c.l.b16 %v11922
        %v12139 = vunpack.c.l.b16 %v11923
        %v12140 = vunpack.c.l.b16 %v11924
        %v12141 = vunpack.c.l.b16 %v11925
        %v12142 = vunpack.c.l.b16 %v11926
        %v12143 = vunpack.c.l.b16 %v11927
        %v12144 = vunpack.c.l.b16 %v11928
        %v12145 = vunpack.c.l.b16 %v11929
        %v12146 = vunpack.c.l.b16 %v11930
        %v12147 = vunpack.c.l.b16 %v11931
        %v12148 = vunpack.c.l.b16 %v11932
        %v12149 = vunpack.c.l.b16 %v11933
        %v12150 = vunpack.c.l.b16 %v11934
        %v12151 = vunpack.c.l.b16 %v11935
        %v12152 = vunpack.c.l.b16 %v11936
        %v12153 = vunpack.c.l.b16 %v11937
        %v12154 = vunpack.c.l.b16 %v11938
        %v12155 = vunpack.c.l.b16 %v11939
        %v12156 = vunpack.c.l.b16 %v11940
        %v12157 = vunpack.c.l.b16 %v11941
        %v12158 = vunpack.c.l.b16 %v11942
        %v12159 = vunpack.c.l.b16 %v11943
        %v12160 = vunpack.c.l.b16 %v11944
        %v12161 = vunpack.c.l.b16 %v11945
        %v12162 = vunpack.c.l.b16 %v11946
        %v12163 = vunpack.c.l.b16 %v11947
        %v12164 = vunpack.c.l.b16 %v11948
        %v12165 = vunpack.c.l.b16 %v11949
        %v12166 = vunpack.c.l.b16 %v11950
        %v12167 = vunpack.c.l.b16 %v11951
        %v12168 = vunpack.c.l.b16 %v11952
        %v12169 = vunpack.c.l.b16 %v11953
        %v12170 = vunpack.c.l.b16 %v11954
        %v12171 = vunpack.c.l.b16 %v11955
        %v12172 = vunpack.c.l.b16 %v11956
        %v12173 = vunpack.c.l.b16 %v11957
        %v12174 = vunpack.c.l.b16 %v11958
        %v12175 = vunpack.c.l.b16 %v11959
        %v12176 = vunpack.c.l.b16 %v11960
        %v12177 = vunpack.c.l.b16 %v11961
        %v12178 = vunpack.c.l.b16 %v11962
        %v12179 = vunpack.c.l.b16 %v11963
        %v12180 = vunpack.c.l.b16 %v11964
        %v12181 = vunpack.c.l.b16 %v11965
        %v12182 = vunpack.c.l.b16 %v11966
        %v12183 = vunpack.c.l.b16 %v11967
        %v12184 = vunpack.c.l.b16 %v11968
        %v12185 = vunpack.c.l.b16 %v11969
        %v12186 = vunpack.c.l.b16 %v11970
        %v12187 = vunpack.c.l.b16 %v11971
        %v12188 = vunpack.c.l.b16 %v11972
        %v12189 = vunpack.c.l.b16 %v11973
        %v12190 = vunpack.c.l.b16 %v11974
        %v12191 = vunpack.c.l.b16 %v11975
        %v12192 = vunpack.c.l.b16 %v11976
        %v12193 = vunpack.c.l.b16 %v11977
        %v12194 = vunpack.c.l.b16 %v11978
        %v12195 = vunpack.c.l.b16 %v11979
        %v12196 = vunpack.c.l.b16 %v11980
        %v12197 = vunpack.c.l.b16 %v11981
        %v12198 = vunpack.c.l.b16 %v11982
        %v12199 = vunpack.c.l.b16 %v11983
        %v12200 = vunpack.c.l.b16 %v11984
        %v12201 = vunpack.c.l.b16 %v11985
        %v12202 = vunpack.c.l.b16 %v11986
        %v12203 = vunpack.c.l.b16 %v11987
        %v12204 = vunpack.c.l.b16 %v11988
        %v12205 = vunpack.c.l.b16 %v11989
        %v12206 = vunpack.c.l.b16 %v11990
        %v12207 = vunpack.c.l.b16 %v11991
        %v12208 = vunpack.c.l.b16 %v11992
        %v12209 = vunpack.c.l.b16 %v11993
        %v12210 = vunpack.c.l.b16 %v11994
        %v12211 = vunpack.c.l.b16 %v11995
        %v12212 = vunpack.c.l.b16 %v11996
        %v12213 = vunpack.c.l.b16 %v11997
        %v12214 = vunpack.c.l.b16 %v11998
        %v12215 = vunpack.c.l.b16 %v11999
        %v12216 = vunpack.c.l.b16 %v12000
        %v12217 = vpack.c.b16 %v12110, %v12109
        %v12218 = vpack.c.b16 %v12112, %v12111
        %v12219 = vpack.c.b16 %v12114, %v12113
        %v12220 = vpack.c.b16 %v12116, %v12115
        %v12221 = vpack.c.b16 %v12118, %v12117
        %v12222 = vpack.c.b16 %v12120, %v12119
        %v12223 = vpack.c.b16 %v12122, %v12121
        %v12224 = vpack.c.b16 %v12124, %v12123
        %v12225 = vpack.c.b16 %v12126, %v12125
        %v12226 = vpack.c.b16 %v12128, %v12127
        %v12227 = vpack.c.b16 %v12130, %v12129
        %v12228 = vpack.c.b16 %v12132, %v12131
        %v12229 = vpack.c.b16 %v12134, %v12133
        %v12230 = vpack.c.b16 %v12136, %v12135
        %v12231 = vpack.c.b16 %v12138, %v12137
        %v12232 = vpack.c.b16 %v12140, %v12139
        %v12233 = vpack.c.b16 %v12142, %v12141
        %v12234 = vpack.c.b16 %v12144, %v12143
        %v12235 = vpack.c.b16 %v12146, %v12145
        %v12236 = vpack.c.b16 %v12148, %v12147
        %v12237 = vpack.c.b16 %v12150, %v12149
        %v12238 = vpack.c.b16 %v12152, %v12151
        %v12239 = vpack.c.b16 %v12154, %v12153
        %v12240 = vpack.c.b16 %v12156, %v12155
        %v12241 = vpack.c.b16 %v12158, %v12157
        %v12242 = vpack.c.b16 %v12160, %v12159
        %v12243 = vpack.c.b16 %v12162, %v12161
        %v12244 = vpack.c.b16 %v12164, %v12163
        %v12245 = vpack.c.b16 %v12166, %v12165
        %v12246 = vpack.c.b16 %v12168, %v12167
        %v12247 = vpack.c.b16 %v12170, %v12169
        %v12248 = vpack.c.b16 %v12172, %v12171
        %v12249 = vpack.c.b16 %v12174, %v12173
        %v12250 = vpack.c.b16 %v12176, %v12175
        %v12251 = vpack.c.b16 %v12178, %v12177
        %v12252 = vpack.c.b16 %v12180, %v12179
        %v12253 = vpack.c.b16 %v12182, %v12181
        %v12254 = vpack.c.b16 %v12184, %v12183
        %v12255 = vpack.c.b16 %v12186, %v12185
        %v12256 = vpack.c.b16 %v12188, %v12187
        %v12257 = vpack.c.b16 %v12190, %v12189
        %v12258 = vpack.c.b16 %v12192, %v12191
        %v12259 = vpack.c.b16 %v12194, %v12193
        %v12260 = vpack.c.b16 %v12196, %v12195
        %v12261 = vpack.c.b16 %v12198, %v12197
        %v12262 = vpack.c.b16 %v12200, %v12199
        %v12263 = vpack.c.b16 %v12202, %v12201
        %v12264 = vpack.c.b16 %v12204, %v12203
        %v12265 = vpack.c.b16 %v12206, %v12205
        %v12266 = vpack.c.b16 %v12208, %v12207
        %v12267 = vpack.c.b16 %v12210, %v12209
        %v12268 = vpack.c.b16 %v12212, %v12211
        %v12269 = vpack.c.b16 %v12214, %v12213
        %v12270 = vpack.c.b16 %v12216, %v12215
        %v12326 = vsel %vm11588, %v11371, 0
        %v12329 = vsel %vm11588, %v11374, 0
        %v12332 = vsel %vm11588, %v11377, 0
        %v12335 = vsel %vm11588, %v11380, 0
        %v12338 = vsel %vm11588, %v11383, 0
        %v12341 = vsel %vm11588, %v11386, 0
        %v12344 = vsel %vm11588, %v11389, 0
        %v12347 = vsel %vm11588, %v11392, 0
        %v12350 = vsel %vm11588, %v11395, 0
        %v12353 = vsel %vm11588, %v11398, 0
        %v12356 = vsel %vm11588, %v11401, 0
        %v12359 = vsel %vm11588, %v11404, 0
        %v12362 = vsel %vm11588, %v11407, 0
        %v12365 = vsel %vm11588, %v11410, 0
        %v12368 = vsel %vm11588, %v11491, 0
        %v12370 = vsel %vm11588, %v1228, 0
        %12372 = vmatprep.subr.bf16.mxu0 0
        %12373 = vmatpush1.bf16.msra.mxu0 %v12217
        %12374 = vmatprep.subr.bf16.mxu0 0
        %12375 = vmatpush1.bf16.msra.mxu0 %v12218
        %12376 = vmatprep.subr.bf16.mxu0 0
        %12377 = vmatpush1.bf16.msra.mxu0 %v12219
        %12378 = vmatprep.subr.bf16.mxu0 0
        %12379 = vmatpush1.bf16.msra.mxu0 %v12220
        %12380 = vmatprep.subr.bf16.mxu0 0
        %12381 = vmatpush1.bf16.msra.mxu0 %v12221
        %12382 = vmatprep.subr.bf16.mxu0 0
        %12383 = vmatpush1.bf16.msra.mxu0 %v12222
        %12384 = vmatprep.subr.bf16.mxu0 0
        %12385 = vmatpush1.bf16.msra.mxu0 %v12223
        %12386 = vmatprep.subr.bf16.mxu0 0
        %12387 = vmatpush1.bf16.msra.mxu0 %v12224
        %12388 = vmatprep.subr.bf16.mxu0 0
        %12389 = vmatpush1.bf16.msra.mxu0 %v12225
        %12390 = vmatprep.subr.bf16.mxu0 0
        %12391 = vmatpush1.bf16.msra.mxu0 %v12226
        %12392 = vmatprep.subr.bf16.mxu0 0
        %12393 = vmatpush1.bf16.msra.mxu0 %v12227
        %12394 = vmatprep.subr.bf16.mxu0 0
        %12395 = vmatpush1.bf16.msra.mxu0 %v12228
        %12396 = vmatprep.subr.bf16.mxu0 0
        %12397 = vmatpush1.bf16.msra.mxu0 %v12229
        %12398 = vmatprep.subr.bf16.mxu0 0
        %12399 = vmatpush1.bf16.msra.mxu0 %v12230
        %12400 = vmatprep.subr.bf16.mxu0 0
        %12401 = vmatpush1.bf16.msra.mxu0 %v12231
        %12402 = vmatprep.subr.bf16.mxu0 0
        %12403 = vmatpush1.bf16.msra.mxu0 %v12232
        %12404 = vmatprep.mubr.bf16.mxu0 %v11638
        %12405 = vmatmul.mubr.bf16.gmra.mrb[0].mxu0 %v11590
        %v12406 = vpop.f32.mrb[0].mxu0
        %v12407 = vadd.f32 0.0, %v12406
        %v12408 = vpop.f32.mrb[0].mxu0
        %v12409 = vpop.f32.mrb[0].mxu0
        %v12410 = vadd.f32 0.0, %v12409
        %v12411 = vpop.f32.mrb[0].mxu0
        %12412 = vmatprep.mubr.bf16.mxu0 %v11641
        %12413 = vmatmul.mubr.bf16.gmra.mrb[0].mxu0 %v11593
        %v12414 = vpop.f32.mrb[0].mxu0
        %v12415 = vadd.f32 0.0, %v12414
        %v12416 = vpop.f32.mrb[0].mxu0
        %v12417 = vpop.f32.mrb[0].mxu0
        %v12418 = vadd.f32 0.0, %v12417
        %v12419 = vpop.f32.mrb[0].mxu0
        %12420 = vmatprep.mubr.bf16.mxu0 %v11644
        %12421 = vmatmul.mubr.bf16.gmra.mrb[0].mxu0 %v11596
        %v12422 = vpop.f32.mrb[0].mxu0
        %v12423 = vadd.f32 0.0, %v12422
        %v12424 = vpop.f32.mrb[0].mxu0
        %v12425 = vpop.f32.mrb[0].mxu0
        %v12426 = vadd.f32 0.0, %v12425
        %v12427 = vpop.f32.mrb[0].mxu0
        %12428 = vmatprep.mubr.bf16.mxu0 %v11647
        %12429 = vmatmul.mubr.bf16.gmra.mrb[0].mxu0 %v11599
        %v12430 = vpop.f32.mrb[0].mxu0
        %v12431 = vadd.f32 0.0, %v12430
        %v12432 = vpop.f32.mrb[0].mxu0
        %v12433 = vpop.f32.mrb[0].mxu0
        %v12434 = vadd.f32 0.0, %v12433
        %v12435 = vpop.f32.mrb[0].mxu0
        %12436 = vmatprep.mubr.bf16.mxu0 %v11650
        %12437 = vmatmul.mubr.bf16.gmra.mrb[0].mxu0 %v11602
        %v12438 = vpop.f32.mrb[0].mxu0
        %v12439 = vadd.f32 0.0, %v12438
        %v12440 = vpop.f32.mrb[0].mxu0
        %v12441 = vpop.f32.mrb[0].mxu0
        %v12442 = vadd.f32 0.0, %v12441
        %v12443 = vpop.f32.mrb[0].mxu0
        %12444 = vmatprep.mubr.bf16.mxu0 %v11653
        %12445 = vmatmul.mubr.bf16.gmra.mrb[0].mxu0 %v11605
        %v12446 = vpop.f32.mrb[0].mxu0
        %v12447 = vadd.f32 0.0, %v12446
        %v12448 = vpop.f32.mrb[0].mxu0
        %v12449 = vpop.f32.mrb[0].mxu0
        %v12450 = vadd.f32 0.0, %v12449
        %v12451 = vpop.f32.mrb[0].mxu0
        %12452 = vmatprep.mubr.bf16.mxu0 %v11656
        %12453 = vmatmul.mubr.bf16.gmra.mrb[0].mxu0 %v11608
        %v12454 = vpop.f32.mrb[0].mxu0
        %v12455 = vadd.f32 0.0, %v12454
        %v12456 = vpop.f32.mrb[0].mxu0
        %v12457 = vpop.f32.mrb[0].mxu0
        %v12458 = vadd.f32 0.0, %v12457
        %v12459 = vpop.f32.mrb[0].mxu0
        %12460 = vmatprep.mubr.bf16.mxu0 %v11659
        %12461 = vmatmul.mubr.bf16.gmra.mrb[0].mxu0 %v11611
        %v12462 = vpop.f32.mrb[0].mxu0
        %v12463 = vadd.f32 0.0, %v12462
        %v12464 = vpop.f32.mrb[0].mxu0
        %v12465 = vpop.f32.mrb[0].mxu0
        %v12466 = vadd.f32 0.0, %v12465
        %v12467 = vpop.f32.mrb[0].mxu0
        %12468 = vmatprep.mubr.bf16.mxu0 %v11662
        %12469 = vmatmul.mubr.bf16.gmra.mrb[0].mxu0 %v11614
        %v12470 = vpop.f32.mrb[0].mxu0
        %v12471 = vadd.f32 0.0, %v12470
        %v12472 = vpop.f32.mrb[0].mxu0
        %v12473 = vpop.f32.mrb[0].mxu0
        %v12474 = vadd.f32 0.0, %v12473
        %v12475 = vpop.f32.mrb[0].mxu0
        %12476 = vmatprep.mubr.bf16.mxu0 %v11665
        %12477 = vmatmul.mubr.bf16.gmra.mrb[0].mxu0 %v11617
        %v12478 = vpop.f32.mrb[0].mxu0
        %v12479 = vadd.f32 0.0, %v12478
        %v12480 = vpop.f32.mrb[0].mxu0
        %v12481 = vpop.f32.mrb[0].mxu0
        %v12482 = vadd.f32 0.0, %v12481
        %v12483 = vpop.f32.mrb[0].mxu0
        %12484 = vmatprep.mubr.bf16.mxu0 %v11668
        %12485 = vmatmul.mubr.bf16.gmra.mrb[0].mxu0 %v11620
        %v12486 = vpop.f32.mrb[0].mxu0
        %v12487 = vadd.f32 0.0, %v12486
        %v12488 = vpop.f32.mrb[0].mxu0
        %v12489 = vpop.f32.mrb[0].mxu0
        %v12490 = vadd.f32 0.0, %v12489
        %v12491 = vpop.f32.mrb[0].mxu0
        %12492 = vmatprep.mubr.bf16.mxu0 %v11671
        %12493 = vmatmul.mubr.bf16.gmra.mrb[0].mxu0 %v11623
        %v12494 = vpop.f32.mrb[0].mxu0
        %v12495 = vadd.f32 0.0, %v12494
        %v12496 = vpop.f32.mrb[0].mxu0
        %v12497 = vpop.f32.mrb[0].mxu0
        %v12498 = vadd.f32 0.0, %v12497
        %v12499 = vpop.f32.mrb[0].mxu0
        %12500 = vmatprep.mubr.bf16.mxu0 %v11674
        %12501 = vmatmul.mubr.bf16.gmra.mrb[0].mxu0 %v11626
        %v12502 = vpop.f32.mrb[0].mxu0
        %v12503 = vadd.f32 0.0, %v12502
        %v12504 = vpop.f32.mrb[0].mxu0
        %v12505 = vpop.f32.mrb[0].mxu0
        %v12506 = vadd.f32 0.0, %v12505
        %v12507 = vpop.f32.mrb[0].mxu0
        %12508 = vmatprep.mubr.bf16.mxu0 %v11677
        %12509 = vmatmul.mubr.bf16.gmra.mrb[0].mxu0 %v11629
        %v12510 = vpop.f32.mrb[0].mxu0
        %v12511 = vadd.f32 0.0, %v12510
        %v12512 = vpop.f32.mrb[0].mxu0
        %v12513 = vpop.f32.mrb[0].mxu0
        %v12514 = vadd.f32 0.0, %v12513
        %v12515 = vpop.f32.mrb[0].mxu0
        %12516 = vmatprep.mubr.bf16.mxu0 %v11680
        %12517 = vmatmul.mubr.bf16.gmra.mrb[0].mxu0 %v11632
        %v12518 = vpop.f32.mrb[0].mxu0
        %v12519 = vadd.f32 0.0, %v12518
        %v12520 = vpop.f32.mrb[0].mxu0
        %v12521 = vpop.f32.mrb[0].mxu0
        %v12522 = vadd.f32 0.0, %v12521
        %v12523 = vpop.f32.mrb[0].mxu0
        %12524 = vmatprep.mubr.bf16.mxu0 %v11683
        %12525 = vmatmul.mubr.bf16.gmra.mrb[0].mxu0 %v11635
        %v12526 = vpop.f32.mrb[0].mxu0
        %v12527 = vadd.f32 0.0, %v12526
        %v12528 = vpop.f32.mrb[0].mxu0
        %v12529 = vpop.f32.mrb[0].mxu0
        %v12530 = vadd.f32 0.0, %v12529
        %v12531 = vpop.f32.mrb[0].mxu0
        %12532 = vdwg.mxu0
        %12533 = vmatprep.subr.bf16.mxu0 0
        %12534 = vmatpush1.bf16.msra.mxu0 %v12233
        %12535 = vmatprep.subr.bf16.mxu0 0
        %12536 = vmatpush1.bf16.msra.mxu0 %v12234
        %12537 = vmatprep.subr.bf16.mxu0 0
        %12538 = vmatpush1.bf16.msra.mxu0 %v12235
        %12539 = vmatprep.subr.bf16.mxu0 0
        %12540 = vmatpush1.bf16.msra.mxu0 %v12236
        %12541 = vmatprep.subr.bf16.mxu0 0
        %12542 = vmatpush1.bf16.msra.mxu0 %v12237
        %12543 = vmatprep.subr.bf16.mxu0 0
        %12544 = vmatpush1.bf16.msra.mxu0 %v12238
        %12545 = vmatprep.subr.bf16.mxu0 0
        %12546 = vmatpush1.bf16.msra.mxu0 %v12239
        %12547 = vmatprep.subr.bf16.mxu0 0
        %12548 = vmatpush1.bf16.msra.mxu0 %v12240
        %12549 = vmatprep.subr.bf16.mxu0 0
        %12550 = vmatpush1.bf16.msra.mxu0 %v12241
        %12551 = vmatprep.subr.bf16.mxu0 0
        %12552 = vmatpush1.bf16.msra.mxu0 %v12242
        %12553 = vmatprep.subr.bf16.mxu0 0
        %12554 = vmatpush1.bf16.msra.mxu0 %v12243
        %12555 = vmatprep.subr.bf16.mxu0 0
        %12556 = vmatpush1.bf16.msra.mxu0 %v12244
        %12557 = vmatprep.subr.bf16.mxu0 0
        %12558 = vmatpush1.bf16.msra.mxu0 %v12245
        %12559 = vmatprep.subr.bf16.mxu0 0
        %12560 = vmatpush1.bf16.msra.mxu0 %v12246
        %12561 = vmatprep.subr.bf16.mxu0 0
        %12562 = vmatpush1.bf16.msra.mxu0 %v12247
        %12563 = vmatprep.subr.bf16.mxu0 0
        %12564 = vmatpush1.bf16.msra.mxu0 %v12248
        %12565 = vmatprep.mubr.bf16.mxu0 %v11735
        %12566 = vmatmul.mubr.bf16.gmra.mrb[0].mxu0 %v11686
        %v12567 = vpop.f32.mrb[0].mxu0
        %v12568 = vadd.f32 %v12407, %v12567
        %v12569 = vpop.f32.mrb[0].mxu0
        %v12570 = vpop.f32.mrb[0].mxu0
        %v12571 = vadd.f32 %v12410, %v12570
        %v12572 = vpop.f32.mrb[0].mxu0
        %12573 = vmatprep.mubr.bf16.mxu0 %v11739
        %12574 = vmatmul.mubr.bf16.gmra.mrb[0].mxu0 %v11689
        %v12575 = vpop.f32.mrb[0].mxu0
        %v12576 = vadd.f32 %v12415, %v12575
        %v12577 = vpop.f32.mrb[0].mxu0
        %v12578 = vpop.f32.mrb[0].mxu0
        %v12579 = vadd.f32 %v12418, %v12578
        %v12580 = vpop.f32.mrb[0].mxu0
        %12581 = vmatprep.mubr.bf16.mxu0 %v11743
        %12582 = vmatmul.mubr.bf16.gmra.mrb[0].mxu0 %v11692
        %v12583 = vpop.f32.mrb[0].mxu0
        %v12584 = vadd.f32 %v12423, %v12583
        %v12585 = vpop.f32.mrb[0].mxu0
        %v12586 = vpop.f32.mrb[0].mxu0
        %v12587 = vadd.f32 %v12426, %v12586
        %v12588 = vpop.f32.mrb[0].mxu0
        %12589 = vmatprep.mubr.bf16.mxu0 %v11747
        %12590 = vmatmul.mubr.bf16.gmra.mrb[0].mxu0 %v11695
        %v12591 = vpop.f32.mrb[0].mxu0
        %v12592 = vadd.f32 %v12431, %v12591
        %v12593 = vpop.f32.mrb[0].mxu0
        %v12594 = vpop.f32.mrb[0].mxu0
        %v12595 = vadd.f32 %v12434, %v12594
        %v12596 = vpop.f32.mrb[0].mxu0
        %12597 = vmatprep.mubr.bf16.mxu0 %v11751
        %12598 = vmatmul.mubr.bf16.gmra.mrb[0].mxu0 %v11698
        %v12599 = vpop.f32.mrb[0].mxu0
        %v12600 = vadd.f32 %v12439, %v12599
        %v12601 = vpop.f32.mrb[0].mxu0
        %v12602 = vpop.f32.mrb[0].mxu0
        %v12603 = vadd.f32 %v12442, %v12602
        %v12604 = vpop.f32.mrb[0].mxu0
        %12605 = vmatprep.mubr.bf16.mxu0 %v11755
        %12606 = vmatmul.mubr.bf16.gmra.mrb[0].mxu0 %v11701
        %v12607 = vpop.f32.mrb[0].mxu0
        %v12608 = vadd.f32 %v12447, %v12607
        %v12609 = vpop.f32.mrb[0].mxu0
        %v12610 = vpop.f32.mrb[0].mxu0
        %v12611 = vadd.f32 %v12450, %v12610
        %v12612 = vpop.f32.mrb[0].mxu0
        %12613 = vmatprep.mubr.bf16.mxu0 %v11759
        %12614 = vmatmul.mubr.bf16.gmra.mrb[0].mxu0 %v11704
        %v12615 = vpop.f32.mrb[0].mxu0
        %v12616 = vadd.f32 %v12455, %v12615
        %v12617 = vpop.f32.mrb[0].mxu0
        %v12618 = vpop.f32.mrb[0].mxu0
        %v12619 = vadd.f32 %v12458, %v12618
        %v12620 = vpop.f32.mrb[0].mxu0
        %12621 = vmatprep.mubr.bf16.mxu0 %v11763
        %12622 = vmatmul.mubr.bf16.gmra.mrb[0].mxu0 %v11707
        %v12623 = vpop.f32.mrb[0].mxu0
        %v12624 = vadd.f32 %v12463, %v12623
        %v12625 = vpop.f32.mrb[0].mxu0
        %v12626 = vpop.f32.mrb[0].mxu0
        %v12627 = vadd.f32 %v12466, %v12626
        %v12628 = vpop.f32.mrb[0].mxu0
        %12629 = vmatprep.mubr.bf16.mxu0 %v11767
        %12630 = vmatmul.mubr.bf16.gmra.mrb[0].mxu0 %v11710
        %v12631 = vpop.f32.mrb[0].mxu0
        %v12632 = vadd.f32 %v12471, %v12631
        %v12633 = vpop.f32.mrb[0].mxu0
        %v12634 = vpop.f32.mrb[0].mxu0
        %v12635 = vadd.f32 %v12474, %v12634
        %v12636 = vpop.f32.mrb[0].mxu0
        %12637 = vmatprep.mubr.bf16.mxu0 %v11771
        %12638 = vmatmul.mubr.bf16.gmra.mrb[0].mxu0 %v11713
        %v12639 = vpop.f32.mrb[0].mxu0
        %v12640 = vadd.f32 %v12479, %v12639
        %v12641 = vpop.f32.mrb[0].mxu0
        %v12642 = vpop.f32.mrb[0].mxu0
        %v12643 = vadd.f32 %v12482, %v12642
        %v12644 = vpop.f32.mrb[0].mxu0
        %12645 = vmatprep.mubr.bf16.mxu0 %v11775
        %12646 = vmatmul.mubr.bf16.gmra.mrb[0].mxu0 %v11716
        %v12647 = vpop.f32.mrb[0].mxu0
        %v12648 = vadd.f32 %v12487, %v12647
        %v12649 = vpop.f32.mrb[0].mxu0
        %v12650 = vpop.f32.mrb[0].mxu0
        %v12651 = vadd.f32 %v12490, %v12650
        %v12652 = vpop.f32.mrb[0].mxu0
        %12653 = vmatprep.mubr.bf16.mxu0 %v11779
        %12654 = vmatmul.mubr.bf16.gmra.mrb[0].mxu0 %v11719
        %v12655 = vpop.f32.mrb[0].mxu0
        %v12656 = vadd.f32 %v12495, %v12655
        %v12657 = vpop.f32.mrb[0].mxu0
        %v12658 = vpop.f32.mrb[0].mxu0
        %v12659 = vadd.f32 %v12498, %v12658
        %v12660 = vpop.f32.mrb[0].mxu0
        %12661 = vmatprep.mubr.bf16.mxu0 %v11783
        %12662 = vmatmul.mubr.bf16.gmra.mrb[0].mxu0 %v11722
        %v12663 = vpop.f32.mrb[0].mxu0
        %v12664 = vadd.f32 %v12503, %v12663
        %v12665 = vpop.f32.mrb[0].mxu0
        %v12666 = vpop.f32.mrb[0].mxu0
        %v12667 = vadd.f32 %v12506, %v12666
        %v12668 = vpop.f32.mrb[0].mxu0
        %12669 = vmatprep.mubr.bf16.mxu0 %v11787
        %12670 = vmatmul.mubr.bf16.gmra.mrb[0].mxu0 %v11725
        %v12671 = vpop.f32.mrb[0].mxu0
        %v12672 = vadd.f32 %v12511, %v12671
        %v12673 = vpop.f32.mrb[0].mxu0
        %v12674 = vpop.f32.mrb[0].mxu0
        %v12675 = vadd.f32 %v12514, %v12674
        %v12676 = vpop.f32.mrb[0].mxu0
        %12677 = vmatprep.mubr.bf16.mxu0 %v11791
        %12678 = vmatmul.mubr.bf16.gmra.mrb[0].mxu0 %v11728
        %v12679 = vpop.f32.mrb[0].mxu0
        %v12680 = vadd.f32 %v12519, %v12679
        %v12681 = vpop.f32.mrb[0].mxu0
        %v12682 = vpop.f32.mrb[0].mxu0
        %v12683 = vadd.f32 %v12522, %v12682
        %v12684 = vpop.f32.mrb[0].mxu0
        %12685 = vmatprep.mubr.bf16.mxu0 %v11795
        %12686 = vmatmul.mubr.bf16.gmra.mrb[0].mxu0 %v11731
        %v12687 = vpop.f32.mrb[0].mxu0
        %v12688 = vadd.f32 %v12527, %v12687
        %v12689 = vpop.f32.mrb[0].mxu0
        %v12690 = vpop.f32.mrb[0].mxu0
        %v12691 = vadd.f32 %v12530, %v12690
        %v12692 = vpop.f32.mrb[0].mxu0
        %12693 = vdwg.mxu0
        %12694 = vmatprep.subr.bf16.mxu0 0
        %12695 = vmatpush1.bf16.msra.mxu0 %v12249
        %12696 = vmatprep.subr.bf16.mxu0 0
        %12697 = vmatpush1.bf16.msra.mxu0 %v12250
        %12698 = vmatprep.subr.bf16.mxu0 0
        %12699 = vmatpush1.bf16.msra.mxu0 %v12251
        %12700 = vmatprep.subr.bf16.mxu0 0
        %12701 = vmatpush1.bf16.msra.mxu0 %v12252
        %12702 = vmatprep.subr.bf16.mxu0 0
        %12703 = vmatpush1.bf16.msra.mxu0 %v12253
        %12704 = vmatprep.subr.bf16.mxu0 0
        %12705 = vmatpush1.bf16.msra.mxu0 %v12254
        %12706 = vmatprep.subr.bf16.mxu0 0
        %12707 = vmatpush1.bf16.msra.mxu0 %v12255
        %12708 = vmatprep.subr.bf16.mxu0 0
        %12709 = vmatpush1.bf16.msra.mxu0 %v12256
        %12710 = vmatprep.subr.bf16.mxu0 0
        %12711 = vmatpush1.bf16.msra.mxu0 %v12257
        %12712 = vmatprep.subr.bf16.mxu0 0
        %12713 = vmatpush1.bf16.msra.mxu0 %v12258
        %12714 = vmatprep.subr.bf16.mxu0 0
        %12715 = vmatpush1.bf16.msra.mxu0 %v12259
        %12716 = vmatprep.subr.bf16.mxu0 0
        %12717 = vmatpush1.bf16.msra.mxu0 %v12260
        %12718 = vmatprep.subr.bf16.mxu0 0
        %12719 = vmatpush1.bf16.msra.mxu0 %v12261
        %12720 = vmatprep.subr.bf16.mxu0 0
        %12721 = vmatpush1.bf16.msra.mxu0 %v12262
        %12722 = vmatprep.subr.bf16.mxu0 0
        %12723 = vmatpush1.bf16.msra.mxu0 %v12263
        %12724 = vmatprep.subr.bf16.mxu0 0
        %12725 = vmatpush1.bf16.msra.mxu0 %v12264
        %12726 = vmatprep.mubr.bf16.mxu0 %v11846
        %12727 = vmatmul.mubr.bf16.gmra.mrb[0].mxu0 %v11798
        %v12728 = vpop.f32.mrb[0].mxu0
        %v12729 = vadd.f32 %v12568, %v12728
        %v12730 = vpop.f32.mrb[0].mxu0
        %v12731 = vpop.f32.mrb[0].mxu0
        %v12732 = vadd.f32 %v12571, %v12731
        %v12733 = vpop.f32.mrb[0].mxu0
        %12734 = vmatprep.mubr.bf16.mxu0 %v11849
        %12735 = vmatmul.mubr.bf16.gmra.mrb[0].mxu0 %v11801
        %v12736 = vpop.f32.mrb[0].mxu0
        %v12737 = vadd.f32 %v12576, %v12736
        %v12738 = vpop.f32.mrb[0].mxu0
        %v12739 = vpop.f32.mrb[0].mxu0
        %v12740 = vadd.f32 %v12579, %v12739
        %v12741 = vpop.f32.mrb[0].mxu0
        %12742 = vmatprep.mubr.bf16.mxu0 %v11852
        %12743 = vmatmul.mubr.bf16.gmra.mrb[0].mxu0 %v11804
        %v12744 = vpop.f32.mrb[0].mxu0
        %v12745 = vadd.f32 %v12584, %v12744
        %v12746 = vpop.f32.mrb[0].mxu0
        %v12747 = vpop.f32.mrb[0].mxu0
        %v12748 = vadd.f32 %v12587, %v12747
        %v12749 = vpop.f32.mrb[0].mxu0
        %12750 = vmatprep.mubr.bf16.mxu0 %v11855
        %12751 = vmatmul.mubr.bf16.gmra.mrb[0].mxu0 %v11807
        %v12752 = vpop.f32.mrb[0].mxu0
        %v12753 = vadd.f32 %v12592, %v12752
        %v12754 = vpop.f32.mrb[0].mxu0
        %v12755 = vpop.f32.mrb[0].mxu0
        %v12756 = vadd.f32 %v12595, %v12755
        %v12757 = vpop.f32.mrb[0].mxu0
        %12758 = vmatprep.mubr.bf16.mxu0 %v11858
        %12759 = vmatmul.mubr.bf16.gmra.mrb[0].mxu0 %v11810
        %v12760 = vpop.f32.mrb[0].mxu0
        %v12761 = vadd.f32 %v12600, %v12760
        %v12762 = vpop.f32.mrb[0].mxu0
        %v12763 = vpop.f32.mrb[0].mxu0
        %v12764 = vadd.f32 %v12603, %v12763
        %v12765 = vpop.f32.mrb[0].mxu0
        %12766 = vmatprep.mubr.bf16.mxu0 %v11861
        %12767 = vmatmul.mubr.bf16.gmra.mrb[0].mxu0 %v11813
        %v12768 = vpop.f32.mrb[0].mxu0
        %v12769 = vadd.f32 %v12608, %v12768
        %v12770 = vpop.f32.mrb[0].mxu0
        %v12771 = vpop.f32.mrb[0].mxu0
        %v12772 = vadd.f32 %v12611, %v12771
        %v12773 = vpop.f32.mrb[0].mxu0
        %12774 = vmatprep.mubr.bf16.mxu0 %v11864
        %12775 = vmatmul.mubr.bf16.gmra.mrb[0].mxu0 %v11816
        %v12776 = vpop.f32.mrb[0].mxu0
        %v12777 = vadd.f32 %v12616, %v12776
        %v12778 = vpop.f32.mrb[0].mxu0
        %v12779 = vpop.f32.mrb[0].mxu0
        %v12780 = vadd.f32 %v12619, %v12779
        %v12781 = vpop.f32.mrb[0].mxu0
        %12782 = vmatprep.mubr.bf16.mxu0 %v11867
        %12783 = vmatmul.mubr.bf16.gmra.mrb[0].mxu0 %v11819
        %v12784 = vpop.f32.mrb[0].mxu0
        %v12785 = vadd.f32 %v12624, %v12784
        %v12786 = vpop.f32.mrb[0].mxu0
        %v12787 = vpop.f32.mrb[0].mxu0
        %v12788 = vadd.f32 %v12627, %v12787
        %v12789 = vpop.f32.mrb[0].mxu0
        %12790 = vmatprep.mubr.bf16.mxu0 %v11870
        %12791 = vmatmul.mubr.bf16.gmra.mrb[0].mxu0 %v11822
        %v12792 = vpop.f32.mrb[0].mxu0
        %v12793 = vadd.f32 %v12632, %v12792
        %v12794 = vpop.f32.mrb[0].mxu0
        %v12795 = vpop.f32.mrb[0].mxu0
        %v12796 = vadd.f32 %v12635, %v12795
        %v12797 = vpop.f32.mrb[0].mxu0
        %12798 = vmatprep.mubr.bf16.mxu0 %v11873
        %12799 = vmatmul.mubr.bf16.gmra.mrb[0].mxu0 %v11825
        %v12800 = vpop.f32.mrb[0].mxu0
        %v12801 = vadd.f32 %v12640, %v12800
        %v12802 = vpop.f32.mrb[0].mxu0
        %v12803 = vpop.f32.mrb[0].mxu0
        %v12804 = vadd.f32 %v12643, %v12803
        %v12805 = vpop.f32.mrb[0].mxu0
        %12806 = vmatprep.mubr.bf16.mxu0 %v11876
        %12807 = vmatmul.mubr.bf16.gmra.mrb[0].mxu0 %v11828
        %v12808 = vpop.f32.mrb[0].mxu0
        %v12809 = vadd.f32 %v12648, %v12808
        %v12810 = vpop.f32.mrb[0].mxu0
        %v12811 = vpop.f32.mrb[0].mxu0
        %v12812 = vadd.f32 %v12651, %v12811
        %v12813 = vpop.f32.mrb[0].mxu0
        %12814 = vmatprep.mubr.bf16.mxu0 %v11879
        %12815 = vmatmul.mubr.bf16.gmra.mrb[0].mxu0 %v11831
        %v12816 = vpop.f32.mrb[0].mxu0
        %v12817 = vadd.f32 %v12656, %v12816
        %v12818 = vpop.f32.mrb[0].mxu0
        %v12819 = vpop.f32.mrb[0].mxu0
        %v12820 = vadd.f32 %v12659, %v12819
        %v12821 = vpop.f32.mrb[0].mxu0
        %12822 = vmatprep.mubr.bf16.mxu0 %v11882
        %12823 = vmatmul.mubr.bf16.gmra.mrb[0].mxu0 %v11834
        %v12824 = vpop.f32.mrb[0].mxu0
        %v12825 = vadd.f32 %v12664, %v12824
        %v12826 = vpop.f32.mrb[0].mxu0
        %v12827 = vpop.f32.mrb[0].mxu0
        %v12828 = vadd.f32 %v12667, %v12827
        %v12829 = vpop.f32.mrb[0].mxu0
        %12830 = vmatprep.mubr.bf16.mxu0 %v11885
        %12831 = vmatmul.mubr.bf16.gmra.mrb[0].mxu0 %v11837
        %v12832 = vpop.f32.mrb[0].mxu0
        %v12833 = vadd.f32 %v12672, %v12832
        %v12834 = vpop.f32.mrb[0].mxu0
        %v12835 = vpop.f32.mrb[0].mxu0
        %v12836 = vadd.f32 %v12675, %v12835
        %v12837 = vpop.f32.mrb[0].mxu0
        %12838 = vmatprep.mubr.bf16.mxu0 %v11888
        %12839 = vmatmul.mubr.bf16.gmra.mrb[0].mxu0 %v11840
        %v12840 = vpop.f32.mrb[0].mxu0
        %v12841 = vadd.f32 %v12680, %v12840
        %v12842 = vpop.f32.mrb[0].mxu0
        %v12843 = vpop.f32.mrb[0].mxu0
        %v12844 = vadd.f32 %v12683, %v12843
        %v12845 = vpop.f32.mrb[0].mxu0
        %12846 = vmatprep.mubr.bf16.mxu0 %v11891
        %12847 = vmatmul.mubr.bf16.gmra.mrb[0].mxu0 %v11843
        %v12848 = vpop.f32.mrb[0].mxu0
        %v12849 = vadd.f32 %v12688, %v12848
        %v12850 = vpop.f32.mrb[0].mxu0
        %v12851 = vpop.f32.mrb[0].mxu0
        %v12852 = vadd.f32 %v12691, %v12851
        %v12853 = vpop.f32.mrb[0].mxu0
        %12854 = vdwg.mxu0
        %12855 = vmatprep.subr.bf16.mxu0 0
        %12856 = vmatpush1.bf16.msra.mxu0 %v12265
        %12857 = vmatprep.subr.bf16.mxu0 0
        %12858 = vmatpush1.bf16.msra.mxu0 %v12266
        %12859 = vmatprep.subr.bf16.mxu0 0
        %12860 = vmatpush1.bf16.msra.mxu0 %v12267
        %12861 = vmatprep.subr.bf16.mxu0 0
        %12862 = vmatpush1.bf16.msra.mxu0 %v12268
        %12863 = vmatprep.subr.bf16.mxu0 0
        %12864 = vmatpush1.bf16.msra.mxu0 %v12269
        %12865 = vmatprep.subr.bf16.mxu0 0
        %12866 = vmatpush1.bf16.msra.mxu0 %v12270
        %12867 = vmatprep.subr.bf16.mxu0 0
        %12868 = vmatpush1.bf16.msra.mxu0 0
        %12869 = vmatprep.subr.bf16.mxu0 0
        %12870 = vmatpush1.bf16.msra.mxu0 0
        %12871 = vmatprep.subr.bf16.mxu0 0
        %12872 = vmatpush1.bf16.msra.mxu0 0
        %12873 = vmatprep.subr.bf16.mxu0 0
        %12874 = vmatpush1.bf16.msra.mxu0 0
        %12875 = vmatprep.subr.bf16.mxu0 0
        %12876 = vmatpush1.bf16.msra.mxu0 0
        %12877 = vmatprep.subr.bf16.mxu0 0
        %12878 = vmatpush1.bf16.msra.mxu0 0
        %12879 = vmatprep.subr.bf16.mxu0 0
        %12880 = vmatpush1.bf16.msra.mxu0 0
        %12881 = vmatprep.subr.bf16.mxu0 0
        %12882 = vmatpush1.bf16.msra.mxu0 0
        %12883 = vmatprep.subr.bf16.mxu0 0
        %12884 = vmatpush1.bf16.msra.mxu0 0
        %12885 = vmatprep.subr.bf16.mxu0 0
        %12886 = vmatpush1.bf16.msra.mxu0 0
        %12887 = vmatprep.mubr.bf16.mxu0 0
        %12888 = vmatmul.mubr.bf16.gmra.mrb[0].mxu0 %v12326
        %v12889 = vpop.f32.mrb[0].mxu0
        %v12890 = vadd.f32 %v12729, %v12889
        %v12891 = vpop.f32.mrb[0].mxu0
        %v12892 = vpop.f32.mrb[0].mxu0
        %v12893 = vadd.f32 %v12732, %v12892
        %v12894 = vpop.f32.mrb[0].mxu0
        %12895 = vmatprep.mubr.bf16.mxu0 0
        %12896 = vmatmul.mubr.bf16.gmra.mrb[0].mxu0 %v12329
        %v12897 = vpop.f32.mrb[0].mxu0
        %v12898 = vadd.f32 %v12737, %v12897
        %v12899 = vpop.f32.mrb[0].mxu0
        %v12900 = vpop.f32.mrb[0].mxu0
        %v12901 = vadd.f32 %v12740, %v12900
        %v12902 = vpop.f32.mrb[0].mxu0
        %12903 = vmatprep.mubr.bf16.mxu0 0
        %12904 = vmatmul.mubr.bf16.gmra.mrb[0].mxu0 %v12332
        %v12905 = vpop.f32.mrb[0].mxu0
        %v12906 = vadd.f32 %v12745, %v12905
        %v12907 = vpop.f32.mrb[0].mxu0
        %v12908 = vpop.f32.mrb[0].mxu0
        %v12909 = vadd.f32 %v12748, %v12908
        %v12910 = vpop.f32.mrb[0].mxu0
        %12911 = vmatprep.mubr.bf16.mxu0 0
        %12912 = vmatmul.mubr.bf16.gmra.mrb[0].mxu0 %v12335
        %v12913 = vpop.f32.mrb[0].mxu0
        %v12914 = vadd.f32 %v12753, %v12913
        %v12915 = vpop.f32.mrb[0].mxu0
        %v12916 = vpop.f32.mrb[0].mxu0
        %v12917 = vadd.f32 %v12756, %v12916
        %v12918 = vpop.f32.mrb[0].mxu0
        %12919 = vmatprep.mubr.bf16.mxu0 0
        %12920 = vmatmul.mubr.bf16.gmra.mrb[0].mxu0 %v12338
        %v12921 = vpop.f32.mrb[0].mxu0
        %v12922 = vadd.f32 %v12761, %v12921
        %v12923 = vpop.f32.mrb[0].mxu0
        %v12924 = vpop.f32.mrb[0].mxu0
        %v12925 = vadd.f32 %v12764, %v12924
        %v12926 = vpop.f32.mrb[0].mxu0
        %12927 = vmatprep.mubr.bf16.mxu0 0
        %12928 = vmatmul.mubr.bf16.gmra.mrb[0].mxu0 %v12341
        %v12929 = vpop.f32.mrb[0].mxu0
        %v12930 = vadd.f32 %v12769, %v12929
        %v12931 = vpop.f32.mrb[0].mxu0
        %v12932 = vpop.f32.mrb[0].mxu0
        %v12933 = vadd.f32 %v12772, %v12932
        %v12934 = vpop.f32.mrb[0].mxu0
        %12935 = vmatprep.mubr.bf16.mxu0 0
        %12936 = vmatmul.mubr.bf16.gmra.mrb[0].mxu0 %v12344
        %v12937 = vpop.f32.mrb[0].mxu0
        %v12938 = vadd.f32 %v12777, %v12937
        %v12939 = vpop.f32.mrb[0].mxu0
        %v12940 = vpop.f32.mrb[0].mxu0
        %v12941 = vadd.f32 %v12780, %v12940
        %v12942 = vpop.f32.mrb[0].mxu0
        %12943 = vmatprep.mubr.bf16.mxu0 0
        %12944 = vmatmul.mubr.bf16.gmra.mrb[0].mxu0 %v12347
        %v12945 = vpop.f32.mrb[0].mxu0
        %v12946 = vadd.f32 %v12785, %v12945
        %v12947 = vpop.f32.mrb[0].mxu0
        %v12948 = vpop.f32.mrb[0].mxu0
        %v12949 = vadd.f32 %v12788, %v12948
        %v12950 = vpop.f32.mrb[0].mxu0
        %12951 = vmatprep.mubr.bf16.mxu0 0
        %12952 = vmatmul.mubr.bf16.gmra.mrb[0].mxu0 %v12350
        %v12953 = vpop.f32.mrb[0].mxu0
        %v12954 = vadd.f32 %v12793, %v12953
        %v12955 = vpop.f32.mrb[0].mxu0
        %v12956 = vpop.f32.mrb[0].mxu0
        %v12957 = vadd.f32 %v12796, %v12956
        %v12958 = vpop.f32.mrb[0].mxu0
        %12959 = vmatprep.mubr.bf16.mxu0 0
        %12960 = vmatmul.mubr.bf16.gmra.mrb[0].mxu0 %v12353
        %v12961 = vpop.f32.mrb[0].mxu0
        %v12962 = vadd.f32 %v12801, %v12961
        %v12963 = vpop.f32.mrb[0].mxu0
        %v12964 = vpop.f32.mrb[0].mxu0
        %v12965 = vadd.f32 %v12804, %v12964
        %v12966 = vpop.f32.mrb[0].mxu0
        %12967 = vmatprep.mubr.bf16.mxu0 0
        %12968 = vmatmul.mubr.bf16.gmra.mrb[0].mxu0 %v12356
        %v12969 = vpop.f32.mrb[0].mxu0
        %v12970 = vadd.f32 %v12809, %v12969
        %v12971 = vpop.f32.mrb[0].mxu0
        %v12972 = vpop.f32.mrb[0].mxu0
        %v12973 = vadd.f32 %v12812, %v12972
        %v12974 = vpop.f32.mrb[0].mxu0
        %12975 = vmatprep.mubr.bf16.mxu0 0
        %12976 = vmatmul.mubr.bf16.gmra.mrb[0].mxu0 %v12359
        %v12977 = vpop.f32.mrb[0].mxu0
        %v12978 = vadd.f32 %v12817, %v12977
        %v12979 = vpop.f32.mrb[0].mxu0
        %v12980 = vpop.f32.mrb[0].mxu0
        %v12981 = vadd.f32 %v12820, %v12980
        %v12982 = vpop.f32.mrb[0].mxu0
        %12983 = vmatprep.mubr.bf16.mxu0 0
        %12984 = vmatmul.mubr.bf16.gmra.mrb[0].mxu0 %v12362
        %v12985 = vpop.f32.mrb[0].mxu0
        %v12986 = vadd.f32 %v12825, %v12985
        %v12987 = vpop.f32.mrb[0].mxu0
        %v12988 = vpop.f32.mrb[0].mxu0
        %v12989 = vadd.f32 %v12828, %v12988
        %v12990 = vpop.f32.mrb[0].mxu0
        %12991 = vmatprep.mubr.bf16.mxu0 0
        %12992 = vmatmul.mubr.bf16.gmra.mrb[0].mxu0 %v12365
        %v12993 = vpop.f32.mrb[0].mxu0
        %v12994 = vadd.f32 %v12833, %v12993
        %v12995 = vpop.f32.mrb[0].mxu0
        %v12996 = vpop.f32.mrb[0].mxu0
        %v12997 = vadd.f32 %v12836, %v12996
        %v12998 = vpop.f32.mrb[0].mxu0
        %12999 = vmatprep.mubr.bf16.mxu0 0
        %13000 = vmatmul.mubr.bf16.gmra.mrb[0].mxu0 %v12368
        %v13001 = vpop.f32.mrb[0].mxu0
        %v13002 = vadd.f32 %v12841, %v13001
        %v13003 = vpop.f32.mrb[0].mxu0
        %v13004 = vpop.f32.mrb[0].mxu0
        %v13005 = vadd.f32 %v12844, %v13004
        %v13006 = vpop.f32.mrb[0].mxu0
        %13007 = vmatprep.mubr.bf16.mxu0 0
        %13008 = vmatmul.mubr.bf16.gmra.mrb[0].mxu0 %v12370
        %v13009 = vpop.f32.mrb[0].mxu0
        %v13010 = vadd.f32 %v12849, %v13009
        %v13011 = vpop.f32.mrb[0].mxu0
        %v13012 = vpop.f32.mrb[0].mxu0
        %v13013 = vadd.f32 %v12852, %v13012
        %v13014 = vpop.f32.mrb[0].mxu0
        %13015 = vdwg.mxu0
        %v13016 = vld [vmem:[#allocation23] sm:$0x1]
        %v13017 = vlaneseq
        %v13018 = vshrl.u32 %v13017, 7
        %v13019 = vsub.s32 0, %v13018
        %v13020 = vrot.slane %v13016, %v13019
        %v13021 = vmul.f32 %v12890, %v13020
        %v13022 = vmul.f32 %v12893, %v13020
        %v13023 = vmul.f32 %v12898, %v13020
        %v13024 = vmul.f32 %v12901, %v13020
        %v13025 = vmul.f32 %v12906, %v13020
        %v13026 = vmul.f32 %v12909, %v13020
        %v13027 = vmul.f32 %v12914, %v13020
        %v13028 = vmul.f32 %v12917, %v13020
        %v13029 = vmul.f32 %v12922, %v13020
        %v13030 = vmul.f32 %v12925, %v13020
        %v13031 = vmul.f32 %v12930, %v13020
        %v13032 = vmul.f32 %v12933, %v13020
        %v13033 = vmul.f32 %v12938, %v13020
        %v13034 = vmul.f32 %v12941, %v13020
        %v13035 = vmul.f32 %v12946, %v13020
        %v13036 = vmul.f32 %v12949, %v13020
        %v13037 = vmul.f32 %v12954, %v13020
        %v13038 = vmul.f32 %v12957, %v13020
        %v13039 = vmul.f32 %v12962, %v13020
        %v13040 = vmul.f32 %v12965, %v13020
        %v13041 = vmul.f32 %v12970, %v13020
        %v13042 = vmul.f32 %v12973, %v13020
        %v13043 = vmul.f32 %v12978, %v13020
        %v13044 = vmul.f32 %v12981, %v13020
        %v13045 = vmul.f32 %v12986, %v13020
        %v13046 = vmul.f32 %v12989, %v13020
        %v13047 = vmul.f32 %v12994, %v13020
        %v13048 = vmul.f32 %v12997, %v13020
        %v13049 = vmul.f32 %v13002, %v13020
        %v13050 = vmul.f32 %v13005, %v13020
        %v13051 = vmul.f32 %v13010, %v13020
        %v13052 = vmul.f32 %v13013, %v13020
        %v13053 = vld [vmem:[#allocation23 + $0x1] sm:$0x1]
        %v13054 = vlaneseq
        %v13055 = vshrl.u32 %v13054, 7
        %v13056 = vsub.s32 0, %v13055
        %v13057 = vrot.slane %v13053, %v13056
        %v13058 = vadd.f32 %v13021, %v13057
        %v13059 = vadd.f32 %v13022, %v13057
        %v13060 = vadd.f32 %v13023, %v13057
        %v13061 = vadd.f32 %v13024, %v13057
        %v13062 = vadd.f32 %v13025, %v13057
        %v13063 = vadd.f32 %v13026, %v13057
        %v13064 = vadd.f32 %v13027, %v13057
        %v13065 = vadd.f32 %v13028, %v13057
        %v13066 = vadd.f32 %v13029, %v13057
        %v13067 = vadd.f32 %v13030, %v13057
        %v13068 = vadd.f32 %v13031, %v13057
        %v13069 = vadd.f32 %v13032, %v13057
        %v13070 = vadd.f32 %v13033, %v13057
        %v13071 = vadd.f32 %v13034, %v13057
        %v13072 = vadd.f32 %v13035, %v13057
        %v13073 = vadd.f32 %v13036, %v13057
        %v13074 = vadd.f32 %v13037, %v13057
        %v13075 = vadd.f32 %v13038, %v13057
        %v13076 = vadd.f32 %v13039, %v13057
        %v13077 = vadd.f32 %v13040, %v13057
        %v13078 = vadd.f32 %v13041, %v13057
        %v13079 = vadd.f32 %v13042, %v13057
        %v13080 = vadd.f32 %v13043, %v13057
        %v13081 = vadd.f32 %v13044, %v13057
        %v13082 = vadd.f32 %v13045, %v13057
        %v13083 = vadd.f32 %v13046, %v13057
        %v13084 = vadd.f32 %v13047, %v13057
        %v13085 = vadd.f32 %v13048, %v13057
        %v13086 = vadd.f32 %v13049, %v13057
        %v13087 = vadd.f32 %v13050, %v13057
        %v13088 = vadd.f32 %v13051, %v13057
        %v13089 = vadd.f32 %v13052, %v13057
        %v13090 = vmax.f32 %v13058, 0.0
        %v13091 = vmax.f32 %v13059, 0.0
        %v13092 = vmax.f32 %v13060, 0.0
        %v13093 = vmax.f32 %v13061, 0.0
        %v13094 = vmax.f32 %v13062, 0.0
        %v13095 = vmax.f32 %v13063, 0.0
        %v13096 = vmax.f32 %v13064, 0.0
        %v13097 = vmax.f32 %v13065, 0.0
        %v13098 = vmax.f32 %v13066, 0.0
        %v13099 = vmax.f32 %v13067, 0.0
        %v13100 = vmax.f32 %v13068, 0.0
        %v13101 = vmax.f32 %v13069, 0.0
        %v13102 = vmax.f32 %v13070, 0.0
        %v13103 = vmax.f32 %v13071, 0.0
        %v13104 = vmax.f32 %v13072, 0.0
        %v13105 = vmax.f32 %v13073, 0.0
        %v13106 = vmax.f32 %v13074, 0.0
        %v13107 = vmax.f32 %v13075, 0.0
        %v13108 = vmax.f32 %v13076, 0.0
        %v13109 = vmax.f32 %v13077, 0.0
        %v13110 = vmax.f32 %v13078, 0.0
        %v13111 = vmax.f32 %v13079, 0.0
        %v13112 = vmax.f32 %v13080, 0.0
        %v13113 = vmax.f32 %v13081, 0.0
        %v13114 = vmax.f32 %v13082, 0.0
        %v13115 = vmax.f32 %v13083, 0.0
        %v13116 = vmax.f32 %v13084, 0.0
        %v13117 = vmax.f32 %v13085, 0.0
        %v13118 = vmax.f32 %v13086, 0.0
        %v13119 = vmax.f32 %v13087, 0.0
        %v13120 = vmax.f32 %v13088, 0.0
        %v13121 = vmax.f32 %v13089, 0.0
        %v13122 = vld [vmem:[#allocation25] sm:$0xff]
        %v13123 = vld [vmem:[#allocation25 + $0x8] sm:$0x3]
        %v13124 = vld [vmem:[#allocation26] sm:$0xff]
        %v13125 = vld [vmem:[#allocation26 + $0x8] sm:$0x3]
        %13127 = vset.pattern.permute.xlu0 0
        %13128 = vperm.xlu0 %13127, %v13124
        %v13129 = vpop.permute.xlu0 %13128
        %13132 = vset.pattern.permute.xlu0 0
        %13133 = vperm.xlu0 %13132, %v13125
        %v13134 = vpop.permute.xlu0 %13133
        %v13137 = vsel %vm2665, %v13122, 0
        %v13140 = vsel %vm2665, %v13123, 0
        %v13143 = vsel %vm2665, %v13090, 0
        %v13146 = vsel %vm2665, %v13091, 0
        %v13149 = vsel %vm2665, %v13092, 0
        %v13152 = vsel %vm2665, %v13093, 0
        %v13155 = vsel %vm2665, %v13094, 0
        %v13158 = vsel %vm2665, %v13095, 0
        %v13161 = vsel %vm2665, %v13096, 0
        %v13164 = vsel %vm2665, %v13097, 0
        %v13167 = vsel %vm2665, %v13098, 0
        %v13170 = vsel %vm2665, %v13099, 0
        %v13173 = vsel %vm2665, %v13100, 0
        %v13176 = vsel %vm2665, %v13101, 0
        %v13179 = vsel %vm2665, %v13102, 0
        %v13182 = vsel %vm2665, %v13103, 0
        %v13185 = vsel %vm2665, %v13104, 0
        %v13188 = vsel %vm2665, %v13105, 0
        %v13191 = vsel %vm2665, %v13106, 0
        %v13194 = vsel %vm2665, %v13107, 0
        %v13197 = vsel %vm2665, %v13108, 0
        %v13200 = vsel %vm2665, %v13109, 0
        %v13203 = vsel %vm2665, %v13110, 0
        %v13206 = vsel %vm2665, %v13111, 0
        %v13209 = vsel %vm2665, %v13112, 0
        %v13212 = vsel %vm2665, %v13113, 0
        %v13215 = vsel %vm2665, %v13114, 0
        %v13218 = vsel %vm2665, %v13115, 0
        %v13221 = vsel %vm2665, %v13116, 0
        %v13224 = vsel %vm2665, %v13117, 0
        %v13227 = vsel %vm2665, %v13118, 0
        %v13230 = vsel %vm2665, %v13119, 0
        %v13233 = vsel %vm2665, %v13120, 0
        %v13236 = vsel %vm2665, %v13121, 0
        %13238 = vmatprep.subr.mxu0 0.0
        %13239 = vmatpush1.xpose.msra.mxu0 %v13143
        %13240 = vmatprep.subr.mxu0 0.0
        %13241 = vmatpush1.xpose.msra.mxu0 %v13146
        %13242 = vmatprep.subr.mxu0 0.0
        %13243 = vmatpush1.xpose.msra.mxu0 %v13149
        %13244 = vmatprep.subr.mxu0 0.0
        %13245 = vmatpush1.xpose.msra.mxu0 %v13152
        %13246 = vmatprep.subr.mxu0 0.0
        %13247 = vmatpush1.xpose.msra.mxu0 %v13155
        %13248 = vmatprep.subr.mxu0 0.0
        %13249 = vmatpush1.xpose.msra.mxu0 %v13158
        %13250 = vmatprep.subr.mxu0 0.0
        %13251 = vmatpush1.xpose.msra.mxu0 %v13161
        %13252 = vmatprep.subr.mxu0 0.0
        %13253 = vmatpush1.xpose.msra.mxu0 %v13164
        %13254 = vmatprep.subr.mxu0 0.0
        %13255 = vmatpush1.xpose.msra.mxu0 %v13167
        %13256 = vmatprep.subr.mxu0 0.0
        %13257 = vmatpush1.xpose.msra.mxu0 %v13170
        %13258 = vmatprep.subr.mxu0 0.0
        %13259 = vmatpush1.xpose.msra.mxu0 %v13173
        %13260 = vmatprep.subr.mxu0 0.0
        %13261 = vmatpush1.xpose.msra.mxu0 %v13176
        %13262 = vmatprep.subr.mxu0 0.0
        %13263 = vmatpush1.xpose.msra.mxu0 %v13179
        %13264 = vmatprep.subr.mxu0 0.0
        %13265 = vmatpush1.xpose.msra.mxu0 %v13182
        %13266 = vmatprep.subr.mxu0 0.0
        %13267 = vmatpush1.xpose.msra.mxu0 %v13185
        %13268 = vmatprep.subr.mxu0 0.0
        %13269 = vmatpush1.xpose.msra.mxu0 %v13188
        %13270 = vmatprep.subr.mxu0 0.0
        %13271 = vmatpush1.xpose.msra.mxu0 %v13191
        %13272 = vmatprep.subr.mxu0 0.0
        %13273 = vmatpush1.xpose.msra.mxu0 %v13194
        %13274 = vmatprep.subr.mxu0 0.0
        %13275 = vmatpush1.xpose.msra.mxu0 %v13197
        %13276 = vmatprep.subr.mxu0 0.0
        %13277 = vmatpush1.xpose.msra.mxu0 %v13200
        %13278 = vmatprep.subr.mxu0 0.0
        %13279 = vmatpush1.xpose.msra.mxu0 %v13203
        %13280 = vmatprep.subr.mxu0 0.0
        %13281 = vmatpush1.xpose.msra.mxu0 %v13206
        %13282 = vmatprep.subr.mxu0 0.0
        %13283 = vmatpush1.xpose.msra.mxu0 %v13209
        %13284 = vmatprep.subr.mxu0 0.0
        %13285 = vmatpush1.xpose.msra.mxu0 %v13212
        %13286 = vmatprep.subr.mxu0 0.0
        %13287 = vmatpush1.xpose.msra.mxu0 %v13215
        %13288 = vmatprep.subr.mxu0 0.0
        %13289 = vmatpush1.xpose.msra.mxu0 %v13218
        %13290 = vmatprep.subr.mxu0 0.0
        %13291 = vmatpush1.xpose.msra.mxu0 %v13221
        %13292 = vmatprep.subr.mxu0 0.0
        %13293 = vmatpush1.xpose.msra.mxu0 %v13224
        %13294 = vmatprep.subr.mxu0 0.0
        %13295 = vmatpush1.xpose.msra.mxu0 %v13227
        %13296 = vmatprep.subr.mxu0 0.0
        %13297 = vmatpush1.xpose.msra.mxu0 %v13230
        %13298 = vmatprep.subr.mxu0 0.0
        %13299 = vmatpush1.xpose.msra.mxu0 %v13233
        %13300 = vmatprep.subr.mxu0 0.0
        %13301 = vmatpush1.xpose.msra.mxu0 %v13236
        %13302 = vmatprep.mubr.f32.mxu0 0.0
        %13303 = vmatmul.mubr.f32.gmra.mrb[0].mxu0 %v13137
        %v13304 = vpop.f32.mrb[0].mxu0
        %v13305 = vadd.f32 %v13129, %v13304
        %v13306 = vpop.f32.mrb[0].mxu0
        %v13307 = vadd.f32 %v13129, %v13306
        %13308 = vmatprep.mubr.f32.mxu0 0.0
        %13309 = vmatmul.mubr.f32.gmra.mrb[0].mxu0 %v13140
        %v13310 = vpop.f32.mrb[0].mxu0
        %v13311 = vadd.f32 %v13134, %v13310
        %v13312 = vpop.f32.mrb[0].mxu0
        %v13313 = vadd.f32 %v13134, %v13312
        %13314 = vdwg.mxu0
        %13315 = vst [vmem:[%s745] sm:$0xff] %v13305
        %13316 = vst [vmem:[%s745 + $0x8] sm:$0xff] %v13307
        %13317 = vst [vmem:[%s745 + $0x10] sm:$0x3] %v13311
        %13318 = vst [vmem:[%s745 + $0x18] sm:$0x3] %v13313
        %s13319 = sand.u32 %s390, 1
        %s13320 = scalar_lea.sflag [#allocation4], %s13319
        %s13321 = sand.u32 %s390, 1
        %s13322 = smul.addr %s13321, 32
        %s13323 = scalar_lea.vmem [#allocation28], %s13322
        // Predicated region
        $region149: #{unet_forward.1} parent=83 // pred_check
          %p13324 = pneg %p400
        $region150: #{unet_forward.1} parent=83 // pred_check_branch
          %13326 = sbr.rel (%p13324) target = $region152
        $region151: #{unet_forward.1} parent=83 // pred_region
          %s13328 = ssub.s32 512, 512
          %13329 = vsyncadd %s13320, %s13328
          %s13330 = smul.addr %s41, 4
          %s13331 = smul.addr %s13330, 128
          %s13332 = scalar_lea.hbm %s16, %s13331
          %s13333 = sshll.u32 %s13323, 4
          %s13334 = int_to_ptr.vmem [resolvable:$true] %s13333
          %13339 = dma.vmem_to_hbm [thread:$0]  %s13334, 512, %s13332, %s13320, 256, 256, 16
        $region152: #{unet_forward.1} parent=83 // pred_fallthru
          _
      $region84: #{unet_forward.1} parent=5 // pred_fallthru
        _
      %p13340 = scmp.le.s32.totalorder 2, %s36
      // Predicated region
      $region153: #{unet_forward.1} parent=5 // pred_check
        %p13341 = pneg %p13340
      $region154: #{unet_forward.1} parent=5 // pred_check_branch
        %13343 = sbr.rel (%p13341) target = $region156
      $region155: #{unet_forward.1} parent=5 // pred_region
        %s13344 = ssub.s32 %s36, 2
        // Predicated region
        $region157: #{unet_forward.1} parent=155 // pred_check
          %p13345 = pneg %p406
        $region158: #{unet_forward.1} parent=155 // pred_check_branch
          %13347 = sbr.rel (%p13345) target = $region160
        $region159: #{unet_forward.1} parent=155 // pred_region
          %s13348 = sand.u32 %s391, 1
          %s13349 = scalar_lea.sflag [#allocation4], %s13348
          %s13350 = sand.u32 %s391, 1
          %s13351 = smul.addr %s13350, 32
          %s13352 = scalar_lea.vmem [#allocation28], %s13351
          %13353 = dma.done %s13349, 512
        $region160: #{unet_forward.1} parent=155 // pred_fallthru
          _
      $region156: #{unet_forward.1} parent=5 // pred_fallthru
        _
    $region6: #{unet_forward.1} parent=1 // loop_footer
      %s40 = sadd.s32 1, %s36
    $region7: #{unet_forward.1} parent=1 // loop_footer_branch
      %35 = sbr.rel target = $region3
    $region8: #{unet_forward.1} parent=1 // loop_exit
      _
    %13354 = vsyncpa [#allocation3], 1
    %s13355 = scalar_lea.sflag [#allocation3], 1
    %13356 = vsyncpa %s13355, 1
    %13357 = vsyncpa [#allocation6], 1
    %13358 = vsyncpa [#allocation9], 1
    %13359 = vsyncpa [#allocation12], 1
    %13360 = vsyncpa [#allocation15], 1
    %13361 = vsyncpa [#allocation18], 1
    %13362 = vsyncpa [#allocation21], 1
    %13363 = vsyncpa [#allocation24], 1
    %13364 = vsyncpa [#allocation27], 1
    %13365 = vsyncpa [#allocation4], 1
    %s13366 = scalar_lea.sflag [#allocation4], 1
    %13367 = vsyncpa %s13366, 1

</llo_original>
